<compile_context>
chip_gen: v7x
topology: tpu7x:2x2x1
jax: 0.10.0
libtpu: 0.0.40
codegen_flags: <defaults>
</compile_context>

<pallas_src>
import jax
import jax.numpy as jnp
from jax.experimental import pallas as pl
from jax.experimental.pallas import tpu as pltpu

_LANE = 128


def _round_up(a, m):
    return (a + m - 1) // m * m


def _inception3_kernel(x_ref, w1_ref, b1_ref, w2_ref, b2_ref, o_ref, h_ref):
    # x_ref : (L, Cin, Bt)   batch on lanes, channels on sublanes
    # w1_ref: (Cd, Cin)      k=1 conv weight
    # b1_ref: (Cd, 1)
    # w2_ref: (3, Cd, Cd)    k=3 conv weight, (out, in) per tap
    # b2_ref: (Cd, 1)
    # o_ref : (2*Lo, Bt)     rows [0:Lo] = mean over chans, [Lo:2*Lo] = max
    # h_ref : (L, Cd, Bt)    VMEM scratch for the k=1 activation
    L, Cin, Bt = x_ref.shape
    Cd = w1_ref.shape[0]
    Lo = L - 2

    w1 = w1_ref[...]                                    # (Cd, Cin)
    w2 = w2_ref[...]                                    # (3, Cd, Cd)
    # Hoisted bias broadcasts (JAX does not CSE broadcast_in_dim).
    b1b = jnp.broadcast_to(b1_ref[...], (Cd, Bt))       # (Cd, Bt)
    b2b = jnp.broadcast_to(b2_ref[...], (Cd, Bt))       # (Cd, Bt)

    # ---- Conv1d(kernel_size=1) + ReLU, per position, batch on lanes.
    # For tiny Cin the VPU FMAs beat a K=Cin MXU contraction; fall back to
    # the MXU when the channel contraction is deep enough to fill it.
    for l in range(L):
        xl = x_ref[l]                                   # (Cin, Bt)
        if Cin >= 16:
            acc = jnp.dot(w1, xl, preferred_element_type=jnp.float32)
        else:
            acc = w1[:, 0:1] * xl[0:1, :]               # (Cd,1)*(1,Bt)->(Cd,Bt)
            for c in range(1, Cin):
                acc = acc + w1[:, c:c + 1] * xl[c:c + 1, :]
        h_ref[l] = jnp.maximum(acc + b1b, 0.0)          # (Cd, Bt)

    # ---- Conv1d(kernel_size=3, valid) + ReLU + mean/max over channels.
    # One (Cd,Cd)@(Cd,Bt) MXU matmul per tap per output position (batch is
    # the matmul N dimension). Channels sit on sublanes, so mean/max are
    # sublane reductions whose results are lane-dense (1, Bt) rows.
    mean_rows = []
    max_rows = []
    for l in range(Lo):
        z = jnp.dot(w2[0], h_ref[l], preferred_element_type=jnp.float32)
        z = z + jnp.dot(w2[1], h_ref[l + 1], preferred_element_type=jnp.float32)
        z = z + jnp.dot(w2[2], h_ref[l + 2], preferred_element_type=jnp.float32)
        z = jnp.maximum(z + b2b, 0.0)                   # (Cd, Bt)
        mean_rows.append(jnp.mean(z, axis=0, keepdims=True))
        max_rows.append(jnp.max(z, axis=0, keepdims=True))

    # Single unmasked lane-dense store of the whole output block.
    o_ref[...] = jnp.concatenate(mean_rows + max_rows, axis=0)  # (2*Lo, Bt)


def inception3_forward(x_ncl, w1, b1, w2, b2):
    """x_ncl: (N, Cin, L).  PyTorch Conv1d weights:
       w1: (Cd, Cin, 1), b1: (Cd,), w2: (Cd, Cd, 3), b2: (Cd,).
       Returns (N, 2*(L-2)) matching torch.cat((mean, max), dim=1)."""
    N, Cin, L = x_ncl.shape
    Cd = w1.shape[0]
    Lo = L - 2
    assert L >= 3, "Conv1d(kernel_size=3, valid) needs L >= 3"

    # ---- Batch-tile (lane) sizing from a VMEM budget that accounts for
    # (8,128) tile padding of every resident buffer.
    per_lane_bytes = 4 * (
        2 * L * _round_up(Cin, 8)          # double-buffered input block
        + L * _round_up(Cd, 8)             # h scratch
        + 2 * _round_up(2 * Lo, 8)         # double-buffered output block
        + 12 * _round_up(Cd, 8))           # z / broadcast temporaries
    budget = 24 * 1024 * 1024              # safe for v7x's 64 MiB (32 scoped)
    bt_cap = max(_LANE, min(2048, (budget // per_lane_bytes) // _LANE * _LANE))

    n_lanes = _round_up(N, _LANE)
    if n_lanes <= bt_cap:
        if N > _LANE:
            # Split into >= 2 lane-multiple tiles so both TensorCores get work.
            Bt = _round_up(pl.cdiv(N, 2), _LANE)
        else:
            Bt = n_lanes
    else:
        Bt = bt_cap
    num_steps = pl.cdiv(N, Bt)
    n_pad = num_steps * Bt

    # ---- Lane-dense layouts (batch on the last axis everywhere).
    x_k = jnp.transpose(x_ncl.astype(jnp.float32), (2, 1, 0))   # (L, Cin, N)
    if n_pad != N:
        x_k = jnp.pad(x_k, ((0, 0), (0, 0), (0, n_pad - N)))

    w1_k = w1[:, :, 0].astype(jnp.float32)                       # (Cd, Cin)
    b1_k = b1.reshape(Cd, 1).astype(jnp.float32)
    w2_k = jnp.transpose(w2, (2, 0, 1)).astype(jnp.float32)      # (3, Cd, Cd)
    b2_k = b2.reshape(Cd, 1).astype(jnp.float32)

    # ---- VMEM accounting (padded tiles + resident weights + slack).
    w_bytes = 4 * (_round_up(Cd, 8) * _round_up(Cin, _LANE)
                   + 2 * _round_up(Cd, 8) * _LANE
                   + 3 * _round_up(Cd, 8) * _round_up(Cd, _LANE))
    vmem_needed = per_lane_bytes * Bt + w_bytes
    vmem_limit = int(min(max(vmem_needed + (8 << 20), 16 << 20), 48 << 20))

    out = pl.pallas_call(
        _inception3_kernel,
        out_shape=jax.ShapeDtypeStruct((2 * Lo, n_pad), jnp.float32),
        grid_spec=pltpu.PrefetchScalarGridSpec(
            num_scalar_prefetch=0,
            grid=(num_steps,),
            in_specs=[
                pl.BlockSpec((L, Cin, Bt), lambda n: (0, 0, n)),
                pl.BlockSpec((Cd, Cin), lambda n: (0, 0)),
                pl.BlockSpec((Cd, 1), lambda n: (0, 0)),
                pl.BlockSpec((3, Cd, Cd), lambda n: (0, 0, 0)),
                pl.BlockSpec((Cd, 1), lambda n: (0, 0)),
            ],
            out_specs=pl.BlockSpec((2 * Lo, Bt), lambda n: (0, n)),
            scratch_shapes=[pltpu.VMEM((L, Cd, Bt), jnp.float32)],
        ),
        compiler_params=pltpu.CompilerParams(
            dimension_semantics=("parallel",),
            vmem_limit_bytes=vmem_limit),
    )(x_k, w1_k, b1_k, w2_k, b2_k)

    # (2*Lo, n_pad) -> (N, 2*Lo): rows [0:Lo] mean, [Lo:2*Lo] max, matching
    # torch.cat((avg_pool, max_pool), dim=1) after the transpose.
    return jnp.transpose(out)[:N]


def _reference(x_ncl, w1, b1, w2, b2):
    """Pure-JAX reference of the PyTorch forward for verification."""
    h = jnp.einsum("ncl,dc->ndl", x_ncl, w1[:, :, 0]) + b1[None, :, None]
    h = jnp.maximum(h, 0.0)
    Lo = x_ncl.shape[2] - 2
    z = b2[None, :, None]
    for k in range(3):
        z = z + jnp.einsum("ncl,dc->ndl", h[:, :, k:k + Lo], w2[:, :, k])
    z = jnp.maximum(z, 0.0)
    return jnp.concatenate([jnp.mean(z, axis=1), jnp.max(z, axis=1)], axis=1)


if __name__ == "__main__":
    key = jax.random.PRNGKey(0)
    N, Cin, L, Cd = 4, 4, 16, 64          # batch, input_dim, seq len, conv_dim
    kx, k1, k2, k3, k4 = jax.random.split(key, 5)

    x = jax.random.normal(kx, (N, Cin, L), dtype=jnp.float32)
    w1 = jax.random.normal(k1, (Cd, Cin, 1), dtype=jnp.float32) * 0.2
    b1 = jax.random.normal(k2, (Cd,), dtype=jnp.float32) * 0.1
    w2 = jax.random.normal(k3, (Cd, Cd, 3), dtype=jnp.float32) * 0.1
    b2 = jax.random.normal(k4, (Cd,), dtype=jnp.float32) * 0.1

    out = jax.block_until_ready(inception3_forward(x, w1, b1, w2, b2))
    ref = _reference(x, w1, b1, w2, b2)
    assert out.shape == (N, 2 * (L - 2)), out.shape
    assert jnp.allclose(out, ref, atol=5e-4, rtol=5e-4), float(
        jnp.max(jnp.abs(out - ref)))

    # Exercise the lane-padding + multi-grid-step (2 TensorCore) path.
    N2 = 300
    x2 = jax.random.normal(kx, (N2, Cin, L), dtype=jnp.float32)
    out2 = jax.block_until_ready(inception3_forward(x2, w1, b1, w2, b2))
    ref2 = _reference(x2, w1, b1, w2, b2)
    assert out2.shape == (N2, 2 * (L - 2)), out2.shape
    assert jnp.allclose(out2, ref2, atol=5e-4, rtol=5e-4), float(
        jnp.max(jnp.abs(out2 - ref2)))

    print("KERNEL_OK")
</pallas_src>

<mosaic_0001>
module attributes {stable_mosaic.version = 11 : i64} {
  func.func @_inception3_kernel(%arg0: i32, %arg1: memref<16x4x128xf32, #tpu.memory_space<vmem>>, %arg2: memref<64x4xf32, #tpu.memory_space<vmem>>, %arg3: memref<64x1xf32, #tpu.memory_space<vmem>>, %arg4: memref<3x64x64xf32, #tpu.memory_space<vmem>>, %arg5: memref<64x1xf32, #tpu.memory_space<vmem>>, %arg6: memref<28x128xf32, #tpu.memory_space<vmem>>, %arg7: memref<16x64x128xf32, #tpu.memory_space<vmem>>) attributes {dimension_semantics = [#tpu.dimension_semantics<parallel>], iteration_bounds = array<i64: 1>, scalar_prefetch = 0 : i64, scratch_operands = 1 : i64, tpu.core_type = #tpu.core_type<tc>, window_params = [{transform_indices = @transform_0, window_bounds = array<i64: 16, 4, 128>}, {pipeline_mode = #tpu.pipeline_mode<synchronous>, transform_indices = @transform_1, window_bounds = array<i64: 64, 4>}, {pipeline_mode = #tpu.pipeline_mode<synchronous>, transform_indices = @transform_2, window_bounds = array<i64: 64, 1>}, {pipeline_mode = #tpu.pipeline_mode<synchronous>, transform_indices = @transform_3, window_bounds = array<i64: 3, 64, 64>}, {pipeline_mode = #tpu.pipeline_mode<synchronous>, transform_indices = @transform_4, window_bounds = array<i64: 64, 1>}, {transform_indices = @transform_5, window_bounds = array<i64: 28, 128>}]} {
    %c0 = arith.constant 0 : index
    %c0_0 = arith.constant 0 : index
    %0 = vector.load %arg2[%c0, %c0_0] : memref<64x4xf32, #tpu.memory_space<vmem>>, vector<64x4xf32>
    %c0_1 = arith.constant 0 : index
    %c0_2 = arith.constant 0 : index
    %c0_3 = arith.constant 0 : index
    %1 = vector.load %arg4[%c0_1, %c0_2, %c0_3] : memref<3x64x64xf32, #tpu.memory_space<vmem>>, vector<3x64x64xf32>
    %c0_4 = arith.constant 0 : index
    %c0_5 = arith.constant 0 : index
    %2 = vector.load %arg3[%c0_4, %c0_5] : memref<64x1xf32, #tpu.memory_space<vmem>>, vector<64x1xf32>
    %3 = vector.shape_cast %2 : vector<64x1xf32> to vector<64x1xf32>
    %4 = vector.broadcast %3 : vector<64x1xf32> to vector<64x128xf32>
    %c0_6 = arith.constant 0 : index
    %c0_7 = arith.constant 0 : index
    %5 = vector.load %arg5[%c0_6, %c0_7] : memref<64x1xf32, #tpu.memory_space<vmem>>, vector<64x1xf32>
    %6 = vector.shape_cast %5 : vector<64x1xf32> to vector<64x1xf32>
    %7 = vector.broadcast %6 : vector<64x1xf32> to vector<64x128xf32>
    %c0_8 = arith.constant 0 : index
    %c0_9 = arith.constant 0 : index
    %c0_10 = arith.constant 0 : index
    %8 = vector.load %arg1[%c0_8, %c0_9, %c0_10] : memref<16x4x128xf32, #tpu.memory_space<vmem>>, vector<1x4x128xf32>
    %9 = vector.shape_cast %8 : vector<1x4x128xf32> to vector<4x128xf32>
    %10 = vector.extract_strided_slice %0 {offsets = [0, 0], sizes = [64, 1], strides = [1, 1]} : vector<64x4xf32> to vector<64x1xf32>
    %11 = vector.extract_strided_slice %9 {offsets = [0, 0], sizes = [1, 128], strides = [1, 1]} : vector<4x128xf32> to vector<1x128xf32>
    %12 = vector.broadcast %10 : vector<64x1xf32> to vector<64x128xf32>
    %13 = vector.broadcast %11 : vector<1x128xf32> to vector<64x128xf32>
    %14 = arith.mulf %12, %13 : vector<64x128xf32>
    %15 = vector.extract_strided_slice %0 {offsets = [0, 1], sizes = [64, 1], strides = [1, 1]} : vector<64x4xf32> to vector<64x1xf32>
    %16 = vector.extract_strided_slice %9 {offsets = [1, 0], sizes = [1, 128], strides = [1, 1]} : vector<4x128xf32> to vector<1x128xf32>
    %17 = vector.broadcast %15 : vector<64x1xf32> to vector<64x128xf32>
    %18 = vector.broadcast %16 : vector<1x128xf32> to vector<64x128xf32>
    %19 = arith.mulf %17, %18 : vector<64x128xf32>
    %20 = arith.addf %14, %19 : vector<64x128xf32>
    %21 = vector.extract_strided_slice %0 {offsets = [0, 2], sizes = [64, 1], strides = [1, 1]} : vector<64x4xf32> to vector<64x1xf32>
    %22 = vector.extract_strided_slice %9 {offsets = [2, 0], sizes = [1, 128], strides = [1, 1]} : vector<4x128xf32> to vector<1x128xf32>
    %23 = vector.broadcast %21 : vector<64x1xf32> to vector<64x128xf32>
    %24 = vector.broadcast %22 : vector<1x128xf32> to vector<64x128xf32>
    %25 = arith.mulf %23, %24 : vector<64x128xf32>
    %26 = arith.addf %20, %25 : vector<64x128xf32>
    %27 = vector.extract_strided_slice %0 {offsets = [0, 3], sizes = [64, 1], strides = [1, 1]} : vector<64x4xf32> to vector<64x1xf32>
    %28 = vector.extract_strided_slice %9 {offsets = [3, 0], sizes = [1, 128], strides = [1, 1]} : vector<4x128xf32> to vector<1x128xf32>
    %29 = vector.broadcast %27 : vector<64x1xf32> to vector<64x128xf32>
    %30 = vector.broadcast %28 : vector<1x128xf32> to vector<64x128xf32>
    %31 = arith.mulf %29, %30 : vector<64x128xf32>
    %32 = arith.addf %26, %31 : vector<64x128xf32>
    %33 = arith.addf %32, %4 : vector<64x128xf32>
    %cst = arith.constant 0.000000e+00 : f32
    %34 = vector.broadcast %cst : f32 to vector<64x128xf32>
    %35 = arith.maximumf %33, %34 : vector<64x128xf32>
    %c0_11 = arith.constant 0 : index
    %c0_12 = arith.constant 0 : index
    %c0_13 = arith.constant 0 : index
    %36 = vector.load %arg7[%c0_11, %c0_12, %c0_13] : memref<16x64x128xf32, #tpu.memory_space<vmem>>, vector<1x64x128xf32>
    %37 = vector.shape_cast %36 : vector<1x64x128xf32> to vector<64x128xf32>
    %38 = vector.shape_cast %35 : vector<64x128xf32> to vector<1x64x128xf32>
    tpu.vector_store %arg7[%c0_11, %c0_12, %c0_13], %38 {strides = array<i32>} : memref<16x64x128xf32, #tpu.memory_space<vmem>>, vector<1x64x128xf32>,
    %c1 = arith.constant 1 : index
    %c0_14 = arith.constant 0 : index
    %c0_15 = arith.constant 0 : index
    %39 = vector.load %arg1[%c1, %c0_14, %c0_15] : memref<16x4x128xf32, #tpu.memory_space<vmem>>, vector<1x4x128xf32>
    %40 = vector.shape_cast %39 : vector<1x4x128xf32> to vector<4x128xf32>
    %41 = vector.extract_strided_slice %0 {offsets = [0, 0], sizes = [64, 1], strides = [1, 1]} : vector<64x4xf32> to vector<64x1xf32>
    %42 = vector.extract_strided_slice %40 {offsets = [0, 0], sizes = [1, 128], strides = [1, 1]} : vector<4x128xf32> to vector<1x128xf32>
    %43 = vector.broadcast %41 : vector<64x1xf32> to vector<64x128xf32>
    %44 = vector.broadcast %42 : vector<1x128xf32> to vector<64x128xf32>
    %45 = arith.mulf %43, %44 : vector<64x128xf32>
    %46 = vector.extract_strided_slice %0 {offsets = [0, 1], sizes = [64, 1], strides = [1, 1]} : vector<64x4xf32> to vector<64x1xf32>
    %47 = vector.extract_strided_slice %40 {offsets = [1, 0], sizes = [1, 128], strides = [1, 1]} : vector<4x128xf32> to vector<1x128xf32>
    %48 = vector.broadcast %46 : vector<64x1xf32> to vector<64x128xf32>
    %49 = vector.broadcast %47 : vector<1x128xf32> to vector<64x128xf32>
    %50 = arith.mulf %48, %49 : vector<64x128xf32>
    %51 = arith.addf %45, %50 : vector<64x128xf32>
    %52 = vector.extract_strided_slice %0 {offsets = [0, 2], sizes = [64, 1], strides = [1, 1]} : vector<64x4xf32> to vector<64x1xf32>
    %53 = vector.extract_strided_slice %40 {offsets = [2, 0], sizes = [1, 128], strides = [1, 1]} : vector<4x128xf32> to vector<1x128xf32>
    %54 = vector.broadcast %52 : vector<64x1xf32> to vector<64x128xf32>
    %55 = vector.broadcast %53 : vector<1x128xf32> to vector<64x128xf32>
    %56 = arith.mulf %54, %55 : vector<64x128xf32>
    %57 = arith.addf %51, %56 : vector<64x128xf32>
    %58 = vector.extract_strided_slice %0 {offsets = [0, 3], sizes = [64, 1], strides = [1, 1]} : vector<64x4xf32> to vector<64x1xf32>
    %59 = vector.extract_strided_slice %40 {offsets = [3, 0], sizes = [1, 128], strides = [1, 1]} : vector<4x128xf32> to vector<1x128xf32>
    %60 = vector.broadcast %58 : vector<64x1xf32> to vector<64x128xf32>
    %61 = vector.broadcast %59 : vector<1x128xf32> to vector<64x128xf32>
    %62 = arith.mulf %60, %61 : vector<64x128xf32>
    %63 = arith.addf %57, %62 : vector<64x128xf32>
    %64 = arith.addf %63, %4 : vector<64x128xf32>
    %cst_16 = arith.constant 0.000000e+00 : f32
    %65 = vector.broadcast %cst_16 : f32 to vector<64x128xf32>
    %66 = arith.maximumf %64, %65 : vector<64x128xf32>
    %c1_17 = arith.constant 1 : index
    %c0_18 = arith.constant 0 : index
    %c0_19 = arith.constant 0 : index
    %67 = vector.load %arg7[%c1_17, %c0_18, %c0_19] : memref<16x64x128xf32, #tpu.memory_space<vmem>>, vector<1x64x128xf32>
    %68 = vector.shape_cast %67 : vector<1x64x128xf32> to vector<64x128xf32>
    %69 = vector.shape_cast %66 : vector<64x128xf32> to vector<1x64x128xf32>
    tpu.vector_store %arg7[%c1_17, %c0_18, %c0_19], %69 {strides = array<i32>} : memref<16x64x128xf32, #tpu.memory_space<vmem>>, vector<1x64x128xf32>,
    %c2 = arith.constant 2 : index
    %c0_20 = arith.constant 0 : index
    %c0_21 = arith.constant 0 : index
    %70 = vector.load %arg1[%c2, %c0_20, %c0_21] : memref<16x4x128xf32, #tpu.memory_space<vmem>>, vector<1x4x128xf32>
    %71 = vector.shape_cast %70 : vector<1x4x128xf32> to vector<4x128xf32>
    %72 = vector.extract_strided_slice %0 {offsets = [0, 0], sizes = [64, 1], strides = [1, 1]} : vector<64x4xf32> to vector<64x1xf32>
    %73 = vector.extract_strided_slice %71 {offsets = [0, 0], sizes = [1, 128], strides = [1, 1]} : vector<4x128xf32> to vector<1x128xf32>
    %74 = vector.broadcast %72 : vector<64x1xf32> to vector<64x128xf32>
    %75 = vector.broadcast %73 : vector<1x128xf32> to vector<64x128xf32>
    %76 = arith.mulf %74, %75 : vector<64x128xf32>
    %77 = vector.extract_strided_slice %0 {offsets = [0, 1], sizes = [64, 1], strides = [1, 1]} : vector<64x4xf32> to vector<64x1xf32>
    %78 = vector.extract_strided_slice %71 {offsets = [1, 0], sizes = [1, 128], strides = [1, 1]} : vector<4x128xf32> to vector<1x128xf32>
    %79 = vector.broadcast %77 : vector<64x1xf32> to vector<64x128xf32>
    %80 = vector.broadcast %78 : vector<1x128xf32> to vector<64x128xf32>
    %81 = arith.mulf %79, %80 : vector<64x128xf32>
    %82 = arith.addf %76, %81 : vector<64x128xf32>
    %83 = vector.extract_strided_slice %0 {offsets = [0, 2], sizes = [64, 1], strides = [1, 1]} : vector<64x4xf32> to vector<64x1xf32>
    %84 = vector.extract_strided_slice %71 {offsets = [2, 0], sizes = [1, 128], strides = [1, 1]} : vector<4x128xf32> to vector<1x128xf32>
    %85 = vector.broadcast %83 : vector<64x1xf32> to vector<64x128xf32>
    %86 = vector.broadcast %84 : vector<1x128xf32> to vector<64x128xf32>
    %87 = arith.mulf %85, %86 : vector<64x128xf32>
    %88 = arith.addf %82, %87 : vector<64x128xf32>
    %89 = vector.extract_strided_slice %0 {offsets = [0, 3], sizes = [64, 1], strides = [1, 1]} : vector<64x4xf32> to vector<64x1xf32>
    %90 = vector.extract_strided_slice %71 {offsets = [3, 0], sizes = [1, 128], strides = [1, 1]} : vector<4x128xf32> to vector<1x128xf32>
    %91 = vector.broadcast %89 : vector<64x1xf32> to vector<64x128xf32>
    %92 = vector.broadcast %90 : vector<1x128xf32> to vector<64x128xf32>
    %93 = arith.mulf %91, %92 : vector<64x128xf32>
    %94 = arith.addf %88, %93 : vector<64x128xf32>
    %95 = arith.addf %94, %4 : vector<64x128xf32>
    %cst_22 = arith.constant 0.000000e+00 : f32
    %96 = vector.broadcast %cst_22 : f32 to vector<64x128xf32>
    %97 = arith.maximumf %95, %96 : vector<64x128xf32>
    %c2_23 = arith.constant 2 : index
    %c0_24 = arith.constant 0 : index
    %c0_25 = arith.constant 0 : index
    %98 = vector.load %arg7[%c2_23, %c0_24, %c0_25] : memref<16x64x128xf32, #tpu.memory_space<vmem>>, vector<1x64x128xf32>
    %99 = vector.shape_cast %98 : vector<1x64x128xf32> to vector<64x128xf32>
    %100 = vector.shape_cast %97 : vector<64x128xf32> to vector<1x64x128xf32>
    tpu.vector_store %arg7[%c2_23, %c0_24, %c0_25], %100 {strides = array<i32>} : memref<16x64x128xf32, #tpu.memory_space<vmem>>, vector<1x64x128xf32>,
    %c3 = arith.constant 3 : index
    %c0_26 = arith.constant 0 : index
    %c0_27 = arith.constant 0 : index
    %101 = vector.load %arg1[%c3, %c0_26, %c0_27] : memref<16x4x128xf32, #tpu.memory_space<vmem>>, vector<1x4x128xf32>
    %102 = vector.shape_cast %101 : vector<1x4x128xf32> to vector<4x128xf32>
    %103 = vector.extract_strided_slice %0 {offsets = [0, 0], sizes = [64, 1], strides = [1, 1]} : vector<64x4xf32> to vector<64x1xf32>
    %104 = vector.extract_strided_slice %102 {offsets = [0, 0], sizes = [1, 128], strides = [1, 1]} : vector<4x128xf32> to vector<1x128xf32>
    %105 = vector.broadcast %103 : vector<64x1xf32> to vector<64x128xf32>
    %106 = vector.broadcast %104 : vector<1x128xf32> to vector<64x128xf32>
    %107 = arith.mulf %105, %106 : vector<64x128xf32>
    %108 = vector.extract_strided_slice %0 {offsets = [0, 1], sizes = [64, 1], strides = [1, 1]} : vector<64x4xf32> to vector<64x1xf32>
    %109 = vector.extract_strided_slice %102 {offsets = [1, 0], sizes = [1, 128], strides = [1, 1]} : vector<4x128xf32> to vector<1x128xf32>
    %110 = vector.broadcast %108 : vector<64x1xf32> to vector<64x128xf32>
    %111 = vector.broadcast %109 : vector<1x128xf32> to vector<64x128xf32>
    %112 = arith.mulf %110, %111 : vector<64x128xf32>
    %113 = arith.addf %107, %112 : vector<64x128xf32>
    %114 = vector.extract_strided_slice %0 {offsets = [0, 2], sizes = [64, 1], strides = [1, 1]} : vector<64x4xf32> to vector<64x1xf32>
    %115 = vector.extract_strided_slice %102 {offsets = [2, 0], sizes = [1, 128], strides = [1, 1]} : vector<4x128xf32> to vector<1x128xf32>
    %116 = vector.broadcast %114 : vector<64x1xf32> to vector<64x128xf32>
    %117 = vector.broadcast %115 : vector<1x128xf32> to vector<64x128xf32>
    %118 = arith.mulf %116, %117 : vector<64x128xf32>
    %119 = arith.addf %113, %118 : vector<64x128xf32>
    %120 = vector.extract_strided_slice %0 {offsets = [0, 3], sizes = [64, 1], strides = [1, 1]} : vector<64x4xf32> to vector<64x1xf32>
    %121 = vector.extract_strided_slice %102 {offsets = [3, 0], sizes = [1, 128], strides = [1, 1]} : vector<4x128xf32> to vector<1x128xf32>
    %122 = vector.broadcast %120 : vector<64x1xf32> to vector<64x128xf32>
    %123 = vector.broadcast %121 : vector<1x128xf32> to vector<64x128xf32>
    %124 = arith.mulf %122, %123 : vector<64x128xf32>
    %125 = arith.addf %119, %124 : vector<64x128xf32>
    %126 = arith.addf %125, %4 : vector<64x128xf32>
    %cst_28 = arith.constant 0.000000e+00 : f32
    %127 = vector.broadcast %cst_28 : f32 to vector<64x128xf32>
    %128 = arith.maximumf %126, %127 : vector<64x128xf32>
    %c3_29 = arith.constant 3 : index
    %c0_30 = arith.constant 0 : index
    %c0_31 = arith.constant 0 : index
    %129 = vector.load %arg7[%c3_29, %c0_30, %c0_31] : memref<16x64x128xf32, #tpu.memory_space<vmem>>, vector<1x64x128xf32>
    %130 = vector.shape_cast %129 : vector<1x64x128xf32> to vector<64x128xf32>
    %131 = vector.shape_cast %128 : vector<64x128xf32> to vector<1x64x128xf32>
    tpu.vector_store %arg7[%c3_29, %c0_30, %c0_31], %131 {strides = array<i32>} : memref<16x64x128xf32, #tpu.memory_space<vmem>>, vector<1x64x128xf32>,
    %c4 = arith.constant 4 : index
    %c0_32 = arith.constant 0 : index
    %c0_33 = arith.constant 0 : index
    %132 = vector.load %arg1[%c4, %c0_32, %c0_33] : memref<16x4x128xf32, #tpu.memory_space<vmem>>, vector<1x4x128xf32>
    %133 = vector.shape_cast %132 : vector<1x4x128xf32> to vector<4x128xf32>
    %134 = vector.extract_strided_slice %0 {offsets = [0, 0], sizes = [64, 1], strides = [1, 1]} : vector<64x4xf32> to vector<64x1xf32>
    %135 = vector.extract_strided_slice %133 {offsets = [0, 0], sizes = [1, 128], strides = [1, 1]} : vector<4x128xf32> to vector<1x128xf32>
    %136 = vector.broadcast %134 : vector<64x1xf32> to vector<64x128xf32>
    %137 = vector.broadcast %135 : vector<1x128xf32> to vector<64x128xf32>
    %138 = arith.mulf %136, %137 : vector<64x128xf32>
    %139 = vector.extract_strided_slice %0 {offsets = [0, 1], sizes = [64, 1], strides = [1, 1]} : vector<64x4xf32> to vector<64x1xf32>
    %140 = vector.extract_strided_slice %133 {offsets = [1, 0], sizes = [1, 128], strides = [1, 1]} : vector<4x128xf32> to vector<1x128xf32>
    %141 = vector.broadcast %139 : vector<64x1xf32> to vector<64x128xf32>
    %142 = vector.broadcast %140 : vector<1x128xf32> to vector<64x128xf32>
    %143 = arith.mulf %141, %142 : vector<64x128xf32>
    %144 = arith.addf %138, %143 : vector<64x128xf32>
    %145 = vector.extract_strided_slice %0 {offsets = [0, 2], sizes = [64, 1], strides = [1, 1]} : vector<64x4xf32> to vector<64x1xf32>
    %146 = vector.extract_strided_slice %133 {offsets = [2, 0], sizes = [1, 128], strides = [1, 1]} : vector<4x128xf32> to vector<1x128xf32>
    %147 = vector.broadcast %145 : vector<64x1xf32> to vector<64x128xf32>
    %148 = vector.broadcast %146 : vector<1x128xf32> to vector<64x128xf32>
    %149 = arith.mulf %147, %148 : vector<64x128xf32>
    %150 = arith.addf %144, %149 : vector<64x128xf32>
    %151 = vector.extract_strided_slice %0 {offsets = [0, 3], sizes = [64, 1], strides = [1, 1]} : vector<64x4xf32> to vector<64x1xf32>
    %152 = vector.extract_strided_slice %133 {offsets = [3, 0], sizes = [1, 128], strides = [1, 1]} : vector<4x128xf32> to vector<1x128xf32>
    %153 = vector.broadcast %151 : vector<64x1xf32> to vector<64x128xf32>
    %154 = vector.broadcast %152 : vector<1x128xf32> to vector<64x128xf32>
    %155 = arith.mulf %153, %154 : vector<64x128xf32>
    %156 = arith.addf %150, %155 : vector<64x128xf32>
    %157 = arith.addf %156, %4 : vector<64x128xf32>
    %cst_34 = arith.constant 0.000000e+00 : f32
    %158 = vector.broadcast %cst_34 : f32 to vector<64x128xf32>
    %159 = arith.maximumf %157, %158 : vector<64x128xf32>
    %c4_35 = arith.constant 4 : index
    %c0_36 = arith.constant 0 : index
    %c0_37 = arith.constant 0 : index
    %160 = vector.load %arg7[%c4_35, %c0_36, %c0_37] : memref<16x64x128xf32, #tpu.memory_space<vmem>>, vector<1x64x128xf32>
    %161 = vector.shape_cast %160 : vector<1x64x128xf32> to vector<64x128xf32>
    %162 = vector.shape_cast %159 : vector<64x128xf32> to vector<1x64x128xf32>
    tpu.vector_store %arg7[%c4_35, %c0_36, %c0_37], %162 {strides = array<i32>} : memref<16x64x128xf32, #tpu.memory_space<vmem>>, vector<1x64x128xf32>,
    %c5 = arith.constant 5 : index
    %c0_38 = arith.constant 0 : index
    %c0_39 = arith.constant 0 : index
    %163 = vector.load %arg1[%c5, %c0_38, %c0_39] : memref<16x4x128xf32, #tpu.memory_space<vmem>>, vector<1x4x128xf32>
    %164 = vector.shape_cast %163 : vector<1x4x128xf32> to vector<4x128xf32>
    %165 = vector.extract_strided_slice %0 {offsets = [0, 0], sizes = [64, 1], strides = [1, 1]} : vector<64x4xf32> to vector<64x1xf32>
    %166 = vector.extract_strided_slice %164 {offsets = [0, 0], sizes = [1, 128], strides = [1, 1]} : vector<4x128xf32> to vector<1x128xf32>
    %167 = vector.broadcast %165 : vector<64x1xf32> to vector<64x128xf32>
    %168 = vector.broadcast %166 : vector<1x128xf32> to vector<64x128xf32>
    %169 = arith.mulf %167, %168 : vector<64x128xf32>
    %170 = vector.extract_strided_slice %0 {offsets = [0, 1], sizes = [64, 1], strides = [1, 1]} : vector<64x4xf32> to vector<64x1xf32>
    %171 = vector.extract_strided_slice %164 {offsets = [1, 0], sizes = [1, 128], strides = [1, 1]} : vector<4x128xf32> to vector<1x128xf32>
    %172 = vector.broadcast %170 : vector<64x1xf32> to vector<64x128xf32>
    %173 = vector.broadcast %171 : vector<1x128xf32> to vector<64x128xf32>
    %174 = arith.mulf %172, %173 : vector<64x128xf32>
    %175 = arith.addf %169, %174 : vector<64x128xf32>
    %176 = vector.extract_strided_slice %0 {offsets = [0, 2], sizes = [64, 1], strides = [1, 1]} : vector<64x4xf32> to vector<64x1xf32>
    %177 = vector.extract_strided_slice %164 {offsets = [2, 0], sizes = [1, 128], strides = [1, 1]} : vector<4x128xf32> to vector<1x128xf32>
    %178 = vector.broadcast %176 : vector<64x1xf32> to vector<64x128xf32>
    %179 = vector.broadcast %177 : vector<1x128xf32> to vector<64x128xf32>
    %180 = arith.mulf %178, %179 : vector<64x128xf32>
    %181 = arith.addf %175, %180 : vector<64x128xf32>
    %182 = vector.extract_strided_slice %0 {offsets = [0, 3], sizes = [64, 1], strides = [1, 1]} : vector<64x4xf32> to vector<64x1xf32>
    %183 = vector.extract_strided_slice %164 {offsets = [3, 0], sizes = [1, 128], strides = [1, 1]} : vector<4x128xf32> to vector<1x128xf32>
    %184 = vector.broadcast %182 : vector<64x1xf32> to vector<64x128xf32>
    %185 = vector.broadcast %183 : vector<1x128xf32> to vector<64x128xf32>
    %186 = arith.mulf %184, %185 : vector<64x128xf32>
    %187 = arith.addf %181, %186 : vector<64x128xf32>
    %188 = arith.addf %187, %4 : vector<64x128xf32>
    %cst_40 = arith.constant 0.000000e+00 : f32
    %189 = vector.broadcast %cst_40 : f32 to vector<64x128xf32>
    %190 = arith.maximumf %188, %189 : vector<64x128xf32>
    %c5_41 = arith.constant 5 : index
    %c0_42 = arith.constant 0 : index
    %c0_43 = arith.constant 0 : index
    %191 = vector.load %arg7[%c5_41, %c0_42, %c0_43] : memref<16x64x128xf32, #tpu.memory_space<vmem>>, vector<1x64x128xf32>
    %192 = vector.shape_cast %191 : vector<1x64x128xf32> to vector<64x128xf32>
    %193 = vector.shape_cast %190 : vector<64x128xf32> to vector<1x64x128xf32>
    tpu.vector_store %arg7[%c5_41, %c0_42, %c0_43], %193 {strides = array<i32>} : memref<16x64x128xf32, #tpu.memory_space<vmem>>, vector<1x64x128xf32>,
    %c6 = arith.constant 6 : index
    %c0_44 = arith.constant 0 : index
    %c0_45 = arith.constant 0 : index
    %194 = vector.load %arg1[%c6, %c0_44, %c0_45] : memref<16x4x128xf32, #tpu.memory_space<vmem>>, vector<1x4x128xf32>
    %195 = vector.shape_cast %194 : vector<1x4x128xf32> to vector<4x128xf32>
    %196 = vector.extract_strided_slice %0 {offsets = [0, 0], sizes = [64, 1], strides = [1, 1]} : vector<64x4xf32> to vector<64x1xf32>
    %197 = vector.extract_strided_slice %195 {offsets = [0, 0], sizes = [1, 128], strides = [1, 1]} : vector<4x128xf32> to vector<1x128xf32>
    %198 = vector.broadcast %196 : vector<64x1xf32> to vector<64x128xf32>
    %199 = vector.broadcast %197 : vector<1x128xf32> to vector<64x128xf32>
    %200 = arith.mulf %198, %199 : vector<64x128xf32>
    %201 = vector.extract_strided_slice %0 {offsets = [0, 1], sizes = [64, 1], strides = [1, 1]} : vector<64x4xf32> to vector<64x1xf32>
    %202 = vector.extract_strided_slice %195 {offsets = [1, 0], sizes = [1, 128], strides = [1, 1]} : vector<4x128xf32> to vector<1x128xf32>
    %203 = vector.broadcast %201 : vector<64x1xf32> to vector<64x128xf32>
    %204 = vector.broadcast %202 : vector<1x128xf32> to vector<64x128xf32>
    %205 = arith.mulf %203, %204 : vector<64x128xf32>
    %206 = arith.addf %200, %205 : vector<64x128xf32>
    %207 = vector.extract_strided_slice %0 {offsets = [0, 2], sizes = [64, 1], strides = [1, 1]} : vector<64x4xf32> to vector<64x1xf32>
    %208 = vector.extract_strided_slice %195 {offsets = [2, 0], sizes = [1, 128], strides = [1, 1]} : vector<4x128xf32> to vector<1x128xf32>
    %209 = vector.broadcast %207 : vector<64x1xf32> to vector<64x128xf32>
    %210 = vector.broadcast %208 : vector<1x128xf32> to vector<64x128xf32>
    %211 = arith.mulf %209, %210 : vector<64x128xf32>
    %212 = arith.addf %206, %211 : vector<64x128xf32>
    %213 = vector.extract_strided_slice %0 {offsets = [0, 3], sizes = [64, 1], strides = [1, 1]} : vector<64x4xf32> to vector<64x1xf32>
    %214 = vector.extract_strided_slice %195 {offsets = [3, 0], sizes = [1, 128], strides = [1, 1]} : vector<4x128xf32> to vector<1x128xf32>
    %215 = vector.broadcast %213 : vector<64x1xf32> to vector<64x128xf32>
    %216 = vector.broadcast %214 : vector<1x128xf32> to vector<64x128xf32>
    %217 = arith.mulf %215, %216 : vector<64x128xf32>
    %218 = arith.addf %212, %217 : vector<64x128xf32>
    %219 = arith.addf %218, %4 : vector<64x128xf32>
    %cst_46 = arith.constant 0.000000e+00 : f32
    %220 = vector.broadcast %cst_46 : f32 to vector<64x128xf32>
    %221 = arith.maximumf %219, %220 : vector<64x128xf32>
    %c6_47 = arith.constant 6 : index
    %c0_48 = arith.constant 0 : index
    %c0_49 = arith.constant 0 : index
    %222 = vector.load %arg7[%c6_47, %c0_48, %c0_49] : memref<16x64x128xf32, #tpu.memory_space<vmem>>, vector<1x64x128xf32>
    %223 = vector.shape_cast %222 : vector<1x64x128xf32> to vector<64x128xf32>
    %224 = vector.shape_cast %221 : vector<64x128xf32> to vector<1x64x128xf32>
    tpu.vector_store %arg7[%c6_47, %c0_48, %c0_49], %224 {strides = array<i32>} : memref<16x64x128xf32, #tpu.memory_space<vmem>>, vector<1x64x128xf32>,
    %c7 = arith.constant 7 : index
    %c0_50 = arith.constant 0 : index
    %c0_51 = arith.constant 0 : index
    %225 = vector.load %arg1[%c7, %c0_50, %c0_51] : memref<16x4x128xf32, #tpu.memory_space<vmem>>, vector<1x4x128xf32>
    %226 = vector.shape_cast %225 : vector<1x4x128xf32> to vector<4x128xf32>
    %227 = vector.extract_strided_slice %0 {offsets = [0, 0], sizes = [64, 1], strides = [1, 1]} : vector<64x4xf32> to vector<64x1xf32>
    %228 = vector.extract_strided_slice %226 {offsets = [0, 0], sizes = [1, 128], strides = [1, 1]} : vector<4x128xf32> to vector<1x128xf32>
    %229 = vector.broadcast %227 : vector<64x1xf32> to vector<64x128xf32>
    %230 = vector.broadcast %228 : vector<1x128xf32> to vector<64x128xf32>
    %231 = arith.mulf %229, %230 : vector<64x128xf32>
    %232 = vector.extract_strided_slice %0 {offsets = [0, 1], sizes = [64, 1], strides = [1, 1]} : vector<64x4xf32> to vector<64x1xf32>
    %233 = vector.extract_strided_slice %226 {offsets = [1, 0], sizes = [1, 128], strides = [1, 1]} : vector<4x128xf32> to vector<1x128xf32>
    %234 = vector.broadcast %232 : vector<64x1xf32> to vector<64x128xf32>
    %235 = vector.broadcast %233 : vector<1x128xf32> to vector<64x128xf32>
    %236 = arith.mulf %234, %235 : vector<64x128xf32>
    %237 = arith.addf %231, %236 : vector<64x128xf32>
    %238 = vector.extract_strided_slice %0 {offsets = [0, 2], sizes = [64, 1], strides = [1, 1]} : vector<64x4xf32> to vector<64x1xf32>
    %239 = vector.extract_strided_slice %226 {offsets = [2, 0], sizes = [1, 128], strides = [1, 1]} : vector<4x128xf32> to vector<1x128xf32>
    %240 = vector.broadcast %238 : vector<64x1xf32> to vector<64x128xf32>
    %241 = vector.broadcast %239 : vector<1x128xf32> to vector<64x128xf32>
    %242 = arith.mulf %240, %241 : vector<64x128xf32>
    %243 = arith.addf %237, %242 : vector<64x128xf32>
    %244 = vector.extract_strided_slice %0 {offsets = [0, 3], sizes = [64, 1], strides = [1, 1]} : vector<64x4xf32> to vector<64x1xf32>
    %245 = vector.extract_strided_slice %226 {offsets = [3, 0], sizes = [1, 128], strides = [1, 1]} : vector<4x128xf32> to vector<1x128xf32>
    %246 = vector.broadcast %244 : vector<64x1xf32> to vector<64x128xf32>
    %247 = vector.broadcast %245 : vector<1x128xf32> to vector<64x128xf32>
    %248 = arith.mulf %246, %247 : vector<64x128xf32>
    %249 = arith.addf %243, %248 : vector<64x128xf32>
    %250 = arith.addf %249, %4 : vector<64x128xf32>
    %cst_52 = arith.constant 0.000000e+00 : f32
    %251 = vector.broadcast %cst_52 : f32 to vector<64x128xf32>
    %252 = arith.maximumf %250, %251 : vector<64x128xf32>
    %c7_53 = arith.constant 7 : index
    %c0_54 = arith.constant 0 : index
    %c0_55 = arith.constant 0 : index
    %253 = vector.load %arg7[%c7_53, %c0_54, %c0_55] : memref<16x64x128xf32, #tpu.memory_space<vmem>>, vector<1x64x128xf32>
    %254 = vector.shape_cast %253 : vector<1x64x128xf32> to vector<64x128xf32>
    %255 = vector.shape_cast %252 : vector<64x128xf32> to vector<1x64x128xf32>
    tpu.vector_store %arg7[%c7_53, %c0_54, %c0_55], %255 {strides = array<i32>} : memref<16x64x128xf32, #tpu.memory_space<vmem>>, vector<1x64x128xf32>,
    %c8 = arith.constant 8 : index
    %c0_56 = arith.constant 0 : index
    %c0_57 = arith.constant 0 : index
    %256 = vector.load %arg1[%c8, %c0_56, %c0_57] : memref<16x4x128xf32, #tpu.memory_space<vmem>>, vector<1x4x128xf32>
    %257 = vector.shape_cast %256 : vector<1x4x128xf32> to vector<4x128xf32>
    %258 = vector.extract_strided_slice %0 {offsets = [0, 0], sizes = [64, 1], strides = [1, 1]} : vector<64x4xf32> to vector<64x1xf32>
    %259 = vector.extract_strided_slice %257 {offsets = [0, 0], sizes = [1, 128], strides = [1, 1]} : vector<4x128xf32> to vector<1x128xf32>
    %260 = vector.broadcast %258 : vector<64x1xf32> to vector<64x128xf32>
    %261 = vector.broadcast %259 : vector<1x128xf32> to vector<64x128xf32>
    %262 = arith.mulf %260, %261 : vector<64x128xf32>
    %263 = vector.extract_strided_slice %0 {offsets = [0, 1], sizes = [64, 1], strides = [1, 1]} : vector<64x4xf32> to vector<64x1xf32>
    %264 = vector.extract_strided_slice %257 {offsets = [1, 0], sizes = [1, 128], strides = [1, 1]} : vector<4x128xf32> to vector<1x128xf32>
    %265 = vector.broadcast %263 : vector<64x1xf32> to vector<64x128xf32>
    %266 = vector.broadcast %264 : vector<1x128xf32> to vector<64x128xf32>
    %267 = arith.mulf %265, %266 : vector<64x128xf32>
    %268 = arith.addf %262, %267 : vector<64x128xf32>
    %269 = vector.extract_strided_slice %0 {offsets = [0, 2], sizes = [64, 1], strides = [1, 1]} : vector<64x4xf32> to vector<64x1xf32>
    %270 = vector.extract_strided_slice %257 {offsets = [2, 0], sizes = [1, 128], strides = [1, 1]} : vector<4x128xf32> to vector<1x128xf32>
    %271 = vector.broadcast %269 : vector<64x1xf32> to vector<64x128xf32>
    %272 = vector.broadcast %270 : vector<1x128xf32> to vector<64x128xf32>
    %273 = arith.mulf %271, %272 : vector<64x128xf32>
    %274 = arith.addf %268, %273 : vector<64x128xf32>
    %275 = vector.extract_strided_slice %0 {offsets = [0, 3], sizes = [64, 1], strides = [1, 1]} : vector<64x4xf32> to vector<64x1xf32>
    %276 = vector.extract_strided_slice %257 {offsets = [3, 0], sizes = [1, 128], strides = [1, 1]} : vector<4x128xf32> to vector<1x128xf32>
    %277 = vector.broadcast %275 : vector<64x1xf32> to vector<64x128xf32>
    %278 = vector.broadcast %276 : vector<1x128xf32> to vector<64x128xf32>
    %279 = arith.mulf %277, %278 : vector<64x128xf32>
    %280 = arith.addf %274, %279 : vector<64x128xf32>
    %281 = arith.addf %280, %4 : vector<64x128xf32>
    %cst_58 = arith.constant 0.000000e+00 : f32
    %282 = vector.broadcast %cst_58 : f32 to vector<64x128xf32>
    %283 = arith.maximumf %281, %282 : vector<64x128xf32>
    %c8_59 = arith.constant 8 : index
    %c0_60 = arith.constant 0 : index
    %c0_61 = arith.constant 0 : index
    %284 = vector.load %arg7[%c8_59, %c0_60, %c0_61] : memref<16x64x128xf32, #tpu.memory_space<vmem>>, vector<1x64x128xf32>
    %285 = vector.shape_cast %284 : vector<1x64x128xf32> to vector<64x128xf32>
    %286 = vector.shape_cast %283 : vector<64x128xf32> to vector<1x64x128xf32>
    tpu.vector_store %arg7[%c8_59, %c0_60, %c0_61], %286 {strides = array<i32>} : memref<16x64x128xf32, #tpu.memory_space<vmem>>, vector<1x64x128xf32>,
    %c9 = arith.constant 9 : index
    %c0_62 = arith.constant 0 : index
    %c0_63 = arith.constant 0 : index
    %287 = vector.load %arg1[%c9, %c0_62, %c0_63] : memref<16x4x128xf32, #tpu.memory_space<vmem>>, vector<1x4x128xf32>
    %288 = vector.shape_cast %287 : vector<1x4x128xf32> to vector<4x128xf32>
    %289 = vector.extract_strided_slice %0 {offsets = [0, 0], sizes = [64, 1], strides = [1, 1]} : vector<64x4xf32> to vector<64x1xf32>
    %290 = vector.extract_strided_slice %288 {offsets = [0, 0], sizes = [1, 128], strides = [1, 1]} : vector<4x128xf32> to vector<1x128xf32>
    %291 = vector.broadcast %289 : vector<64x1xf32> to vector<64x128xf32>
    %292 = vector.broadcast %290 : vector<1x128xf32> to vector<64x128xf32>
    %293 = arith.mulf %291, %292 : vector<64x128xf32>
    %294 = vector.extract_strided_slice %0 {offsets = [0, 1], sizes = [64, 1], strides = [1, 1]} : vector<64x4xf32> to vector<64x1xf32>
    %295 = vector.extract_strided_slice %288 {offsets = [1, 0], sizes = [1, 128], strides = [1, 1]} : vector<4x128xf32> to vector<1x128xf32>
    %296 = vector.broadcast %294 : vector<64x1xf32> to vector<64x128xf32>
    %297 = vector.broadcast %295 : vector<1x128xf32> to vector<64x128xf32>
    %298 = arith.mulf %296, %297 : vector<64x128xf32>
    %299 = arith.addf %293, %298 : vector<64x128xf32>
    %300 = vector.extract_strided_slice %0 {offsets = [0, 2], sizes = [64, 1], strides = [1, 1]} : vector<64x4xf32> to vector<64x1xf32>
    %301 = vector.extract_strided_slice %288 {offsets = [2, 0], sizes = [1, 128], strides = [1, 1]} : vector<4x128xf32> to vector<1x128xf32>
    %302 = vector.broadcast %300 : vector<64x1xf32> to vector<64x128xf32>
    %303 = vector.broadcast %301 : vector<1x128xf32> to vector<64x128xf32>
    %304 = arith.mulf %302, %303 : vector<64x128xf32>
    %305 = arith.addf %299, %304 : vector<64x128xf32>
    %306 = vector.extract_strided_slice %0 {offsets = [0, 3], sizes = [64, 1], strides = [1, 1]} : vector<64x4xf32> to vector<64x1xf32>
    %307 = vector.extract_strided_slice %288 {offsets = [3, 0], sizes = [1, 128], strides = [1, 1]} : vector<4x128xf32> to vector<1x128xf32>
    %308 = vector.broadcast %306 : vector<64x1xf32> to vector<64x128xf32>
    %309 = vector.broadcast %307 : vector<1x128xf32> to vector<64x128xf32>
    %310 = arith.mulf %308, %309 : vector<64x128xf32>
    %311 = arith.addf %305, %310 : vector<64x128xf32>
    %312 = arith.addf %311, %4 : vector<64x128xf32>
    %cst_64 = arith.constant 0.000000e+00 : f32
    %313 = vector.broadcast %cst_64 : f32 to vector<64x128xf32>
    %314 = arith.maximumf %312, %313 : vector<64x128xf32>
    %c9_65 = arith.constant 9 : index
    %c0_66 = arith.constant 0 : index
    %c0_67 = arith.constant 0 : index
    %315 = vector.load %arg7[%c9_65, %c0_66, %c0_67] : memref<16x64x128xf32, #tpu.memory_space<vmem>>, vector<1x64x128xf32>
    %316 = vector.shape_cast %315 : vector<1x64x128xf32> to vector<64x128xf32>
    %317 = vector.shape_cast %314 : vector<64x128xf32> to vector<1x64x128xf32>
    tpu.vector_store %arg7[%c9_65, %c0_66, %c0_67], %317 {strides = array<i32>} : memref<16x64x128xf32, #tpu.memory_space<vmem>>, vector<1x64x128xf32>,
    %c10 = arith.constant 10 : index
    %c0_68 = arith.constant 0 : index
    %c0_69 = arith.constant 0 : index
    %318 = vector.load %arg1[%c10, %c0_68, %c0_69] : memref<16x4x128xf32, #tpu.memory_space<vmem>>, vector<1x4x128xf32>
    %319 = vector.shape_cast %318 : vector<1x4x128xf32> to vector<4x128xf32>
    %320 = vector.extract_strided_slice %0 {offsets = [0, 0], sizes = [64, 1], strides = [1, 1]} : vector<64x4xf32> to vector<64x1xf32>
    %321 = vector.extract_strided_slice %319 {offsets = [0, 0], sizes = [1, 128], strides = [1, 1]} : vector<4x128xf32> to vector<1x128xf32>
    %322 = vector.broadcast %320 : vector<64x1xf32> to vector<64x128xf32>
    %323 = vector.broadcast %321 : vector<1x128xf32> to vector<64x128xf32>
    %324 = arith.mulf %322, %323 : vector<64x128xf32>
    %325 = vector.extract_strided_slice %0 {offsets = [0, 1], sizes = [64, 1], strides = [1, 1]} : vector<64x4xf32> to vector<64x1xf32>
    %326 = vector.extract_strided_slice %319 {offsets = [1, 0], sizes = [1, 128], strides = [1, 1]} : vector<4x128xf32> to vector<1x128xf32>
    %327 = vector.broadcast %325 : vector<64x1xf32> to vector<64x128xf32>
    %328 = vector.broadcast %326 : vector<1x128xf32> to vector<64x128xf32>
    %329 = arith.mulf %327, %328 : vector<64x128xf32>
    %330 = arith.addf %324, %329 : vector<64x128xf32>
    %331 = vector.extract_strided_slice %0 {offsets = [0, 2], sizes = [64, 1], strides = [1, 1]} : vector<64x4xf32> to vector<64x1xf32>
    %332 = vector.extract_strided_slice %319 {offsets = [2, 0], sizes = [1, 128], strides = [1, 1]} : vector<4x128xf32> to vector<1x128xf32>
    %333 = vector.broadcast %331 : vector<64x1xf32> to vector<64x128xf32>
    %334 = vector.broadcast %332 : vector<1x128xf32> to vector<64x128xf32>
    %335 = arith.mulf %333, %334 : vector<64x128xf32>
    %336 = arith.addf %330, %335 : vector<64x128xf32>
    %337 = vector.extract_strided_slice %0 {offsets = [0, 3], sizes = [64, 1], strides = [1, 1]} : vector<64x4xf32> to vector<64x1xf32>
    %338 = vector.extract_strided_slice %319 {offsets = [3, 0], sizes = [1, 128], strides = [1, 1]} : vector<4x128xf32> to vector<1x128xf32>
    %339 = vector.broadcast %337 : vector<64x1xf32> to vector<64x128xf32>
    %340 = vector.broadcast %338 : vector<1x128xf32> to vector<64x128xf32>
    %341 = arith.mulf %339, %340 : vector<64x128xf32>
    %342 = arith.addf %336, %341 : vector<64x128xf32>
    %343 = arith.addf %342, %4 : vector<64x128xf32>
    %cst_70 = arith.constant 0.000000e+00 : f32
    %344 = vector.broadcast %cst_70 : f32 to vector<64x128xf32>
    %345 = arith.maximumf %343, %344 : vector<64x128xf32>
    %c10_71 = arith.constant 10 : index
    %c0_72 = arith.constant 0 : index
    %c0_73 = arith.constant 0 : index
    %346 = vector.load %arg7[%c10_71, %c0_72, %c0_73] : memref<16x64x128xf32, #tpu.memory_space<vmem>>, vector<1x64x128xf32>
    %347 = vector.shape_cast %346 : vector<1x64x128xf32> to vector<64x128xf32>
    %348 = vector.shape_cast %345 : vector<64x128xf32> to vector<1x64x128xf32>
    tpu.vector_store %arg7[%c10_71, %c0_72, %c0_73], %348 {strides = array<i32>} : memref<16x64x128xf32, #tpu.memory_space<vmem>>, vector<1x64x128xf32>,
    %c11 = arith.constant 11 : index
    %c0_74 = arith.constant 0 : index
    %c0_75 = arith.constant 0 : index
    %349 = vector.load %arg1[%c11, %c0_74, %c0_75] : memref<16x4x128xf32, #tpu.memory_space<vmem>>, vector<1x4x128xf32>
    %350 = vector.shape_cast %349 : vector<1x4x128xf32> to vector<4x128xf32>
    %351 = vector.extract_strided_slice %0 {offsets = [0, 0], sizes = [64, 1], strides = [1, 1]} : vector<64x4xf32> to vector<64x1xf32>
    %352 = vector.extract_strided_slice %350 {offsets = [0, 0], sizes = [1, 128], strides = [1, 1]} : vector<4x128xf32> to vector<1x128xf32>
    %353 = vector.broadcast %351 : vector<64x1xf32> to vector<64x128xf32>
    %354 = vector.broadcast %352 : vector<1x128xf32> to vector<64x128xf32>
    %355 = arith.mulf %353, %354 : vector<64x128xf32>
    %356 = vector.extract_strided_slice %0 {offsets = [0, 1], sizes = [64, 1], strides = [1, 1]} : vector<64x4xf32> to vector<64x1xf32>
    %357 = vector.extract_strided_slice %350 {offsets = [1, 0], sizes = [1, 128], strides = [1, 1]} : vector<4x128xf32> to vector<1x128xf32>
    %358 = vector.broadcast %356 : vector<64x1xf32> to vector<64x128xf32>
    %359 = vector.broadcast %357 : vector<1x128xf32> to vector<64x128xf32>
    %360 = arith.mulf %358, %359 : vector<64x128xf32>
    %361 = arith.addf %355, %360 : vector<64x128xf32>
    %362 = vector.extract_strided_slice %0 {offsets = [0, 2], sizes = [64, 1], strides = [1, 1]} : vector<64x4xf32> to vector<64x1xf32>
    %363 = vector.extract_strided_slice %350 {offsets = [2, 0], sizes = [1, 128], strides = [1, 1]} : vector<4x128xf32> to vector<1x128xf32>
    %364 = vector.broadcast %362 : vector<64x1xf32> to vector<64x128xf32>
    %365 = vector.broadcast %363 : vector<1x128xf32> to vector<64x128xf32>
    %366 = arith.mulf %364, %365 : vector<64x128xf32>
    %367 = arith.addf %361, %366 : vector<64x128xf32>
    %368 = vector.extract_strided_slice %0 {offsets = [0, 3], sizes = [64, 1], strides = [1, 1]} : vector<64x4xf32> to vector<64x1xf32>
    %369 = vector.extract_strided_slice %350 {offsets = [3, 0], sizes = [1, 128], strides = [1, 1]} : vector<4x128xf32> to vector<1x128xf32>
    %370 = vector.broadcast %368 : vector<64x1xf32> to vector<64x128xf32>
    %371 = vector.broadcast %369 : vector<1x128xf32> to vector<64x128xf32>
    %372 = arith.mulf %370, %371 : vector<64x128xf32>
    %373 = arith.addf %367, %372 : vector<64x128xf32>
    %374 = arith.addf %373, %4 : vector<64x128xf32>
    %cst_76 = arith.constant 0.000000e+00 : f32
    %375 = vector.broadcast %cst_76 : f32 to vector<64x128xf32>
    %376 = arith.maximumf %374, %375 : vector<64x128xf32>
    %c11_77 = arith.constant 11 : index
    %c0_78 = arith.constant 0 : index
    %c0_79 = arith.constant 0 : index
    %377 = vector.load %arg7[%c11_77, %c0_78, %c0_79] : memref<16x64x128xf32, #tpu.memory_space<vmem>>, vector<1x64x128xf32>
    %378 = vector.shape_cast %377 : vector<1x64x128xf32> to vector<64x128xf32>
    %379 = vector.shape_cast %376 : vector<64x128xf32> to vector<1x64x128xf32>
    tpu.vector_store %arg7[%c11_77, %c0_78, %c0_79], %379 {strides = array<i32>} : memref<16x64x128xf32, #tpu.memory_space<vmem>>, vector<1x64x128xf32>,
    %c12 = arith.constant 12 : index
    %c0_80 = arith.constant 0 : index
    %c0_81 = arith.constant 0 : index
    %380 = vector.load %arg1[%c12, %c0_80, %c0_81] : memref<16x4x128xf32, #tpu.memory_space<vmem>>, vector<1x4x128xf32>
    %381 = vector.shape_cast %380 : vector<1x4x128xf32> to vector<4x128xf32>
    %382 = vector.extract_strided_slice %0 {offsets = [0, 0], sizes = [64, 1], strides = [1, 1]} : vector<64x4xf32> to vector<64x1xf32>
    %383 = vector.extract_strided_slice %381 {offsets = [0, 0], sizes = [1, 128], strides = [1, 1]} : vector<4x128xf32> to vector<1x128xf32>
    %384 = vector.broadcast %382 : vector<64x1xf32> to vector<64x128xf32>
    %385 = vector.broadcast %383 : vector<1x128xf32> to vector<64x128xf32>
    %386 = arith.mulf %384, %385 : vector<64x128xf32>
    %387 = vector.extract_strided_slice %0 {offsets = [0, 1], sizes = [64, 1], strides = [1, 1]} : vector<64x4xf32> to vector<64x1xf32>
    %388 = vector.extract_strided_slice %381 {offsets = [1, 0], sizes = [1, 128], strides = [1, 1]} : vector<4x128xf32> to vector<1x128xf32>
    %389 = vector.broadcast %387 : vector<64x1xf32> to vector<64x128xf32>
    %390 = vector.broadcast %388 : vector<1x128xf32> to vector<64x128xf32>
    %391 = arith.mulf %389, %390 : vector<64x128xf32>
    %392 = arith.addf %386, %391 : vector<64x128xf32>
    %393 = vector.extract_strided_slice %0 {offsets = [0, 2], sizes = [64, 1], strides = [1, 1]} : vector<64x4xf32> to vector<64x1xf32>
    %394 = vector.extract_strided_slice %381 {offsets = [2, 0], sizes = [1, 128], strides = [1, 1]} : vector<4x128xf32> to vector<1x128xf32>
    %395 = vector.broadcast %393 : vector<64x1xf32> to vector<64x128xf32>
    %396 = vector.broadcast %394 : vector<1x128xf32> to vector<64x128xf32>
    %397 = arith.mulf %395, %396 : vector<64x128xf32>
    %398 = arith.addf %392, %397 : vector<64x128xf32>
    %399 = vector.extract_strided_slice %0 {offsets = [0, 3], sizes = [64, 1], strides = [1, 1]} : vector<64x4xf32> to vector<64x1xf32>
    %400 = vector.extract_strided_slice %381 {offsets = [3, 0], sizes = [1, 128], strides = [1, 1]} : vector<4x128xf32> to vector<1x128xf32>
    %401 = vector.broadcast %399 : vector<64x1xf32> to vector<64x128xf32>
    %402 = vector.broadcast %400 : vector<1x128xf32> to vector<64x128xf32>
    %403 = arith.mulf %401, %402 : vector<64x128xf32>
    %404 = arith.addf %398, %403 : vector<64x128xf32>
    %405 = arith.addf %404, %4 : vector<64x128xf32>
    %cst_82 = arith.constant 0.000000e+00 : f32
    %406 = vector.broadcast %cst_82 : f32 to vector<64x128xf32>
    %407 = arith.maximumf %405, %406 : vector<64x128xf32>
    %c12_83 = arith.constant 12 : index
    %c0_84 = arith.constant 0 : index
    %c0_85 = arith.constant 0 : index
    %408 = vector.load %arg7[%c12_83, %c0_84, %c0_85] : memref<16x64x128xf32, #tpu.memory_space<vmem>>, vector<1x64x128xf32>
    %409 = vector.shape_cast %408 : vector<1x64x128xf32> to vector<64x128xf32>
    %410 = vector.shape_cast %407 : vector<64x128xf32> to vector<1x64x128xf32>
    tpu.vector_store %arg7[%c12_83, %c0_84, %c0_85], %410 {strides = array<i32>} : memref<16x64x128xf32, #tpu.memory_space<vmem>>, vector<1x64x128xf32>,
    %c13 = arith.constant 13 : index
    %c0_86 = arith.constant 0 : index
    %c0_87 = arith.constant 0 : index
    %411 = vector.load %arg1[%c13, %c0_86, %c0_87] : memref<16x4x128xf32, #tpu.memory_space<vmem>>, vector<1x4x128xf32>
    %412 = vector.shape_cast %411 : vector<1x4x128xf32> to vector<4x128xf32>
    %413 = vector.extract_strided_slice %0 {offsets = [0, 0], sizes = [64, 1], strides = [1, 1]} : vector<64x4xf32> to vector<64x1xf32>
    %414 = vector.extract_strided_slice %412 {offsets = [0, 0], sizes = [1, 128], strides = [1, 1]} : vector<4x128xf32> to vector<1x128xf32>
    %415 = vector.broadcast %413 : vector<64x1xf32> to vector<64x128xf32>
    %416 = vector.broadcast %414 : vector<1x128xf32> to vector<64x128xf32>
    %417 = arith.mulf %415, %416 : vector<64x128xf32>
    %418 = vector.extract_strided_slice %0 {offsets = [0, 1], sizes = [64, 1], strides = [1, 1]} : vector<64x4xf32> to vector<64x1xf32>
    %419 = vector.extract_strided_slice %412 {offsets = [1, 0], sizes = [1, 128], strides = [1, 1]} : vector<4x128xf32> to vector<1x128xf32>
    %420 = vector.broadcast %418 : vector<64x1xf32> to vector<64x128xf32>
    %421 = vector.broadcast %419 : vector<1x128xf32> to vector<64x128xf32>
    %422 = arith.mulf %420, %421 : vector<64x128xf32>
    %423 = arith.addf %417, %422 : vector<64x128xf32>
    %424 = vector.extract_strided_slice %0 {offsets = [0, 2], sizes = [64, 1], strides = [1, 1]} : vector<64x4xf32> to vector<64x1xf32>
    %425 = vector.extract_strided_slice %412 {offsets = [2, 0], sizes = [1, 128], strides = [1, 1]} : vector<4x128xf32> to vector<1x128xf32>
    %426 = vector.broadcast %424 : vector<64x1xf32> to vector<64x128xf32>
    %427 = vector.broadcast %425 : vector<1x128xf32> to vector<64x128xf32>
    %428 = arith.mulf %426, %427 : vector<64x128xf32>
    %429 = arith.addf %423, %428 : vector<64x128xf32>
    %430 = vector.extract_strided_slice %0 {offsets = [0, 3], sizes = [64, 1], strides = [1, 1]} : vector<64x4xf32> to vector<64x1xf32>
    %431 = vector.extract_strided_slice %412 {offsets = [3, 0], sizes = [1, 128], strides = [1, 1]} : vector<4x128xf32> to vector<1x128xf32>
    %432 = vector.broadcast %430 : vector<64x1xf32> to vector<64x128xf32>
    %433 = vector.broadcast %431 : vector<1x128xf32> to vector<64x128xf32>
    %434 = arith.mulf %432, %433 : vector<64x128xf32>
    %435 = arith.addf %429, %434 : vector<64x128xf32>
    %436 = arith.addf %435, %4 : vector<64x128xf32>
    %cst_88 = arith.constant 0.000000e+00 : f32
    %437 = vector.broadcast %cst_88 : f32 to vector<64x128xf32>
    %438 = arith.maximumf %436, %437 : vector<64x128xf32>
    %c13_89 = arith.constant 13 : index
    %c0_90 = arith.constant 0 : index
    %c0_91 = arith.constant 0 : index
    %439 = vector.load %arg7[%c13_89, %c0_90, %c0_91] : memref<16x64x128xf32, #tpu.memory_space<vmem>>, vector<1x64x128xf32>
    %440 = vector.shape_cast %439 : vector<1x64x128xf32> to vector<64x128xf32>
    %441 = vector.shape_cast %438 : vector<64x128xf32> to vector<1x64x128xf32>
    tpu.vector_store %arg7[%c13_89, %c0_90, %c0_91], %441 {strides = array<i32>} : memref<16x64x128xf32, #tpu.memory_space<vmem>>, vector<1x64x128xf32>,
    %c14 = arith.constant 14 : index
    %c0_92 = arith.constant 0 : index
    %c0_93 = arith.constant 0 : index
    %442 = vector.load %arg1[%c14, %c0_92, %c0_93] : memref<16x4x128xf32, #tpu.memory_space<vmem>>, vector<1x4x128xf32>
    %443 = vector.shape_cast %442 : vector<1x4x128xf32> to vector<4x128xf32>
    %444 = vector.extract_strided_slice %0 {offsets = [0, 0], sizes = [64, 1], strides = [1, 1]} : vector<64x4xf32> to vector<64x1xf32>
    %445 = vector.extract_strided_slice %443 {offsets = [0, 0], sizes = [1, 128], strides = [1, 1]} : vector<4x128xf32> to vector<1x128xf32>
    %446 = vector.broadcast %444 : vector<64x1xf32> to vector<64x128xf32>
    %447 = vector.broadcast %445 : vector<1x128xf32> to vector<64x128xf32>
    %448 = arith.mulf %446, %447 : vector<64x128xf32>
    %449 = vector.extract_strided_slice %0 {offsets = [0, 1], sizes = [64, 1], strides = [1, 1]} : vector<64x4xf32> to vector<64x1xf32>
    %450 = vector.extract_strided_slice %443 {offsets = [1, 0], sizes = [1, 128], strides = [1, 1]} : vector<4x128xf32> to vector<1x128xf32>
    %451 = vector.broadcast %449 : vector<64x1xf32> to vector<64x128xf32>
    %452 = vector.broadcast %450 : vector<1x128xf32> to vector<64x128xf32>
    %453 = arith.mulf %451, %452 : vector<64x128xf32>
    %454 = arith.addf %448, %453 : vector<64x128xf32>
    %455 = vector.extract_strided_slice %0 {offsets = [0, 2], sizes = [64, 1], strides = [1, 1]} : vector<64x4xf32> to vector<64x1xf32>
    %456 = vector.extract_strided_slice %443 {offsets = [2, 0], sizes = [1, 128], strides = [1, 1]} : vector<4x128xf32> to vector<1x128xf32>
    %457 = vector.broadcast %455 : vector<64x1xf32> to vector<64x128xf32>
    %458 = vector.broadcast %456 : vector<1x128xf32> to vector<64x128xf32>
    %459 = arith.mulf %457, %458 : vector<64x128xf32>
    %460 = arith.addf %454, %459 : vector<64x128xf32>
    %461 = vector.extract_strided_slice %0 {offsets = [0, 3], sizes = [64, 1], strides = [1, 1]} : vector<64x4xf32> to vector<64x1xf32>
    %462 = vector.extract_strided_slice %443 {offsets = [3, 0], sizes = [1, 128], strides = [1, 1]} : vector<4x128xf32> to vector<1x128xf32>
    %463 = vector.broadcast %461 : vector<64x1xf32> to vector<64x128xf32>
    %464 = vector.broadcast %462 : vector<1x128xf32> to vector<64x128xf32>
    %465 = arith.mulf %463, %464 : vector<64x128xf32>
    %466 = arith.addf %460, %465 : vector<64x128xf32>
    %467 = arith.addf %466, %4 : vector<64x128xf32>
    %cst_94 = arith.constant 0.000000e+00 : f32
    %468 = vector.broadcast %cst_94 : f32 to vector<64x128xf32>
    %469 = arith.maximumf %467, %468 : vector<64x128xf32>
    %c14_95 = arith.constant 14 : index
    %c0_96 = arith.constant 0 : index
    %c0_97 = arith.constant 0 : index
    %470 = vector.load %arg7[%c14_95, %c0_96, %c0_97] : memref<16x64x128xf32, #tpu.memory_space<vmem>>, vector<1x64x128xf32>
    %471 = vector.shape_cast %470 : vector<1x64x128xf32> to vector<64x128xf32>
    %472 = vector.shape_cast %469 : vector<64x128xf32> to vector<1x64x128xf32>
    tpu.vector_store %arg7[%c14_95, %c0_96, %c0_97], %472 {strides = array<i32>} : memref<16x64x128xf32, #tpu.memory_space<vmem>>, vector<1x64x128xf32>,
    %c15 = arith.constant 15 : index
    %c0_98 = arith.constant 0 : index
    %c0_99 = arith.constant 0 : index
    %473 = vector.load %arg1[%c15, %c0_98, %c0_99] : memref<16x4x128xf32, #tpu.memory_space<vmem>>, vector<1x4x128xf32>
    %474 = vector.shape_cast %473 : vector<1x4x128xf32> to vector<4x128xf32>
    %475 = vector.extract_strided_slice %0 {offsets = [0, 0], sizes = [64, 1], strides = [1, 1]} : vector<64x4xf32> to vector<64x1xf32>
    %476 = vector.extract_strided_slice %474 {offsets = [0, 0], sizes = [1, 128], strides = [1, 1]} : vector<4x128xf32> to vector<1x128xf32>
    %477 = vector.broadcast %475 : vector<64x1xf32> to vector<64x128xf32>
    %478 = vector.broadcast %476 : vector<1x128xf32> to vector<64x128xf32>
    %479 = arith.mulf %477, %478 : vector<64x128xf32>
    %480 = vector.extract_strided_slice %0 {offsets = [0, 1], sizes = [64, 1], strides = [1, 1]} : vector<64x4xf32> to vector<64x1xf32>
    %481 = vector.extract_strided_slice %474 {offsets = [1, 0], sizes = [1, 128], strides = [1, 1]} : vector<4x128xf32> to vector<1x128xf32>
    %482 = vector.broadcast %480 : vector<64x1xf32> to vector<64x128xf32>
    %483 = vector.broadcast %481 : vector<1x128xf32> to vector<64x128xf32>
    %484 = arith.mulf %482, %483 : vector<64x128xf32>
    %485 = arith.addf %479, %484 : vector<64x128xf32>
    %486 = vector.extract_strided_slice %0 {offsets = [0, 2], sizes = [64, 1], strides = [1, 1]} : vector<64x4xf32> to vector<64x1xf32>
    %487 = vector.extract_strided_slice %474 {offsets = [2, 0], sizes = [1, 128], strides = [1, 1]} : vector<4x128xf32> to vector<1x128xf32>
    %488 = vector.broadcast %486 : vector<64x1xf32> to vector<64x128xf32>
    %489 = vector.broadcast %487 : vector<1x128xf32> to vector<64x128xf32>
    %490 = arith.mulf %488, %489 : vector<64x128xf32>
    %491 = arith.addf %485, %490 : vector<64x128xf32>
    %492 = vector.extract_strided_slice %0 {offsets = [0, 3], sizes = [64, 1], strides = [1, 1]} : vector<64x4xf32> to vector<64x1xf32>
    %493 = vector.extract_strided_slice %474 {offsets = [3, 0], sizes = [1, 128], strides = [1, 1]} : vector<4x128xf32> to vector<1x128xf32>
    %494 = vector.broadcast %492 : vector<64x1xf32> to vector<64x128xf32>
    %495 = vector.broadcast %493 : vector<1x128xf32> to vector<64x128xf32>
    %496 = arith.mulf %494, %495 : vector<64x128xf32>
    %497 = arith.addf %491, %496 : vector<64x128xf32>
    %498 = arith.addf %497, %4 : vector<64x128xf32>
    %cst_100 = arith.constant 0.000000e+00 : f32
    %499 = vector.broadcast %cst_100 : f32 to vector<64x128xf32>
    %500 = arith.maximumf %498, %499 : vector<64x128xf32>
    %c15_101 = arith.constant 15 : index
    %c0_102 = arith.constant 0 : index
    %c0_103 = arith.constant 0 : index
    %501 = vector.load %arg7[%c15_101, %c0_102, %c0_103] : memref<16x64x128xf32, #tpu.memory_space<vmem>>, vector<1x64x128xf32>
    %502 = vector.shape_cast %501 : vector<1x64x128xf32> to vector<64x128xf32>
    %503 = vector.shape_cast %500 : vector<64x128xf32> to vector<1x64x128xf32>
    tpu.vector_store %arg7[%c15_101, %c0_102, %c0_103], %503 {strides = array<i32>} : memref<16x64x128xf32, #tpu.memory_space<vmem>>, vector<1x64x128xf32>,
    %504 = vector.extract_strided_slice %1 {offsets = [0, 0, 0], sizes = [1, 64, 64], strides = [1, 1, 1]} : vector<3x64x64xf32> to vector<1x64x64xf32>
    %505 = vector.shape_cast %504 : vector<1x64x64xf32> to vector<64x64xf32>
    %c0_104 = arith.constant 0 : index
    %c0_105 = arith.constant 0 : index
    %c0_106 = arith.constant 0 : index
    %506 = vector.load %arg7[%c0_104, %c0_105, %c0_106] : memref<16x64x128xf32, #tpu.memory_space<vmem>>, vector<1x64x128xf32>
    %507 = vector.shape_cast %506 : vector<1x64x128xf32> to vector<64x128xf32>
    %cst_107 = arith.constant dense<0.000000e+00> : vector<64x128xf32>
    %508 = tpu.matmul %505, %507, %cst_107 {dimension_numbers = #tpu.dot_dimension_numbers<[1], [0], [0], [1], [0, 0, 1, 1], [], []>} : vector<64x64xf32>, vector<64x128xf32>, vector<64x128xf32> -> vector<64x128xf32>
    %509 = vector.extract_strided_slice %1 {offsets = [1, 0, 0], sizes = [1, 64, 64], strides = [1, 1, 1]} : vector<3x64x64xf32> to vector<1x64x64xf32>
    %510 = vector.shape_cast %509 : vector<1x64x64xf32> to vector<64x64xf32>
    %c1_108 = arith.constant 1 : index
    %c0_109 = arith.constant 0 : index
    %c0_110 = arith.constant 0 : index
    %511 = vector.load %arg7[%c1_108, %c0_109, %c0_110] : memref<16x64x128xf32, #tpu.memory_space<vmem>>, vector<1x64x128xf32>
    %512 = vector.shape_cast %511 : vector<1x64x128xf32> to vector<64x128xf32>
    %cst_111 = arith.constant dense<0.000000e+00> : vector<64x128xf32>
    %513 = tpu.matmul %510, %512, %cst_111 {dimension_numbers = #tpu.dot_dimension_numbers<[1], [0], [0], [1], [0, 0, 1, 1], [], []>} : vector<64x64xf32>, vector<64x128xf32>, vector<64x128xf32> -> vector<64x128xf32>
    %514 = arith.addf %508, %513 : vector<64x128xf32>
    %515 = vector.extract_strided_slice %1 {offsets = [2, 0, 0], sizes = [1, 64, 64], strides = [1, 1, 1]} : vector<3x64x64xf32> to vector<1x64x64xf32>
    %516 = vector.shape_cast %515 : vector<1x64x64xf32> to vector<64x64xf32>
    %c2_112 = arith.constant 2 : index
    %c0_113 = arith.constant 0 : index
    %c0_114 = arith.constant 0 : index
    %517 = vector.load %arg7[%c2_112, %c0_113, %c0_114] : memref<16x64x128xf32, #tpu.memory_space<vmem>>, vector<1x64x128xf32>
    %518 = vector.shape_cast %517 : vector<1x64x128xf32> to vector<64x128xf32>
    %cst_115 = arith.constant dense<0.000000e+00> : vector<64x128xf32>
    %519 = tpu.matmul %516, %518, %cst_115 {dimension_numbers = #tpu.dot_dimension_numbers<[1], [0], [0], [1], [0, 0, 1, 1], [], []>} : vector<64x64xf32>, vector<64x128xf32>, vector<64x128xf32> -> vector<64x128xf32>
    %520 = arith.addf %514, %519 : vector<64x128xf32>
    %521 = arith.addf %520, %7 : vector<64x128xf32>
    %cst_116 = arith.constant 0.000000e+00 : f32
    %522 = vector.broadcast %cst_116 : f32 to vector<64x128xf32>
    %523 = arith.maximumf %521, %522 : vector<64x128xf32>
    %cst_117 = arith.constant dense<0.000000e+00> : vector<128xf32>
    %524 = vector.multi_reduction <add>, %523, %cst_117 [0] : vector<64x128xf32> to vector<128xf32>
    %525 = vector.shape_cast %524 : vector<128xf32> to vector<1x128xf32>
    %cst_118 = arith.constant 6.400000e+01 : f32
    %526 = vector.broadcast %cst_118 : f32 to vector<1x128xf32>
    %527 = arith.divf %525, %526 : vector<1x128xf32>
    %cst_119 = arith.constant dense<0xFF800000> : vector<128xf32>
    %528 = vector.multi_reduction <maximumf>, %523, %cst_119 [0] : vector<64x128xf32> to vector<128xf32>
    %529 = vector.shape_cast %528 : vector<128xf32> to vector<1x128xf32>
    %530 = vector.extract_strided_slice %1 {offsets = [0, 0, 0], sizes = [1, 64, 64], strides = [1, 1, 1]} : vector<3x64x64xf32> to vector<1x64x64xf32>
    %531 = vector.shape_cast %530 : vector<1x64x64xf32> to vector<64x64xf32>
    %c1_120 = arith.constant 1 : index
    %c0_121 = arith.constant 0 : index
    %c0_122 = arith.constant 0 : index
    %532 = vector.load %arg7[%c1_120, %c0_121, %c0_122] : memref<16x64x128xf32, #tpu.memory_space<vmem>>, vector<1x64x128xf32>
    %533 = vector.shape_cast %532 : vector<1x64x128xf32> to vector<64x128xf32>
    %cst_123 = arith.constant dense<0.000000e+00> : vector<64x128xf32>
    %534 = tpu.matmul %531, %533, %cst_123 {dimension_numbers = #tpu.dot_dimension_numbers<[1], [0], [0], [1], [0, 0, 1, 1], [], []>} : vector<64x64xf32>, vector<64x128xf32>, vector<64x128xf32> -> vector<64x128xf32>
    %535 = vector.extract_strided_slice %1 {offsets = [1, 0, 0], sizes = [1, 64, 64], strides = [1, 1, 1]} : vector<3x64x64xf32> to vector<1x64x64xf32>
    %536 = vector.shape_cast %535 : vector<1x64x64xf32> to vector<64x64xf32>
    %c2_124 = arith.constant 2 : index
    %c0_125 = arith.constant 0 : index
    %c0_126 = arith.constant 0 : index
    %537 = vector.load %arg7[%c2_124, %c0_125, %c0_126] : memref<16x64x128xf32, #tpu.memory_space<vmem>>, vector<1x64x128xf32>
    %538 = vector.shape_cast %537 : vector<1x64x128xf32> to vector<64x128xf32>
    %cst_127 = arith.constant dense<0.000000e+00> : vector<64x128xf32>
    %539 = tpu.matmul %536, %538, %cst_127 {dimension_numbers = #tpu.dot_dimension_numbers<[1], [0], [0], [1], [0, 0, 1, 1], [], []>} : vector<64x64xf32>, vector<64x128xf32>, vector<64x128xf32> -> vector<64x128xf32>
    %540 = arith.addf %534, %539 : vector<64x128xf32>
    %541 = vector.extract_strided_slice %1 {offsets = [2, 0, 0], sizes = [1, 64, 64], strides = [1, 1, 1]} : vector<3x64x64xf32> to vector<1x64x64xf32>
    %542 = vector.shape_cast %541 : vector<1x64x64xf32> to vector<64x64xf32>
    %c3_128 = arith.constant 3 : index
    %c0_129 = arith.constant 0 : index
    %c0_130 = arith.constant 0 : index
    %543 = vector.load %arg7[%c3_128, %c0_129, %c0_130] : memref<16x64x128xf32, #tpu.memory_space<vmem>>, vector<1x64x128xf32>
    %544 = vector.shape_cast %543 : vector<1x64x128xf32> to vector<64x128xf32>
    %cst_131 = arith.constant dense<0.000000e+00> : vector<64x128xf32>
    %545 = tpu.matmul %542, %544, %cst_131 {dimension_numbers = #tpu.dot_dimension_numbers<[1], [0], [0], [1], [0, 0, 1, 1], [], []>} : vector<64x64xf32>, vector<64x128xf32>, vector<64x128xf32> -> vector<64x128xf32>
    %546 = arith.addf %540, %545 : vector<64x128xf32>
    %547 = arith.addf %546, %7 : vector<64x128xf32>
    %cst_132 = arith.constant 0.000000e+00 : f32
    %548 = vector.broadcast %cst_132 : f32 to vector<64x128xf32>
    %549 = arith.maximumf %547, %548 : vector<64x128xf32>
    %cst_133 = arith.constant dense<0.000000e+00> : vector<128xf32>
    %550 = vector.multi_reduction <add>, %549, %cst_133 [0] : vector<64x128xf32> to vector<128xf32>
    %551 = vector.shape_cast %550 : vector<128xf32> to vector<1x128xf32>
    %cst_134 = arith.constant 6.400000e+01 : f32
    %552 = vector.broadcast %cst_134 : f32 to vector<1x128xf32>
    %553 = arith.divf %551, %552 : vector<1x128xf32>
    %cst_135 = arith.constant dense<0xFF800000> : vector<128xf32>
    %554 = vector.multi_reduction <maximumf>, %549, %cst_135 [0] : vector<64x128xf32> to vector<128xf32>
    %555 = vector.shape_cast %554 : vector<128xf32> to vector<1x128xf32>
    %556 = vector.extract_strided_slice %1 {offsets = [0, 0, 0], sizes = [1, 64, 64], strides = [1, 1, 1]} : vector<3x64x64xf32> to vector<1x64x64xf32>
    %557 = vector.shape_cast %556 : vector<1x64x64xf32> to vector<64x64xf32>
    %c2_136 = arith.constant 2 : index
    %c0_137 = arith.constant 0 : index
    %c0_138 = arith.constant 0 : index
    %558 = vector.load %arg7[%c2_136, %c0_137, %c0_138] : memref<16x64x128xf32, #tpu.memory_space<vmem>>, vector<1x64x128xf32>
    %559 = vector.shape_cast %558 : vector<1x64x128xf32> to vector<64x128xf32>
    %cst_139 = arith.constant dense<0.000000e+00> : vector<64x128xf32>
    %560 = tpu.matmul %557, %559, %cst_139 {dimension_numbers = #tpu.dot_dimension_numbers<[1], [0], [0], [1], [0, 0, 1, 1], [], []>} : vector<64x64xf32>, vector<64x128xf32>, vector<64x128xf32> -> vector<64x128xf32>
    %561 = vector.extract_strided_slice %1 {offsets = [1, 0, 0], sizes = [1, 64, 64], strides = [1, 1, 1]} : vector<3x64x64xf32> to vector<1x64x64xf32>
    %562 = vector.shape_cast %561 : vector<1x64x64xf32> to vector<64x64xf32>
    %c3_140 = arith.constant 3 : index
    %c0_141 = arith.constant 0 : index
    %c0_142 = arith.constant 0 : index
    %563 = vector.load %arg7[%c3_140, %c0_141, %c0_142] : memref<16x64x128xf32, #tpu.memory_space<vmem>>, vector<1x64x128xf32>
    %564 = vector.shape_cast %563 : vector<1x64x128xf32> to vector<64x128xf32>
    %cst_143 = arith.constant dense<0.000000e+00> : vector<64x128xf32>
    %565 = tpu.matmul %562, %564, %cst_143 {dimension_numbers = #tpu.dot_dimension_numbers<[1], [0], [0], [1], [0, 0, 1, 1], [], []>} : vector<64x64xf32>, vector<64x128xf32>, vector<64x128xf32> -> vector<64x128xf32>
    %566 = arith.addf %560, %565 : vector<64x128xf32>
    %567 = vector.extract_strided_slice %1 {offsets = [2, 0, 0], sizes = [1, 64, 64], strides = [1, 1, 1]} : vector<3x64x64xf32> to vector<1x64x64xf32>
    %568 = vector.shape_cast %567 : vector<1x64x64xf32> to vector<64x64xf32>
    %c4_144 = arith.constant 4 : index
    %c0_145 = arith.constant 0 : index
    %c0_146 = arith.constant 0 : index
    %569 = vector.load %arg7[%c4_144, %c0_145, %c0_146] : memref<16x64x128xf32, #tpu.memory_space<vmem>>, vector<1x64x128xf32>
    %570 = vector.shape_cast %569 : vector<1x64x128xf32> to vector<64x128xf32>
    %cst_147 = arith.constant dense<0.000000e+00> : vector<64x128xf32>
    %571 = tpu.matmul %568, %570, %cst_147 {dimension_numbers = #tpu.dot_dimension_numbers<[1], [0], [0], [1], [0, 0, 1, 1], [], []>} : vector<64x64xf32>, vector<64x128xf32>, vector<64x128xf32> -> vector<64x128xf32>
    %572 = arith.addf %566, %571 : vector<64x128xf32>
    %573 = arith.addf %572, %7 : vector<64x128xf32>
    %cst_148 = arith.constant 0.000000e+00 : f32
    %574 = vector.broadcast %cst_148 : f32 to vector<64x128xf32>
    %575 = arith.maximumf %573, %574 : vector<64x128xf32>
    %cst_149 = arith.constant dense<0.000000e+00> : vector<128xf32>
    %576 = vector.multi_reduction <add>, %575, %cst_149 [0] : vector<64x128xf32> to vector<128xf32>
    %577 = vector.shape_cast %576 : vector<128xf32> to vector<1x128xf32>
    %cst_150 = arith.constant 6.400000e+01 : f32
    %578 = vector.broadcast %cst_150 : f32 to vector<1x128xf32>
    %579 = arith.divf %577, %578 : vector<1x128xf32>
    %cst_151 = arith.constant dense<0xFF800000> : vector<128xf32>
    %580 = vector.multi_reduction <maximumf>, %575, %cst_151 [0] : vector<64x128xf32> to vector<128xf32>
    %581 = vector.shape_cast %580 : vector<128xf32> to vector<1x128xf32>
    %582 = vector.extract_strided_slice %1 {offsets = [0, 0, 0], sizes = [1, 64, 64], strides = [1, 1, 1]} : vector<3x64x64xf32> to vector<1x64x64xf32>
    %583 = vector.shape_cast %582 : vector<1x64x64xf32> to vector<64x64xf32>
    %c3_152 = arith.constant 3 : index
    %c0_153 = arith.constant 0 : index
    %c0_154 = arith.constant 0 : index
    %584 = vector.load %arg7[%c3_152, %c0_153, %c0_154] : memref<16x64x128xf32, #tpu.memory_space<vmem>>, vector<1x64x128xf32>
    %585 = vector.shape_cast %584 : vector<1x64x128xf32> to vector<64x128xf32>
    %cst_155 = arith.constant dense<0.000000e+00> : vector<64x128xf32>
    %586 = tpu.matmul %583, %585, %cst_155 {dimension_numbers = #tpu.dot_dimension_numbers<[1], [0], [0], [1], [0, 0, 1, 1], [], []>} : vector<64x64xf32>, vector<64x128xf32>, vector<64x128xf32> -> vector<64x128xf32>
    %587 = vector.extract_strided_slice %1 {offsets = [1, 0, 0], sizes = [1, 64, 64], strides = [1, 1, 1]} : vector<3x64x64xf32> to vector<1x64x64xf32>
    %588 = vector.shape_cast %587 : vector<1x64x64xf32> to vector<64x64xf32>
    %c4_156 = arith.constant 4 : index
    %c0_157 = arith.constant 0 : index
    %c0_158 = arith.constant 0 : index
    %589 = vector.load %arg7[%c4_156, %c0_157, %c0_158] : memref<16x64x128xf32, #tpu.memory_space<vmem>>, vector<1x64x128xf32>
    %590 = vector.shape_cast %589 : vector<1x64x128xf32> to vector<64x128xf32>
    %cst_159 = arith.constant dense<0.000000e+00> : vector<64x128xf32>
    %591 = tpu.matmul %588, %590, %cst_159 {dimension_numbers = #tpu.dot_dimension_numbers<[1], [0], [0], [1], [0, 0, 1, 1], [], []>} : vector<64x64xf32>, vector<64x128xf32>, vector<64x128xf32> -> vector<64x128xf32>
    %592 = arith.addf %586, %591 : vector<64x128xf32>
    %593 = vector.extract_strided_slice %1 {offsets = [2, 0, 0], sizes = [1, 64, 64], strides = [1, 1, 1]} : vector<3x64x64xf32> to vector<1x64x64xf32>
    %594 = vector.shape_cast %593 : vector<1x64x64xf32> to vector<64x64xf32>
    %c5_160 = arith.constant 5 : index
    %c0_161 = arith.constant 0 : index
    %c0_162 = arith.constant 0 : index
    %595 = vector.load %arg7[%c5_160, %c0_161, %c0_162] : memref<16x64x128xf32, #tpu.memory_space<vmem>>, vector<1x64x128xf32>
    %596 = vector.shape_cast %595 : vector<1x64x128xf32> to vector<64x128xf32>
    %cst_163 = arith.constant dense<0.000000e+00> : vector<64x128xf32>
    %597 = tpu.matmul %594, %596, %cst_163 {dimension_numbers = #tpu.dot_dimension_numbers<[1], [0], [0], [1], [0, 0, 1, 1], [], []>} : vector<64x64xf32>, vector<64x128xf32>, vector<64x128xf32> -> vector<64x128xf32>
    %598 = arith.addf %592, %597 : vector<64x128xf32>
    %599 = arith.addf %598, %7 : vector<64x128xf32>
    %cst_164 = arith.constant 0.000000e+00 : f32
    %600 = vector.broadcast %cst_164 : f32 to vector<64x128xf32>
    %601 = arith.maximumf %599, %600 : vector<64x128xf32>
    %cst_165 = arith.constant dense<0.000000e+00> : vector<128xf32>
    %602 = vector.multi_reduction <add>, %601, %cst_165 [0] : vector<64x128xf32> to vector<128xf32>
    %603 = vector.shape_cast %602 : vector<128xf32> to vector<1x128xf32>
    %cst_166 = arith.constant 6.400000e+01 : f32
    %604 = vector.broadcast %cst_166 : f32 to vector<1x128xf32>
    %605 = arith.divf %603, %604 : vector<1x128xf32>
    %cst_167 = arith.constant dense<0xFF800000> : vector<128xf32>
    %606 = vector.multi_reduction <maximumf>, %601, %cst_167 [0] : vector<64x128xf32> to vector<128xf32>
    %607 = vector.shape_cast %606 : vector<128xf32> to vector<1x128xf32>
    %608 = vector.extract_strided_slice %1 {offsets = [0, 0, 0], sizes = [1, 64, 64], strides = [1, 1, 1]} : vector<3x64x64xf32> to vector<1x64x64xf32>
    %609 = vector.shape_cast %608 : vector<1x64x64xf32> to vector<64x64xf32>
    %c4_168 = arith.constant 4 : index
    %c0_169 = arith.constant 0 : index
    %c0_170 = arith.constant 0 : index
    %610 = vector.load %arg7[%c4_168, %c0_169, %c0_170] : memref<16x64x128xf32, #tpu.memory_space<vmem>>, vector<1x64x128xf32>
    %611 = vector.shape_cast %610 : vector<1x64x128xf32> to vector<64x128xf32>
    %cst_171 = arith.constant dense<0.000000e+00> : vector<64x128xf32>
    %612 = tpu.matmul %609, %611, %cst_171 {dimension_numbers = #tpu.dot_dimension_numbers<[1], [0], [0], [1], [0, 0, 1, 1], [], []>} : vector<64x64xf32>, vector<64x128xf32>, vector<64x128xf32> -> vector<64x128xf32>
    %613 = vector.extract_strided_slice %1 {offsets = [1, 0, 0], sizes = [1, 64, 64], strides = [1, 1, 1]} : vector<3x64x64xf32> to vector<1x64x64xf32>
    %614 = vector.shape_cast %613 : vector<1x64x64xf32> to vector<64x64xf32>
    %c5_172 = arith.constant 5 : index
    %c0_173 = arith.constant 0 : index
    %c0_174 = arith.constant 0 : index
    %615 = vector.load %arg7[%c5_172, %c0_173, %c0_174] : memref<16x64x128xf32, #tpu.memory_space<vmem>>, vector<1x64x128xf32>
    %616 = vector.shape_cast %615 : vector<1x64x128xf32> to vector<64x128xf32>
    %cst_175 = arith.constant dense<0.000000e+00> : vector<64x128xf32>
    %617 = tpu.matmul %614, %616, %cst_175 {dimension_numbers = #tpu.dot_dimension_numbers<[1], [0], [0], [1], [0, 0, 1, 1], [], []>} : vector<64x64xf32>, vector<64x128xf32>, vector<64x128xf32> -> vector<64x128xf32>
    %618 = arith.addf %612, %617 : vector<64x128xf32>
    %619 = vector.extract_strided_slice %1 {offsets = [2, 0, 0], sizes = [1, 64, 64], strides = [1, 1, 1]} : vector<3x64x64xf32> to vector<1x64x64xf32>
    %620 = vector.shape_cast %619 : vector<1x64x64xf32> to vector<64x64xf32>
    %c6_176 = arith.constant 6 : index
    %c0_177 = arith.constant 0 : index
    %c0_178 = arith.constant 0 : index
    %621 = vector.load %arg7[%c6_176, %c0_177, %c0_178] : memref<16x64x128xf32, #tpu.memory_space<vmem>>, vector<1x64x128xf32>
    %622 = vector.shape_cast %621 : vector<1x64x128xf32> to vector<64x128xf32>
    %cst_179 = arith.constant dense<0.000000e+00> : vector<64x128xf32>
    %623 = tpu.matmul %620, %622, %cst_179 {dimension_numbers = #tpu.dot_dimension_numbers<[1], [0], [0], [1], [0, 0, 1, 1], [], []>} : vector<64x64xf32>, vector<64x128xf32>, vector<64x128xf32> -> vector<64x128xf32>
    %624 = arith.addf %618, %623 : vector<64x128xf32>
    %625 = arith.addf %624, %7 : vector<64x128xf32>
    %cst_180 = arith.constant 0.000000e+00 : f32
    %626 = vector.broadcast %cst_180 : f32 to vector<64x128xf32>
    %627 = arith.maximumf %625, %626 : vector<64x128xf32>
    %cst_181 = arith.constant dense<0.000000e+00> : vector<128xf32>
    %628 = vector.multi_reduction <add>, %627, %cst_181 [0] : vector<64x128xf32> to vector<128xf32>
    %629 = vector.shape_cast %628 : vector<128xf32> to vector<1x128xf32>
    %cst_182 = arith.constant 6.400000e+01 : f32
    %630 = vector.broadcast %cst_182 : f32 to vector<1x128xf32>
    %631 = arith.divf %629, %630 : vector<1x128xf32>
    %cst_183 = arith.constant dense<0xFF800000> : vector<128xf32>
    %632 = vector.multi_reduction <maximumf>, %627, %cst_183 [0] : vector<64x128xf32> to vector<128xf32>
    %633 = vector.shape_cast %632 : vector<128xf32> to vector<1x128xf32>
    %634 = vector.extract_strided_slice %1 {offsets = [0, 0, 0], sizes = [1, 64, 64], strides = [1, 1, 1]} : vector<3x64x64xf32> to vector<1x64x64xf32>
    %635 = vector.shape_cast %634 : vector<1x64x64xf32> to vector<64x64xf32>
    %c5_184 = arith.constant 5 : index
    %c0_185 = arith.constant 0 : index
    %c0_186 = arith.constant 0 : index
    %636 = vector.load %arg7[%c5_184, %c0_185, %c0_186] : memref<16x64x128xf32, #tpu.memory_space<vmem>>, vector<1x64x128xf32>
    %637 = vector.shape_cast %636 : vector<1x64x128xf32> to vector<64x128xf32>
    %cst_187 = arith.constant dense<0.000000e+00> : vector<64x128xf32>
    %638 = tpu.matmul %635, %637, %cst_187 {dimension_numbers = #tpu.dot_dimension_numbers<[1], [0], [0], [1], [0, 0, 1, 1], [], []>} : vector<64x64xf32>, vector<64x128xf32>, vector<64x128xf32> -> vector<64x128xf32>
    %639 = vector.extract_strided_slice %1 {offsets = [1, 0, 0], sizes = [1, 64, 64], strides = [1, 1, 1]} : vector<3x64x64xf32> to vector<1x64x64xf32>
    %640 = vector.shape_cast %639 : vector<1x64x64xf32> to vector<64x64xf32>
    %c6_188 = arith.constant 6 : index
    %c0_189 = arith.constant 0 : index
    %c0_190 = arith.constant 0 : index
    %641 = vector.load %arg7[%c6_188, %c0_189, %c0_190] : memref<16x64x128xf32, #tpu.memory_space<vmem>>, vector<1x64x128xf32>
    %642 = vector.shape_cast %641 : vector<1x64x128xf32> to vector<64x128xf32>
    %cst_191 = arith.constant dense<0.000000e+00> : vector<64x128xf32>
    %643 = tpu.matmul %640, %642, %cst_191 {dimension_numbers = #tpu.dot_dimension_numbers<[1], [0], [0], [1], [0, 0, 1, 1], [], []>} : vector<64x64xf32>, vector<64x128xf32>, vector<64x128xf32> -> vector<64x128xf32>
    %644 = arith.addf %638, %643 : vector<64x128xf32>
    %645 = vector.extract_strided_slice %1 {offsets = [2, 0, 0], sizes = [1, 64, 64], strides = [1, 1, 1]} : vector<3x64x64xf32> to vector<1x64x64xf32>
    %646 = vector.shape_cast %645 : vector<1x64x64xf32> to vector<64x64xf32>
    %c7_192 = arith.constant 7 : index
    %c0_193 = arith.constant 0 : index
    %c0_194 = arith.constant 0 : index
    %647 = vector.load %arg7[%c7_192, %c0_193, %c0_194] : memref<16x64x128xf32, #tpu.memory_space<vmem>>, vector<1x64x128xf32>
    %648 = vector.shape_cast %647 : vector<1x64x128xf32> to vector<64x128xf32>
    %cst_195 = arith.constant dense<0.000000e+00> : vector<64x128xf32>
    %649 = tpu.matmul %646, %648, %cst_195 {dimension_numbers = #tpu.dot_dimension_numbers<[1], [0], [0], [1], [0, 0, 1, 1], [], []>} : vector<64x64xf32>, vector<64x128xf32>, vector<64x128xf32> -> vector<64x128xf32>
    %650 = arith.addf %644, %649 : vector<64x128xf32>
    %651 = arith.addf %650, %7 : vector<64x128xf32>
    %cst_196 = arith.constant 0.000000e+00 : f32
    %652 = vector.broadcast %cst_196 : f32 to vector<64x128xf32>
    %653 = arith.maximumf %651, %652 : vector<64x128xf32>
    %cst_197 = arith.constant dense<0.000000e+00> : vector<128xf32>
    %654 = vector.multi_reduction <add>, %653, %cst_197 [0] : vector<64x128xf32> to vector<128xf32>
    %655 = vector.shape_cast %654 : vector<128xf32> to vector<1x128xf32>
    %cst_198 = arith.constant 6.400000e+01 : f32
    %656 = vector.broadcast %cst_198 : f32 to vector<1x128xf32>
    %657 = arith.divf %655, %656 : vector<1x128xf32>
    %cst_199 = arith.constant dense<0xFF800000> : vector<128xf32>
    %658 = vector.multi_reduction <maximumf>, %653, %cst_199 [0] : vector<64x128xf32> to vector<128xf32>
    %659 = vector.shape_cast %658 : vector<128xf32> to vector<1x128xf32>
    %660 = vector.extract_strided_slice %1 {offsets = [0, 0, 0], sizes = [1, 64, 64], strides = [1, 1, 1]} : vector<3x64x64xf32> to vector<1x64x64xf32>
    %661 = vector.shape_cast %660 : vector<1x64x64xf32> to vector<64x64xf32>
    %c6_200 = arith.constant 6 : index
    %c0_201 = arith.constant 0 : index
    %c0_202 = arith.constant 0 : index
    %662 = vector.load %arg7[%c6_200, %c0_201, %c0_202] : memref<16x64x128xf32, #tpu.memory_space<vmem>>, vector<1x64x128xf32>
    %663 = vector.shape_cast %662 : vector<1x64x128xf32> to vector<64x128xf32>
    %cst_203 = arith.constant dense<0.000000e+00> : vector<64x128xf32>
    %664 = tpu.matmul %661, %663, %cst_203 {dimension_numbers = #tpu.dot_dimension_numbers<[1], [0], [0], [1], [0, 0, 1, 1], [], []>} : vector<64x64xf32>, vector<64x128xf32>, vector<64x128xf32> -> vector<64x128xf32>
    %665 = vector.extract_strided_slice %1 {offsets = [1, 0, 0], sizes = [1, 64, 64], strides = [1, 1, 1]} : vector<3x64x64xf32> to vector<1x64x64xf32>
    %666 = vector.shape_cast %665 : vector<1x64x64xf32> to vector<64x64xf32>
    %c7_204 = arith.constant 7 : index
    %c0_205 = arith.constant 0 : index
    %c0_206 = arith.constant 0 : index
    %667 = vector.load %arg7[%c7_204, %c0_205, %c0_206] : memref<16x64x128xf32, #tpu.memory_space<vmem>>, vector<1x64x128xf32>
    %668 = vector.shape_cast %667 : vector<1x64x128xf32> to vector<64x128xf32>
    %cst_207 = arith.constant dense<0.000000e+00> : vector<64x128xf32>
    %669 = tpu.matmul %666, %668, %cst_207 {dimension_numbers = #tpu.dot_dimension_numbers<[1], [0], [0], [1], [0, 0, 1, 1], [], []>} : vector<64x64xf32>, vector<64x128xf32>, vector<64x128xf32> -> vector<64x128xf32>
    %670 = arith.addf %664, %669 : vector<64x128xf32>
    %671 = vector.extract_strided_slice %1 {offsets = [2, 0, 0], sizes = [1, 64, 64], strides = [1, 1, 1]} : vector<3x64x64xf32> to vector<1x64x64xf32>
    %672 = vector.shape_cast %671 : vector<1x64x64xf32> to vector<64x64xf32>
    %c8_208 = arith.constant 8 : index
    %c0_209 = arith.constant 0 : index
    %c0_210 = arith.constant 0 : index
    %673 = vector.load %arg7[%c8_208, %c0_209, %c0_210] : memref<16x64x128xf32, #tpu.memory_space<vmem>>, vector<1x64x128xf32>
    %674 = vector.shape_cast %673 : vector<1x64x128xf32> to vector<64x128xf32>
    %cst_211 = arith.constant dense<0.000000e+00> : vector<64x128xf32>
    %675 = tpu.matmul %672, %674, %cst_211 {dimension_numbers = #tpu.dot_dimension_numbers<[1], [0], [0], [1], [0, 0, 1, 1], [], []>} : vector<64x64xf32>, vector<64x128xf32>, vector<64x128xf32> -> vector<64x128xf32>
    %676 = arith.addf %670, %675 : vector<64x128xf32>
    %677 = arith.addf %676, %7 : vector<64x128xf32>
    %cst_212 = arith.constant 0.000000e+00 : f32
    %678 = vector.broadcast %cst_212 : f32 to vector<64x128xf32>
    %679 = arith.maximumf %677, %678 : vector<64x128xf32>
    %cst_213 = arith.constant dense<0.000000e+00> : vector<128xf32>
    %680 = vector.multi_reduction <add>, %679, %cst_213 [0] : vector<64x128xf32> to vector<128xf32>
    %681 = vector.shape_cast %680 : vector<128xf32> to vector<1x128xf32>
    %cst_214 = arith.constant 6.400000e+01 : f32
    %682 = vector.broadcast %cst_214 : f32 to vector<1x128xf32>
    %683 = arith.divf %681, %682 : vector<1x128xf32>
    %cst_215 = arith.constant dense<0xFF800000> : vector<128xf32>
    %684 = vector.multi_reduction <maximumf>, %679, %cst_215 [0] : vector<64x128xf32> to vector<128xf32>
    %685 = vector.shape_cast %684 : vector<128xf32> to vector<1x128xf32>
    %686 = vector.extract_strided_slice %1 {offsets = [0, 0, 0], sizes = [1, 64, 64], strides = [1, 1, 1]} : vector<3x64x64xf32> to vector<1x64x64xf32>
    %687 = vector.shape_cast %686 : vector<1x64x64xf32> to vector<64x64xf32>
    %c7_216 = arith.constant 7 : index
    %c0_217 = arith.constant 0 : index
    %c0_218 = arith.constant 0 : index
    %688 = vector.load %arg7[%c7_216, %c0_217, %c0_218] : memref<16x64x128xf32, #tpu.memory_space<vmem>>, vector<1x64x128xf32>
    %689 = vector.shape_cast %688 : vector<1x64x128xf32> to vector<64x128xf32>
    %cst_219 = arith.constant dense<0.000000e+00> : vector<64x128xf32>
    %690 = tpu.matmul %687, %689, %cst_219 {dimension_numbers = #tpu.dot_dimension_numbers<[1], [0], [0], [1], [0, 0, 1, 1], [], []>} : vector<64x64xf32>, vector<64x128xf32>, vector<64x128xf32> -> vector<64x128xf32>
    %691 = vector.extract_strided_slice %1 {offsets = [1, 0, 0], sizes = [1, 64, 64], strides = [1, 1, 1]} : vector<3x64x64xf32> to vector<1x64x64xf32>
    %692 = vector.shape_cast %691 : vector<1x64x64xf32> to vector<64x64xf32>
    %c8_220 = arith.constant 8 : index
    %c0_221 = arith.constant 0 : index
    %c0_222 = arith.constant 0 : index
    %693 = vector.load %arg7[%c8_220, %c0_221, %c0_222] : memref<16x64x128xf32, #tpu.memory_space<vmem>>, vector<1x64x128xf32>
    %694 = vector.shape_cast %693 : vector<1x64x128xf32> to vector<64x128xf32>
    %cst_223 = arith.constant dense<0.000000e+00> : vector<64x128xf32>
    %695 = tpu.matmul %692, %694, %cst_223 {dimension_numbers = #tpu.dot_dimension_numbers<[1], [0], [0], [1], [0, 0, 1, 1], [], []>} : vector<64x64xf32>, vector<64x128xf32>, vector<64x128xf32> -> vector<64x128xf32>
    %696 = arith.addf %690, %695 : vector<64x128xf32>
    %697 = vector.extract_strided_slice %1 {offsets = [2, 0, 0], sizes = [1, 64, 64], strides = [1, 1, 1]} : vector<3x64x64xf32> to vector<1x64x64xf32>
    %698 = vector.shape_cast %697 : vector<1x64x64xf32> to vector<64x64xf32>
    %c9_224 = arith.constant 9 : index
    %c0_225 = arith.constant 0 : index
    %c0_226 = arith.constant 0 : index
    %699 = vector.load %arg7[%c9_224, %c0_225, %c0_226] : memref<16x64x128xf32, #tpu.memory_space<vmem>>, vector<1x64x128xf32>
    %700 = vector.shape_cast %699 : vector<1x64x128xf32> to vector<64x128xf32>
    %cst_227 = arith.constant dense<0.000000e+00> : vector<64x128xf32>
    %701 = tpu.matmul %698, %700, %cst_227 {dimension_numbers = #tpu.dot_dimension_numbers<[1], [0], [0], [1], [0, 0, 1, 1], [], []>} : vector<64x64xf32>, vector<64x128xf32>, vector<64x128xf32> -> vector<64x128xf32>
    %702 = arith.addf %696, %701 : vector<64x128xf32>
    %703 = arith.addf %702, %7 : vector<64x128xf32>
    %cst_228 = arith.constant 0.000000e+00 : f32
    %704 = vector.broadcast %cst_228 : f32 to vector<64x128xf32>
    %705 = arith.maximumf %703, %704 : vector<64x128xf32>
    %cst_229 = arith.constant dense<0.000000e+00> : vector<128xf32>
    %706 = vector.multi_reduction <add>, %705, %cst_229 [0] : vector<64x128xf32> to vector<128xf32>
    %707 = vector.shape_cast %706 : vector<128xf32> to vector<1x128xf32>
    %cst_230 = arith.constant 6.400000e+01 : f32
    %708 = vector.broadcast %cst_230 : f32 to vector<1x128xf32>
    %709 = arith.divf %707, %708 : vector<1x128xf32>
    %cst_231 = arith.constant dense<0xFF800000> : vector<128xf32>
    %710 = vector.multi_reduction <maximumf>, %705, %cst_231 [0] : vector<64x128xf32> to vector<128xf32>
    %711 = vector.shape_cast %710 : vector<128xf32> to vector<1x128xf32>
    %712 = vector.extract_strided_slice %1 {offsets = [0, 0, 0], sizes = [1, 64, 64], strides = [1, 1, 1]} : vector<3x64x64xf32> to vector<1x64x64xf32>
    %713 = vector.shape_cast %712 : vector<1x64x64xf32> to vector<64x64xf32>
    %c8_232 = arith.constant 8 : index
    %c0_233 = arith.constant 0 : index
    %c0_234 = arith.constant 0 : index
    %714 = vector.load %arg7[%c8_232, %c0_233, %c0_234] : memref<16x64x128xf32, #tpu.memory_space<vmem>>, vector<1x64x128xf32>
    %715 = vector.shape_cast %714 : vector<1x64x128xf32> to vector<64x128xf32>
    %cst_235 = arith.constant dense<0.000000e+00> : vector<64x128xf32>
    %716 = tpu.matmul %713, %715, %cst_235 {dimension_numbers = #tpu.dot_dimension_numbers<[1], [0], [0], [1], [0, 0, 1, 1], [], []>} : vector<64x64xf32>, vector<64x128xf32>, vector<64x128xf32> -> vector<64x128xf32>
    %717 = vector.extract_strided_slice %1 {offsets = [1, 0, 0], sizes = [1, 64, 64], strides = [1, 1, 1]} : vector<3x64x64xf32> to vector<1x64x64xf32>
    %718 = vector.shape_cast %717 : vector<1x64x64xf32> to vector<64x64xf32>
    %c9_236 = arith.constant 9 : index
    %c0_237 = arith.constant 0 : index
    %c0_238 = arith.constant 0 : index
    %719 = vector.load %arg7[%c9_236, %c0_237, %c0_238] : memref<16x64x128xf32, #tpu.memory_space<vmem>>, vector<1x64x128xf32>
    %720 = vector.shape_cast %719 : vector<1x64x128xf32> to vector<64x128xf32>
    %cst_239 = arith.constant dense<0.000000e+00> : vector<64x128xf32>
    %721 = tpu.matmul %718, %720, %cst_239 {dimension_numbers = #tpu.dot_dimension_numbers<[1], [0], [0], [1], [0, 0, 1, 1], [], []>} : vector<64x64xf32>, vector<64x128xf32>, vector<64x128xf32> -> vector<64x128xf32>
    %722 = arith.addf %716, %721 : vector<64x128xf32>
    %723 = vector.extract_strided_slice %1 {offsets = [2, 0, 0], sizes = [1, 64, 64], strides = [1, 1, 1]} : vector<3x64x64xf32> to vector<1x64x64xf32>
    %724 = vector.shape_cast %723 : vector<1x64x64xf32> to vector<64x64xf32>
    %c10_240 = arith.constant 10 : index
    %c0_241 = arith.constant 0 : index
    %c0_242 = arith.constant 0 : index
    %725 = vector.load %arg7[%c10_240, %c0_241, %c0_242] : memref<16x64x128xf32, #tpu.memory_space<vmem>>, vector<1x64x128xf32>
    %726 = vector.shape_cast %725 : vector<1x64x128xf32> to vector<64x128xf32>
    %cst_243 = arith.constant dense<0.000000e+00> : vector<64x128xf32>
    %727 = tpu.matmul %724, %726, %cst_243 {dimension_numbers = #tpu.dot_dimension_numbers<[1], [0], [0], [1], [0, 0, 1, 1], [], []>} : vector<64x64xf32>, vector<64x128xf32>, vector<64x128xf32> -> vector<64x128xf32>
    %728 = arith.addf %722, %727 : vector<64x128xf32>
    %729 = arith.addf %728, %7 : vector<64x128xf32>
    %cst_244 = arith.constant 0.000000e+00 : f32
    %730 = vector.broadcast %cst_244 : f32 to vector<64x128xf32>
    %731 = arith.maximumf %729, %730 : vector<64x128xf32>
    %cst_245 = arith.constant dense<0.000000e+00> : vector<128xf32>
    %732 = vector.multi_reduction <add>, %731, %cst_245 [0] : vector<64x128xf32> to vector<128xf32>
    %733 = vector.shape_cast %732 : vector<128xf32> to vector<1x128xf32>
    %cst_246 = arith.constant 6.400000e+01 : f32
    %734 = vector.broadcast %cst_246 : f32 to vector<1x128xf32>
    %735 = arith.divf %733, %734 : vector<1x128xf32>
    %cst_247 = arith.constant dense<0xFF800000> : vector<128xf32>
    %736 = vector.multi_reduction <maximumf>, %731, %cst_247 [0] : vector<64x128xf32> to vector<128xf32>
    %737 = vector.shape_cast %736 : vector<128xf32> to vector<1x128xf32>
    %738 = vector.extract_strided_slice %1 {offsets = [0, 0, 0], sizes = [1, 64, 64], strides = [1, 1, 1]} : vector<3x64x64xf32> to vector<1x64x64xf32>
    %739 = vector.shape_cast %738 : vector<1x64x64xf32> to vector<64x64xf32>
    %c9_248 = arith.constant 9 : index
    %c0_249 = arith.constant 0 : index
    %c0_250 = arith.constant 0 : index
    %740 = vector.load %arg7[%c9_248, %c0_249, %c0_250] : memref<16x64x128xf32, #tpu.memory_space<vmem>>, vector<1x64x128xf32>
    %741 = vector.shape_cast %740 : vector<1x64x128xf32> to vector<64x128xf32>
    %cst_251 = arith.constant dense<0.000000e+00> : vector<64x128xf32>
    %742 = tpu.matmul %739, %741, %cst_251 {dimension_numbers = #tpu.dot_dimension_numbers<[1], [0], [0], [1], [0, 0, 1, 1], [], []>} : vector<64x64xf32>, vector<64x128xf32>, vector<64x128xf32> -> vector<64x128xf32>
    %743 = vector.extract_strided_slice %1 {offsets = [1, 0, 0], sizes = [1, 64, 64], strides = [1, 1, 1]} : vector<3x64x64xf32> to vector<1x64x64xf32>
    %744 = vector.shape_cast %743 : vector<1x64x64xf32> to vector<64x64xf32>
    %c10_252 = arith.constant 10 : index
    %c0_253 = arith.constant 0 : index
    %c0_254 = arith.constant 0 : index
    %745 = vector.load %arg7[%c10_252, %c0_253, %c0_254] : memref<16x64x128xf32, #tpu.memory_space<vmem>>, vector<1x64x128xf32>
    %746 = vector.shape_cast %745 : vector<1x64x128xf32> to vector<64x128xf32>
    %cst_255 = arith.constant dense<0.000000e+00> : vector<64x128xf32>
    %747 = tpu.matmul %744, %746, %cst_255 {dimension_numbers = #tpu.dot_dimension_numbers<[1], [0], [0], [1], [0, 0, 1, 1], [], []>} : vector<64x64xf32>, vector<64x128xf32>, vector<64x128xf32> -> vector<64x128xf32>
    %748 = arith.addf %742, %747 : vector<64x128xf32>
    %749 = vector.extract_strided_slice %1 {offsets = [2, 0, 0], sizes = [1, 64, 64], strides = [1, 1, 1]} : vector<3x64x64xf32> to vector<1x64x64xf32>
    %750 = vector.shape_cast %749 : vector<1x64x64xf32> to vector<64x64xf32>
    %c11_256 = arith.constant 11 : index
    %c0_257 = arith.constant 0 : index
    %c0_258 = arith.constant 0 : index
    %751 = vector.load %arg7[%c11_256, %c0_257, %c0_258] : memref<16x64x128xf32, #tpu.memory_space<vmem>>, vector<1x64x128xf32>
    %752 = vector.shape_cast %751 : vector<1x64x128xf32> to vector<64x128xf32>
    %cst_259 = arith.constant dense<0.000000e+00> : vector<64x128xf32>
    %753 = tpu.matmul %750, %752, %cst_259 {dimension_numbers = #tpu.dot_dimension_numbers<[1], [0], [0], [1], [0, 0, 1, 1], [], []>} : vector<64x64xf32>, vector<64x128xf32>, vector<64x128xf32> -> vector<64x128xf32>
    %754 = arith.addf %748, %753 : vector<64x128xf32>
    %755 = arith.addf %754, %7 : vector<64x128xf32>
    %cst_260 = arith.constant 0.000000e+00 : f32
    %756 = vector.broadcast %cst_260 : f32 to vector<64x128xf32>
    %757 = arith.maximumf %755, %756 : vector<64x128xf32>
    %cst_261 = arith.constant dense<0.000000e+00> : vector<128xf32>
    %758 = vector.multi_reduction <add>, %757, %cst_261 [0] : vector<64x128xf32> to vector<128xf32>
    %759 = vector.shape_cast %758 : vector<128xf32> to vector<1x128xf32>
    %cst_262 = arith.constant 6.400000e+01 : f32
    %760 = vector.broadcast %cst_262 : f32 to vector<1x128xf32>
    %761 = arith.divf %759, %760 : vector<1x128xf32>
    %cst_263 = arith.constant dense<0xFF800000> : vector<128xf32>
    %762 = vector.multi_reduction <maximumf>, %757, %cst_263 [0] : vector<64x128xf32> to vector<128xf32>
    %763 = vector.shape_cast %762 : vector<128xf32> to vector<1x128xf32>
    %764 = vector.extract_strided_slice %1 {offsets = [0, 0, 0], sizes = [1, 64, 64], strides = [1, 1, 1]} : vector<3x64x64xf32> to vector<1x64x64xf32>
    %765 = vector.shape_cast %764 : vector<1x64x64xf32> to vector<64x64xf32>
    %c10_264 = arith.constant 10 : index
    %c0_265 = arith.constant 0 : index
    %c0_266 = arith.constant 0 : index
    %766 = vector.load %arg7[%c10_264, %c0_265, %c0_266] : memref<16x64x128xf32, #tpu.memory_space<vmem>>, vector<1x64x128xf32>
    %767 = vector.shape_cast %766 : vector<1x64x128xf32> to vector<64x128xf32>
    %cst_267 = arith.constant dense<0.000000e+00> : vector<64x128xf32>
    %768 = tpu.matmul %765, %767, %cst_267 {dimension_numbers = #tpu.dot_dimension_numbers<[1], [0], [0], [1], [0, 0, 1, 1], [], []>} : vector<64x64xf32>, vector<64x128xf32>, vector<64x128xf32> -> vector<64x128xf32>
    %769 = vector.extract_strided_slice %1 {offsets = [1, 0, 0], sizes = [1, 64, 64], strides = [1, 1, 1]} : vector<3x64x64xf32> to vector<1x64x64xf32>
    %770 = vector.shape_cast %769 : vector<1x64x64xf32> to vector<64x64xf32>
    %c11_268 = arith.constant 11 : index
    %c0_269 = arith.constant 0 : index
    %c0_270 = arith.constant 0 : index
    %771 = vector.load %arg7[%c11_268, %c0_269, %c0_270] : memref<16x64x128xf32, #tpu.memory_space<vmem>>, vector<1x64x128xf32>
    %772 = vector.shape_cast %771 : vector<1x64x128xf32> to vector<64x128xf32>
    %cst_271 = arith.constant dense<0.000000e+00> : vector<64x128xf32>
    %773 = tpu.matmul %770, %772, %cst_271 {dimension_numbers = #tpu.dot_dimension_numbers<[1], [0], [0], [1], [0, 0, 1, 1], [], []>} : vector<64x64xf32>, vector<64x128xf32>, vector<64x128xf32> -> vector<64x128xf32>
    %774 = arith.addf %768, %773 : vector<64x128xf32>
    %775 = vector.extract_strided_slice %1 {offsets = [2, 0, 0], sizes = [1, 64, 64], strides = [1, 1, 1]} : vector<3x64x64xf32> to vector<1x64x64xf32>
    %776 = vector.shape_cast %775 : vector<1x64x64xf32> to vector<64x64xf32>
    %c12_272 = arith.constant 12 : index
    %c0_273 = arith.constant 0 : index
    %c0_274 = arith.constant 0 : index
    %777 = vector.load %arg7[%c12_272, %c0_273, %c0_274] : memref<16x64x128xf32, #tpu.memory_space<vmem>>, vector<1x64x128xf32>
    %778 = vector.shape_cast %777 : vector<1x64x128xf32> to vector<64x128xf32>
    %cst_275 = arith.constant dense<0.000000e+00> : vector<64x128xf32>
    %779 = tpu.matmul %776, %778, %cst_275 {dimension_numbers = #tpu.dot_dimension_numbers<[1], [0], [0], [1], [0, 0, 1, 1], [], []>} : vector<64x64xf32>, vector<64x128xf32>, vector<64x128xf32> -> vector<64x128xf32>
    %780 = arith.addf %774, %779 : vector<64x128xf32>
    %781 = arith.addf %780, %7 : vector<64x128xf32>
    %cst_276 = arith.constant 0.000000e+00 : f32
    %782 = vector.broadcast %cst_276 : f32 to vector<64x128xf32>
    %783 = arith.maximumf %781, %782 : vector<64x128xf32>
    %cst_277 = arith.constant dense<0.000000e+00> : vector<128xf32>
    %784 = vector.multi_reduction <add>, %783, %cst_277 [0] : vector<64x128xf32> to vector<128xf32>
    %785 = vector.shape_cast %784 : vector<128xf32> to vector<1x128xf32>
    %cst_278 = arith.constant 6.400000e+01 : f32
    %786 = vector.broadcast %cst_278 : f32 to vector<1x128xf32>
    %787 = arith.divf %785, %786 : vector<1x128xf32>
    %cst_279 = arith.constant dense<0xFF800000> : vector<128xf32>
    %788 = vector.multi_reduction <maximumf>, %783, %cst_279 [0] : vector<64x128xf32> to vector<128xf32>
    %789 = vector.shape_cast %788 : vector<128xf32> to vector<1x128xf32>
    %790 = vector.extract_strided_slice %1 {offsets = [0, 0, 0], sizes = [1, 64, 64], strides = [1, 1, 1]} : vector<3x64x64xf32> to vector<1x64x64xf32>
    %791 = vector.shape_cast %790 : vector<1x64x64xf32> to vector<64x64xf32>
    %c11_280 = arith.constant 11 : index
    %c0_281 = arith.constant 0 : index
    %c0_282 = arith.constant 0 : index
    %792 = vector.load %arg7[%c11_280, %c0_281, %c0_282] : memref<16x64x128xf32, #tpu.memory_space<vmem>>, vector<1x64x128xf32>
    %793 = vector.shape_cast %792 : vector<1x64x128xf32> to vector<64x128xf32>
    %cst_283 = arith.constant dense<0.000000e+00> : vector<64x128xf32>
    %794 = tpu.matmul %791, %793, %cst_283 {dimension_numbers = #tpu.dot_dimension_numbers<[1], [0], [0], [1], [0, 0, 1, 1], [], []>} : vector<64x64xf32>, vector<64x128xf32>, vector<64x128xf32> -> vector<64x128xf32>
    %795 = vector.extract_strided_slice %1 {offsets = [1, 0, 0], sizes = [1, 64, 64], strides = [1, 1, 1]} : vector<3x64x64xf32> to vector<1x64x64xf32>
    %796 = vector.shape_cast %795 : vector<1x64x64xf32> to vector<64x64xf32>
    %c12_284 = arith.constant 12 : index
    %c0_285 = arith.constant 0 : index
    %c0_286 = arith.constant 0 : index
    %797 = vector.load %arg7[%c12_284, %c0_285, %c0_286] : memref<16x64x128xf32, #tpu.memory_space<vmem>>, vector<1x64x128xf32>
    %798 = vector.shape_cast %797 : vector<1x64x128xf32> to vector<64x128xf32>
    %cst_287 = arith.constant dense<0.000000e+00> : vector<64x128xf32>
    %799 = tpu.matmul %796, %798, %cst_287 {dimension_numbers = #tpu.dot_dimension_numbers<[1], [0], [0], [1], [0, 0, 1, 1], [], []>} : vector<64x64xf32>, vector<64x128xf32>, vector<64x128xf32> -> vector<64x128xf32>
    %800 = arith.addf %794, %799 : vector<64x128xf32>
    %801 = vector.extract_strided_slice %1 {offsets = [2, 0, 0], sizes = [1, 64, 64], strides = [1, 1, 1]} : vector<3x64x64xf32> to vector<1x64x64xf32>
    %802 = vector.shape_cast %801 : vector<1x64x64xf32> to vector<64x64xf32>
    %c13_288 = arith.constant 13 : index
    %c0_289 = arith.constant 0 : index
    %c0_290 = arith.constant 0 : index
    %803 = vector.load %arg7[%c13_288, %c0_289, %c0_290] : memref<16x64x128xf32, #tpu.memory_space<vmem>>, vector<1x64x128xf32>
    %804 = vector.shape_cast %803 : vector<1x64x128xf32> to vector<64x128xf32>
    %cst_291 = arith.constant dense<0.000000e+00> : vector<64x128xf32>
    %805 = tpu.matmul %802, %804, %cst_291 {dimension_numbers = #tpu.dot_dimension_numbers<[1], [0], [0], [1], [0, 0, 1, 1], [], []>} : vector<64x64xf32>, vector<64x128xf32>, vector<64x128xf32> -> vector<64x128xf32>
    %806 = arith.addf %800, %805 : vector<64x128xf32>
    %807 = arith.addf %806, %7 : vector<64x128xf32>
    %cst_292 = arith.constant 0.000000e+00 : f32
    %808 = vector.broadcast %cst_292 : f32 to vector<64x128xf32>
    %809 = arith.maximumf %807, %808 : vector<64x128xf32>
    %cst_293 = arith.constant dense<0.000000e+00> : vector<128xf32>
    %810 = vector.multi_reduction <add>, %809, %cst_293 [0] : vector<64x128xf32> to vector<128xf32>
    %811 = vector.shape_cast %810 : vector<128xf32> to vector<1x128xf32>
    %cst_294 = arith.constant 6.400000e+01 : f32
    %812 = vector.broadcast %cst_294 : f32 to vector<1x128xf32>
    %813 = arith.divf %811, %812 : vector<1x128xf32>
    %cst_295 = arith.constant dense<0xFF800000> : vector<128xf32>
    %814 = vector.multi_reduction <maximumf>, %809, %cst_295 [0] : vector<64x128xf32> to vector<128xf32>
    %815 = vector.shape_cast %814 : vector<128xf32> to vector<1x128xf32>
    %816 = vector.extract_strided_slice %1 {offsets = [0, 0, 0], sizes = [1, 64, 64], strides = [1, 1, 1]} : vector<3x64x64xf32> to vector<1x64x64xf32>
    %817 = vector.shape_cast %816 : vector<1x64x64xf32> to vector<64x64xf32>
    %c12_296 = arith.constant 12 : index
    %c0_297 = arith.constant 0 : index
    %c0_298 = arith.constant 0 : index
    %818 = vector.load %arg7[%c12_296, %c0_297, %c0_298] : memref<16x64x128xf32, #tpu.memory_space<vmem>>, vector<1x64x128xf32>
    %819 = vector.shape_cast %818 : vector<1x64x128xf32> to vector<64x128xf32>
    %cst_299 = arith.constant dense<0.000000e+00> : vector<64x128xf32>
    %820 = tpu.matmul %817, %819, %cst_299 {dimension_numbers = #tpu.dot_dimension_numbers<[1], [0], [0], [1], [0, 0, 1, 1], [], []>} : vector<64x64xf32>, vector<64x128xf32>, vector<64x128xf32> -> vector<64x128xf32>
    %821 = vector.extract_strided_slice %1 {offsets = [1, 0, 0], sizes = [1, 64, 64], strides = [1, 1, 1]} : vector<3x64x64xf32> to vector<1x64x64xf32>
    %822 = vector.shape_cast %821 : vector<1x64x64xf32> to vector<64x64xf32>
    %c13_300 = arith.constant 13 : index
    %c0_301 = arith.constant 0 : index
    %c0_302 = arith.constant 0 : index
    %823 = vector.load %arg7[%c13_300, %c0_301, %c0_302] : memref<16x64x128xf32, #tpu.memory_space<vmem>>, vector<1x64x128xf32>
    %824 = vector.shape_cast %823 : vector<1x64x128xf32> to vector<64x128xf32>
    %cst_303 = arith.constant dense<0.000000e+00> : vector<64x128xf32>
    %825 = tpu.matmul %822, %824, %cst_303 {dimension_numbers = #tpu.dot_dimension_numbers<[1], [0], [0], [1], [0, 0, 1, 1], [], []>} : vector<64x64xf32>, vector<64x128xf32>, vector<64x128xf32> -> vector<64x128xf32>
    %826 = arith.addf %820, %825 : vector<64x128xf32>
    %827 = vector.extract_strided_slice %1 {offsets = [2, 0, 0], sizes = [1, 64, 64], strides = [1, 1, 1]} : vector<3x64x64xf32> to vector<1x64x64xf32>
    %828 = vector.shape_cast %827 : vector<1x64x64xf32> to vector<64x64xf32>
    %c14_304 = arith.constant 14 : index
    %c0_305 = arith.constant 0 : index
    %c0_306 = arith.constant 0 : index
    %829 = vector.load %arg7[%c14_304, %c0_305, %c0_306] : memref<16x64x128xf32, #tpu.memory_space<vmem>>, vector<1x64x128xf32>
    %830 = vector.shape_cast %829 : vector<1x64x128xf32> to vector<64x128xf32>
    %cst_307 = arith.constant dense<0.000000e+00> : vector<64x128xf32>
    %831 = tpu.matmul %828, %830, %cst_307 {dimension_numbers = #tpu.dot_dimension_numbers<[1], [0], [0], [1], [0, 0, 1, 1], [], []>} : vector<64x64xf32>, vector<64x128xf32>, vector<64x128xf32> -> vector<64x128xf32>
    %832 = arith.addf %826, %831 : vector<64x128xf32>
    %833 = arith.addf %832, %7 : vector<64x128xf32>
    %cst_308 = arith.constant 0.000000e+00 : f32
    %834 = vector.broadcast %cst_308 : f32 to vector<64x128xf32>
    %835 = arith.maximumf %833, %834 : vector<64x128xf32>
    %cst_309 = arith.constant dense<0.000000e+00> : vector<128xf32>
    %836 = vector.multi_reduction <add>, %835, %cst_309 [0] : vector<64x128xf32> to vector<128xf32>
    %837 = vector.shape_cast %836 : vector<128xf32> to vector<1x128xf32>
    %cst_310 = arith.constant 6.400000e+01 : f32
    %838 = vector.broadcast %cst_310 : f32 to vector<1x128xf32>
    %839 = arith.divf %837, %838 : vector<1x128xf32>
    %cst_311 = arith.constant dense<0xFF800000> : vector<128xf32>
    %840 = vector.multi_reduction <maximumf>, %835, %cst_311 [0] : vector<64x128xf32> to vector<128xf32>
    %841 = vector.shape_cast %840 : vector<128xf32> to vector<1x128xf32>
    %842 = vector.extract_strided_slice %1 {offsets = [0, 0, 0], sizes = [1, 64, 64], strides = [1, 1, 1]} : vector<3x64x64xf32> to vector<1x64x64xf32>
    %843 = vector.shape_cast %842 : vector<1x64x64xf32> to vector<64x64xf32>
    %c13_312 = arith.constant 13 : index
    %c0_313 = arith.constant 0 : index
    %c0_314 = arith.constant 0 : index
    %844 = vector.load %arg7[%c13_312, %c0_313, %c0_314] : memref<16x64x128xf32, #tpu.memory_space<vmem>>, vector<1x64x128xf32>
    %845 = vector.shape_cast %844 : vector<1x64x128xf32> to vector<64x128xf32>
    %cst_315 = arith.constant dense<0.000000e+00> : vector<64x128xf32>
    %846 = tpu.matmul %843, %845, %cst_315 {dimension_numbers = #tpu.dot_dimension_numbers<[1], [0], [0], [1], [0, 0, 1, 1], [], []>} : vector<64x64xf32>, vector<64x128xf32>, vector<64x128xf32> -> vector<64x128xf32>
    %847 = vector.extract_strided_slice %1 {offsets = [1, 0, 0], sizes = [1, 64, 64], strides = [1, 1, 1]} : vector<3x64x64xf32> to vector<1x64x64xf32>
    %848 = vector.shape_cast %847 : vector<1x64x64xf32> to vector<64x64xf32>
    %c14_316 = arith.constant 14 : index
    %c0_317 = arith.constant 0 : index
    %c0_318 = arith.constant 0 : index
    %849 = vector.load %arg7[%c14_316, %c0_317, %c0_318] : memref<16x64x128xf32, #tpu.memory_space<vmem>>, vector<1x64x128xf32>
    %850 = vector.shape_cast %849 : vector<1x64x128xf32> to vector<64x128xf32>
    %cst_319 = arith.constant dense<0.000000e+00> : vector<64x128xf32>
    %851 = tpu.matmul %848, %850, %cst_319 {dimension_numbers = #tpu.dot_dimension_numbers<[1], [0], [0], [1], [0, 0, 1, 1], [], []>} : vector<64x64xf32>, vector<64x128xf32>, vector<64x128xf32> -> vector<64x128xf32>
    %852 = arith.addf %846, %851 : vector<64x128xf32>
    %853 = vector.extract_strided_slice %1 {offsets = [2, 0, 0], sizes = [1, 64, 64], strides = [1, 1, 1]} : vector<3x64x64xf32> to vector<1x64x64xf32>
    %854 = vector.shape_cast %853 : vector<1x64x64xf32> to vector<64x64xf32>
    %c15_320 = arith.constant 15 : index
    %c0_321 = arith.constant 0 : index
    %c0_322 = arith.constant 0 : index
    %855 = vector.load %arg7[%c15_320, %c0_321, %c0_322] : memref<16x64x128xf32, #tpu.memory_space<vmem>>, vector<1x64x128xf32>
    %856 = vector.shape_cast %855 : vector<1x64x128xf32> to vector<64x128xf32>
    %cst_323 = arith.constant dense<0.000000e+00> : vector<64x128xf32>
    %857 = tpu.matmul %854, %856, %cst_323 {dimension_numbers = #tpu.dot_dimension_numbers<[1], [0], [0], [1], [0, 0, 1, 1], [], []>} : vector<64x64xf32>, vector<64x128xf32>, vector<64x128xf32> -> vector<64x128xf32>
    %858 = arith.addf %852, %857 : vector<64x128xf32>
    %859 = arith.addf %858, %7 : vector<64x128xf32>
    %cst_324 = arith.constant 0.000000e+00 : f32
    %860 = vector.broadcast %cst_324 : f32 to vector<64x128xf32>
    %861 = arith.maximumf %859, %860 : vector<64x128xf32>
    %cst_325 = arith.constant dense<0.000000e+00> : vector<128xf32>
    %862 = vector.multi_reduction <add>, %861, %cst_325 [0] : vector<64x128xf32> to vector<128xf32>
    %863 = vector.shape_cast %862 : vector<128xf32> to vector<1x128xf32>
    %cst_326 = arith.constant 6.400000e+01 : f32
    %864 = vector.broadcast %cst_326 : f32 to vector<1x128xf32>
    %865 = arith.divf %863, %864 : vector<1x128xf32>
    %cst_327 = arith.constant dense<0xFF800000> : vector<128xf32>
    %866 = vector.multi_reduction <maximumf>, %861, %cst_327 [0] : vector<64x128xf32> to vector<128xf32>
    %867 = vector.shape_cast %866 : vector<128xf32> to vector<1x128xf32>
    %868 = tpu.concatenate %527, %553, %579, %605, %631, %657, %683, %709, %735, %761, %787, %813, %839, %865, %529, %555 in 0 : vector<1x128xf32>, vector<1x128xf32>, vector<1x128xf32>, vector<1x128xf32>, vector<1x128xf32>, vector<1x128xf32>, vector<1x128xf32>, vector<1x128xf32>, vector<1x128xf32>, vector<1x128xf32>, vector<1x128xf32>, vector<1x128xf32>, vector<1x128xf32>, vector<1x128xf32>, vector<1x128xf32>, vector<1x128xf32> -> vector<16x128xf32>
    %869 = tpu.concatenate %581, %607, %633, %659, %685, %711, %737, %763, %789, %815, %841, %867 in 0 : vector<1x128xf32>, vector<1x128xf32>, vector<1x128xf32>, vector<1x128xf32>, vector<1x128xf32>, vector<1x128xf32>, vector<1x128xf32>, vector<1x128xf32>, vector<1x128xf32>, vector<1x128xf32>, vector<1x128xf32>, vector<1x128xf32> -> vector<12x128xf32>
    %870 = tpu.concatenate %868, %869 in 0 : vector<16x128xf32>, vector<12x128xf32> -> vector<28x128xf32>
    %c0_328 = arith.constant 0 : index
    %c0_329 = arith.constant 0 : index
    %871 = vector.load %arg6[%c0_328, %c0_329] : memref<28x128xf32, #tpu.memory_space<vmem>>, vector<28x128xf32>
    tpu.vector_store %arg6[%c0_328, %c0_329], %870 {strides = array<i32>} : memref<28x128xf32, #tpu.memory_space<vmem>>, vector<28x128xf32>,
    return
  }
  func.func @transform_0(%arg0: i32) -> (i32, i32, i32) {
    %c0_i32 = arith.constant 0 : i32
    %c0_i32_0 = arith.constant 0 : i32
    %c0_i32_1 = arith.constant 0 : i32
    return %c0_i32, %c0_i32_0, %arg0 : i32, i32, i32
  }
  func.func @transform_1(%arg0: i32) -> (i32, i32) {
    %c0_i32 = arith.constant 0 : i32
    %c0_i32_0 = arith.constant 0 : i32
    %c0_i32_1 = arith.constant 0 : i32
    return %c0_i32, %c0_i32_0 : i32, i32
  }
  func.func @transform_2(%arg0: i32) -> (i32, i32) {
    %c0_i32 = arith.constant 0 : i32
    %c0_i32_0 = arith.constant 0 : i32
    %c0_i32_1 = arith.constant 0 : i32
    return %c0_i32, %c0_i32_0 : i32, i32
  }
  func.func @transform_3(%arg0: i32) -> (i32, i32, i32) {
    %c0_i32 = arith.constant 0 : i32
    %c0_i32_0 = arith.constant 0 : i32
    %c0_i32_1 = arith.constant 0 : i32
    %c0_i32_2 = arith.constant 0 : i32
    return %c0_i32, %c0_i32_0, %c0_i32_1 : i32, i32, i32
  }
  func.func @transform_4(%arg0: i32) -> (i32, i32) {
    %c0_i32 = arith.constant 0 : i32
    %c0_i32_0 = arith.constant 0 : i32
    %c0_i32_1 = arith.constant 0 : i32
    return %c0_i32, %c0_i32_0 : i32, i32
  }
  func.func @transform_5(%arg0: i32) -> (i32, i32) {
    %c0_i32 = arith.constant 0 : i32
    %c0_i32_0 = arith.constant 0 : i32
    return %c0_i32, %arg0 : i32, i32
  }
}

</mosaic_0001>

<llo_original>
// kernel: tpu_custom_call.1
$region0: #{tpu_custom_call.1}
  #allocation0 [shape = 'u32[]', space=smem, size = 0x4, offset = 0x4, fixed_abs, tag = 'smem constant byte address 0x4 - core index']
  #allocation1 [shape = 'u32[144,128]{1,0:T(1,128)}', space=vmem, size = 0x12000, scoped, tag = 'internal scratch']
  #allocation2 [shape = 'f32[16,64,128]{2,1,0:T(8,128)}', space=vmem, size = 0x80000, scoped, tag = 'scratch operand']
  %s0 = inlined_call_operand.hbm [shape: f32[16,4,128], index: 0, kind: input, shape index: {}]
  %s1 = inlined_call_operand.vmem [shape: f32[64,4], index: 1, kind: input, shape index: {}]
  %s2 = inlined_call_operand.vmem [shape: f32[64,1], index: 2, kind: input, shape index: {}]
  %s3 = inlined_call_operand.vmem [shape: f32[3,64,64], index: 3, kind: input, shape index: {}]
  %s4 = inlined_call_operand.vmem [shape: f32[64,1], index: 4, kind: input, shape index: {}]
  %s5 = inlined_call_operand.hbm [shape: f32[28,128], index: 5, kind: output, shape index: {}]
  %s6 = sld [smem:[#allocation0]]
  $region34: #{tpu_custom_call.1} parent=0
    _
  %s8 = ssub.s32 1, %s6
  %s9 = scalar_select 0, %s8, %s6
  $region1: #{tpu_custom_call.1} parent=0
    #allocation3 [shape = 'u8[32768]{0}', space=vmem, size = 0x8000, scoped, tag = 'input window, operand 0, single buffered']
    #allocation4 [shape = 's32[1]{0}', space=sflag, size = 0x4, scoped, tag = 'scoped memory for tpu_custom_call.1']
    #allocation5 [shape = 's32[1]{0}', space=sflag, size = 0x4, scoped, tag = 'scoped memory for tpu_custom_call.1']
    #allocation6 [shape = 'u8[16384]{0}', space=vmem, size = 0x4000, scoped, tag = 'output window, operand 0, single buffered']
    %10 = vsyncpa [#allocation4], 0
    %11 = vsyncpa [#allocation5], 0
    // Predicated region
    $region2: #{tpu_custom_call.1} parent=1 // pred_check
      _
    $region3: #{tpu_custom_call.1} parent=1 // pred_check_branch
      %13 = sbr.rel (0) target = $region5
    $region4: #{tpu_custom_call.1} parent=1 // pred_region
      %s15 = ssub.s32 1024, 1024
      %16 = vsyncadd [#allocation4], %s15
      %s17 = sshll.u32 [#allocation3], 4
      %s18 = int_to_ptr.vmem [resolvable:$true] %s17
      %23 = dma.hbm_to_vmem [thread:$0]  %s0, 1024, %s18, [#allocation4], 64, 64, 4
    $region5: #{tpu_custom_call.1} parent=1 // pred_fallthru
      _
    // Predicated region
    $region6: #{tpu_custom_call.1} parent=1 // pred_check
      _
    $region7: #{tpu_custom_call.1} parent=1 // pred_check_branch
      %25 = sbr.rel (0) target = $region9
    $region8: #{tpu_custom_call.1} parent=1 // pred_region
      _
    $region9: #{tpu_custom_call.1} parent=1 // pred_fallthru
      _
    // Predicated region
    $region10: #{tpu_custom_call.1} parent=1 // pred_check
      _
    $region11: #{tpu_custom_call.1} parent=1 // pred_check_branch
      %27 = sbr.rel (0) target = $region13
    $region12: #{tpu_custom_call.1} parent=1 // pred_region
      _
    $region13: #{tpu_custom_call.1} parent=1 // pred_fallthru
      _
    // Predicated region
    $region14: #{tpu_custom_call.1} parent=1 // pred_check
      _
    $region15: #{tpu_custom_call.1} parent=1 // pred_check_branch
      %29 = sbr.rel (0) target = $region17
    $region16: #{tpu_custom_call.1} parent=1 // pred_region
      _
    $region17: #{tpu_custom_call.1} parent=1 // pred_fallthru
      _
    // Predicated region
    $region18: #{tpu_custom_call.1} parent=1 // pred_check
      _
    $region19: #{tpu_custom_call.1} parent=1 // pred_check_branch
      %31 = sbr.rel (0) target = $region21
    $region20: #{tpu_custom_call.1} parent=1 // pred_region
      _
    $region21: #{tpu_custom_call.1} parent=1 // pred_fallthru
      _
    // Predicated region
    $region22: #{tpu_custom_call.1} parent=1 // pred_check
      _
    $region23: #{tpu_custom_call.1} parent=1 // pred_check_branch
      %33 = sbr.rel (0) target = $region25
    $region24: #{tpu_custom_call.1} parent=1 // pred_region
      %34 = dma.done [#allocation4], 1024
    $region25: #{tpu_custom_call.1} parent=1 // pred_fallthru
      _
    %v35 = vld [vmem:[%s1] sm:$0xff]
    %v36 = vld [vmem:[%s1 + $0x8] sm:$0xff]
    %v37 = vld [vmem:[%s1 + $0x10] sm:$0xff]
    %v38 = vld [vmem:[%s1 + $0x18] sm:$0xff]
    %v39 = vld [vmem:[%s1 + $0x20] sm:$0xff]
    %v40 = vld [vmem:[%s1 + $0x28] sm:$0xff]
    %v41 = vld [vmem:[%s1 + $0x30] sm:$0xff]
    %v42 = vld [vmem:[%s1 + $0x38] sm:$0xff]
    %v43 = vld [vmem:[%s3] sm:$0xff]
    %v44 = vld [vmem:[%s3 + $0x8] sm:$0xff]
    %v45 = vld [vmem:[%s3 + $0x10] sm:$0xff]
    %v46 = vld [vmem:[%s3 + $0x18] sm:$0xff]
    %v47 = vld [vmem:[%s3 + $0x20] sm:$0xff]
    %v48 = vld [vmem:[%s3 + $0x28] sm:$0xff]
    %v49 = vld [vmem:[%s3 + $0x30] sm:$0xff]
    %v50 = vld [vmem:[%s3 + $0x38] sm:$0xff]
    %v51 = vld [vmem:[%s3 + $0x40] sm:$0xff]
    %v52 = vld [vmem:[%s3 + $0x48] sm:$0xff]
    %v53 = vld [vmem:[%s3 + $0x50] sm:$0xff]
    %v54 = vld [vmem:[%s3 + $0x58] sm:$0xff]
    %v55 = vld [vmem:[%s3 + $0x60] sm:$0xff]
    %v56 = vld [vmem:[%s3 + $0x68] sm:$0xff]
    %v57 = vld [vmem:[%s3 + $0x70] sm:$0xff]
    %v58 = vld [vmem:[%s3 + $0x78] sm:$0xff]
    %v59 = vld [vmem:[%s3 + $0x80] sm:$0xff]
    %v60 = vld [vmem:[%s3 + $0x88] sm:$0xff]
    %v61 = vld [vmem:[%s3 + $0x90] sm:$0xff]
    %v62 = vld [vmem:[%s3 + $0x98] sm:$0xff]
    %v63 = vld [vmem:[%s3 + $0xa0] sm:$0xff]
    %v64 = vld [vmem:[%s3 + $0xa8] sm:$0xff]
    %v65 = vld [vmem:[%s3 + $0xb0] sm:$0xff]
    %v66 = vld [vmem:[%s3 + $0xb8] sm:$0xff]
    %v67 = vld [vmem:[%s2] sm:$0xff]
    %v68 = vld [vmem:[%s2 + $0x8] sm:$0xff]
    %v69 = vld [vmem:[%s2 + $0x10] sm:$0xff]
    %v70 = vld [vmem:[%s2 + $0x18] sm:$0xff]
    %v71 = vld [vmem:[%s2 + $0x20] sm:$0xff]
    %v72 = vld [vmem:[%s2 + $0x28] sm:$0xff]
    %v73 = vld [vmem:[%s2 + $0x30] sm:$0xff]
    %v74 = vld [vmem:[%s2 + $0x38] sm:$0xff]
    %76 = vset.pattern.permute.xlu0 0
    %77 = vperm.xlu0 %76, %v67
    %v78 = vpop.permute.xlu0 %77
    %81 = vset.pattern.permute.xlu0 0
    %82 = vperm.xlu0 %81, %v68
    %v83 = vpop.permute.xlu0 %82
    %86 = vset.pattern.permute.xlu0 0
    %87 = vperm.xlu0 %86, %v69
    %v88 = vpop.permute.xlu0 %87
    %91 = vset.pattern.permute.xlu0 0
    %92 = vperm.xlu0 %91, %v70
    %v93 = vpop.permute.xlu0 %92
    %96 = vset.pattern.permute.xlu0 0
    %97 = vperm.xlu0 %96, %v71
    %v98 = vpop.permute.xlu0 %97
    %101 = vset.pattern.permute.xlu0 0
    %102 = vperm.xlu0 %101, %v72
    %v103 = vpop.permute.xlu0 %102
    %106 = vset.pattern.permute.xlu0 0
    %107 = vperm.xlu0 %106, %v73
    %v108 = vpop.permute.xlu0 %107
    %111 = vset.pattern.permute.xlu0 0
    %112 = vperm.xlu0 %111, %v74
    %v113 = vpop.permute.xlu0 %112
    %v115 = vld [vmem:[%s4] sm:$0xff]
    %v116 = vld [vmem:[%s4 + $0x8] sm:$0xff]
    %v117 = vld [vmem:[%s4 + $0x10] sm:$0xff]
    %v118 = vld [vmem:[%s4 + $0x18] sm:$0xff]
    %v119 = vld [vmem:[%s4 + $0x20] sm:$0xff]
    %v120 = vld [vmem:[%s4 + $0x28] sm:$0xff]
    %v121 = vld [vmem:[%s4 + $0x30] sm:$0xff]
    %v122 = vld [vmem:[%s4 + $0x38] sm:$0xff]
    %124 = vset.pattern.permute.xlu0 0
    %125 = vperm.xlu0 %124, %v115
    %v126 = vpop.permute.xlu0 %125
    %129 = vset.pattern.permute.xlu0 0
    %130 = vperm.xlu0 %129, %v116
    %v131 = vpop.permute.xlu0 %130
    %134 = vset.pattern.permute.xlu0 0
    %135 = vperm.xlu0 %134, %v117
    %v136 = vpop.permute.xlu0 %135
    %139 = vset.pattern.permute.xlu0 0
    %140 = vperm.xlu0 %139, %v118
    %v141 = vpop.permute.xlu0 %140
    %144 = vset.pattern.permute.xlu0 0
    %145 = vperm.xlu0 %144, %v119
    %v146 = vpop.permute.xlu0 %145
    %149 = vset.pattern.permute.xlu0 0
    %150 = vperm.xlu0 %149, %v120
    %v151 = vpop.permute.xlu0 %150
    %154 = vset.pattern.permute.xlu0 0
    %155 = vperm.xlu0 %154, %v121
    %v156 = vpop.permute.xlu0 %155
    %159 = vset.pattern.permute.xlu0 0
    %160 = vperm.xlu0 %159, %v122
    %v161 = vpop.permute.xlu0 %160
    %v163 = vld [vmem:[#allocation3] sm:$0xf]
    %165 = vset.pattern.permute.xlu0 0
    %166 = vperm.xlu0 %165, %v35
    %v167 = vpop.permute.xlu0 %166
    %170 = vset.pattern.permute.xlu0 0
    %171 = vperm.xlu0 %170, %v36
    %v172 = vpop.permute.xlu0 %171
    %175 = vset.pattern.permute.xlu0 0
    %176 = vperm.xlu0 %175, %v37
    %v177 = vpop.permute.xlu0 %176
    %180 = vset.pattern.permute.xlu0 0
    %181 = vperm.xlu0 %180, %v38
    %v182 = vpop.permute.xlu0 %181
    %185 = vset.pattern.permute.xlu0 0
    %186 = vperm.xlu0 %185, %v39
    %v187 = vpop.permute.xlu0 %186
    %190 = vset.pattern.permute.xlu0 0
    %191 = vperm.xlu0 %190, %v40
    %v192 = vpop.permute.xlu0 %191
    %195 = vset.pattern.permute.xlu0 0
    %196 = vperm.xlu0 %195, %v41
    %v197 = vpop.permute.xlu0 %196
    %200 = vset.pattern.permute.xlu0 0
    %201 = vperm.xlu0 %200, %v42
    %v202 = vpop.permute.xlu0 %201
    %v204 = vlaneseq
    %v205 = vshrl.u32 %v204, 7
    %v206 = vsub.s32 0, %v205
    %v207 = vrot.slane %v163, %v206
    %v208 = vmul.f32 %v167, %v207
    %v209 = vmul.f32 %v172, %v207
    %v210 = vmul.f32 %v177, %v207
    %v211 = vmul.f32 %v182, %v207
    %v212 = vmul.f32 %v187, %v207
    %v213 = vmul.f32 %v192, %v207
    %v214 = vmul.f32 %v197, %v207
    %v215 = vmul.f32 %v202, %v207
    %216 = vset.pattern.permute.xlu0 1
    %217 = vperm.xlu0 %216, %v35
    %v218 = vpop.permute.xlu0 %217
    %220 = vset.pattern.permute.xlu0 1
    %221 = vperm.xlu0 %220, %v36
    %v222 = vpop.permute.xlu0 %221
    %224 = vset.pattern.permute.xlu0 1
    %225 = vperm.xlu0 %224, %v37
    %v226 = vpop.permute.xlu0 %225
    %228 = vset.pattern.permute.xlu0 1
    %229 = vperm.xlu0 %228, %v38
    %v230 = vpop.permute.xlu0 %229
    %232 = vset.pattern.permute.xlu0 1
    %233 = vperm.xlu0 %232, %v39
    %v234 = vpop.permute.xlu0 %233
    %236 = vset.pattern.permute.xlu0 1
    %237 = vperm.xlu0 %236, %v40
    %v238 = vpop.permute.xlu0 %237
    %240 = vset.pattern.permute.xlu0 1
    %241 = vperm.xlu0 %240, %v41
    %v242 = vpop.permute.xlu0 %241
    %244 = vset.pattern.permute.xlu0 1
    %245 = vperm.xlu0 %244, %v42
    %v246 = vpop.permute.xlu0 %245
    %v248 = vlaneseq
    %v249 = vshrl.u32 %v248, 7
    %v250 = vsub.s32 1, %v249
    %v251 = vrot.slane %v163, %v250
    %v252 = vmul.f32 %v218, %v251
    %v253 = vmul.f32 %v222, %v251
    %v254 = vmul.f32 %v226, %v251
    %v255 = vmul.f32 %v230, %v251
    %v256 = vmul.f32 %v234, %v251
    %v257 = vmul.f32 %v238, %v251
    %v258 = vmul.f32 %v242, %v251
    %v259 = vmul.f32 %v246, %v251
    %v260 = vadd.f32 %v208, %v252
    %v261 = vadd.f32 %v209, %v253
    %v262 = vadd.f32 %v210, %v254
    %v263 = vadd.f32 %v211, %v255
    %v264 = vadd.f32 %v212, %v256
    %v265 = vadd.f32 %v213, %v257
    %v266 = vadd.f32 %v214, %v258
    %v267 = vadd.f32 %v215, %v259
    %268 = vset.pattern.permute.xlu0 2
    %269 = vperm.xlu0 %268, %v35
    %v270 = vpop.permute.xlu0 %269
    %272 = vset.pattern.permute.xlu0 2
    %273 = vperm.xlu0 %272, %v36
    %v274 = vpop.permute.xlu0 %273
    %276 = vset.pattern.permute.xlu0 2
    %277 = vperm.xlu0 %276, %v37
    %v278 = vpop.permute.xlu0 %277
    %280 = vset.pattern.permute.xlu0 2
    %281 = vperm.xlu0 %280, %v38
    %v282 = vpop.permute.xlu0 %281
    %284 = vset.pattern.permute.xlu0 2
    %285 = vperm.xlu0 %284, %v39
    %v286 = vpop.permute.xlu0 %285
    %288 = vset.pattern.permute.xlu0 2
    %289 = vperm.xlu0 %288, %v40
    %v290 = vpop.permute.xlu0 %289
    %292 = vset.pattern.permute.xlu0 2
    %293 = vperm.xlu0 %292, %v41
    %v294 = vpop.permute.xlu0 %293
    %296 = vset.pattern.permute.xlu0 2
    %297 = vperm.xlu0 %296, %v42
    %v298 = vpop.permute.xlu0 %297
    %v300 = vlaneseq
    %v301 = vshrl.u32 %v300, 7
    %v302 = vsub.s32 2, %v301
    %v303 = vrot.slane %v163, %v302
    %v304 = vmul.f32 %v270, %v303
    %v305 = vmul.f32 %v274, %v303
    %v306 = vmul.f32 %v278, %v303
    %v307 = vmul.f32 %v282, %v303
    %v308 = vmul.f32 %v286, %v303
    %v309 = vmul.f32 %v290, %v303
    %v310 = vmul.f32 %v294, %v303
    %v311 = vmul.f32 %v298, %v303
    %v312 = vadd.f32 %v260, %v304
    %v313 = vadd.f32 %v261, %v305
    %v314 = vadd.f32 %v262, %v306
    %v315 = vadd.f32 %v263, %v307
    %v316 = vadd.f32 %v264, %v308
    %v317 = vadd.f32 %v265, %v309
    %v318 = vadd.f32 %v266, %v310
    %v319 = vadd.f32 %v267, %v311
    %320 = vset.pattern.permute.xlu0 3
    %321 = vperm.xlu0 %320, %v35
    %v322 = vpop.permute.xlu0 %321
    %324 = vset.pattern.permute.xlu0 3
    %325 = vperm.xlu0 %324, %v36
    %v326 = vpop.permute.xlu0 %325
    %328 = vset.pattern.permute.xlu0 3
    %329 = vperm.xlu0 %328, %v37
    %v330 = vpop.permute.xlu0 %329
    %332 = vset.pattern.permute.xlu0 3
    %333 = vperm.xlu0 %332, %v38
    %v334 = vpop.permute.xlu0 %333
    %336 = vset.pattern.permute.xlu0 3
    %337 = vperm.xlu0 %336, %v39
    %v338 = vpop.permute.xlu0 %337
    %340 = vset.pattern.permute.xlu0 3
    %341 = vperm.xlu0 %340, %v40
    %v342 = vpop.permute.xlu0 %341
    %344 = vset.pattern.permute.xlu0 3
    %345 = vperm.xlu0 %344, %v41
    %v346 = vpop.permute.xlu0 %345
    %348 = vset.pattern.permute.xlu0 3
    %349 = vperm.xlu0 %348, %v42
    %v350 = vpop.permute.xlu0 %349
    %v352 = vlaneseq
    %v353 = vshrl.u32 %v352, 7
    %v354 = vsub.s32 3, %v353
    %v355 = vrot.slane %v163, %v354
    %v356 = vmul.f32 %v322, %v355
    %v357 = vmul.f32 %v326, %v355
    %v358 = vmul.f32 %v330, %v355
    %v359 = vmul.f32 %v334, %v355
    %v360 = vmul.f32 %v338, %v355
    %v361 = vmul.f32 %v342, %v355
    %v362 = vmul.f32 %v346, %v355
    %v363 = vmul.f32 %v350, %v355
    %v364 = vadd.f32 %v312, %v356
    %v365 = vadd.f32 %v313, %v357
    %v366 = vadd.f32 %v314, %v358
    %v367 = vadd.f32 %v315, %v359
    %v368 = vadd.f32 %v316, %v360
    %v369 = vadd.f32 %v317, %v361
    %v370 = vadd.f32 %v318, %v362
    %v371 = vadd.f32 %v319, %v363
    %v372 = vadd.f32 %v364, %v78
    %v373 = vadd.f32 %v365, %v83
    %v374 = vadd.f32 %v366, %v88
    %v375 = vadd.f32 %v367, %v93
    %v376 = vadd.f32 %v368, %v98
    %v377 = vadd.f32 %v369, %v103
    %v378 = vadd.f32 %v370, %v108
    %v379 = vadd.f32 %v371, %v113
    %v380 = vmax.f32 %v372, 0.0
    %v381 = vmax.f32 %v373, 0.0
    %v382 = vmax.f32 %v374, 0.0
    %v383 = vmax.f32 %v375, 0.0
    %v384 = vmax.f32 %v376, 0.0
    %v385 = vmax.f32 %v377, 0.0
    %v386 = vmax.f32 %v378, 0.0
    %v387 = vmax.f32 %v379, 0.0
    %388 = vst [vmem:[#allocation2] sm:$0xff] %v380
    %389 = vst [vmem:[#allocation2 + $0x8] sm:$0xff] %v381
    %390 = vst [vmem:[#allocation2 + $0x10] sm:$0xff] %v382
    %391 = vst [vmem:[#allocation2 + $0x18] sm:$0xff] %v383
    %392 = vst [vmem:[#allocation2 + $0x20] sm:$0xff] %v384
    %393 = vst [vmem:[#allocation2 + $0x28] sm:$0xff] %v385
    %394 = vst [vmem:[#allocation2 + $0x30] sm:$0xff] %v386
    %395 = vst [vmem:[#allocation2 + $0x38] sm:$0xff] %v387
    %s396 = scalar_lea.vmem [#allocation3], 4
    %v397 = vld [vmem:[%s396] sm:$0xf]
    %v398 = vlaneseq
    %v399 = vshrl.u32 %v398, 7
    %v400 = vsub.s32 0, %v399
    %v401 = vrot.slane %v397, %v400
    %v402 = vmul.f32 %v167, %v401
    %v403 = vmul.f32 %v172, %v401
    %v404 = vmul.f32 %v177, %v401
    %v405 = vmul.f32 %v182, %v401
    %v406 = vmul.f32 %v187, %v401
    %v407 = vmul.f32 %v192, %v401
    %v408 = vmul.f32 %v197, %v401
    %v409 = vmul.f32 %v202, %v401
    %v410 = vlaneseq
    %v411 = vshrl.u32 %v410, 7
    %v412 = vsub.s32 1, %v411
    %v413 = vrot.slane %v397, %v412
    %v414 = vmul.f32 %v218, %v413
    %v415 = vmul.f32 %v222, %v413
    %v416 = vmul.f32 %v226, %v413
    %v417 = vmul.f32 %v230, %v413
    %v418 = vmul.f32 %v234, %v413
    %v419 = vmul.f32 %v238, %v413
    %v420 = vmul.f32 %v242, %v413
    %v421 = vmul.f32 %v246, %v413
    %v422 = vadd.f32 %v402, %v414
    %v423 = vadd.f32 %v403, %v415
    %v424 = vadd.f32 %v404, %v416
    %v425 = vadd.f32 %v405, %v417
    %v426 = vadd.f32 %v406, %v418
    %v427 = vadd.f32 %v407, %v419
    %v428 = vadd.f32 %v408, %v420
    %v429 = vadd.f32 %v409, %v421
    %v430 = vlaneseq
    %v431 = vshrl.u32 %v430, 7
    %v432 = vsub.s32 2, %v431
    %v433 = vrot.slane %v397, %v432
    %v434 = vmul.f32 %v270, %v433
    %v435 = vmul.f32 %v274, %v433
    %v436 = vmul.f32 %v278, %v433
    %v437 = vmul.f32 %v282, %v433
    %v438 = vmul.f32 %v286, %v433
    %v439 = vmul.f32 %v290, %v433
    %v440 = vmul.f32 %v294, %v433
    %v441 = vmul.f32 %v298, %v433
    %v442 = vadd.f32 %v422, %v434
    %v443 = vadd.f32 %v423, %v435
    %v444 = vadd.f32 %v424, %v436
    %v445 = vadd.f32 %v425, %v437
    %v446 = vadd.f32 %v426, %v438
    %v447 = vadd.f32 %v427, %v439
    %v448 = vadd.f32 %v428, %v440
    %v449 = vadd.f32 %v429, %v441
    %v450 = vlaneseq
    %v451 = vshrl.u32 %v450, 7
    %v452 = vsub.s32 3, %v451
    %v453 = vrot.slane %v397, %v452
    %v454 = vmul.f32 %v322, %v453
    %v455 = vmul.f32 %v326, %v453
    %v456 = vmul.f32 %v330, %v453
    %v457 = vmul.f32 %v334, %v453
    %v458 = vmul.f32 %v338, %v453
    %v459 = vmul.f32 %v342, %v453
    %v460 = vmul.f32 %v346, %v453
    %v461 = vmul.f32 %v350, %v453
    %v462 = vadd.f32 %v442, %v454
    %v463 = vadd.f32 %v443, %v455
    %v464 = vadd.f32 %v444, %v456
    %v465 = vadd.f32 %v445, %v457
    %v466 = vadd.f32 %v446, %v458
    %v467 = vadd.f32 %v447, %v459
    %v468 = vadd.f32 %v448, %v460
    %v469 = vadd.f32 %v449, %v461
    %v470 = vadd.f32 %v462, %v78
    %v471 = vadd.f32 %v463, %v83
    %v472 = vadd.f32 %v464, %v88
    %v473 = vadd.f32 %v465, %v93
    %v474 = vadd.f32 %v466, %v98
    %v475 = vadd.f32 %v467, %v103
    %v476 = vadd.f32 %v468, %v108
    %v477 = vadd.f32 %v469, %v113
    %v478 = vmax.f32 %v470, 0.0
    %v479 = vmax.f32 %v471, 0.0
    %v480 = vmax.f32 %v472, 0.0
    %v481 = vmax.f32 %v473, 0.0
    %v482 = vmax.f32 %v474, 0.0
    %v483 = vmax.f32 %v475, 0.0
    %v484 = vmax.f32 %v476, 0.0
    %v485 = vmax.f32 %v477, 0.0
    %s486 = scalar_lea.vmem [#allocation2], 64
    %487 = vst [vmem:[%s486] sm:$0xff] %v478
    %488 = vst [vmem:[%s486 + $0x8] sm:$0xff] %v479
    %489 = vst [vmem:[%s486 + $0x10] sm:$0xff] %v480
    %490 = vst [vmem:[%s486 + $0x18] sm:$0xff] %v481
    %491 = vst [vmem:[%s486 + $0x20] sm:$0xff] %v482
    %492 = vst [vmem:[%s486 + $0x28] sm:$0xff] %v483
    %493 = vst [vmem:[%s486 + $0x30] sm:$0xff] %v484
    %494 = vst [vmem:[%s486 + $0x38] sm:$0xff] %v485
    %s495 = scalar_lea.vmem [#allocation3], 8
    %v496 = vld [vmem:[%s495] sm:$0xf]
    %v497 = vlaneseq
    %v498 = vshrl.u32 %v497, 7
    %v499 = vsub.s32 0, %v498
    %v500 = vrot.slane %v496, %v499
    %v501 = vmul.f32 %v167, %v500
    %v502 = vmul.f32 %v172, %v500
    %v503 = vmul.f32 %v177, %v500
    %v504 = vmul.f32 %v182, %v500
    %v505 = vmul.f32 %v187, %v500
    %v506 = vmul.f32 %v192, %v500
    %v507 = vmul.f32 %v197, %v500
    %v508 = vmul.f32 %v202, %v500
    %v509 = vlaneseq
    %v510 = vshrl.u32 %v509, 7
    %v511 = vsub.s32 1, %v510
    %v512 = vrot.slane %v496, %v511
    %v513 = vmul.f32 %v218, %v512
    %v514 = vmul.f32 %v222, %v512
    %v515 = vmul.f32 %v226, %v512
    %v516 = vmul.f32 %v230, %v512
    %v517 = vmul.f32 %v234, %v512
    %v518 = vmul.f32 %v238, %v512
    %v519 = vmul.f32 %v242, %v512
    %v520 = vmul.f32 %v246, %v512
    %v521 = vadd.f32 %v501, %v513
    %v522 = vadd.f32 %v502, %v514
    %v523 = vadd.f32 %v503, %v515
    %v524 = vadd.f32 %v504, %v516
    %v525 = vadd.f32 %v505, %v517
    %v526 = vadd.f32 %v506, %v518
    %v527 = vadd.f32 %v507, %v519
    %v528 = vadd.f32 %v508, %v520
    %v529 = vlaneseq
    %v530 = vshrl.u32 %v529, 7
    %v531 = vsub.s32 2, %v530
    %v532 = vrot.slane %v496, %v531
    %v533 = vmul.f32 %v270, %v532
    %v534 = vmul.f32 %v274, %v532
    %v535 = vmul.f32 %v278, %v532
    %v536 = vmul.f32 %v282, %v532
    %v537 = vmul.f32 %v286, %v532
    %v538 = vmul.f32 %v290, %v532
    %v539 = vmul.f32 %v294, %v532
    %v540 = vmul.f32 %v298, %v532
    %v541 = vadd.f32 %v521, %v533
    %v542 = vadd.f32 %v522, %v534
    %v543 = vadd.f32 %v523, %v535
    %v544 = vadd.f32 %v524, %v536
    %v545 = vadd.f32 %v525, %v537
    %v546 = vadd.f32 %v526, %v538
    %v547 = vadd.f32 %v527, %v539
    %v548 = vadd.f32 %v528, %v540
    %v549 = vlaneseq
    %v550 = vshrl.u32 %v549, 7
    %v551 = vsub.s32 3, %v550
    %v552 = vrot.slane %v496, %v551
    %v553 = vmul.f32 %v322, %v552
    %v554 = vmul.f32 %v326, %v552
    %v555 = vmul.f32 %v330, %v552
    %v556 = vmul.f32 %v334, %v552
    %v557 = vmul.f32 %v338, %v552
    %v558 = vmul.f32 %v342, %v552
    %v559 = vmul.f32 %v346, %v552
    %v560 = vmul.f32 %v350, %v552
    %v561 = vadd.f32 %v541, %v553
    %v562 = vadd.f32 %v542, %v554
    %v563 = vadd.f32 %v543, %v555
    %v564 = vadd.f32 %v544, %v556
    %v565 = vadd.f32 %v545, %v557
    %v566 = vadd.f32 %v546, %v558
    %v567 = vadd.f32 %v547, %v559
    %v568 = vadd.f32 %v548, %v560
    %v569 = vadd.f32 %v561, %v78
    %v570 = vadd.f32 %v562, %v83
    %v571 = vadd.f32 %v563, %v88
    %v572 = vadd.f32 %v564, %v93
    %v573 = vadd.f32 %v565, %v98
    %v574 = vadd.f32 %v566, %v103
    %v575 = vadd.f32 %v567, %v108
    %v576 = vadd.f32 %v568, %v113
    %v577 = vmax.f32 %v569, 0.0
    %v578 = vmax.f32 %v570, 0.0
    %v579 = vmax.f32 %v571, 0.0
    %v580 = vmax.f32 %v572, 0.0
    %v581 = vmax.f32 %v573, 0.0
    %v582 = vmax.f32 %v574, 0.0
    %v583 = vmax.f32 %v575, 0.0
    %v584 = vmax.f32 %v576, 0.0
    %s585 = scalar_lea.vmem [#allocation2], 128
    %586 = vst [vmem:[%s585] sm:$0xff] %v577
    %587 = vst [vmem:[%s585 + $0x8] sm:$0xff] %v578
    %588 = vst [vmem:[%s585 + $0x10] sm:$0xff] %v579
    %589 = vst [vmem:[%s585 + $0x18] sm:$0xff] %v580
    %590 = vst [vmem:[%s585 + $0x20] sm:$0xff] %v581
    %591 = vst [vmem:[%s585 + $0x28] sm:$0xff] %v582
    %592 = vst [vmem:[%s585 + $0x30] sm:$0xff] %v583
    %593 = vst [vmem:[%s585 + $0x38] sm:$0xff] %v584
    %s594 = scalar_lea.vmem [#allocation3], 12
    %v595 = vld [vmem:[%s594] sm:$0xf]
    %v596 = vlaneseq
    %v597 = vshrl.u32 %v596, 7
    %v598 = vsub.s32 0, %v597
    %v599 = vrot.slane %v595, %v598
    %v600 = vmul.f32 %v167, %v599
    %v601 = vmul.f32 %v172, %v599
    %v602 = vmul.f32 %v177, %v599
    %v603 = vmul.f32 %v182, %v599
    %v604 = vmul.f32 %v187, %v599
    %v605 = vmul.f32 %v192, %v599
    %v606 = vmul.f32 %v197, %v599
    %v607 = vmul.f32 %v202, %v599
    %v608 = vlaneseq
    %v609 = vshrl.u32 %v608, 7
    %v610 = vsub.s32 1, %v609
    %v611 = vrot.slane %v595, %v610
    %v612 = vmul.f32 %v218, %v611
    %v613 = vmul.f32 %v222, %v611
    %v614 = vmul.f32 %v226, %v611
    %v615 = vmul.f32 %v230, %v611
    %v616 = vmul.f32 %v234, %v611
    %v617 = vmul.f32 %v238, %v611
    %v618 = vmul.f32 %v242, %v611
    %v619 = vmul.f32 %v246, %v611
    %v620 = vadd.f32 %v600, %v612
    %v621 = vadd.f32 %v601, %v613
    %v622 = vadd.f32 %v602, %v614
    %v623 = vadd.f32 %v603, %v615
    %v624 = vadd.f32 %v604, %v616
    %v625 = vadd.f32 %v605, %v617
    %v626 = vadd.f32 %v606, %v618
    %v627 = vadd.f32 %v607, %v619
    %v628 = vlaneseq
    %v629 = vshrl.u32 %v628, 7
    %v630 = vsub.s32 2, %v629
    %v631 = vrot.slane %v595, %v630
    %v632 = vmul.f32 %v270, %v631
    %v633 = vmul.f32 %v274, %v631
    %v634 = vmul.f32 %v278, %v631
    %v635 = vmul.f32 %v282, %v631
    %v636 = vmul.f32 %v286, %v631
    %v637 = vmul.f32 %v290, %v631
    %v638 = vmul.f32 %v294, %v631
    %v639 = vmul.f32 %v298, %v631
    %v640 = vadd.f32 %v620, %v632
    %v641 = vadd.f32 %v621, %v633
    %v642 = vadd.f32 %v622, %v634
    %v643 = vadd.f32 %v623, %v635
    %v644 = vadd.f32 %v624, %v636
    %v645 = vadd.f32 %v625, %v637
    %v646 = vadd.f32 %v626, %v638
    %v647 = vadd.f32 %v627, %v639
    %v648 = vlaneseq
    %v649 = vshrl.u32 %v648, 7
    %v650 = vsub.s32 3, %v649
    %v651 = vrot.slane %v595, %v650
    %v652 = vmul.f32 %v322, %v651
    %v653 = vmul.f32 %v326, %v651
    %v654 = vmul.f32 %v330, %v651
    %v655 = vmul.f32 %v334, %v651
    %v656 = vmul.f32 %v338, %v651
    %v657 = vmul.f32 %v342, %v651
    %v658 = vmul.f32 %v346, %v651
    %v659 = vmul.f32 %v350, %v651
    %v660 = vadd.f32 %v640, %v652
    %v661 = vadd.f32 %v641, %v653
    %v662 = vadd.f32 %v642, %v654
    %v663 = vadd.f32 %v643, %v655
    %v664 = vadd.f32 %v644, %v656
    %v665 = vadd.f32 %v645, %v657
    %v666 = vadd.f32 %v646, %v658
    %v667 = vadd.f32 %v647, %v659
    %v668 = vadd.f32 %v660, %v78
    %v669 = vadd.f32 %v661, %v83
    %v670 = vadd.f32 %v662, %v88
    %v671 = vadd.f32 %v663, %v93
    %v672 = vadd.f32 %v664, %v98
    %v673 = vadd.f32 %v665, %v103
    %v674 = vadd.f32 %v666, %v108
    %v675 = vadd.f32 %v667, %v113
    %v676 = vmax.f32 %v668, 0.0
    %v677 = vmax.f32 %v669, 0.0
    %v678 = vmax.f32 %v670, 0.0
    %v679 = vmax.f32 %v671, 0.0
    %v680 = vmax.f32 %v672, 0.0
    %v681 = vmax.f32 %v673, 0.0
    %v682 = vmax.f32 %v674, 0.0
    %v683 = vmax.f32 %v675, 0.0
    %s684 = scalar_lea.vmem [#allocation2], 192
    %685 = vst [vmem:[%s684] sm:$0xff] %v676
    %686 = vst [vmem:[%s684 + $0x8] sm:$0xff] %v677
    %687 = vst [vmem:[%s684 + $0x10] sm:$0xff] %v678
    %688 = vst [vmem:[%s684 + $0x18] sm:$0xff] %v679
    %689 = vst [vmem:[%s684 + $0x20] sm:$0xff] %v680
    %690 = vst [vmem:[%s684 + $0x28] sm:$0xff] %v681
    %691 = vst [vmem:[%s684 + $0x30] sm:$0xff] %v682
    %692 = vst [vmem:[%s684 + $0x38] sm:$0xff] %v683
    %s693 = scalar_lea.vmem [#allocation3], 16
    %v694 = vld [vmem:[%s693] sm:$0xf]
    %v695 = vlaneseq
    %v696 = vshrl.u32 %v695, 7
    %v697 = vsub.s32 0, %v696
    %v698 = vrot.slane %v694, %v697
    %v699 = vmul.f32 %v167, %v698
    %v700 = vmul.f32 %v172, %v698
    %v701 = vmul.f32 %v177, %v698
    %v702 = vmul.f32 %v182, %v698
    %v703 = vmul.f32 %v187, %v698
    %v704 = vmul.f32 %v192, %v698
    %v705 = vmul.f32 %v197, %v698
    %v706 = vmul.f32 %v202, %v698
    %v707 = vlaneseq
    %v708 = vshrl.u32 %v707, 7
    %v709 = vsub.s32 1, %v708
    %v710 = vrot.slane %v694, %v709
    %v711 = vmul.f32 %v218, %v710
    %v712 = vmul.f32 %v222, %v710
    %v713 = vmul.f32 %v226, %v710
    %v714 = vmul.f32 %v230, %v710
    %v715 = vmul.f32 %v234, %v710
    %v716 = vmul.f32 %v238, %v710
    %v717 = vmul.f32 %v242, %v710
    %v718 = vmul.f32 %v246, %v710
    %v719 = vadd.f32 %v699, %v711
    %v720 = vadd.f32 %v700, %v712
    %v721 = vadd.f32 %v701, %v713
    %v722 = vadd.f32 %v702, %v714
    %v723 = vadd.f32 %v703, %v715
    %v724 = vadd.f32 %v704, %v716
    %v725 = vadd.f32 %v705, %v717
    %v726 = vadd.f32 %v706, %v718
    %v727 = vlaneseq
    %v728 = vshrl.u32 %v727, 7
    %v729 = vsub.s32 2, %v728
    %v730 = vrot.slane %v694, %v729
    %v731 = vmul.f32 %v270, %v730
    %v732 = vmul.f32 %v274, %v730
    %v733 = vmul.f32 %v278, %v730
    %v734 = vmul.f32 %v282, %v730
    %v735 = vmul.f32 %v286, %v730
    %v736 = vmul.f32 %v290, %v730
    %v737 = vmul.f32 %v294, %v730
    %v738 = vmul.f32 %v298, %v730
    %v739 = vadd.f32 %v719, %v731
    %v740 = vadd.f32 %v720, %v732
    %v741 = vadd.f32 %v721, %v733
    %v742 = vadd.f32 %v722, %v734
    %v743 = vadd.f32 %v723, %v735
    %v744 = vadd.f32 %v724, %v736
    %v745 = vadd.f32 %v725, %v737
    %v746 = vadd.f32 %v726, %v738
    %v747 = vlaneseq
    %v748 = vshrl.u32 %v747, 7
    %v749 = vsub.s32 3, %v748
    %v750 = vrot.slane %v694, %v749
    %v751 = vmul.f32 %v322, %v750
    %v752 = vmul.f32 %v326, %v750
    %v753 = vmul.f32 %v330, %v750
    %v754 = vmul.f32 %v334, %v750
    %v755 = vmul.f32 %v338, %v750
    %v756 = vmul.f32 %v342, %v750
    %v757 = vmul.f32 %v346, %v750
    %v758 = vmul.f32 %v350, %v750
    %v759 = vadd.f32 %v739, %v751
    %v760 = vadd.f32 %v740, %v752
    %v761 = vadd.f32 %v741, %v753
    %v762 = vadd.f32 %v742, %v754
    %v763 = vadd.f32 %v743, %v755
    %v764 = vadd.f32 %v744, %v756
    %v765 = vadd.f32 %v745, %v757
    %v766 = vadd.f32 %v746, %v758
    %v767 = vadd.f32 %v759, %v78
    %v768 = vadd.f32 %v760, %v83
    %v769 = vadd.f32 %v761, %v88
    %v770 = vadd.f32 %v762, %v93
    %v771 = vadd.f32 %v763, %v98
    %v772 = vadd.f32 %v764, %v103
    %v773 = vadd.f32 %v765, %v108
    %v774 = vadd.f32 %v766, %v113
    %v775 = vmax.f32 %v767, 0.0
    %v776 = vmax.f32 %v768, 0.0
    %v777 = vmax.f32 %v769, 0.0
    %v778 = vmax.f32 %v770, 0.0
    %v779 = vmax.f32 %v771, 0.0
    %v780 = vmax.f32 %v772, 0.0
    %v781 = vmax.f32 %v773, 0.0
    %v782 = vmax.f32 %v774, 0.0
    %s783 = scalar_lea.vmem [#allocation2], 256
    %784 = vst [vmem:[%s783] sm:$0xff] %v775
    %785 = vst [vmem:[%s783 + $0x8] sm:$0xff] %v776
    %786 = vst [vmem:[%s783 + $0x10] sm:$0xff] %v777
    %787 = vst [vmem:[%s783 + $0x18] sm:$0xff] %v778
    %788 = vst [vmem:[%s783 + $0x20] sm:$0xff] %v779
    %789 = vst [vmem:[%s783 + $0x28] sm:$0xff] %v780
    %790 = vst [vmem:[%s783 + $0x30] sm:$0xff] %v781
    %791 = vst [vmem:[%s783 + $0x38] sm:$0xff] %v782
    %s792 = scalar_lea.vmem [#allocation3], 20
    %v793 = vld [vmem:[%s792] sm:$0xf]
    %v794 = vlaneseq
    %v795 = vshrl.u32 %v794, 7
    %v796 = vsub.s32 0, %v795
    %v797 = vrot.slane %v793, %v796
    %v798 = vmul.f32 %v167, %v797
    %v799 = vmul.f32 %v172, %v797
    %v800 = vmul.f32 %v177, %v797
    %v801 = vmul.f32 %v182, %v797
    %v802 = vmul.f32 %v187, %v797
    %v803 = vmul.f32 %v192, %v797
    %v804 = vmul.f32 %v197, %v797
    %v805 = vmul.f32 %v202, %v797
    %v806 = vlaneseq
    %v807 = vshrl.u32 %v806, 7
    %v808 = vsub.s32 1, %v807
    %v809 = vrot.slane %v793, %v808
    %v810 = vmul.f32 %v218, %v809
    %v811 = vmul.f32 %v222, %v809
    %v812 = vmul.f32 %v226, %v809
    %v813 = vmul.f32 %v230, %v809
    %v814 = vmul.f32 %v234, %v809
    %v815 = vmul.f32 %v238, %v809
    %v816 = vmul.f32 %v242, %v809
    %v817 = vmul.f32 %v246, %v809
    %v818 = vadd.f32 %v798, %v810
    %v819 = vadd.f32 %v799, %v811
    %v820 = vadd.f32 %v800, %v812
    %v821 = vadd.f32 %v801, %v813
    %v822 = vadd.f32 %v802, %v814
    %v823 = vadd.f32 %v803, %v815
    %v824 = vadd.f32 %v804, %v816
    %v825 = vadd.f32 %v805, %v817
    %v826 = vlaneseq
    %v827 = vshrl.u32 %v826, 7
    %v828 = vsub.s32 2, %v827
    %v829 = vrot.slane %v793, %v828
    %v830 = vmul.f32 %v270, %v829
    %v831 = vmul.f32 %v274, %v829
    %v832 = vmul.f32 %v278, %v829
    %v833 = vmul.f32 %v282, %v829
    %v834 = vmul.f32 %v286, %v829
    %v835 = vmul.f32 %v290, %v829
    %v836 = vmul.f32 %v294, %v829
    %v837 = vmul.f32 %v298, %v829
    %v838 = vadd.f32 %v818, %v830
    %v839 = vadd.f32 %v819, %v831
    %v840 = vadd.f32 %v820, %v832
    %v841 = vadd.f32 %v821, %v833
    %v842 = vadd.f32 %v822, %v834
    %v843 = vadd.f32 %v823, %v835
    %v844 = vadd.f32 %v824, %v836
    %v845 = vadd.f32 %v825, %v837
    %v846 = vlaneseq
    %v847 = vshrl.u32 %v846, 7
    %v848 = vsub.s32 3, %v847
    %v849 = vrot.slane %v793, %v848
    %v850 = vmul.f32 %v322, %v849
    %v851 = vmul.f32 %v326, %v849
    %v852 = vmul.f32 %v330, %v849
    %v853 = vmul.f32 %v334, %v849
    %v854 = vmul.f32 %v338, %v849
    %v855 = vmul.f32 %v342, %v849
    %v856 = vmul.f32 %v346, %v849
    %v857 = vmul.f32 %v350, %v849
    %v858 = vadd.f32 %v838, %v850
    %v859 = vadd.f32 %v839, %v851
    %v860 = vadd.f32 %v840, %v852
    %v861 = vadd.f32 %v841, %v853
    %v862 = vadd.f32 %v842, %v854
    %v863 = vadd.f32 %v843, %v855
    %v864 = vadd.f32 %v844, %v856
    %v865 = vadd.f32 %v845, %v857
    %v866 = vadd.f32 %v858, %v78
    %v867 = vadd.f32 %v859, %v83
    %v868 = vadd.f32 %v860, %v88
    %v869 = vadd.f32 %v861, %v93
    %v870 = vadd.f32 %v862, %v98
    %v871 = vadd.f32 %v863, %v103
    %v872 = vadd.f32 %v864, %v108
    %v873 = vadd.f32 %v865, %v113
    %v874 = vmax.f32 %v866, 0.0
    %v875 = vmax.f32 %v867, 0.0
    %v876 = vmax.f32 %v868, 0.0
    %v877 = vmax.f32 %v869, 0.0
    %v878 = vmax.f32 %v870, 0.0
    %v879 = vmax.f32 %v871, 0.0
    %v880 = vmax.f32 %v872, 0.0
    %v881 = vmax.f32 %v873, 0.0
    %s882 = scalar_lea.vmem [#allocation2], 320
    %883 = vst [vmem:[%s882] sm:$0xff] %v874
    %884 = vst [vmem:[%s882 + $0x8] sm:$0xff] %v875
    %885 = vst [vmem:[%s882 + $0x10] sm:$0xff] %v876
    %886 = vst [vmem:[%s882 + $0x18] sm:$0xff] %v877
    %887 = vst [vmem:[%s882 + $0x20] sm:$0xff] %v878
    %888 = vst [vmem:[%s882 + $0x28] sm:$0xff] %v879
    %889 = vst [vmem:[%s882 + $0x30] sm:$0xff] %v880
    %890 = vst [vmem:[%s882 + $0x38] sm:$0xff] %v881
    %s891 = scalar_lea.vmem [#allocation3], 24
    %v892 = vld [vmem:[%s891] sm:$0xf]
    %v893 = vlaneseq
    %v894 = vshrl.u32 %v893, 7
    %v895 = vsub.s32 0, %v894
    %v896 = vrot.slane %v892, %v895
    %v897 = vmul.f32 %v167, %v896
    %v898 = vmul.f32 %v172, %v896
    %v899 = vmul.f32 %v177, %v896
    %v900 = vmul.f32 %v182, %v896
    %v901 = vmul.f32 %v187, %v896
    %v902 = vmul.f32 %v192, %v896
    %v903 = vmul.f32 %v197, %v896
    %v904 = vmul.f32 %v202, %v896
    %v905 = vlaneseq
    %v906 = vshrl.u32 %v905, 7
    %v907 = vsub.s32 1, %v906
    %v908 = vrot.slane %v892, %v907
    %v909 = vmul.f32 %v218, %v908
    %v910 = vmul.f32 %v222, %v908
    %v911 = vmul.f32 %v226, %v908
    %v912 = vmul.f32 %v230, %v908
    %v913 = vmul.f32 %v234, %v908
    %v914 = vmul.f32 %v238, %v908
    %v915 = vmul.f32 %v242, %v908
    %v916 = vmul.f32 %v246, %v908
    %v917 = vadd.f32 %v897, %v909
    %v918 = vadd.f32 %v898, %v910
    %v919 = vadd.f32 %v899, %v911
    %v920 = vadd.f32 %v900, %v912
    %v921 = vadd.f32 %v901, %v913
    %v922 = vadd.f32 %v902, %v914
    %v923 = vadd.f32 %v903, %v915
    %v924 = vadd.f32 %v904, %v916
    %v925 = vlaneseq
    %v926 = vshrl.u32 %v925, 7
    %v927 = vsub.s32 2, %v926
    %v928 = vrot.slane %v892, %v927
    %v929 = vmul.f32 %v270, %v928
    %v930 = vmul.f32 %v274, %v928
    %v931 = vmul.f32 %v278, %v928
    %v932 = vmul.f32 %v282, %v928
    %v933 = vmul.f32 %v286, %v928
    %v934 = vmul.f32 %v290, %v928
    %v935 = vmul.f32 %v294, %v928
    %v936 = vmul.f32 %v298, %v928
    %v937 = vadd.f32 %v917, %v929
    %v938 = vadd.f32 %v918, %v930
    %v939 = vadd.f32 %v919, %v931
    %v940 = vadd.f32 %v920, %v932
    %v941 = vadd.f32 %v921, %v933
    %v942 = vadd.f32 %v922, %v934
    %v943 = vadd.f32 %v923, %v935
    %v944 = vadd.f32 %v924, %v936
    %v945 = vlaneseq
    %v946 = vshrl.u32 %v945, 7
    %v947 = vsub.s32 3, %v946
    %v948 = vrot.slane %v892, %v947
    %v949 = vmul.f32 %v322, %v948
    %v950 = vmul.f32 %v326, %v948
    %v951 = vmul.f32 %v330, %v948
    %v952 = vmul.f32 %v334, %v948
    %v953 = vmul.f32 %v338, %v948
    %v954 = vmul.f32 %v342, %v948
    %v955 = vmul.f32 %v346, %v948
    %v956 = vmul.f32 %v350, %v948
    %v957 = vadd.f32 %v937, %v949
    %v958 = vadd.f32 %v938, %v950
    %v959 = vadd.f32 %v939, %v951
    %v960 = vadd.f32 %v940, %v952
    %v961 = vadd.f32 %v941, %v953
    %v962 = vadd.f32 %v942, %v954
    %v963 = vadd.f32 %v943, %v955
    %v964 = vadd.f32 %v944, %v956
    %v965 = vadd.f32 %v957, %v78
    %v966 = vadd.f32 %v958, %v83
    %v967 = vadd.f32 %v959, %v88
    %v968 = vadd.f32 %v960, %v93
    %v969 = vadd.f32 %v961, %v98
    %v970 = vadd.f32 %v962, %v103
    %v971 = vadd.f32 %v963, %v108
    %v972 = vadd.f32 %v964, %v113
    %v973 = vmax.f32 %v965, 0.0
    %v974 = vmax.f32 %v966, 0.0
    %v975 = vmax.f32 %v967, 0.0
    %v976 = vmax.f32 %v968, 0.0
    %v977 = vmax.f32 %v969, 0.0
    %v978 = vmax.f32 %v970, 0.0
    %v979 = vmax.f32 %v971, 0.0
    %v980 = vmax.f32 %v972, 0.0
    %s981 = scalar_lea.vmem [#allocation2], 384
    %982 = vst [vmem:[%s981] sm:$0xff] %v973
    %983 = vst [vmem:[%s981 + $0x8] sm:$0xff] %v974
    %984 = vst [vmem:[%s981 + $0x10] sm:$0xff] %v975
    %985 = vst [vmem:[%s981 + $0x18] sm:$0xff] %v976
    %986 = vst [vmem:[%s981 + $0x20] sm:$0xff] %v977
    %987 = vst [vmem:[%s981 + $0x28] sm:$0xff] %v978
    %988 = vst [vmem:[%s981 + $0x30] sm:$0xff] %v979
    %989 = vst [vmem:[%s981 + $0x38] sm:$0xff] %v980
    %s990 = scalar_lea.vmem [#allocation3], 28
    %v991 = vld [vmem:[%s990] sm:$0xf]
    %v992 = vlaneseq
    %v993 = vshrl.u32 %v992, 7
    %v994 = vsub.s32 0, %v993
    %v995 = vrot.slane %v991, %v994
    %v996 = vmul.f32 %v167, %v995
    %v997 = vmul.f32 %v172, %v995
    %v998 = vmul.f32 %v177, %v995
    %v999 = vmul.f32 %v182, %v995
    %v1000 = vmul.f32 %v187, %v995
    %v1001 = vmul.f32 %v192, %v995
    %v1002 = vmul.f32 %v197, %v995
    %v1003 = vmul.f32 %v202, %v995
    %v1004 = vlaneseq
    %v1005 = vshrl.u32 %v1004, 7
    %v1006 = vsub.s32 1, %v1005
    %v1007 = vrot.slane %v991, %v1006
    %v1008 = vmul.f32 %v218, %v1007
    %v1009 = vmul.f32 %v222, %v1007
    %v1010 = vmul.f32 %v226, %v1007
    %v1011 = vmul.f32 %v230, %v1007
    %v1012 = vmul.f32 %v234, %v1007
    %v1013 = vmul.f32 %v238, %v1007
    %v1014 = vmul.f32 %v242, %v1007
    %v1015 = vmul.f32 %v246, %v1007
    %v1016 = vadd.f32 %v996, %v1008
    %v1017 = vadd.f32 %v997, %v1009
    %v1018 = vadd.f32 %v998, %v1010
    %v1019 = vadd.f32 %v999, %v1011
    %v1020 = vadd.f32 %v1000, %v1012
    %v1021 = vadd.f32 %v1001, %v1013
    %v1022 = vadd.f32 %v1002, %v1014
    %v1023 = vadd.f32 %v1003, %v1015
    %v1024 = vlaneseq
    %v1025 = vshrl.u32 %v1024, 7
    %v1026 = vsub.s32 2, %v1025
    %v1027 = vrot.slane %v991, %v1026
    %v1028 = vmul.f32 %v270, %v1027
    %v1029 = vmul.f32 %v274, %v1027
    %v1030 = vmul.f32 %v278, %v1027
    %v1031 = vmul.f32 %v282, %v1027
    %v1032 = vmul.f32 %v286, %v1027
    %v1033 = vmul.f32 %v290, %v1027
    %v1034 = vmul.f32 %v294, %v1027
    %v1035 = vmul.f32 %v298, %v1027
    %v1036 = vadd.f32 %v1016, %v1028
    %v1037 = vadd.f32 %v1017, %v1029
    %v1038 = vadd.f32 %v1018, %v1030
    %v1039 = vadd.f32 %v1019, %v1031
    %v1040 = vadd.f32 %v1020, %v1032
    %v1041 = vadd.f32 %v1021, %v1033
    %v1042 = vadd.f32 %v1022, %v1034
    %v1043 = vadd.f32 %v1023, %v1035
    %v1044 = vlaneseq
    %v1045 = vshrl.u32 %v1044, 7
    %v1046 = vsub.s32 3, %v1045
    %v1047 = vrot.slane %v991, %v1046
    %v1048 = vmul.f32 %v322, %v1047
    %v1049 = vmul.f32 %v326, %v1047
    %v1050 = vmul.f32 %v330, %v1047
    %v1051 = vmul.f32 %v334, %v1047
    %v1052 = vmul.f32 %v338, %v1047
    %v1053 = vmul.f32 %v342, %v1047
    %v1054 = vmul.f32 %v346, %v1047
    %v1055 = vmul.f32 %v350, %v1047
    %v1056 = vadd.f32 %v1036, %v1048
    %v1057 = vadd.f32 %v1037, %v1049
    %v1058 = vadd.f32 %v1038, %v1050
    %v1059 = vadd.f32 %v1039, %v1051
    %v1060 = vadd.f32 %v1040, %v1052
    %v1061 = vadd.f32 %v1041, %v1053
    %v1062 = vadd.f32 %v1042, %v1054
    %v1063 = vadd.f32 %v1043, %v1055
    %v1064 = vadd.f32 %v1056, %v78
    %v1065 = vadd.f32 %v1057, %v83
    %v1066 = vadd.f32 %v1058, %v88
    %v1067 = vadd.f32 %v1059, %v93
    %v1068 = vadd.f32 %v1060, %v98
    %v1069 = vadd.f32 %v1061, %v103
    %v1070 = vadd.f32 %v1062, %v108
    %v1071 = vadd.f32 %v1063, %v113
    %v1072 = vmax.f32 %v1064, 0.0
    %v1073 = vmax.f32 %v1065, 0.0
    %v1074 = vmax.f32 %v1066, 0.0
    %v1075 = vmax.f32 %v1067, 0.0
    %v1076 = vmax.f32 %v1068, 0.0
    %v1077 = vmax.f32 %v1069, 0.0
    %v1078 = vmax.f32 %v1070, 0.0
    %v1079 = vmax.f32 %v1071, 0.0
    %s1080 = scalar_lea.vmem [#allocation2], 448
    %1081 = vst [vmem:[%s1080] sm:$0xff] %v1072
    %1082 = vst [vmem:[%s1080 + $0x8] sm:$0xff] %v1073
    %1083 = vst [vmem:[%s1080 + $0x10] sm:$0xff] %v1074
    %1084 = vst [vmem:[%s1080 + $0x18] sm:$0xff] %v1075
    %1085 = vst [vmem:[%s1080 + $0x20] sm:$0xff] %v1076
    %1086 = vst [vmem:[%s1080 + $0x28] sm:$0xff] %v1077
    %1087 = vst [vmem:[%s1080 + $0x30] sm:$0xff] %v1078
    %1088 = vst [vmem:[%s1080 + $0x38] sm:$0xff] %v1079
    %s1089 = scalar_lea.vmem [#allocation3], 32
    %v1090 = vld [vmem:[%s1089] sm:$0xf]
    %v1091 = vlaneseq
    %v1092 = vshrl.u32 %v1091, 7
    %v1093 = vsub.s32 0, %v1092
    %v1094 = vrot.slane %v1090, %v1093
    %v1095 = vmul.f32 %v167, %v1094
    %v1096 = vmul.f32 %v172, %v1094
    %v1097 = vmul.f32 %v177, %v1094
    %v1098 = vmul.f32 %v182, %v1094
    %v1099 = vmul.f32 %v187, %v1094
    %v1100 = vmul.f32 %v192, %v1094
    %v1101 = vmul.f32 %v197, %v1094
    %v1102 = vmul.f32 %v202, %v1094
    %v1103 = vlaneseq
    %v1104 = vshrl.u32 %v1103, 7
    %v1105 = vsub.s32 1, %v1104
    %v1106 = vrot.slane %v1090, %v1105
    %v1107 = vmul.f32 %v218, %v1106
    %v1108 = vmul.f32 %v222, %v1106
    %v1109 = vmul.f32 %v226, %v1106
    %v1110 = vmul.f32 %v230, %v1106
    %v1111 = vmul.f32 %v234, %v1106
    %v1112 = vmul.f32 %v238, %v1106
    %v1113 = vmul.f32 %v242, %v1106
    %v1114 = vmul.f32 %v246, %v1106
    %v1115 = vadd.f32 %v1095, %v1107
    %v1116 = vadd.f32 %v1096, %v1108
    %v1117 = vadd.f32 %v1097, %v1109
    %v1118 = vadd.f32 %v1098, %v1110
    %v1119 = vadd.f32 %v1099, %v1111
    %v1120 = vadd.f32 %v1100, %v1112
    %v1121 = vadd.f32 %v1101, %v1113
    %v1122 = vadd.f32 %v1102, %v1114
    %v1123 = vlaneseq
    %v1124 = vshrl.u32 %v1123, 7
    %v1125 = vsub.s32 2, %v1124
    %v1126 = vrot.slane %v1090, %v1125
    %v1127 = vmul.f32 %v270, %v1126
    %v1128 = vmul.f32 %v274, %v1126
    %v1129 = vmul.f32 %v278, %v1126
    %v1130 = vmul.f32 %v282, %v1126
    %v1131 = vmul.f32 %v286, %v1126
    %v1132 = vmul.f32 %v290, %v1126
    %v1133 = vmul.f32 %v294, %v1126
    %v1134 = vmul.f32 %v298, %v1126
    %v1135 = vadd.f32 %v1115, %v1127
    %v1136 = vadd.f32 %v1116, %v1128
    %v1137 = vadd.f32 %v1117, %v1129
    %v1138 = vadd.f32 %v1118, %v1130
    %v1139 = vadd.f32 %v1119, %v1131
    %v1140 = vadd.f32 %v1120, %v1132
    %v1141 = vadd.f32 %v1121, %v1133
    %v1142 = vadd.f32 %v1122, %v1134
    %v1143 = vlaneseq
    %v1144 = vshrl.u32 %v1143, 7
    %v1145 = vsub.s32 3, %v1144
    %v1146 = vrot.slane %v1090, %v1145
    %v1147 = vmul.f32 %v322, %v1146
    %v1148 = vmul.f32 %v326, %v1146
    %v1149 = vmul.f32 %v330, %v1146
    %v1150 = vmul.f32 %v334, %v1146
    %v1151 = vmul.f32 %v338, %v1146
    %v1152 = vmul.f32 %v342, %v1146
    %v1153 = vmul.f32 %v346, %v1146
    %v1154 = vmul.f32 %v350, %v1146
    %v1155 = vadd.f32 %v1135, %v1147
    %v1156 = vadd.f32 %v1136, %v1148
    %v1157 = vadd.f32 %v1137, %v1149
    %v1158 = vadd.f32 %v1138, %v1150
    %v1159 = vadd.f32 %v1139, %v1151
    %v1160 = vadd.f32 %v1140, %v1152
    %v1161 = vadd.f32 %v1141, %v1153
    %v1162 = vadd.f32 %v1142, %v1154
    %v1163 = vadd.f32 %v1155, %v78
    %v1164 = vadd.f32 %v1156, %v83
    %v1165 = vadd.f32 %v1157, %v88
    %v1166 = vadd.f32 %v1158, %v93
    %v1167 = vadd.f32 %v1159, %v98
    %v1168 = vadd.f32 %v1160, %v103
    %v1169 = vadd.f32 %v1161, %v108
    %v1170 = vadd.f32 %v1162, %v113
    %v1171 = vmax.f32 %v1163, 0.0
    %v1172 = vmax.f32 %v1164, 0.0
    %v1173 = vmax.f32 %v1165, 0.0
    %v1174 = vmax.f32 %v1166, 0.0
    %v1175 = vmax.f32 %v1167, 0.0
    %v1176 = vmax.f32 %v1168, 0.0
    %v1177 = vmax.f32 %v1169, 0.0
    %v1178 = vmax.f32 %v1170, 0.0
    %s1179 = scalar_lea.vmem [#allocation2], 512
    %1180 = vst [vmem:[%s1179] sm:$0xff] %v1171
    %1181 = vst [vmem:[%s1179 + $0x8] sm:$0xff] %v1172
    %1182 = vst [vmem:[%s1179 + $0x10] sm:$0xff] %v1173
    %1183 = vst [vmem:[%s1179 + $0x18] sm:$0xff] %v1174
    %1184 = vst [vmem:[%s1179 + $0x20] sm:$0xff] %v1175
    %1185 = vst [vmem:[%s1179 + $0x28] sm:$0xff] %v1176
    %1186 = vst [vmem:[%s1179 + $0x30] sm:$0xff] %v1177
    %1187 = vst [vmem:[%s1179 + $0x38] sm:$0xff] %v1178
    %s1188 = scalar_lea.vmem [#allocation3], 36
    %v1189 = vld [vmem:[%s1188] sm:$0xf]
    %v1190 = vlaneseq
    %v1191 = vshrl.u32 %v1190, 7
    %v1192 = vsub.s32 0, %v1191
    %v1193 = vrot.slane %v1189, %v1192
    %v1194 = vmul.f32 %v167, %v1193
    %v1195 = vmul.f32 %v172, %v1193
    %v1196 = vmul.f32 %v177, %v1193
    %v1197 = vmul.f32 %v182, %v1193
    %v1198 = vmul.f32 %v187, %v1193
    %v1199 = vmul.f32 %v192, %v1193
    %v1200 = vmul.f32 %v197, %v1193
    %v1201 = vmul.f32 %v202, %v1193
    %v1202 = vlaneseq
    %v1203 = vshrl.u32 %v1202, 7
    %v1204 = vsub.s32 1, %v1203
    %v1205 = vrot.slane %v1189, %v1204
    %v1206 = vmul.f32 %v218, %v1205
    %v1207 = vmul.f32 %v222, %v1205
    %v1208 = vmul.f32 %v226, %v1205
    %v1209 = vmul.f32 %v230, %v1205
    %v1210 = vmul.f32 %v234, %v1205
    %v1211 = vmul.f32 %v238, %v1205
    %v1212 = vmul.f32 %v242, %v1205
    %v1213 = vmul.f32 %v246, %v1205
    %v1214 = vadd.f32 %v1194, %v1206
    %v1215 = vadd.f32 %v1195, %v1207
    %v1216 = vadd.f32 %v1196, %v1208
    %v1217 = vadd.f32 %v1197, %v1209
    %v1218 = vadd.f32 %v1198, %v1210
    %v1219 = vadd.f32 %v1199, %v1211
    %v1220 = vadd.f32 %v1200, %v1212
    %v1221 = vadd.f32 %v1201, %v1213
    %v1222 = vlaneseq
    %v1223 = vshrl.u32 %v1222, 7
    %v1224 = vsub.s32 2, %v1223
    %v1225 = vrot.slane %v1189, %v1224
    %v1226 = vmul.f32 %v270, %v1225
    %v1227 = vmul.f32 %v274, %v1225
    %v1228 = vmul.f32 %v278, %v1225
    %v1229 = vmul.f32 %v282, %v1225
    %v1230 = vmul.f32 %v286, %v1225
    %v1231 = vmul.f32 %v290, %v1225
    %v1232 = vmul.f32 %v294, %v1225
    %v1233 = vmul.f32 %v298, %v1225
    %v1234 = vadd.f32 %v1214, %v1226
    %v1235 = vadd.f32 %v1215, %v1227
    %v1236 = vadd.f32 %v1216, %v1228
    %v1237 = vadd.f32 %v1217, %v1229
    %v1238 = vadd.f32 %v1218, %v1230
    %v1239 = vadd.f32 %v1219, %v1231
    %v1240 = vadd.f32 %v1220, %v1232
    %v1241 = vadd.f32 %v1221, %v1233
    %v1242 = vlaneseq
    %v1243 = vshrl.u32 %v1242, 7
    %v1244 = vsub.s32 3, %v1243
    %v1245 = vrot.slane %v1189, %v1244
    %v1246 = vmul.f32 %v322, %v1245
    %v1247 = vmul.f32 %v326, %v1245
    %v1248 = vmul.f32 %v330, %v1245
    %v1249 = vmul.f32 %v334, %v1245
    %v1250 = vmul.f32 %v338, %v1245
    %v1251 = vmul.f32 %v342, %v1245
    %v1252 = vmul.f32 %v346, %v1245
    %v1253 = vmul.f32 %v350, %v1245
    %v1254 = vadd.f32 %v1234, %v1246
    %v1255 = vadd.f32 %v1235, %v1247
    %v1256 = vadd.f32 %v1236, %v1248
    %v1257 = vadd.f32 %v1237, %v1249
    %v1258 = vadd.f32 %v1238, %v1250
    %v1259 = vadd.f32 %v1239, %v1251
    %v1260 = vadd.f32 %v1240, %v1252
    %v1261 = vadd.f32 %v1241, %v1253
    %v1262 = vadd.f32 %v1254, %v78
    %v1263 = vadd.f32 %v1255, %v83
    %v1264 = vadd.f32 %v1256, %v88
    %v1265 = vadd.f32 %v1257, %v93
    %v1266 = vadd.f32 %v1258, %v98
    %v1267 = vadd.f32 %v1259, %v103
    %v1268 = vadd.f32 %v1260, %v108
    %v1269 = vadd.f32 %v1261, %v113
    %v1270 = vmax.f32 %v1262, 0.0
    %v1271 = vmax.f32 %v1263, 0.0
    %v1272 = vmax.f32 %v1264, 0.0
    %v1273 = vmax.f32 %v1265, 0.0
    %v1274 = vmax.f32 %v1266, 0.0
    %v1275 = vmax.f32 %v1267, 0.0
    %v1276 = vmax.f32 %v1268, 0.0
    %v1277 = vmax.f32 %v1269, 0.0
    %s1278 = scalar_lea.vmem [#allocation2], 576
    %1279 = vst [vmem:[%s1278] sm:$0xff] %v1270
    %1280 = vst [vmem:[%s1278 + $0x8] sm:$0xff] %v1271
    %1281 = vst [vmem:[%s1278 + $0x10] sm:$0xff] %v1272
    %1282 = vst [vmem:[%s1278 + $0x18] sm:$0xff] %v1273
    %1283 = vst [vmem:[%s1278 + $0x20] sm:$0xff] %v1274
    %1284 = vst [vmem:[%s1278 + $0x28] sm:$0xff] %v1275
    %1285 = vst [vmem:[%s1278 + $0x30] sm:$0xff] %v1276
    %1286 = vst [vmem:[%s1278 + $0x38] sm:$0xff] %v1277
    %s1287 = scalar_lea.vmem [#allocation3], 40
    %v1288 = vld [vmem:[%s1287] sm:$0xf]
    %v1289 = vlaneseq
    %v1290 = vshrl.u32 %v1289, 7
    %v1291 = vsub.s32 0, %v1290
    %v1292 = vrot.slane %v1288, %v1291
    %v1293 = vmul.f32 %v167, %v1292
    %v1294 = vmul.f32 %v172, %v1292
    %v1295 = vmul.f32 %v177, %v1292
    %v1296 = vmul.f32 %v182, %v1292
    %v1297 = vmul.f32 %v187, %v1292
    %v1298 = vmul.f32 %v192, %v1292
    %v1299 = vmul.f32 %v197, %v1292
    %v1300 = vmul.f32 %v202, %v1292
    %v1301 = vlaneseq
    %v1302 = vshrl.u32 %v1301, 7
    %v1303 = vsub.s32 1, %v1302
    %v1304 = vrot.slane %v1288, %v1303
    %v1305 = vmul.f32 %v218, %v1304
    %v1306 = vmul.f32 %v222, %v1304
    %v1307 = vmul.f32 %v226, %v1304
    %v1308 = vmul.f32 %v230, %v1304
    %v1309 = vmul.f32 %v234, %v1304
    %v1310 = vmul.f32 %v238, %v1304
    %v1311 = vmul.f32 %v242, %v1304
    %v1312 = vmul.f32 %v246, %v1304
    %v1313 = vadd.f32 %v1293, %v1305
    %v1314 = vadd.f32 %v1294, %v1306
    %v1315 = vadd.f32 %v1295, %v1307
    %v1316 = vadd.f32 %v1296, %v1308
    %v1317 = vadd.f32 %v1297, %v1309
    %v1318 = vadd.f32 %v1298, %v1310
    %v1319 = vadd.f32 %v1299, %v1311
    %v1320 = vadd.f32 %v1300, %v1312
    %v1321 = vlaneseq
    %v1322 = vshrl.u32 %v1321, 7
    %v1323 = vsub.s32 2, %v1322
    %v1324 = vrot.slane %v1288, %v1323
    %v1325 = vmul.f32 %v270, %v1324
    %v1326 = vmul.f32 %v274, %v1324
    %v1327 = vmul.f32 %v278, %v1324
    %v1328 = vmul.f32 %v282, %v1324
    %v1329 = vmul.f32 %v286, %v1324
    %v1330 = vmul.f32 %v290, %v1324
    %v1331 = vmul.f32 %v294, %v1324
    %v1332 = vmul.f32 %v298, %v1324
    %v1333 = vadd.f32 %v1313, %v1325
    %v1334 = vadd.f32 %v1314, %v1326
    %v1335 = vadd.f32 %v1315, %v1327
    %v1336 = vadd.f32 %v1316, %v1328
    %v1337 = vadd.f32 %v1317, %v1329
    %v1338 = vadd.f32 %v1318, %v1330
    %v1339 = vadd.f32 %v1319, %v1331
    %v1340 = vadd.f32 %v1320, %v1332
    %v1341 = vlaneseq
    %v1342 = vshrl.u32 %v1341, 7
    %v1343 = vsub.s32 3, %v1342
    %v1344 = vrot.slane %v1288, %v1343
    %v1345 = vmul.f32 %v322, %v1344
    %v1346 = vmul.f32 %v326, %v1344
    %v1347 = vmul.f32 %v330, %v1344
    %v1348 = vmul.f32 %v334, %v1344
    %v1349 = vmul.f32 %v338, %v1344
    %v1350 = vmul.f32 %v342, %v1344
    %v1351 = vmul.f32 %v346, %v1344
    %v1352 = vmul.f32 %v350, %v1344
    %v1353 = vadd.f32 %v1333, %v1345
    %v1354 = vadd.f32 %v1334, %v1346
    %v1355 = vadd.f32 %v1335, %v1347
    %v1356 = vadd.f32 %v1336, %v1348
    %v1357 = vadd.f32 %v1337, %v1349
    %v1358 = vadd.f32 %v1338, %v1350
    %v1359 = vadd.f32 %v1339, %v1351
    %v1360 = vadd.f32 %v1340, %v1352
    %v1361 = vadd.f32 %v1353, %v78
    %v1362 = vadd.f32 %v1354, %v83
    %v1363 = vadd.f32 %v1355, %v88
    %v1364 = vadd.f32 %v1356, %v93
    %v1365 = vadd.f32 %v1357, %v98
    %v1366 = vadd.f32 %v1358, %v103
    %v1367 = vadd.f32 %v1359, %v108
    %v1368 = vadd.f32 %v1360, %v113
    %v1369 = vmax.f32 %v1361, 0.0
    %v1370 = vmax.f32 %v1362, 0.0
    %v1371 = vmax.f32 %v1363, 0.0
    %v1372 = vmax.f32 %v1364, 0.0
    %v1373 = vmax.f32 %v1365, 0.0
    %v1374 = vmax.f32 %v1366, 0.0
    %v1375 = vmax.f32 %v1367, 0.0
    %v1376 = vmax.f32 %v1368, 0.0
    %s1377 = scalar_lea.vmem [#allocation2], 640
    %1378 = vst [vmem:[%s1377] sm:$0xff] %v1369
    %1379 = vst [vmem:[%s1377 + $0x8] sm:$0xff] %v1370
    %1380 = vst [vmem:[%s1377 + $0x10] sm:$0xff] %v1371
    %1381 = vst [vmem:[%s1377 + $0x18] sm:$0xff] %v1372
    %1382 = vst [vmem:[%s1377 + $0x20] sm:$0xff] %v1373
    %1383 = vst [vmem:[%s1377 + $0x28] sm:$0xff] %v1374
    %1384 = vst [vmem:[%s1377 + $0x30] sm:$0xff] %v1375
    %1385 = vst [vmem:[%s1377 + $0x38] sm:$0xff] %v1376
    %s1386 = scalar_lea.vmem [#allocation3], 44
    %v1387 = vld [vmem:[%s1386] sm:$0xf]
    %v1388 = vlaneseq
    %v1389 = vshrl.u32 %v1388, 7
    %v1390 = vsub.s32 0, %v1389
    %v1391 = vrot.slane %v1387, %v1390
    %v1392 = vmul.f32 %v167, %v1391
    %v1393 = vmul.f32 %v172, %v1391
    %v1394 = vmul.f32 %v177, %v1391
    %v1395 = vmul.f32 %v182, %v1391
    %v1396 = vmul.f32 %v187, %v1391
    %v1397 = vmul.f32 %v192, %v1391
    %v1398 = vmul.f32 %v197, %v1391
    %v1399 = vmul.f32 %v202, %v1391
    %v1400 = vlaneseq
    %v1401 = vshrl.u32 %v1400, 7
    %v1402 = vsub.s32 1, %v1401
    %v1403 = vrot.slane %v1387, %v1402
    %v1404 = vmul.f32 %v218, %v1403
    %v1405 = vmul.f32 %v222, %v1403
    %v1406 = vmul.f32 %v226, %v1403
    %v1407 = vmul.f32 %v230, %v1403
    %v1408 = vmul.f32 %v234, %v1403
    %v1409 = vmul.f32 %v238, %v1403
    %v1410 = vmul.f32 %v242, %v1403
    %v1411 = vmul.f32 %v246, %v1403
    %v1412 = vadd.f32 %v1392, %v1404
    %v1413 = vadd.f32 %v1393, %v1405
    %v1414 = vadd.f32 %v1394, %v1406
    %v1415 = vadd.f32 %v1395, %v1407
    %v1416 = vadd.f32 %v1396, %v1408
    %v1417 = vadd.f32 %v1397, %v1409
    %v1418 = vadd.f32 %v1398, %v1410
    %v1419 = vadd.f32 %v1399, %v1411
    %v1420 = vlaneseq
    %v1421 = vshrl.u32 %v1420, 7
    %v1422 = vsub.s32 2, %v1421
    %v1423 = vrot.slane %v1387, %v1422
    %v1424 = vmul.f32 %v270, %v1423
    %v1425 = vmul.f32 %v274, %v1423
    %v1426 = vmul.f32 %v278, %v1423
    %v1427 = vmul.f32 %v282, %v1423
    %v1428 = vmul.f32 %v286, %v1423
    %v1429 = vmul.f32 %v290, %v1423
    %v1430 = vmul.f32 %v294, %v1423
    %v1431 = vmul.f32 %v298, %v1423
    %v1432 = vadd.f32 %v1412, %v1424
    %v1433 = vadd.f32 %v1413, %v1425
    %v1434 = vadd.f32 %v1414, %v1426
    %v1435 = vadd.f32 %v1415, %v1427
    %v1436 = vadd.f32 %v1416, %v1428
    %v1437 = vadd.f32 %v1417, %v1429
    %v1438 = vadd.f32 %v1418, %v1430
    %v1439 = vadd.f32 %v1419, %v1431
    %v1440 = vlaneseq
    %v1441 = vshrl.u32 %v1440, 7
    %v1442 = vsub.s32 3, %v1441
    %v1443 = vrot.slane %v1387, %v1442
    %v1444 = vmul.f32 %v322, %v1443
    %v1445 = vmul.f32 %v326, %v1443
    %v1446 = vmul.f32 %v330, %v1443
    %v1447 = vmul.f32 %v334, %v1443
    %v1448 = vmul.f32 %v338, %v1443
    %v1449 = vmul.f32 %v342, %v1443
    %v1450 = vmul.f32 %v346, %v1443
    %v1451 = vmul.f32 %v350, %v1443
    %v1452 = vadd.f32 %v1432, %v1444
    %v1453 = vadd.f32 %v1433, %v1445
    %v1454 = vadd.f32 %v1434, %v1446
    %v1455 = vadd.f32 %v1435, %v1447
    %v1456 = vadd.f32 %v1436, %v1448
    %v1457 = vadd.f32 %v1437, %v1449
    %v1458 = vadd.f32 %v1438, %v1450
    %v1459 = vadd.f32 %v1439, %v1451
    %v1460 = vadd.f32 %v1452, %v78
    %v1461 = vadd.f32 %v1453, %v83
    %v1462 = vadd.f32 %v1454, %v88
    %v1463 = vadd.f32 %v1455, %v93
    %v1464 = vadd.f32 %v1456, %v98
    %v1465 = vadd.f32 %v1457, %v103
    %v1466 = vadd.f32 %v1458, %v108
    %v1467 = vadd.f32 %v1459, %v113
    %v1468 = vmax.f32 %v1460, 0.0
    %v1469 = vmax.f32 %v1461, 0.0
    %v1470 = vmax.f32 %v1462, 0.0
    %v1471 = vmax.f32 %v1463, 0.0
    %v1472 = vmax.f32 %v1464, 0.0
    %v1473 = vmax.f32 %v1465, 0.0
    %v1474 = vmax.f32 %v1466, 0.0
    %v1475 = vmax.f32 %v1467, 0.0
    %s1476 = scalar_lea.vmem [#allocation2], 704
    %1477 = vst [vmem:[%s1476] sm:$0xff] %v1468
    %1478 = vst [vmem:[%s1476 + $0x8] sm:$0xff] %v1469
    %1479 = vst [vmem:[%s1476 + $0x10] sm:$0xff] %v1470
    %1480 = vst [vmem:[%s1476 + $0x18] sm:$0xff] %v1471
    %1481 = vst [vmem:[%s1476 + $0x20] sm:$0xff] %v1472
    %1482 = vst [vmem:[%s1476 + $0x28] sm:$0xff] %v1473
    %1483 = vst [vmem:[%s1476 + $0x30] sm:$0xff] %v1474
    %1484 = vst [vmem:[%s1476 + $0x38] sm:$0xff] %v1475
    %s1485 = scalar_lea.vmem [#allocation3], 48
    %v1486 = vld [vmem:[%s1485] sm:$0xf]
    %v1487 = vlaneseq
    %v1488 = vshrl.u32 %v1487, 7
    %v1489 = vsub.s32 0, %v1488
    %v1490 = vrot.slane %v1486, %v1489
    %v1491 = vmul.f32 %v167, %v1490
    %v1492 = vmul.f32 %v172, %v1490
    %v1493 = vmul.f32 %v177, %v1490
    %v1494 = vmul.f32 %v182, %v1490
    %v1495 = vmul.f32 %v187, %v1490
    %v1496 = vmul.f32 %v192, %v1490
    %v1497 = vmul.f32 %v197, %v1490
    %v1498 = vmul.f32 %v202, %v1490
    %v1499 = vlaneseq
    %v1500 = vshrl.u32 %v1499, 7
    %v1501 = vsub.s32 1, %v1500
    %v1502 = vrot.slane %v1486, %v1501
    %v1503 = vmul.f32 %v218, %v1502
    %v1504 = vmul.f32 %v222, %v1502
    %v1505 = vmul.f32 %v226, %v1502
    %v1506 = vmul.f32 %v230, %v1502
    %v1507 = vmul.f32 %v234, %v1502
    %v1508 = vmul.f32 %v238, %v1502
    %v1509 = vmul.f32 %v242, %v1502
    %v1510 = vmul.f32 %v246, %v1502
    %v1511 = vadd.f32 %v1491, %v1503
    %v1512 = vadd.f32 %v1492, %v1504
    %v1513 = vadd.f32 %v1493, %v1505
    %v1514 = vadd.f32 %v1494, %v1506
    %v1515 = vadd.f32 %v1495, %v1507
    %v1516 = vadd.f32 %v1496, %v1508
    %v1517 = vadd.f32 %v1497, %v1509
    %v1518 = vadd.f32 %v1498, %v1510
    %v1519 = vlaneseq
    %v1520 = vshrl.u32 %v1519, 7
    %v1521 = vsub.s32 2, %v1520
    %v1522 = vrot.slane %v1486, %v1521
    %v1523 = vmul.f32 %v270, %v1522
    %v1524 = vmul.f32 %v274, %v1522
    %v1525 = vmul.f32 %v278, %v1522
    %v1526 = vmul.f32 %v282, %v1522
    %v1527 = vmul.f32 %v286, %v1522
    %v1528 = vmul.f32 %v290, %v1522
    %v1529 = vmul.f32 %v294, %v1522
    %v1530 = vmul.f32 %v298, %v1522
    %v1531 = vadd.f32 %v1511, %v1523
    %v1532 = vadd.f32 %v1512, %v1524
    %v1533 = vadd.f32 %v1513, %v1525
    %v1534 = vadd.f32 %v1514, %v1526
    %v1535 = vadd.f32 %v1515, %v1527
    %v1536 = vadd.f32 %v1516, %v1528
    %v1537 = vadd.f32 %v1517, %v1529
    %v1538 = vadd.f32 %v1518, %v1530
    %v1539 = vlaneseq
    %v1540 = vshrl.u32 %v1539, 7
    %v1541 = vsub.s32 3, %v1540
    %v1542 = vrot.slane %v1486, %v1541
    %v1543 = vmul.f32 %v322, %v1542
    %v1544 = vmul.f32 %v326, %v1542
    %v1545 = vmul.f32 %v330, %v1542
    %v1546 = vmul.f32 %v334, %v1542
    %v1547 = vmul.f32 %v338, %v1542
    %v1548 = vmul.f32 %v342, %v1542
    %v1549 = vmul.f32 %v346, %v1542
    %v1550 = vmul.f32 %v350, %v1542
    %v1551 = vadd.f32 %v1531, %v1543
    %v1552 = vadd.f32 %v1532, %v1544
    %v1553 = vadd.f32 %v1533, %v1545
    %v1554 = vadd.f32 %v1534, %v1546
    %v1555 = vadd.f32 %v1535, %v1547
    %v1556 = vadd.f32 %v1536, %v1548
    %v1557 = vadd.f32 %v1537, %v1549
    %v1558 = vadd.f32 %v1538, %v1550
    %v1559 = vadd.f32 %v1551, %v78
    %v1560 = vadd.f32 %v1552, %v83
    %v1561 = vadd.f32 %v1553, %v88
    %v1562 = vadd.f32 %v1554, %v93
    %v1563 = vadd.f32 %v1555, %v98
    %v1564 = vadd.f32 %v1556, %v103
    %v1565 = vadd.f32 %v1557, %v108
    %v1566 = vadd.f32 %v1558, %v113
    %v1567 = vmax.f32 %v1559, 0.0
    %v1568 = vmax.f32 %v1560, 0.0
    %v1569 = vmax.f32 %v1561, 0.0
    %v1570 = vmax.f32 %v1562, 0.0
    %v1571 = vmax.f32 %v1563, 0.0
    %v1572 = vmax.f32 %v1564, 0.0
    %v1573 = vmax.f32 %v1565, 0.0
    %v1574 = vmax.f32 %v1566, 0.0
    %s1575 = scalar_lea.vmem [#allocation2], 768
    %1576 = vst [vmem:[%s1575] sm:$0xff] %v1567
    %1577 = vst [vmem:[%s1575 + $0x8] sm:$0xff] %v1568
    %1578 = vst [vmem:[%s1575 + $0x10] sm:$0xff] %v1569
    %1579 = vst [vmem:[%s1575 + $0x18] sm:$0xff] %v1570
    %1580 = vst [vmem:[%s1575 + $0x20] sm:$0xff] %v1571
    %1581 = vst [vmem:[%s1575 + $0x28] sm:$0xff] %v1572
    %1582 = vst [vmem:[%s1575 + $0x30] sm:$0xff] %v1573
    %1583 = vst [vmem:[%s1575 + $0x38] sm:$0xff] %v1574
    %s1584 = scalar_lea.vmem [#allocation3], 52
    %v1585 = vld [vmem:[%s1584] sm:$0xf]
    %v1586 = vlaneseq
    %v1587 = vshrl.u32 %v1586, 7
    %v1588 = vsub.s32 0, %v1587
    %v1589 = vrot.slane %v1585, %v1588
    %v1590 = vmul.f32 %v167, %v1589
    %v1591 = vmul.f32 %v172, %v1589
    %v1592 = vmul.f32 %v177, %v1589
    %v1593 = vmul.f32 %v182, %v1589
    %v1594 = vmul.f32 %v187, %v1589
    %v1595 = vmul.f32 %v192, %v1589
    %v1596 = vmul.f32 %v197, %v1589
    %v1597 = vmul.f32 %v202, %v1589
    %v1598 = vlaneseq
    %v1599 = vshrl.u32 %v1598, 7
    %v1600 = vsub.s32 1, %v1599
    %v1601 = vrot.slane %v1585, %v1600
    %v1602 = vmul.f32 %v218, %v1601
    %v1603 = vmul.f32 %v222, %v1601
    %v1604 = vmul.f32 %v226, %v1601
    %v1605 = vmul.f32 %v230, %v1601
    %v1606 = vmul.f32 %v234, %v1601
    %v1607 = vmul.f32 %v238, %v1601
    %v1608 = vmul.f32 %v242, %v1601
    %v1609 = vmul.f32 %v246, %v1601
    %v1610 = vadd.f32 %v1590, %v1602
    %v1611 = vadd.f32 %v1591, %v1603
    %v1612 = vadd.f32 %v1592, %v1604
    %v1613 = vadd.f32 %v1593, %v1605
    %v1614 = vadd.f32 %v1594, %v1606
    %v1615 = vadd.f32 %v1595, %v1607
    %v1616 = vadd.f32 %v1596, %v1608
    %v1617 = vadd.f32 %v1597, %v1609
    %v1618 = vlaneseq
    %v1619 = vshrl.u32 %v1618, 7
    %v1620 = vsub.s32 2, %v1619
    %v1621 = vrot.slane %v1585, %v1620
    %v1622 = vmul.f32 %v270, %v1621
    %v1623 = vmul.f32 %v274, %v1621
    %v1624 = vmul.f32 %v278, %v1621
    %v1625 = vmul.f32 %v282, %v1621
    %v1626 = vmul.f32 %v286, %v1621
    %v1627 = vmul.f32 %v290, %v1621
    %v1628 = vmul.f32 %v294, %v1621
    %v1629 = vmul.f32 %v298, %v1621
    %v1630 = vadd.f32 %v1610, %v1622
    %v1631 = vadd.f32 %v1611, %v1623
    %v1632 = vadd.f32 %v1612, %v1624
    %v1633 = vadd.f32 %v1613, %v1625
    %v1634 = vadd.f32 %v1614, %v1626
    %v1635 = vadd.f32 %v1615, %v1627
    %v1636 = vadd.f32 %v1616, %v1628
    %v1637 = vadd.f32 %v1617, %v1629
    %v1638 = vlaneseq
    %v1639 = vshrl.u32 %v1638, 7
    %v1640 = vsub.s32 3, %v1639
    %v1641 = vrot.slane %v1585, %v1640
    %v1642 = vmul.f32 %v322, %v1641
    %v1643 = vmul.f32 %v326, %v1641
    %v1644 = vmul.f32 %v330, %v1641
    %v1645 = vmul.f32 %v334, %v1641
    %v1646 = vmul.f32 %v338, %v1641
    %v1647 = vmul.f32 %v342, %v1641
    %v1648 = vmul.f32 %v346, %v1641
    %v1649 = vmul.f32 %v350, %v1641
    %v1650 = vadd.f32 %v1630, %v1642
    %v1651 = vadd.f32 %v1631, %v1643
    %v1652 = vadd.f32 %v1632, %v1644
    %v1653 = vadd.f32 %v1633, %v1645
    %v1654 = vadd.f32 %v1634, %v1646
    %v1655 = vadd.f32 %v1635, %v1647
    %v1656 = vadd.f32 %v1636, %v1648
    %v1657 = vadd.f32 %v1637, %v1649
    %v1658 = vadd.f32 %v1650, %v78
    %v1659 = vadd.f32 %v1651, %v83
    %v1660 = vadd.f32 %v1652, %v88
    %v1661 = vadd.f32 %v1653, %v93
    %v1662 = vadd.f32 %v1654, %v98
    %v1663 = vadd.f32 %v1655, %v103
    %v1664 = vadd.f32 %v1656, %v108
    %v1665 = vadd.f32 %v1657, %v113
    %v1666 = vmax.f32 %v1658, 0.0
    %v1667 = vmax.f32 %v1659, 0.0
    %v1668 = vmax.f32 %v1660, 0.0
    %v1669 = vmax.f32 %v1661, 0.0
    %v1670 = vmax.f32 %v1662, 0.0
    %v1671 = vmax.f32 %v1663, 0.0
    %v1672 = vmax.f32 %v1664, 0.0
    %v1673 = vmax.f32 %v1665, 0.0
    %s1674 = scalar_lea.vmem [#allocation2], 832
    %1675 = vst [vmem:[%s1674] sm:$0xff] %v1666
    %1676 = vst [vmem:[%s1674 + $0x8] sm:$0xff] %v1667
    %1677 = vst [vmem:[%s1674 + $0x10] sm:$0xff] %v1668
    %1678 = vst [vmem:[%s1674 + $0x18] sm:$0xff] %v1669
    %1679 = vst [vmem:[%s1674 + $0x20] sm:$0xff] %v1670
    %1680 = vst [vmem:[%s1674 + $0x28] sm:$0xff] %v1671
    %1681 = vst [vmem:[%s1674 + $0x30] sm:$0xff] %v1672
    %1682 = vst [vmem:[%s1674 + $0x38] sm:$0xff] %v1673
    %s1683 = scalar_lea.vmem [#allocation3], 56
    %v1684 = vld [vmem:[%s1683] sm:$0xf]
    %v1685 = vlaneseq
    %v1686 = vshrl.u32 %v1685, 7
    %v1687 = vsub.s32 0, %v1686
    %v1688 = vrot.slane %v1684, %v1687
    %v1689 = vmul.f32 %v167, %v1688
    %v1690 = vmul.f32 %v172, %v1688
    %v1691 = vmul.f32 %v177, %v1688
    %v1692 = vmul.f32 %v182, %v1688
    %v1693 = vmul.f32 %v187, %v1688
    %v1694 = vmul.f32 %v192, %v1688
    %v1695 = vmul.f32 %v197, %v1688
    %v1696 = vmul.f32 %v202, %v1688
    %v1697 = vlaneseq
    %v1698 = vshrl.u32 %v1697, 7
    %v1699 = vsub.s32 1, %v1698
    %v1700 = vrot.slane %v1684, %v1699
    %v1701 = vmul.f32 %v218, %v1700
    %v1702 = vmul.f32 %v222, %v1700
    %v1703 = vmul.f32 %v226, %v1700
    %v1704 = vmul.f32 %v230, %v1700
    %v1705 = vmul.f32 %v234, %v1700
    %v1706 = vmul.f32 %v238, %v1700
    %v1707 = vmul.f32 %v242, %v1700
    %v1708 = vmul.f32 %v246, %v1700
    %v1709 = vadd.f32 %v1689, %v1701
    %v1710 = vadd.f32 %v1690, %v1702
    %v1711 = vadd.f32 %v1691, %v1703
    %v1712 = vadd.f32 %v1692, %v1704
    %v1713 = vadd.f32 %v1693, %v1705
    %v1714 = vadd.f32 %v1694, %v1706
    %v1715 = vadd.f32 %v1695, %v1707
    %v1716 = vadd.f32 %v1696, %v1708
    %v1717 = vlaneseq
    %v1718 = vshrl.u32 %v1717, 7
    %v1719 = vsub.s32 2, %v1718
    %v1720 = vrot.slane %v1684, %v1719
    %v1721 = vmul.f32 %v270, %v1720
    %v1722 = vmul.f32 %v274, %v1720
    %v1723 = vmul.f32 %v278, %v1720
    %v1724 = vmul.f32 %v282, %v1720
    %v1725 = vmul.f32 %v286, %v1720
    %v1726 = vmul.f32 %v290, %v1720
    %v1727 = vmul.f32 %v294, %v1720
    %v1728 = vmul.f32 %v298, %v1720
    %v1729 = vadd.f32 %v1709, %v1721
    %v1730 = vadd.f32 %v1710, %v1722
    %v1731 = vadd.f32 %v1711, %v1723
    %v1732 = vadd.f32 %v1712, %v1724
    %v1733 = vadd.f32 %v1713, %v1725
    %v1734 = vadd.f32 %v1714, %v1726
    %v1735 = vadd.f32 %v1715, %v1727
    %v1736 = vadd.f32 %v1716, %v1728
    %v1737 = vlaneseq
    %v1738 = vshrl.u32 %v1737, 7
    %v1739 = vsub.s32 3, %v1738
    %v1740 = vrot.slane %v1684, %v1739
    %v1741 = vmul.f32 %v322, %v1740
    %v1742 = vmul.f32 %v326, %v1740
    %v1743 = vmul.f32 %v330, %v1740
    %v1744 = vmul.f32 %v334, %v1740
    %v1745 = vmul.f32 %v338, %v1740
    %v1746 = vmul.f32 %v342, %v1740
    %v1747 = vmul.f32 %v346, %v1740
    %v1748 = vmul.f32 %v350, %v1740
    %v1749 = vadd.f32 %v1729, %v1741
    %v1750 = vadd.f32 %v1730, %v1742
    %v1751 = vadd.f32 %v1731, %v1743
    %v1752 = vadd.f32 %v1732, %v1744
    %v1753 = vadd.f32 %v1733, %v1745
    %v1754 = vadd.f32 %v1734, %v1746
    %v1755 = vadd.f32 %v1735, %v1747
    %v1756 = vadd.f32 %v1736, %v1748
    %v1757 = vadd.f32 %v1749, %v78
    %v1758 = vadd.f32 %v1750, %v83
    %v1759 = vadd.f32 %v1751, %v88
    %v1760 = vadd.f32 %v1752, %v93
    %v1761 = vadd.f32 %v1753, %v98
    %v1762 = vadd.f32 %v1754, %v103
    %v1763 = vadd.f32 %v1755, %v108
    %v1764 = vadd.f32 %v1756, %v113
    %v1765 = vmax.f32 %v1757, 0.0
    %v1766 = vmax.f32 %v1758, 0.0
    %v1767 = vmax.f32 %v1759, 0.0
    %v1768 = vmax.f32 %v1760, 0.0
    %v1769 = vmax.f32 %v1761, 0.0
    %v1770 = vmax.f32 %v1762, 0.0
    %v1771 = vmax.f32 %v1763, 0.0
    %v1772 = vmax.f32 %v1764, 0.0
    %s1773 = scalar_lea.vmem [#allocation2], 896
    %1774 = vst [vmem:[%s1773] sm:$0xff] %v1765
    %1775 = vst [vmem:[%s1773 + $0x8] sm:$0xff] %v1766
    %1776 = vst [vmem:[%s1773 + $0x10] sm:$0xff] %v1767
    %1777 = vst [vmem:[%s1773 + $0x18] sm:$0xff] %v1768
    %1778 = vst [vmem:[%s1773 + $0x20] sm:$0xff] %v1769
    %1779 = vst [vmem:[%s1773 + $0x28] sm:$0xff] %v1770
    %1780 = vst [vmem:[%s1773 + $0x30] sm:$0xff] %v1771
    %1781 = vst [vmem:[%s1773 + $0x38] sm:$0xff] %v1772
    %s1782 = scalar_lea.vmem [#allocation3], 60
    %v1783 = vld [vmem:[%s1782] sm:$0xf]
    %v1784 = vlaneseq
    %v1785 = vshrl.u32 %v1784, 7
    %v1786 = vsub.s32 0, %v1785
    %v1787 = vrot.slane %v1783, %v1786
    %v1788 = vmul.f32 %v167, %v1787
    %v1789 = vmul.f32 %v172, %v1787
    %v1790 = vmul.f32 %v177, %v1787
    %v1791 = vmul.f32 %v182, %v1787
    %v1792 = vmul.f32 %v187, %v1787
    %v1793 = vmul.f32 %v192, %v1787
    %v1794 = vmul.f32 %v197, %v1787
    %v1795 = vmul.f32 %v202, %v1787
    %v1796 = vlaneseq
    %v1797 = vshrl.u32 %v1796, 7
    %v1798 = vsub.s32 1, %v1797
    %v1799 = vrot.slane %v1783, %v1798
    %v1800 = vmul.f32 %v218, %v1799
    %v1801 = vmul.f32 %v222, %v1799
    %v1802 = vmul.f32 %v226, %v1799
    %v1803 = vmul.f32 %v230, %v1799
    %v1804 = vmul.f32 %v234, %v1799
    %v1805 = vmul.f32 %v238, %v1799
    %v1806 = vmul.f32 %v242, %v1799
    %v1807 = vmul.f32 %v246, %v1799
    %v1808 = vadd.f32 %v1788, %v1800
    %v1809 = vadd.f32 %v1789, %v1801
    %v1810 = vadd.f32 %v1790, %v1802
    %v1811 = vadd.f32 %v1791, %v1803
    %v1812 = vadd.f32 %v1792, %v1804
    %v1813 = vadd.f32 %v1793, %v1805
    %v1814 = vadd.f32 %v1794, %v1806
    %v1815 = vadd.f32 %v1795, %v1807
    %v1816 = vlaneseq
    %v1817 = vshrl.u32 %v1816, 7
    %v1818 = vsub.s32 2, %v1817
    %v1819 = vrot.slane %v1783, %v1818
    %v1820 = vmul.f32 %v270, %v1819
    %v1821 = vmul.f32 %v274, %v1819
    %v1822 = vmul.f32 %v278, %v1819
    %v1823 = vmul.f32 %v282, %v1819
    %v1824 = vmul.f32 %v286, %v1819
    %v1825 = vmul.f32 %v290, %v1819
    %v1826 = vmul.f32 %v294, %v1819
    %v1827 = vmul.f32 %v298, %v1819
    %v1828 = vadd.f32 %v1808, %v1820
    %v1829 = vadd.f32 %v1809, %v1821
    %v1830 = vadd.f32 %v1810, %v1822
    %v1831 = vadd.f32 %v1811, %v1823
    %v1832 = vadd.f32 %v1812, %v1824
    %v1833 = vadd.f32 %v1813, %v1825
    %v1834 = vadd.f32 %v1814, %v1826
    %v1835 = vadd.f32 %v1815, %v1827
    %v1836 = vlaneseq
    %v1837 = vshrl.u32 %v1836, 7
    %v1838 = vsub.s32 3, %v1837
    %v1839 = vrot.slane %v1783, %v1838
    %v1840 = vmul.f32 %v322, %v1839
    %v1841 = vmul.f32 %v326, %v1839
    %v1842 = vmul.f32 %v330, %v1839
    %v1843 = vmul.f32 %v334, %v1839
    %v1844 = vmul.f32 %v338, %v1839
    %v1845 = vmul.f32 %v342, %v1839
    %v1846 = vmul.f32 %v346, %v1839
    %v1847 = vmul.f32 %v350, %v1839
    %v1848 = vadd.f32 %v1828, %v1840
    %v1849 = vadd.f32 %v1829, %v1841
    %v1850 = vadd.f32 %v1830, %v1842
    %v1851 = vadd.f32 %v1831, %v1843
    %v1852 = vadd.f32 %v1832, %v1844
    %v1853 = vadd.f32 %v1833, %v1845
    %v1854 = vadd.f32 %v1834, %v1846
    %v1855 = vadd.f32 %v1835, %v1847
    %v1856 = vadd.f32 %v1848, %v78
    %v1857 = vadd.f32 %v1849, %v83
    %v1858 = vadd.f32 %v1850, %v88
    %v1859 = vadd.f32 %v1851, %v93
    %v1860 = vadd.f32 %v1852, %v98
    %v1861 = vadd.f32 %v1853, %v103
    %v1862 = vadd.f32 %v1854, %v108
    %v1863 = vadd.f32 %v1855, %v113
    %v1864 = vmax.f32 %v1856, 0.0
    %v1865 = vmax.f32 %v1857, 0.0
    %v1866 = vmax.f32 %v1858, 0.0
    %v1867 = vmax.f32 %v1859, 0.0
    %v1868 = vmax.f32 %v1860, 0.0
    %v1869 = vmax.f32 %v1861, 0.0
    %v1870 = vmax.f32 %v1862, 0.0
    %v1871 = vmax.f32 %v1863, 0.0
    %s1872 = scalar_lea.vmem [#allocation2], 960
    %1873 = vst [vmem:[%s1872] sm:$0xff] %v1864
    %1874 = vst [vmem:[%s1872 + $0x8] sm:$0xff] %v1865
    %1875 = vst [vmem:[%s1872 + $0x10] sm:$0xff] %v1866
    %1876 = vst [vmem:[%s1872 + $0x18] sm:$0xff] %v1867
    %1877 = vst [vmem:[%s1872 + $0x20] sm:$0xff] %v1868
    %1878 = vst [vmem:[%s1872 + $0x28] sm:$0xff] %v1869
    %1879 = vst [vmem:[%s1872 + $0x30] sm:$0xff] %v1870
    %1880 = vst [vmem:[%s1872 + $0x38] sm:$0xff] %v1871
    %v1881 = vld [vmem:[#allocation2] sm:$0xff]
    %v1882 = vld [vmem:[#allocation2 + $0x8] sm:$0xff]
    %v1883 = vld [vmem:[#allocation2 + $0x10] sm:$0xff]
    %v1884 = vld [vmem:[#allocation2 + $0x18] sm:$0xff]
    %v1885 = vld [vmem:[#allocation2 + $0x20] sm:$0xff]
    %v1886 = vld [vmem:[#allocation2 + $0x28] sm:$0xff]
    %v1887 = vld [vmem:[#allocation2 + $0x30] sm:$0xff]
    %v1888 = vld [vmem:[#allocation2 + $0x38] sm:$0xff]
    %v1889 = vld [vmem:[%s486] sm:$0xff]
    %v1890 = vld [vmem:[%s486 + $0x8] sm:$0xff]
    %v1891 = vld [vmem:[%s486 + $0x10] sm:$0xff]
    %v1892 = vld [vmem:[%s486 + $0x18] sm:$0xff]
    %v1893 = vld [vmem:[%s486 + $0x20] sm:$0xff]
    %v1894 = vld [vmem:[%s486 + $0x28] sm:$0xff]
    %v1895 = vld [vmem:[%s486 + $0x30] sm:$0xff]
    %v1896 = vld [vmem:[%s486 + $0x38] sm:$0xff]
    %vm1897 = vcmask 523264
    %v1899 = vsel %vm1897, %v51, 0
    %v1902 = vsel %vm1897, %v52, 0
    %v1905 = vsel %vm1897, %v53, 0
    %v1908 = vsel %vm1897, %v54, 0
    %v1911 = vsel %vm1897, %v55, 0
    %v1914 = vsel %vm1897, %v56, 0
    %v1917 = vsel %vm1897, %v57, 0
    %v1920 = vsel %vm1897, %v58, 0
    %1922 = vmatprep.subr.mxu0 0.0
    %1923 = vmatpush1.msra.mxu0 %v1889
    %1924 = vmatprep.subr.mxu0 0.0
    %1925 = vmatpush1.msra.mxu0 %v1890
    %1926 = vmatprep.subr.mxu0 0.0
    %1927 = vmatpush1.msra.mxu0 %v1891
    %1928 = vmatprep.subr.mxu0 0.0
    %1929 = vmatpush1.msra.mxu0 %v1892
    %1930 = vmatprep.subr.mxu0 0.0
    %1931 = vmatpush1.msra.mxu0 %v1893
    %1932 = vmatprep.subr.mxu0 0.0
    %1933 = vmatpush1.msra.mxu0 %v1894
    %1934 = vmatprep.subr.mxu0 0.0
    %1935 = vmatpush1.msra.mxu0 %v1895
    %1936 = vmatprep.subr.mxu0 0.0
    %1937 = vmatpush1.msra.mxu0 %v1896
    %1938 = vmatprep.subr.mxu0 0.0
    %1939 = vmatpush1.msra.mxu0 0.0
    %1940 = vmatprep.subr.mxu0 0.0
    %1941 = vmatpush1.msra.mxu0 0.0
    %1942 = vmatprep.subr.mxu0 0.0
    %1943 = vmatpush1.msra.mxu0 0.0
    %1944 = vmatprep.subr.mxu0 0.0
    %1945 = vmatpush1.msra.mxu0 0.0
    %1946 = vmatprep.subr.mxu0 0.0
    %1947 = vmatpush1.msra.mxu0 0.0
    %1948 = vmatprep.subr.mxu0 0.0
    %1949 = vmatpush1.msra.mxu0 0.0
    %1950 = vmatprep.subr.mxu0 0.0
    %1951 = vmatpush1.msra.mxu0 0.0
    %1952 = vmatprep.subr.mxu0 0.0
    %1953 = vmatpush1.msra.mxu0 0.0
    %1954 = vmatprep.subr.mxu0 0.0
    %1955 = vmatpush1.msra.mxu0 0.0
    %1956 = vmatprep.subr.mxu0 0.0
    %1957 = vmatpush1.msra.mxu0 0.0
    %1958 = vmatprep.subr.mxu0 0.0
    %1959 = vmatpush1.msra.mxu0 0.0
    %1960 = vmatprep.subr.mxu0 0.0
    %1961 = vmatpush1.msra.mxu0 0.0
    %1962 = vmatprep.subr.mxu0 0.0
    %1963 = vmatpush1.msra.mxu0 0.0
    %1964 = vmatprep.subr.mxu0 0.0
    %1965 = vmatpush1.msra.mxu0 0.0
    %1966 = vmatprep.subr.mxu0 0.0
    %1967 = vmatpush1.msra.mxu0 0.0
    %1968 = vmatprep.subr.mxu0 0.0
    %1969 = vmatpush1.msra.mxu0 0.0
    %1970 = vmatprep.subr.mxu0 0.0
    %1971 = vmatpush1.msra.mxu0 0.0
    %1972 = vmatprep.subr.mxu0 0.0
    %1973 = vmatpush1.msra.mxu0 0.0
    %1974 = vmatprep.subr.mxu0 0.0
    %1975 = vmatpush1.msra.mxu0 0.0
    %1976 = vmatprep.subr.mxu0 0.0
    %1977 = vmatpush1.msra.mxu0 0.0
    %1978 = vmatprep.subr.mxu0 0.0
    %1979 = vmatpush1.msra.mxu0 0.0
    %1980 = vmatprep.subr.mxu0 0.0
    %1981 = vmatpush1.msra.mxu0 0.0
    %1982 = vmatprep.subr.mxu0 0.0
    %1983 = vmatpush1.msra.mxu0 0.0
    %1984 = vmatprep.subr.mxu0 0.0
    %1985 = vmatpush1.msra.mxu0 0.0
    %1986 = vmatprep.mubr.f32.mxu0 0.0
    %1987 = vmatmul.mubr.f32.gmra.mrb[0].mxu0 %v1899
    %v1988 = vpop.f32.mrb[0].mxu0
    %v1989 = vadd.f32 0.0, %v1988
    %v1990 = vpop.f32.mrb[0].mxu0
    %1991 = vmatprep.mubr.f32.mxu0 0.0
    %1992 = vmatmul.mubr.f32.gmra.mrb[0].mxu0 %v1902
    %v1993 = vpop.f32.mrb[0].mxu0
    %v1994 = vadd.f32 0.0, %v1993
    %v1995 = vpop.f32.mrb[0].mxu0
    %1996 = vmatprep.mubr.f32.mxu0 0.0
    %1997 = vmatmul.mubr.f32.gmra.mrb[0].mxu0 %v1905
    %v1998 = vpop.f32.mrb[0].mxu0
    %v1999 = vadd.f32 0.0, %v1998
    %v2000 = vpop.f32.mrb[0].mxu0
    %2001 = vmatprep.mubr.f32.mxu0 0.0
    %2002 = vmatmul.mubr.f32.gmra.mrb[0].mxu0 %v1908
    %v2003 = vpop.f32.mrb[0].mxu0
    %v2004 = vadd.f32 0.0, %v2003
    %v2005 = vpop.f32.mrb[0].mxu0
    %2006 = vmatprep.mubr.f32.mxu0 0.0
    %2007 = vmatmul.mubr.f32.gmra.mrb[0].mxu0 %v1911
    %v2008 = vpop.f32.mrb[0].mxu0
    %v2009 = vadd.f32 0.0, %v2008
    %v2010 = vpop.f32.mrb[0].mxu0
    %2011 = vmatprep.mubr.f32.mxu0 0.0
    %2012 = vmatmul.mubr.f32.gmra.mrb[0].mxu0 %v1914
    %v2013 = vpop.f32.mrb[0].mxu0
    %v2014 = vadd.f32 0.0, %v2013
    %v2015 = vpop.f32.mrb[0].mxu0
    %2016 = vmatprep.mubr.f32.mxu0 0.0
    %2017 = vmatmul.mubr.f32.gmra.mrb[0].mxu0 %v1917
    %v2018 = vpop.f32.mrb[0].mxu0
    %v2019 = vadd.f32 0.0, %v2018
    %v2020 = vpop.f32.mrb[0].mxu0
    %2021 = vmatprep.mubr.f32.mxu0 0.0
    %2022 = vmatmul.mubr.f32.gmra.mrb[0].mxu0 %v1920
    %v2023 = vpop.f32.mrb[0].mxu0
    %v2024 = vadd.f32 0.0, %v2023
    %v2025 = vpop.f32.mrb[0].mxu0
    %2026 = vdwg.mxu0
    %v2028 = vsel %vm1897, %v43, 0
    %v2031 = vsel %vm1897, %v44, 0
    %v2034 = vsel %vm1897, %v45, 0
    %v2037 = vsel %vm1897, %v46, 0
    %v2040 = vsel %vm1897, %v47, 0
    %v2043 = vsel %vm1897, %v48, 0
    %v2046 = vsel %vm1897, %v49, 0
    %v2049 = vsel %vm1897, %v50, 0
    %2051 = vmatprep.subr.mxu0 0.0
    %2052 = vmatpush1.msra.mxu0 %v1881
    %2053 = vmatprep.subr.mxu0 0.0
    %2054 = vmatpush1.msra.mxu0 %v1882
    %2055 = vmatprep.subr.mxu0 0.0
    %2056 = vmatpush1.msra.mxu0 %v1883
    %2057 = vmatprep.subr.mxu0 0.0
    %2058 = vmatpush1.msra.mxu0 %v1884
    %2059 = vmatprep.subr.mxu0 0.0
    %2060 = vmatpush1.msra.mxu0 %v1885
    %2061 = vmatprep.subr.mxu0 0.0
    %2062 = vmatpush1.msra.mxu0 %v1886
    %2063 = vmatprep.subr.mxu0 0.0
    %2064 = vmatpush1.msra.mxu0 %v1887
    %2065 = vmatprep.subr.mxu0 0.0
    %2066 = vmatpush1.msra.mxu0 %v1888
    %2067 = vmatprep.subr.mxu0 0.0
    %2068 = vmatpush1.msra.mxu0 0.0
    %2069 = vmatprep.subr.mxu0 0.0
    %2070 = vmatpush1.msra.mxu0 0.0
    %2071 = vmatprep.subr.mxu0 0.0
    %2072 = vmatpush1.msra.mxu0 0.0
    %2073 = vmatprep.subr.mxu0 0.0
    %2074 = vmatpush1.msra.mxu0 0.0
    %2075 = vmatprep.subr.mxu0 0.0
    %2076 = vmatpush1.msra.mxu0 0.0
    %2077 = vmatprep.subr.mxu0 0.0
    %2078 = vmatpush1.msra.mxu0 0.0
    %2079 = vmatprep.subr.mxu0 0.0
    %2080 = vmatpush1.msra.mxu0 0.0
    %2081 = vmatprep.subr.mxu0 0.0
    %2082 = vmatpush1.msra.mxu0 0.0
    %2083 = vmatprep.subr.mxu0 0.0
    %2084 = vmatpush1.msra.mxu0 0.0
    %2085 = vmatprep.subr.mxu0 0.0
    %2086 = vmatpush1.msra.mxu0 0.0
    %2087 = vmatprep.subr.mxu0 0.0
    %2088 = vmatpush1.msra.mxu0 0.0
    %2089 = vmatprep.subr.mxu0 0.0
    %2090 = vmatpush1.msra.mxu0 0.0
    %2091 = vmatprep.subr.mxu0 0.0
    %2092 = vmatpush1.msra.mxu0 0.0
    %2093 = vmatprep.subr.mxu0 0.0
    %2094 = vmatpush1.msra.mxu0 0.0
    %2095 = vmatprep.subr.mxu0 0.0
    %2096 = vmatpush1.msra.mxu0 0.0
    %2097 = vmatprep.subr.mxu0 0.0
    %2098 = vmatpush1.msra.mxu0 0.0
    %2099 = vmatprep.subr.mxu0 0.0
    %2100 = vmatpush1.msra.mxu0 0.0
    %2101 = vmatprep.subr.mxu0 0.0
    %2102 = vmatpush1.msra.mxu0 0.0
    %2103 = vmatprep.subr.mxu0 0.0
    %2104 = vmatpush1.msra.mxu0 0.0
    %2105 = vmatprep.subr.mxu0 0.0
    %2106 = vmatpush1.msra.mxu0 0.0
    %2107 = vmatprep.subr.mxu0 0.0
    %2108 = vmatpush1.msra.mxu0 0.0
    %2109 = vmatprep.subr.mxu0 0.0
    %2110 = vmatpush1.msra.mxu0 0.0
    %2111 = vmatprep.subr.mxu0 0.0
    %2112 = vmatpush1.msra.mxu0 0.0
    %2113 = vmatprep.subr.mxu0 0.0
    %2114 = vmatpush1.msra.mxu0 0.0
    %2115 = vmatprep.mubr.f32.mxu0 0.0
    %2116 = vmatmul.mubr.f32.gmra.mrb[0].mxu0 %v2028
    %v2117 = vpop.f32.mrb[0].mxu0
    %v2118 = vadd.f32 %v1989, %v2117
    %v2119 = vpop.f32.mrb[0].mxu0
    %2120 = vmatprep.mubr.f32.mxu0 0.0
    %2121 = vmatmul.mubr.f32.gmra.mrb[0].mxu0 %v2031
    %v2122 = vpop.f32.mrb[0].mxu0
    %v2123 = vadd.f32 %v1994, %v2122
    %v2124 = vpop.f32.mrb[0].mxu0
    %2125 = vmatprep.mubr.f32.mxu0 0.0
    %2126 = vmatmul.mubr.f32.gmra.mrb[0].mxu0 %v2034
    %v2127 = vpop.f32.mrb[0].mxu0
    %v2128 = vadd.f32 %v1999, %v2127
    %v2129 = vpop.f32.mrb[0].mxu0
    %2130 = vmatprep.mubr.f32.mxu0 0.0
    %2131 = vmatmul.mubr.f32.gmra.mrb[0].mxu0 %v2037
    %v2132 = vpop.f32.mrb[0].mxu0
    %v2133 = vadd.f32 %v2004, %v2132
    %v2134 = vpop.f32.mrb[0].mxu0
    %2135 = vmatprep.mubr.f32.mxu0 0.0
    %2136 = vmatmul.mubr.f32.gmra.mrb[0].mxu0 %v2040
    %v2137 = vpop.f32.mrb[0].mxu0
    %v2138 = vadd.f32 %v2009, %v2137
    %v2139 = vpop.f32.mrb[0].mxu0
    %2140 = vmatprep.mubr.f32.mxu0 0.0
    %2141 = vmatmul.mubr.f32.gmra.mrb[0].mxu0 %v2043
    %v2142 = vpop.f32.mrb[0].mxu0
    %v2143 = vadd.f32 %v2014, %v2142
    %v2144 = vpop.f32.mrb[0].mxu0
    %2145 = vmatprep.mubr.f32.mxu0 0.0
    %2146 = vmatmul.mubr.f32.gmra.mrb[0].mxu0 %v2046
    %v2147 = vpop.f32.mrb[0].mxu0
    %v2148 = vadd.f32 %v2019, %v2147
    %v2149 = vpop.f32.mrb[0].mxu0
    %2150 = vmatprep.mubr.f32.mxu0 0.0
    %2151 = vmatmul.mubr.f32.gmra.mrb[0].mxu0 %v2049
    %v2152 = vpop.f32.mrb[0].mxu0
    %v2153 = vadd.f32 %v2024, %v2152
    %v2154 = vpop.f32.mrb[0].mxu0
    %2155 = vdwg.mxu0
    %v2156 = vld [vmem:[%s585] sm:$0xff]
    %v2157 = vld [vmem:[%s585 + $0x8] sm:$0xff]
    %v2158 = vld [vmem:[%s585 + $0x10] sm:$0xff]
    %v2159 = vld [vmem:[%s585 + $0x18] sm:$0xff]
    %v2160 = vld [vmem:[%s585 + $0x20] sm:$0xff]
    %v2161 = vld [vmem:[%s585 + $0x28] sm:$0xff]
    %v2162 = vld [vmem:[%s585 + $0x30] sm:$0xff]
    %v2163 = vld [vmem:[%s585 + $0x38] sm:$0xff]
    %v2165 = vsel %vm1897, %v59, 0
    %v2168 = vsel %vm1897, %v60, 0
    %v2171 = vsel %vm1897, %v61, 0
    %v2174 = vsel %vm1897, %v62, 0
    %v2177 = vsel %vm1897, %v63, 0
    %v2180 = vsel %vm1897, %v64, 0
    %v2183 = vsel %vm1897, %v65, 0
    %v2186 = vsel %vm1897, %v66, 0
    %2188 = vmatprep.subr.mxu0 0.0
    %2189 = vmatpush1.msra.mxu0 %v2156
    %2190 = vmatprep.subr.mxu0 0.0
    %2191 = vmatpush1.msra.mxu0 %v2157
    %2192 = vmatprep.subr.mxu0 0.0
    %2193 = vmatpush1.msra.mxu0 %v2158
    %2194 = vmatprep.subr.mxu0 0.0
    %2195 = vmatpush1.msra.mxu0 %v2159
    %2196 = vmatprep.subr.mxu0 0.0
    %2197 = vmatpush1.msra.mxu0 %v2160
    %2198 = vmatprep.subr.mxu0 0.0
    %2199 = vmatpush1.msra.mxu0 %v2161
    %2200 = vmatprep.subr.mxu0 0.0
    %2201 = vmatpush1.msra.mxu0 %v2162
    %2202 = vmatprep.subr.mxu0 0.0
    %2203 = vmatpush1.msra.mxu0 %v2163
    %2204 = vmatprep.subr.mxu0 0.0
    %2205 = vmatpush1.msra.mxu0 0.0
    %2206 = vmatprep.subr.mxu0 0.0
    %2207 = vmatpush1.msra.mxu0 0.0
    %2208 = vmatprep.subr.mxu0 0.0
    %2209 = vmatpush1.msra.mxu0 0.0
    %2210 = vmatprep.subr.mxu0 0.0
    %2211 = vmatpush1.msra.mxu0 0.0
    %2212 = vmatprep.subr.mxu0 0.0
    %2213 = vmatpush1.msra.mxu0 0.0
    %2214 = vmatprep.subr.mxu0 0.0
    %2215 = vmatpush1.msra.mxu0 0.0
    %2216 = vmatprep.subr.mxu0 0.0
    %2217 = vmatpush1.msra.mxu0 0.0
    %2218 = vmatprep.subr.mxu0 0.0
    %2219 = vmatpush1.msra.mxu0 0.0
    %2220 = vmatprep.subr.mxu0 0.0
    %2221 = vmatpush1.msra.mxu0 0.0
    %2222 = vmatprep.subr.mxu0 0.0
    %2223 = vmatpush1.msra.mxu0 0.0
    %2224 = vmatprep.subr.mxu0 0.0
    %2225 = vmatpush1.msra.mxu0 0.0
    %2226 = vmatprep.subr.mxu0 0.0
    %2227 = vmatpush1.msra.mxu0 0.0
    %2228 = vmatprep.subr.mxu0 0.0
    %2229 = vmatpush1.msra.mxu0 0.0
    %2230 = vmatprep.subr.mxu0 0.0
    %2231 = vmatpush1.msra.mxu0 0.0
    %2232 = vmatprep.subr.mxu0 0.0
    %2233 = vmatpush1.msra.mxu0 0.0
    %2234 = vmatprep.subr.mxu0 0.0
    %2235 = vmatpush1.msra.mxu0 0.0
    %2236 = vmatprep.subr.mxu0 0.0
    %2237 = vmatpush1.msra.mxu0 0.0
    %2238 = vmatprep.subr.mxu0 0.0
    %2239 = vmatpush1.msra.mxu0 0.0
    %2240 = vmatprep.subr.mxu0 0.0
    %2241 = vmatpush1.msra.mxu0 0.0
    %2242 = vmatprep.subr.mxu0 0.0
    %2243 = vmatpush1.msra.mxu0 0.0
    %2244 = vmatprep.subr.mxu0 0.0
    %2245 = vmatpush1.msra.mxu0 0.0
    %2246 = vmatprep.subr.mxu0 0.0
    %2247 = vmatpush1.msra.mxu0 0.0
    %2248 = vmatprep.subr.mxu0 0.0
    %2249 = vmatpush1.msra.mxu0 0.0
    %2250 = vmatprep.subr.mxu0 0.0
    %2251 = vmatpush1.msra.mxu0 0.0
    %2252 = vmatprep.mubr.f32.mxu0 0.0
    %2253 = vmatmul.mubr.f32.gmra.mrb[0].mxu0 %v2165
    %v2254 = vpop.f32.mrb[0].mxu0
    %v2255 = vadd.f32 0.0, %v2254
    %v2256 = vpop.f32.mrb[0].mxu0
    %2257 = vmatprep.mubr.f32.mxu0 0.0
    %2258 = vmatmul.mubr.f32.gmra.mrb[0].mxu0 %v2168
    %v2259 = vpop.f32.mrb[0].mxu0
    %v2260 = vadd.f32 0.0, %v2259
    %v2261 = vpop.f32.mrb[0].mxu0
    %2262 = vmatprep.mubr.f32.mxu0 0.0
    %2263 = vmatmul.mubr.f32.gmra.mrb[0].mxu0 %v2171
    %v2264 = vpop.f32.mrb[0].mxu0
    %v2265 = vadd.f32 0.0, %v2264
    %v2266 = vpop.f32.mrb[0].mxu0
    %2267 = vmatprep.mubr.f32.mxu0 0.0
    %2268 = vmatmul.mubr.f32.gmra.mrb[0].mxu0 %v2174
    %v2269 = vpop.f32.mrb[0].mxu0
    %v2270 = vadd.f32 0.0, %v2269
    %v2271 = vpop.f32.mrb[0].mxu0
    %2272 = vmatprep.mubr.f32.mxu0 0.0
    %2273 = vmatmul.mubr.f32.gmra.mrb[0].mxu0 %v2177
    %v2274 = vpop.f32.mrb[0].mxu0
    %v2275 = vadd.f32 0.0, %v2274
    %v2276 = vpop.f32.mrb[0].mxu0
    %2277 = vmatprep.mubr.f32.mxu0 0.0
    %2278 = vmatmul.mubr.f32.gmra.mrb[0].mxu0 %v2180
    %v2279 = vpop.f32.mrb[0].mxu0
    %v2280 = vadd.f32 0.0, %v2279
    %v2281 = vpop.f32.mrb[0].mxu0
    %2282 = vmatprep.mubr.f32.mxu0 0.0
    %2283 = vmatmul.mubr.f32.gmra.mrb[0].mxu0 %v2183
    %v2284 = vpop.f32.mrb[0].mxu0
    %v2285 = vadd.f32 0.0, %v2284
    %v2286 = vpop.f32.mrb[0].mxu0
    %2287 = vmatprep.mubr.f32.mxu0 0.0
    %2288 = vmatmul.mubr.f32.gmra.mrb[0].mxu0 %v2186
    %v2289 = vpop.f32.mrb[0].mxu0
    %v2290 = vadd.f32 0.0, %v2289
    %v2291 = vpop.f32.mrb[0].mxu0
    %2292 = vdwg.mxu0
    %v2293 = vadd.f32 %v2118, %v2255
    %v2294 = vadd.f32 %v2123, %v2260
    %v2295 = vadd.f32 %v2128, %v2265
    %v2296 = vadd.f32 %v2133, %v2270
    %v2297 = vadd.f32 %v2138, %v2275
    %v2298 = vadd.f32 %v2143, %v2280
    %v2299 = vadd.f32 %v2148, %v2285
    %v2300 = vadd.f32 %v2153, %v2290
    %v2301 = vadd.f32 %v2293, %v126
    %v2302 = vadd.f32 %v2294, %v131
    %v2303 = vadd.f32 %v2295, %v136
    %v2304 = vadd.f32 %v2296, %v141
    %v2305 = vadd.f32 %v2297, %v146
    %v2306 = vadd.f32 %v2298, %v151
    %v2307 = vadd.f32 %v2299, %v156
    %v2308 = vadd.f32 %v2300, %v161
    %v2309 = vmax.f32 %v2301, 0.0
    %v2310 = vmax.f32 %v2302, 0.0
    %v2311 = vmax.f32 %v2303, 0.0
    %v2312 = vmax.f32 %v2304, 0.0
    %v2313 = vmax.f32 %v2305, 0.0
    %v2314 = vmax.f32 %v2306, 0.0
    %v2315 = vmax.f32 %v2307, 0.0
    %v2316 = vmax.f32 %v2308, 0.0
    %v2317 = vadd.f32 %v2309, %v2310
    %v2318 = vadd.f32 %v2317, %v2311
    %v2319 = vadd.f32 %v2318, %v2312
    %v2320 = vadd.f32 %v2319, %v2313
    %v2321 = vadd.f32 %v2320, %v2314
    %v2322 = vadd.f32 %v2321, %v2315
    %v2323 = vadd.f32 %v2322, %v2316
    %v2324 = vrot.slane %v2323, 4
    %v2325 = vadd.f32 %v2323, %v2324
    %v2326 = vrot.slane %v2325, 2
    %v2327 = vadd.f32 %v2325, %v2326
    %v2328 = vrot.slane %v2327, 1
    %v2329 = vadd.f32 %v2327, %v2328
    %v2330 = vrcp.pop 64.0
    %v2331 = vmul.f32 %v2329, %v2330
    %v2332 = vmax.f32 %v2309, %v2313
    %v2333 = vmax.f32 %v2310, %v2314
    %v2334 = vmax.f32 %v2311, %v2315
    %v2335 = vmax.f32 %v2312, %v2316
    %v2336 = vmax.f32 %v2332, %v2333
    %v2337 = vmax.f32 %v2334, %v2335
    %v2338 = vmax.f32 %v2336, %v2337
    %v2339 = vrot.slane %v2338, 4
    %v2340 = vmax.f32 %v2338, %v2339
    %v2341 = vrot.slane %v2340, 2
    %v2342 = vmax.f32 %v2340, %v2341
    %v2343 = vrot.slane %v2342, 1
    %v2344 = vmax.f32 %v2342, %v2343
    %2345 = vmatprep.subr.mxu0 0.0
    %2346 = vmatpush1.msra.mxu0 %v2156
    %2347 = vmatprep.subr.mxu0 0.0
    %2348 = vmatpush1.msra.mxu0 %v2157
    %2349 = vmatprep.subr.mxu0 0.0
    %2350 = vmatpush1.msra.mxu0 %v2158
    %2351 = vmatprep.subr.mxu0 0.0
    %2352 = vmatpush1.msra.mxu0 %v2159
    %2353 = vmatprep.subr.mxu0 0.0
    %2354 = vmatpush1.msra.mxu0 %v2160
    %2355 = vmatprep.subr.mxu0 0.0
    %2356 = vmatpush1.msra.mxu0 %v2161
    %2357 = vmatprep.subr.mxu0 0.0
    %2358 = vmatpush1.msra.mxu0 %v2162
    %2359 = vmatprep.subr.mxu0 0.0
    %2360 = vmatpush1.msra.mxu0 %v2163
    %2361 = vmatprep.subr.mxu0 0.0
    %2362 = vmatpush1.msra.mxu0 0.0
    %2363 = vmatprep.subr.mxu0 0.0
    %2364 = vmatpush1.msra.mxu0 0.0
    %2365 = vmatprep.subr.mxu0 0.0
    %2366 = vmatpush1.msra.mxu0 0.0
    %2367 = vmatprep.subr.mxu0 0.0
    %2368 = vmatpush1.msra.mxu0 0.0
    %2369 = vmatprep.subr.mxu0 0.0
    %2370 = vmatpush1.msra.mxu0 0.0
    %2371 = vmatprep.subr.mxu0 0.0
    %2372 = vmatpush1.msra.mxu0 0.0
    %2373 = vmatprep.subr.mxu0 0.0
    %2374 = vmatpush1.msra.mxu0 0.0
    %2375 = vmatprep.subr.mxu0 0.0
    %2376 = vmatpush1.msra.mxu0 0.0
    %2377 = vmatprep.subr.mxu0 0.0
    %2378 = vmatpush1.msra.mxu0 0.0
    %2379 = vmatprep.subr.mxu0 0.0
    %2380 = vmatpush1.msra.mxu0 0.0
    %2381 = vmatprep.subr.mxu0 0.0
    %2382 = vmatpush1.msra.mxu0 0.0
    %2383 = vmatprep.subr.mxu0 0.0
    %2384 = vmatpush1.msra.mxu0 0.0
    %2385 = vmatprep.subr.mxu0 0.0
    %2386 = vmatpush1.msra.mxu0 0.0
    %2387 = vmatprep.subr.mxu0 0.0
    %2388 = vmatpush1.msra.mxu0 0.0
    %2389 = vmatprep.subr.mxu0 0.0
    %2390 = vmatpush1.msra.mxu0 0.0
    %2391 = vmatprep.subr.mxu0 0.0
    %2392 = vmatpush1.msra.mxu0 0.0
    %2393 = vmatprep.subr.mxu0 0.0
    %2394 = vmatpush1.msra.mxu0 0.0
    %2395 = vmatprep.subr.mxu0 0.0
    %2396 = vmatpush1.msra.mxu0 0.0
    %2397 = vmatprep.subr.mxu0 0.0
    %2398 = vmatpush1.msra.mxu0 0.0
    %2399 = vmatprep.subr.mxu0 0.0
    %2400 = vmatpush1.msra.mxu0 0.0
    %2401 = vmatprep.subr.mxu0 0.0
    %2402 = vmatpush1.msra.mxu0 0.0
    %2403 = vmatprep.subr.mxu0 0.0
    %2404 = vmatpush1.msra.mxu0 0.0
    %2405 = vmatprep.subr.mxu0 0.0
    %2406 = vmatpush1.msra.mxu0 0.0
    %2407 = vmatprep.subr.mxu0 0.0
    %2408 = vmatpush1.msra.mxu0 0.0
    %2409 = vmatprep.mubr.f32.mxu0 0.0
    %2410 = vmatmul.mubr.f32.gmra.mrb[0].mxu0 %v1899
    %v2411 = vpop.f32.mrb[0].mxu0
    %v2412 = vadd.f32 0.0, %v2411
    %v2413 = vpop.f32.mrb[0].mxu0
    %2414 = vmatprep.mubr.f32.mxu0 0.0
    %2415 = vmatmul.mubr.f32.gmra.mrb[0].mxu0 %v1902
    %v2416 = vpop.f32.mrb[0].mxu0
    %v2417 = vadd.f32 0.0, %v2416
    %v2418 = vpop.f32.mrb[0].mxu0
    %2419 = vmatprep.mubr.f32.mxu0 0.0
    %2420 = vmatmul.mubr.f32.gmra.mrb[0].mxu0 %v1905
    %v2421 = vpop.f32.mrb[0].mxu0
    %v2422 = vadd.f32 0.0, %v2421
    %v2423 = vpop.f32.mrb[0].mxu0
    %2424 = vmatprep.mubr.f32.mxu0 0.0
    %2425 = vmatmul.mubr.f32.gmra.mrb[0].mxu0 %v1908
    %v2426 = vpop.f32.mrb[0].mxu0
    %v2427 = vadd.f32 0.0, %v2426
    %v2428 = vpop.f32.mrb[0].mxu0
    %2429 = vmatprep.mubr.f32.mxu0 0.0
    %2430 = vmatmul.mubr.f32.gmra.mrb[0].mxu0 %v1911
    %v2431 = vpop.f32.mrb[0].mxu0
    %v2432 = vadd.f32 0.0, %v2431
    %v2433 = vpop.f32.mrb[0].mxu0
    %2434 = vmatprep.mubr.f32.mxu0 0.0
    %2435 = vmatmul.mubr.f32.gmra.mrb[0].mxu0 %v1914
    %v2436 = vpop.f32.mrb[0].mxu0
    %v2437 = vadd.f32 0.0, %v2436
    %v2438 = vpop.f32.mrb[0].mxu0
    %2439 = vmatprep.mubr.f32.mxu0 0.0
    %2440 = vmatmul.mubr.f32.gmra.mrb[0].mxu0 %v1917
    %v2441 = vpop.f32.mrb[0].mxu0
    %v2442 = vadd.f32 0.0, %v2441
    %v2443 = vpop.f32.mrb[0].mxu0
    %2444 = vmatprep.mubr.f32.mxu0 0.0
    %2445 = vmatmul.mubr.f32.gmra.mrb[0].mxu0 %v1920
    %v2446 = vpop.f32.mrb[0].mxu0
    %v2447 = vadd.f32 0.0, %v2446
    %v2448 = vpop.f32.mrb[0].mxu0
    %2449 = vdwg.mxu0
    %2450 = vmatprep.subr.mxu0 0.0
    %2451 = vmatpush1.msra.mxu0 %v1889
    %2452 = vmatprep.subr.mxu0 0.0
    %2453 = vmatpush1.msra.mxu0 %v1890
    %2454 = vmatprep.subr.mxu0 0.0
    %2455 = vmatpush1.msra.mxu0 %v1891
    %2456 = vmatprep.subr.mxu0 0.0
    %2457 = vmatpush1.msra.mxu0 %v1892
    %2458 = vmatprep.subr.mxu0 0.0
    %2459 = vmatpush1.msra.mxu0 %v1893
    %2460 = vmatprep.subr.mxu0 0.0
    %2461 = vmatpush1.msra.mxu0 %v1894
    %2462 = vmatprep.subr.mxu0 0.0
    %2463 = vmatpush1.msra.mxu0 %v1895
    %2464 = vmatprep.subr.mxu0 0.0
    %2465 = vmatpush1.msra.mxu0 %v1896
    %2466 = vmatprep.subr.mxu0 0.0
    %2467 = vmatpush1.msra.mxu0 0.0
    %2468 = vmatprep.subr.mxu0 0.0
    %2469 = vmatpush1.msra.mxu0 0.0
    %2470 = vmatprep.subr.mxu0 0.0
    %2471 = vmatpush1.msra.mxu0 0.0
    %2472 = vmatprep.subr.mxu0 0.0
    %2473 = vmatpush1.msra.mxu0 0.0
    %2474 = vmatprep.subr.mxu0 0.0
    %2475 = vmatpush1.msra.mxu0 0.0
    %2476 = vmatprep.subr.mxu0 0.0
    %2477 = vmatpush1.msra.mxu0 0.0
    %2478 = vmatprep.subr.mxu0 0.0
    %2479 = vmatpush1.msra.mxu0 0.0
    %2480 = vmatprep.subr.mxu0 0.0
    %2481 = vmatpush1.msra.mxu0 0.0
    %2482 = vmatprep.subr.mxu0 0.0
    %2483 = vmatpush1.msra.mxu0 0.0
    %2484 = vmatprep.subr.mxu0 0.0
    %2485 = vmatpush1.msra.mxu0 0.0
    %2486 = vmatprep.subr.mxu0 0.0
    %2487 = vmatpush1.msra.mxu0 0.0
    %2488 = vmatprep.subr.mxu0 0.0
    %2489 = vmatpush1.msra.mxu0 0.0
    %2490 = vmatprep.subr.mxu0 0.0
    %2491 = vmatpush1.msra.mxu0 0.0
    %2492 = vmatprep.subr.mxu0 0.0
    %2493 = vmatpush1.msra.mxu0 0.0
    %2494 = vmatprep.subr.mxu0 0.0
    %2495 = vmatpush1.msra.mxu0 0.0
    %2496 = vmatprep.subr.mxu0 0.0
    %2497 = vmatpush1.msra.mxu0 0.0
    %2498 = vmatprep.subr.mxu0 0.0
    %2499 = vmatpush1.msra.mxu0 0.0
    %2500 = vmatprep.subr.mxu0 0.0
    %2501 = vmatpush1.msra.mxu0 0.0
    %2502 = vmatprep.subr.mxu0 0.0
    %2503 = vmatpush1.msra.mxu0 0.0
    %2504 = vmatprep.subr.mxu0 0.0
    %2505 = vmatpush1.msra.mxu0 0.0
    %2506 = vmatprep.subr.mxu0 0.0
    %2507 = vmatpush1.msra.mxu0 0.0
    %2508 = vmatprep.subr.mxu0 0.0
    %2509 = vmatpush1.msra.mxu0 0.0
    %2510 = vmatprep.subr.mxu0 0.0
    %2511 = vmatpush1.msra.mxu0 0.0
    %2512 = vmatprep.subr.mxu0 0.0
    %2513 = vmatpush1.msra.mxu0 0.0
    %2514 = vmatprep.mubr.f32.mxu0 0.0
    %2515 = vmatmul.mubr.f32.gmra.mrb[0].mxu0 %v2028
    %v2516 = vpop.f32.mrb[0].mxu0
    %v2517 = vadd.f32 %v2412, %v2516
    %v2518 = vpop.f32.mrb[0].mxu0
    %2519 = vmatprep.mubr.f32.mxu0 0.0
    %2520 = vmatmul.mubr.f32.gmra.mrb[0].mxu0 %v2031
    %v2521 = vpop.f32.mrb[0].mxu0
    %v2522 = vadd.f32 %v2417, %v2521
    %v2523 = vpop.f32.mrb[0].mxu0
    %2524 = vmatprep.mubr.f32.mxu0 0.0
    %2525 = vmatmul.mubr.f32.gmra.mrb[0].mxu0 %v2034
    %v2526 = vpop.f32.mrb[0].mxu0
    %v2527 = vadd.f32 %v2422, %v2526
    %v2528 = vpop.f32.mrb[0].mxu0
    %2529 = vmatprep.mubr.f32.mxu0 0.0
    %2530 = vmatmul.mubr.f32.gmra.mrb[0].mxu0 %v2037
    %v2531 = vpop.f32.mrb[0].mxu0
    %v2532 = vadd.f32 %v2427, %v2531
    %v2533 = vpop.f32.mrb[0].mxu0
    %2534 = vmatprep.mubr.f32.mxu0 0.0
    %2535 = vmatmul.mubr.f32.gmra.mrb[0].mxu0 %v2040
    %v2536 = vpop.f32.mrb[0].mxu0
    %v2537 = vadd.f32 %v2432, %v2536
    %v2538 = vpop.f32.mrb[0].mxu0
    %2539 = vmatprep.mubr.f32.mxu0 0.0
    %2540 = vmatmul.mubr.f32.gmra.mrb[0].mxu0 %v2043
    %v2541 = vpop.f32.mrb[0].mxu0
    %v2542 = vadd.f32 %v2437, %v2541
    %v2543 = vpop.f32.mrb[0].mxu0
    %2544 = vmatprep.mubr.f32.mxu0 0.0
    %2545 = vmatmul.mubr.f32.gmra.mrb[0].mxu0 %v2046
    %v2546 = vpop.f32.mrb[0].mxu0
    %v2547 = vadd.f32 %v2442, %v2546
    %v2548 = vpop.f32.mrb[0].mxu0
    %2549 = vmatprep.mubr.f32.mxu0 0.0
    %2550 = vmatmul.mubr.f32.gmra.mrb[0].mxu0 %v2049
    %v2551 = vpop.f32.mrb[0].mxu0
    %v2552 = vadd.f32 %v2447, %v2551
    %v2553 = vpop.f32.mrb[0].mxu0
    %2554 = vdwg.mxu0
    %v2555 = vld [vmem:[%s684] sm:$0xff]
    %v2556 = vld [vmem:[%s684 + $0x8] sm:$0xff]
    %v2557 = vld [vmem:[%s684 + $0x10] sm:$0xff]
    %v2558 = vld [vmem:[%s684 + $0x18] sm:$0xff]
    %v2559 = vld [vmem:[%s684 + $0x20] sm:$0xff]
    %v2560 = vld [vmem:[%s684 + $0x28] sm:$0xff]
    %v2561 = vld [vmem:[%s684 + $0x30] sm:$0xff]
    %v2562 = vld [vmem:[%s684 + $0x38] sm:$0xff]
    %2563 = vmatprep.subr.mxu0 0.0
    %2564 = vmatpush1.msra.mxu0 %v2555
    %2565 = vmatprep.subr.mxu0 0.0
    %2566 = vmatpush1.msra.mxu0 %v2556
    %2567 = vmatprep.subr.mxu0 0.0
    %2568 = vmatpush1.msra.mxu0 %v2557
    %2569 = vmatprep.subr.mxu0 0.0
    %2570 = vmatpush1.msra.mxu0 %v2558
    %2571 = vmatprep.subr.mxu0 0.0
    %2572 = vmatpush1.msra.mxu0 %v2559
    %2573 = vmatprep.subr.mxu0 0.0
    %2574 = vmatpush1.msra.mxu0 %v2560
    %2575 = vmatprep.subr.mxu0 0.0
    %2576 = vmatpush1.msra.mxu0 %v2561
    %2577 = vmatprep.subr.mxu0 0.0
    %2578 = vmatpush1.msra.mxu0 %v2562
    %2579 = vmatprep.subr.mxu0 0.0
    %2580 = vmatpush1.msra.mxu0 0.0
    %2581 = vmatprep.subr.mxu0 0.0
    %2582 = vmatpush1.msra.mxu0 0.0
    %2583 = vmatprep.subr.mxu0 0.0
    %2584 = vmatpush1.msra.mxu0 0.0
    %2585 = vmatprep.subr.mxu0 0.0
    %2586 = vmatpush1.msra.mxu0 0.0
    %2587 = vmatprep.subr.mxu0 0.0
    %2588 = vmatpush1.msra.mxu0 0.0
    %2589 = vmatprep.subr.mxu0 0.0
    %2590 = vmatpush1.msra.mxu0 0.0
    %2591 = vmatprep.subr.mxu0 0.0
    %2592 = vmatpush1.msra.mxu0 0.0
    %2593 = vmatprep.subr.mxu0 0.0
    %2594 = vmatpush1.msra.mxu0 0.0
    %2595 = vmatprep.subr.mxu0 0.0
    %2596 = vmatpush1.msra.mxu0 0.0
    %2597 = vmatprep.subr.mxu0 0.0
    %2598 = vmatpush1.msra.mxu0 0.0
    %2599 = vmatprep.subr.mxu0 0.0
    %2600 = vmatpush1.msra.mxu0 0.0
    %2601 = vmatprep.subr.mxu0 0.0
    %2602 = vmatpush1.msra.mxu0 0.0
    %2603 = vmatprep.subr.mxu0 0.0
    %2604 = vmatpush1.msra.mxu0 0.0
    %2605 = vmatprep.subr.mxu0 0.0
    %2606 = vmatpush1.msra.mxu0 0.0
    %2607 = vmatprep.subr.mxu0 0.0
    %2608 = vmatpush1.msra.mxu0 0.0
    %2609 = vmatprep.subr.mxu0 0.0
    %2610 = vmatpush1.msra.mxu0 0.0
    %2611 = vmatprep.subr.mxu0 0.0
    %2612 = vmatpush1.msra.mxu0 0.0
    %2613 = vmatprep.subr.mxu0 0.0
    %2614 = vmatpush1.msra.mxu0 0.0
    %2615 = vmatprep.subr.mxu0 0.0
    %2616 = vmatpush1.msra.mxu0 0.0
    %2617 = vmatprep.subr.mxu0 0.0
    %2618 = vmatpush1.msra.mxu0 0.0
    %2619 = vmatprep.subr.mxu0 0.0
    %2620 = vmatpush1.msra.mxu0 0.0
    %2621 = vmatprep.subr.mxu0 0.0
    %2622 = vmatpush1.msra.mxu0 0.0
    %2623 = vmatprep.subr.mxu0 0.0
    %2624 = vmatpush1.msra.mxu0 0.0
    %2625 = vmatprep.subr.mxu0 0.0
    %2626 = vmatpush1.msra.mxu0 0.0
    %2627 = vmatprep.mubr.f32.mxu0 0.0
    %2628 = vmatmul.mubr.f32.gmra.mrb[0].mxu0 %v2165
    %v2629 = vpop.f32.mrb[0].mxu0
    %v2630 = vadd.f32 0.0, %v2629
    %v2631 = vpop.f32.mrb[0].mxu0
    %2632 = vmatprep.mubr.f32.mxu0 0.0
    %2633 = vmatmul.mubr.f32.gmra.mrb[0].mxu0 %v2168
    %v2634 = vpop.f32.mrb[0].mxu0
    %v2635 = vadd.f32 0.0, %v2634
    %v2636 = vpop.f32.mrb[0].mxu0
    %2637 = vmatprep.mubr.f32.mxu0 0.0
    %2638 = vmatmul.mubr.f32.gmra.mrb[0].mxu0 %v2171
    %v2639 = vpop.f32.mrb[0].mxu0
    %v2640 = vadd.f32 0.0, %v2639
    %v2641 = vpop.f32.mrb[0].mxu0
    %2642 = vmatprep.mubr.f32.mxu0 0.0
    %2643 = vmatmul.mubr.f32.gmra.mrb[0].mxu0 %v2174
    %v2644 = vpop.f32.mrb[0].mxu0
    %v2645 = vadd.f32 0.0, %v2644
    %v2646 = vpop.f32.mrb[0].mxu0
    %2647 = vmatprep.mubr.f32.mxu0 0.0
    %2648 = vmatmul.mubr.f32.gmra.mrb[0].mxu0 %v2177
    %v2649 = vpop.f32.mrb[0].mxu0
    %v2650 = vadd.f32 0.0, %v2649
    %v2651 = vpop.f32.mrb[0].mxu0
    %2652 = vmatprep.mubr.f32.mxu0 0.0
    %2653 = vmatmul.mubr.f32.gmra.mrb[0].mxu0 %v2180
    %v2654 = vpop.f32.mrb[0].mxu0
    %v2655 = vadd.f32 0.0, %v2654
    %v2656 = vpop.f32.mrb[0].mxu0
    %2657 = vmatprep.mubr.f32.mxu0 0.0
    %2658 = vmatmul.mubr.f32.gmra.mrb[0].mxu0 %v2183
    %v2659 = vpop.f32.mrb[0].mxu0
    %v2660 = vadd.f32 0.0, %v2659
    %v2661 = vpop.f32.mrb[0].mxu0
    %2662 = vmatprep.mubr.f32.mxu0 0.0
    %2663 = vmatmul.mubr.f32.gmra.mrb[0].mxu0 %v2186
    %v2664 = vpop.f32.mrb[0].mxu0
    %v2665 = vadd.f32 0.0, %v2664
    %v2666 = vpop.f32.mrb[0].mxu0
    %2667 = vdwg.mxu0
    %v2668 = vadd.f32 %v2517, %v2630
    %v2669 = vadd.f32 %v2522, %v2635
    %v2670 = vadd.f32 %v2527, %v2640
    %v2671 = vadd.f32 %v2532, %v2645
    %v2672 = vadd.f32 %v2537, %v2650
    %v2673 = vadd.f32 %v2542, %v2655
    %v2674 = vadd.f32 %v2547, %v2660
    %v2675 = vadd.f32 %v2552, %v2665
    %v2676 = vadd.f32 %v2668, %v126
    %v2677 = vadd.f32 %v2669, %v131
    %v2678 = vadd.f32 %v2670, %v136
    %v2679 = vadd.f32 %v2671, %v141
    %v2680 = vadd.f32 %v2672, %v146
    %v2681 = vadd.f32 %v2673, %v151
    %v2682 = vadd.f32 %v2674, %v156
    %v2683 = vadd.f32 %v2675, %v161
    %v2684 = vmax.f32 %v2676, 0.0
    %v2685 = vmax.f32 %v2677, 0.0
    %v2686 = vmax.f32 %v2678, 0.0
    %v2687 = vmax.f32 %v2679, 0.0
    %v2688 = vmax.f32 %v2680, 0.0
    %v2689 = vmax.f32 %v2681, 0.0
    %v2690 = vmax.f32 %v2682, 0.0
    %v2691 = vmax.f32 %v2683, 0.0
    %v2692 = vadd.f32 %v2684, %v2685
    %v2693 = vadd.f32 %v2692, %v2686
    %v2694 = vadd.f32 %v2693, %v2687
    %v2695 = vadd.f32 %v2694, %v2688
    %v2696 = vadd.f32 %v2695, %v2689
    %v2697 = vadd.f32 %v2696, %v2690
    %v2698 = vadd.f32 %v2697, %v2691
    %v2699 = vrot.slane %v2698, 4
    %v2700 = vadd.f32 %v2698, %v2699
    %v2701 = vrot.slane %v2700, 2
    %v2702 = vadd.f32 %v2700, %v2701
    %v2703 = vrot.slane %v2702, 1
    %v2704 = vadd.f32 %v2702, %v2703
    %v2705 = vmul.f32 %v2704, %v2330
    %v2706 = vmax.f32 %v2684, %v2688
    %v2707 = vmax.f32 %v2685, %v2689
    %v2708 = vmax.f32 %v2686, %v2690
    %v2709 = vmax.f32 %v2687, %v2691
    %v2710 = vmax.f32 %v2706, %v2707
    %v2711 = vmax.f32 %v2708, %v2709
    %v2712 = vmax.f32 %v2710, %v2711
    %v2713 = vrot.slane %v2712, 4
    %v2714 = vmax.f32 %v2712, %v2713
    %v2715 = vrot.slane %v2714, 2
    %v2716 = vmax.f32 %v2714, %v2715
    %v2717 = vrot.slane %v2716, 1
    %v2718 = vmax.f32 %v2716, %v2717
    %2719 = vmatprep.subr.mxu0 0.0
    %2720 = vmatpush1.msra.mxu0 %v2555
    %2721 = vmatprep.subr.mxu0 0.0
    %2722 = vmatpush1.msra.mxu0 %v2556
    %2723 = vmatprep.subr.mxu0 0.0
    %2724 = vmatpush1.msra.mxu0 %v2557
    %2725 = vmatprep.subr.mxu0 0.0
    %2726 = vmatpush1.msra.mxu0 %v2558
    %2727 = vmatprep.subr.mxu0 0.0
    %2728 = vmatpush1.msra.mxu0 %v2559
    %2729 = vmatprep.subr.mxu0 0.0
    %2730 = vmatpush1.msra.mxu0 %v2560
    %2731 = vmatprep.subr.mxu0 0.0
    %2732 = vmatpush1.msra.mxu0 %v2561
    %2733 = vmatprep.subr.mxu0 0.0
    %2734 = vmatpush1.msra.mxu0 %v2562
    %2735 = vmatprep.subr.mxu0 0.0
    %2736 = vmatpush1.msra.mxu0 0.0
    %2737 = vmatprep.subr.mxu0 0.0
    %2738 = vmatpush1.msra.mxu0 0.0
    %2739 = vmatprep.subr.mxu0 0.0
    %2740 = vmatpush1.msra.mxu0 0.0
    %2741 = vmatprep.subr.mxu0 0.0
    %2742 = vmatpush1.msra.mxu0 0.0
    %2743 = vmatprep.subr.mxu0 0.0
    %2744 = vmatpush1.msra.mxu0 0.0
    %2745 = vmatprep.subr.mxu0 0.0
    %2746 = vmatpush1.msra.mxu0 0.0
    %2747 = vmatprep.subr.mxu0 0.0
    %2748 = vmatpush1.msra.mxu0 0.0
    %2749 = vmatprep.subr.mxu0 0.0
    %2750 = vmatpush1.msra.mxu0 0.0
    %2751 = vmatprep.subr.mxu0 0.0
    %2752 = vmatpush1.msra.mxu0 0.0
    %2753 = vmatprep.subr.mxu0 0.0
    %2754 = vmatpush1.msra.mxu0 0.0
    %2755 = vmatprep.subr.mxu0 0.0
    %2756 = vmatpush1.msra.mxu0 0.0
    %2757 = vmatprep.subr.mxu0 0.0
    %2758 = vmatpush1.msra.mxu0 0.0
    %2759 = vmatprep.subr.mxu0 0.0
    %2760 = vmatpush1.msra.mxu0 0.0
    %2761 = vmatprep.subr.mxu0 0.0
    %2762 = vmatpush1.msra.mxu0 0.0
    %2763 = vmatprep.subr.mxu0 0.0
    %2764 = vmatpush1.msra.mxu0 0.0
    %2765 = vmatprep.subr.mxu0 0.0
    %2766 = vmatpush1.msra.mxu0 0.0
    %2767 = vmatprep.subr.mxu0 0.0
    %2768 = vmatpush1.msra.mxu0 0.0
    %2769 = vmatprep.subr.mxu0 0.0
    %2770 = vmatpush1.msra.mxu0 0.0
    %2771 = vmatprep.subr.mxu0 0.0
    %2772 = vmatpush1.msra.mxu0 0.0
    %2773 = vmatprep.subr.mxu0 0.0
    %2774 = vmatpush1.msra.mxu0 0.0
    %2775 = vmatprep.subr.mxu0 0.0
    %2776 = vmatpush1.msra.mxu0 0.0
    %2777 = vmatprep.subr.mxu0 0.0
    %2778 = vmatpush1.msra.mxu0 0.0
    %2779 = vmatprep.subr.mxu0 0.0
    %2780 = vmatpush1.msra.mxu0 0.0
    %2781 = vmatprep.subr.mxu0 0.0
    %2782 = vmatpush1.msra.mxu0 0.0
    %2783 = vmatprep.mubr.f32.mxu0 0.0
    %2784 = vmatmul.mubr.f32.gmra.mrb[0].mxu0 %v1899
    %v2785 = vpop.f32.mrb[0].mxu0
    %v2786 = vadd.f32 0.0, %v2785
    %v2787 = vpop.f32.mrb[0].mxu0
    %2788 = vmatprep.mubr.f32.mxu0 0.0
    %2789 = vmatmul.mubr.f32.gmra.mrb[0].mxu0 %v1902
    %v2790 = vpop.f32.mrb[0].mxu0
    %v2791 = vadd.f32 0.0, %v2790
    %v2792 = vpop.f32.mrb[0].mxu0
    %2793 = vmatprep.mubr.f32.mxu0 0.0
    %2794 = vmatmul.mubr.f32.gmra.mrb[0].mxu0 %v1905
    %v2795 = vpop.f32.mrb[0].mxu0
    %v2796 = vadd.f32 0.0, %v2795
    %v2797 = vpop.f32.mrb[0].mxu0
    %2798 = vmatprep.mubr.f32.mxu0 0.0
    %2799 = vmatmul.mubr.f32.gmra.mrb[0].mxu0 %v1908
    %v2800 = vpop.f32.mrb[0].mxu0
    %v2801 = vadd.f32 0.0, %v2800
    %v2802 = vpop.f32.mrb[0].mxu0
    %2803 = vmatprep.mubr.f32.mxu0 0.0
    %2804 = vmatmul.mubr.f32.gmra.mrb[0].mxu0 %v1911
    %v2805 = vpop.f32.mrb[0].mxu0
    %v2806 = vadd.f32 0.0, %v2805
    %v2807 = vpop.f32.mrb[0].mxu0
    %2808 = vmatprep.mubr.f32.mxu0 0.0
    %2809 = vmatmul.mubr.f32.gmra.mrb[0].mxu0 %v1914
    %v2810 = vpop.f32.mrb[0].mxu0
    %v2811 = vadd.f32 0.0, %v2810
    %v2812 = vpop.f32.mrb[0].mxu0
    %2813 = vmatprep.mubr.f32.mxu0 0.0
    %2814 = vmatmul.mubr.f32.gmra.mrb[0].mxu0 %v1917
    %v2815 = vpop.f32.mrb[0].mxu0
    %v2816 = vadd.f32 0.0, %v2815
    %v2817 = vpop.f32.mrb[0].mxu0
    %2818 = vmatprep.mubr.f32.mxu0 0.0
    %2819 = vmatmul.mubr.f32.gmra.mrb[0].mxu0 %v1920
    %v2820 = vpop.f32.mrb[0].mxu0
    %v2821 = vadd.f32 0.0, %v2820
    %v2822 = vpop.f32.mrb[0].mxu0
    %2823 = vdwg.mxu0
    %2824 = vmatprep.subr.mxu0 0.0
    %2825 = vmatpush1.msra.mxu0 %v2156
    %2826 = vmatprep.subr.mxu0 0.0
    %2827 = vmatpush1.msra.mxu0 %v2157
    %2828 = vmatprep.subr.mxu0 0.0
    %2829 = vmatpush1.msra.mxu0 %v2158
    %2830 = vmatprep.subr.mxu0 0.0
    %2831 = vmatpush1.msra.mxu0 %v2159
    %2832 = vmatprep.subr.mxu0 0.0
    %2833 = vmatpush1.msra.mxu0 %v2160
    %2834 = vmatprep.subr.mxu0 0.0
    %2835 = vmatpush1.msra.mxu0 %v2161
    %2836 = vmatprep.subr.mxu0 0.0
    %2837 = vmatpush1.msra.mxu0 %v2162
    %2838 = vmatprep.subr.mxu0 0.0
    %2839 = vmatpush1.msra.mxu0 %v2163
    %2840 = vmatprep.subr.mxu0 0.0
    %2841 = vmatpush1.msra.mxu0 0.0
    %2842 = vmatprep.subr.mxu0 0.0
    %2843 = vmatpush1.msra.mxu0 0.0
    %2844 = vmatprep.subr.mxu0 0.0
    %2845 = vmatpush1.msra.mxu0 0.0
    %2846 = vmatprep.subr.mxu0 0.0
    %2847 = vmatpush1.msra.mxu0 0.0
    %2848 = vmatprep.subr.mxu0 0.0
    %2849 = vmatpush1.msra.mxu0 0.0
    %2850 = vmatprep.subr.mxu0 0.0
    %2851 = vmatpush1.msra.mxu0 0.0
    %2852 = vmatprep.subr.mxu0 0.0
    %2853 = vmatpush1.msra.mxu0 0.0
    %2854 = vmatprep.subr.mxu0 0.0
    %2855 = vmatpush1.msra.mxu0 0.0
    %2856 = vmatprep.subr.mxu0 0.0
    %2857 = vmatpush1.msra.mxu0 0.0
    %2858 = vmatprep.subr.mxu0 0.0
    %2859 = vmatpush1.msra.mxu0 0.0
    %2860 = vmatprep.subr.mxu0 0.0
    %2861 = vmatpush1.msra.mxu0 0.0
    %2862 = vmatprep.subr.mxu0 0.0
    %2863 = vmatpush1.msra.mxu0 0.0
    %2864 = vmatprep.subr.mxu0 0.0
    %2865 = vmatpush1.msra.mxu0 0.0
    %2866 = vmatprep.subr.mxu0 0.0
    %2867 = vmatpush1.msra.mxu0 0.0
    %2868 = vmatprep.subr.mxu0 0.0
    %2869 = vmatpush1.msra.mxu0 0.0
    %2870 = vmatprep.subr.mxu0 0.0
    %2871 = vmatpush1.msra.mxu0 0.0
    %2872 = vmatprep.subr.mxu0 0.0
    %2873 = vmatpush1.msra.mxu0 0.0
    %2874 = vmatprep.subr.mxu0 0.0
    %2875 = vmatpush1.msra.mxu0 0.0
    %2876 = vmatprep.subr.mxu0 0.0
    %2877 = vmatpush1.msra.mxu0 0.0
    %2878 = vmatprep.subr.mxu0 0.0
    %2879 = vmatpush1.msra.mxu0 0.0
    %2880 = vmatprep.subr.mxu0 0.0
    %2881 = vmatpush1.msra.mxu0 0.0
    %2882 = vmatprep.subr.mxu0 0.0
    %2883 = vmatpush1.msra.mxu0 0.0
    %2884 = vmatprep.subr.mxu0 0.0
    %2885 = vmatpush1.msra.mxu0 0.0
    %2886 = vmatprep.subr.mxu0 0.0
    %2887 = vmatpush1.msra.mxu0 0.0
    %2888 = vmatprep.mubr.f32.mxu0 0.0
    %2889 = vmatmul.mubr.f32.gmra.mrb[0].mxu0 %v2028
    %v2890 = vpop.f32.mrb[0].mxu0
    %v2891 = vadd.f32 %v2786, %v2890
    %v2892 = vpop.f32.mrb[0].mxu0
    %2893 = vmatprep.mubr.f32.mxu0 0.0
    %2894 = vmatmul.mubr.f32.gmra.mrb[0].mxu0 %v2031
    %v2895 = vpop.f32.mrb[0].mxu0
    %v2896 = vadd.f32 %v2791, %v2895
    %v2897 = vpop.f32.mrb[0].mxu0
    %2898 = vmatprep.mubr.f32.mxu0 0.0
    %2899 = vmatmul.mubr.f32.gmra.mrb[0].mxu0 %v2034
    %v2900 = vpop.f32.mrb[0].mxu0
    %v2901 = vadd.f32 %v2796, %v2900
    %v2902 = vpop.f32.mrb[0].mxu0
    %2903 = vmatprep.mubr.f32.mxu0 0.0
    %2904 = vmatmul.mubr.f32.gmra.mrb[0].mxu0 %v2037
    %v2905 = vpop.f32.mrb[0].mxu0
    %v2906 = vadd.f32 %v2801, %v2905
    %v2907 = vpop.f32.mrb[0].mxu0
    %2908 = vmatprep.mubr.f32.mxu0 0.0
    %2909 = vmatmul.mubr.f32.gmra.mrb[0].mxu0 %v2040
    %v2910 = vpop.f32.mrb[0].mxu0
    %v2911 = vadd.f32 %v2806, %v2910
    %v2912 = vpop.f32.mrb[0].mxu0
    %2913 = vmatprep.mubr.f32.mxu0 0.0
    %2914 = vmatmul.mubr.f32.gmra.mrb[0].mxu0 %v2043
    %v2915 = vpop.f32.mrb[0].mxu0
    %v2916 = vadd.f32 %v2811, %v2915
    %v2917 = vpop.f32.mrb[0].mxu0
    %2918 = vmatprep.mubr.f32.mxu0 0.0
    %2919 = vmatmul.mubr.f32.gmra.mrb[0].mxu0 %v2046
    %v2920 = vpop.f32.mrb[0].mxu0
    %v2921 = vadd.f32 %v2816, %v2920
    %v2922 = vpop.f32.mrb[0].mxu0
    %2923 = vmatprep.mubr.f32.mxu0 0.0
    %2924 = vmatmul.mubr.f32.gmra.mrb[0].mxu0 %v2049
    %v2925 = vpop.f32.mrb[0].mxu0
    %v2926 = vadd.f32 %v2821, %v2925
    %v2927 = vpop.f32.mrb[0].mxu0
    %2928 = vdwg.mxu0
    %v2929 = vld [vmem:[%s783] sm:$0xff]
    %v2930 = vld [vmem:[%s783 + $0x8] sm:$0xff]
    %v2931 = vld [vmem:[%s783 + $0x10] sm:$0xff]
    %v2932 = vld [vmem:[%s783 + $0x18] sm:$0xff]
    %v2933 = vld [vmem:[%s783 + $0x20] sm:$0xff]
    %v2934 = vld [vmem:[%s783 + $0x28] sm:$0xff]
    %v2935 = vld [vmem:[%s783 + $0x30] sm:$0xff]
    %v2936 = vld [vmem:[%s783 + $0x38] sm:$0xff]
    %2937 = vmatprep.subr.mxu0 0.0
    %2938 = vmatpush1.msra.mxu0 %v2929
    %2939 = vmatprep.subr.mxu0 0.0
    %2940 = vmatpush1.msra.mxu0 %v2930
    %2941 = vmatprep.subr.mxu0 0.0
    %2942 = vmatpush1.msra.mxu0 %v2931
    %2943 = vmatprep.subr.mxu0 0.0
    %2944 = vmatpush1.msra.mxu0 %v2932
    %2945 = vmatprep.subr.mxu0 0.0
    %2946 = vmatpush1.msra.mxu0 %v2933
    %2947 = vmatprep.subr.mxu0 0.0
    %2948 = vmatpush1.msra.mxu0 %v2934
    %2949 = vmatprep.subr.mxu0 0.0
    %2950 = vmatpush1.msra.mxu0 %v2935
    %2951 = vmatprep.subr.mxu0 0.0
    %2952 = vmatpush1.msra.mxu0 %v2936
    %2953 = vmatprep.subr.mxu0 0.0
    %2954 = vmatpush1.msra.mxu0 0.0
    %2955 = vmatprep.subr.mxu0 0.0
    %2956 = vmatpush1.msra.mxu0 0.0
    %2957 = vmatprep.subr.mxu0 0.0
    %2958 = vmatpush1.msra.mxu0 0.0
    %2959 = vmatprep.subr.mxu0 0.0
    %2960 = vmatpush1.msra.mxu0 0.0
    %2961 = vmatprep.subr.mxu0 0.0
    %2962 = vmatpush1.msra.mxu0 0.0
    %2963 = vmatprep.subr.mxu0 0.0
    %2964 = vmatpush1.msra.mxu0 0.0
    %2965 = vmatprep.subr.mxu0 0.0
    %2966 = vmatpush1.msra.mxu0 0.0
    %2967 = vmatprep.subr.mxu0 0.0
    %2968 = vmatpush1.msra.mxu0 0.0
    %2969 = vmatprep.subr.mxu0 0.0
    %2970 = vmatpush1.msra.mxu0 0.0
    %2971 = vmatprep.subr.mxu0 0.0
    %2972 = vmatpush1.msra.mxu0 0.0
    %2973 = vmatprep.subr.mxu0 0.0
    %2974 = vmatpush1.msra.mxu0 0.0
    %2975 = vmatprep.subr.mxu0 0.0
    %2976 = vmatpush1.msra.mxu0 0.0
    %2977 = vmatprep.subr.mxu0 0.0
    %2978 = vmatpush1.msra.mxu0 0.0
    %2979 = vmatprep.subr.mxu0 0.0
    %2980 = vmatpush1.msra.mxu0 0.0
    %2981 = vmatprep.subr.mxu0 0.0
    %2982 = vmatpush1.msra.mxu0 0.0
    %2983 = vmatprep.subr.mxu0 0.0
    %2984 = vmatpush1.msra.mxu0 0.0
    %2985 = vmatprep.subr.mxu0 0.0
    %2986 = vmatpush1.msra.mxu0 0.0
    %2987 = vmatprep.subr.mxu0 0.0
    %2988 = vmatpush1.msra.mxu0 0.0
    %2989 = vmatprep.subr.mxu0 0.0
    %2990 = vmatpush1.msra.mxu0 0.0
    %2991 = vmatprep.subr.mxu0 0.0
    %2992 = vmatpush1.msra.mxu0 0.0
    %2993 = vmatprep.subr.mxu0 0.0
    %2994 = vmatpush1.msra.mxu0 0.0
    %2995 = vmatprep.subr.mxu0 0.0
    %2996 = vmatpush1.msra.mxu0 0.0
    %2997 = vmatprep.subr.mxu0 0.0
    %2998 = vmatpush1.msra.mxu0 0.0
    %2999 = vmatprep.subr.mxu0 0.0
    %3000 = vmatpush1.msra.mxu0 0.0
    %3001 = vmatprep.mubr.f32.mxu0 0.0
    %3002 = vmatmul.mubr.f32.gmra.mrb[0].mxu0 %v2165
    %v3003 = vpop.f32.mrb[0].mxu0
    %v3004 = vadd.f32 0.0, %v3003
    %v3005 = vpop.f32.mrb[0].mxu0
    %3006 = vmatprep.mubr.f32.mxu0 0.0
    %3007 = vmatmul.mubr.f32.gmra.mrb[0].mxu0 %v2168
    %v3008 = vpop.f32.mrb[0].mxu0
    %v3009 = vadd.f32 0.0, %v3008
    %v3010 = vpop.f32.mrb[0].mxu0
    %3011 = vmatprep.mubr.f32.mxu0 0.0
    %3012 = vmatmul.mubr.f32.gmra.mrb[0].mxu0 %v2171
    %v3013 = vpop.f32.mrb[0].mxu0
    %v3014 = vadd.f32 0.0, %v3013
    %v3015 = vpop.f32.mrb[0].mxu0
    %3016 = vmatprep.mubr.f32.mxu0 0.0
    %3017 = vmatmul.mubr.f32.gmra.mrb[0].mxu0 %v2174
    %v3018 = vpop.f32.mrb[0].mxu0
    %v3019 = vadd.f32 0.0, %v3018
    %v3020 = vpop.f32.mrb[0].mxu0
    %3021 = vmatprep.mubr.f32.mxu0 0.0
    %3022 = vmatmul.mubr.f32.gmra.mrb[0].mxu0 %v2177
    %v3023 = vpop.f32.mrb[0].mxu0
    %v3024 = vadd.f32 0.0, %v3023
    %v3025 = vpop.f32.mrb[0].mxu0
    %3026 = vmatprep.mubr.f32.mxu0 0.0
    %3027 = vmatmul.mubr.f32.gmra.mrb[0].mxu0 %v2180
    %v3028 = vpop.f32.mrb[0].mxu0
    %v3029 = vadd.f32 0.0, %v3028
    %v3030 = vpop.f32.mrb[0].mxu0
    %3031 = vmatprep.mubr.f32.mxu0 0.0
    %3032 = vmatmul.mubr.f32.gmra.mrb[0].mxu0 %v2183
    %v3033 = vpop.f32.mrb[0].mxu0
    %v3034 = vadd.f32 0.0, %v3033
    %v3035 = vpop.f32.mrb[0].mxu0
    %3036 = vmatprep.mubr.f32.mxu0 0.0
    %3037 = vmatmul.mubr.f32.gmra.mrb[0].mxu0 %v2186
    %v3038 = vpop.f32.mrb[0].mxu0
    %v3039 = vadd.f32 0.0, %v3038
    %v3040 = vpop.f32.mrb[0].mxu0
    %3041 = vdwg.mxu0
    %v3042 = vadd.f32 %v2891, %v3004
    %v3043 = vadd.f32 %v2896, %v3009
    %v3044 = vadd.f32 %v2901, %v3014
    %v3045 = vadd.f32 %v2906, %v3019
    %v3046 = vadd.f32 %v2911, %v3024
    %v3047 = vadd.f32 %v2916, %v3029
    %v3048 = vadd.f32 %v2921, %v3034
    %v3049 = vadd.f32 %v2926, %v3039
    %v3050 = vadd.f32 %v3042, %v126
    %v3051 = vadd.f32 %v3043, %v131
    %v3052 = vadd.f32 %v3044, %v136
    %v3053 = vadd.f32 %v3045, %v141
    %v3054 = vadd.f32 %v3046, %v146
    %v3055 = vadd.f32 %v3047, %v151
    %v3056 = vadd.f32 %v3048, %v156
    %v3057 = vadd.f32 %v3049, %v161
    %v3058 = vmax.f32 %v3050, 0.0
    %v3059 = vmax.f32 %v3051, 0.0
    %v3060 = vmax.f32 %v3052, 0.0
    %v3061 = vmax.f32 %v3053, 0.0
    %v3062 = vmax.f32 %v3054, 0.0
    %v3063 = vmax.f32 %v3055, 0.0
    %v3064 = vmax.f32 %v3056, 0.0
    %v3065 = vmax.f32 %v3057, 0.0
    %v3066 = vadd.f32 %v3058, %v3059
    %v3067 = vadd.f32 %v3066, %v3060
    %v3068 = vadd.f32 %v3067, %v3061
    %v3069 = vadd.f32 %v3068, %v3062
    %v3070 = vadd.f32 %v3069, %v3063
    %v3071 = vadd.f32 %v3070, %v3064
    %v3072 = vadd.f32 %v3071, %v3065
    %v3073 = vrot.slane %v3072, 4
    %v3074 = vadd.f32 %v3072, %v3073
    %v3075 = vrot.slane %v3074, 2
    %v3076 = vadd.f32 %v3074, %v3075
    %v3077 = vrot.slane %v3076, 1
    %v3078 = vadd.f32 %v3076, %v3077
    %v3079 = vmul.f32 %v3078, %v2330
    %v3080 = vmax.f32 %v3058, %v3062
    %v3081 = vmax.f32 %v3059, %v3063
    %v3082 = vmax.f32 %v3060, %v3064
    %v3083 = vmax.f32 %v3061, %v3065
    %v3084 = vmax.f32 %v3080, %v3081
    %v3085 = vmax.f32 %v3082, %v3083
    %v3086 = vmax.f32 %v3084, %v3085
    %v3087 = vrot.slane %v3086, 4
    %v3088 = vmax.f32 %v3086, %v3087
    %v3089 = vrot.slane %v3088, 2
    %v3090 = vmax.f32 %v3088, %v3089
    %v3091 = vrot.slane %v3090, 1
    %v3092 = vmax.f32 %v3090, %v3091
    %3093 = vmatprep.subr.mxu0 0.0
    %3094 = vmatpush1.msra.mxu0 %v2929
    %3095 = vmatprep.subr.mxu0 0.0
    %3096 = vmatpush1.msra.mxu0 %v2930
    %3097 = vmatprep.subr.mxu0 0.0
    %3098 = vmatpush1.msra.mxu0 %v2931
    %3099 = vmatprep.subr.mxu0 0.0
    %3100 = vmatpush1.msra.mxu0 %v2932
    %3101 = vmatprep.subr.mxu0 0.0
    %3102 = vmatpush1.msra.mxu0 %v2933
    %3103 = vmatprep.subr.mxu0 0.0
    %3104 = vmatpush1.msra.mxu0 %v2934
    %3105 = vmatprep.subr.mxu0 0.0
    %3106 = vmatpush1.msra.mxu0 %v2935
    %3107 = vmatprep.subr.mxu0 0.0
    %3108 = vmatpush1.msra.mxu0 %v2936
    %3109 = vmatprep.subr.mxu0 0.0
    %3110 = vmatpush1.msra.mxu0 0.0
    %3111 = vmatprep.subr.mxu0 0.0
    %3112 = vmatpush1.msra.mxu0 0.0
    %3113 = vmatprep.subr.mxu0 0.0
    %3114 = vmatpush1.msra.mxu0 0.0
    %3115 = vmatprep.subr.mxu0 0.0
    %3116 = vmatpush1.msra.mxu0 0.0
    %3117 = vmatprep.subr.mxu0 0.0
    %3118 = vmatpush1.msra.mxu0 0.0
    %3119 = vmatprep.subr.mxu0 0.0
    %3120 = vmatpush1.msra.mxu0 0.0
    %3121 = vmatprep.subr.mxu0 0.0
    %3122 = vmatpush1.msra.mxu0 0.0
    %3123 = vmatprep.subr.mxu0 0.0
    %3124 = vmatpush1.msra.mxu0 0.0
    %3125 = vmatprep.subr.mxu0 0.0
    %3126 = vmatpush1.msra.mxu0 0.0
    %3127 = vmatprep.subr.mxu0 0.0
    %3128 = vmatpush1.msra.mxu0 0.0
    %3129 = vmatprep.subr.mxu0 0.0
    %3130 = vmatpush1.msra.mxu0 0.0
    %3131 = vmatprep.subr.mxu0 0.0
    %3132 = vmatpush1.msra.mxu0 0.0
    %3133 = vmatprep.subr.mxu0 0.0
    %3134 = vmatpush1.msra.mxu0 0.0
    %3135 = vmatprep.subr.mxu0 0.0
    %3136 = vmatpush1.msra.mxu0 0.0
    %3137 = vmatprep.subr.mxu0 0.0
    %3138 = vmatpush1.msra.mxu0 0.0
    %3139 = vmatprep.subr.mxu0 0.0
    %3140 = vmatpush1.msra.mxu0 0.0
    %3141 = vmatprep.subr.mxu0 0.0
    %3142 = vmatpush1.msra.mxu0 0.0
    %3143 = vmatprep.subr.mxu0 0.0
    %3144 = vmatpush1.msra.mxu0 0.0
    %3145 = vmatprep.subr.mxu0 0.0
    %3146 = vmatpush1.msra.mxu0 0.0
    %3147 = vmatprep.subr.mxu0 0.0
    %3148 = vmatpush1.msra.mxu0 0.0
    %3149 = vmatprep.subr.mxu0 0.0
    %3150 = vmatpush1.msra.mxu0 0.0
    %3151 = vmatprep.subr.mxu0 0.0
    %3152 = vmatpush1.msra.mxu0 0.0
    %3153 = vmatprep.subr.mxu0 0.0
    %3154 = vmatpush1.msra.mxu0 0.0
    %3155 = vmatprep.subr.mxu0 0.0
    %3156 = vmatpush1.msra.mxu0 0.0
    %3157 = vmatprep.mubr.f32.mxu0 0.0
    %3158 = vmatmul.mubr.f32.gmra.mrb[0].mxu0 %v1899
    %v3159 = vpop.f32.mrb[0].mxu0
    %v3160 = vadd.f32 0.0, %v3159
    %v3161 = vpop.f32.mrb[0].mxu0
    %3162 = vmatprep.mubr.f32.mxu0 0.0
    %3163 = vmatmul.mubr.f32.gmra.mrb[0].mxu0 %v1902
    %v3164 = vpop.f32.mrb[0].mxu0
    %v3165 = vadd.f32 0.0, %v3164
    %v3166 = vpop.f32.mrb[0].mxu0
    %3167 = vmatprep.mubr.f32.mxu0 0.0
    %3168 = vmatmul.mubr.f32.gmra.mrb[0].mxu0 %v1905
    %v3169 = vpop.f32.mrb[0].mxu0
    %v3170 = vadd.f32 0.0, %v3169
    %v3171 = vpop.f32.mrb[0].mxu0
    %3172 = vmatprep.mubr.f32.mxu0 0.0
    %3173 = vmatmul.mubr.f32.gmra.mrb[0].mxu0 %v1908
    %v3174 = vpop.f32.mrb[0].mxu0
    %v3175 = vadd.f32 0.0, %v3174
    %v3176 = vpop.f32.mrb[0].mxu0
    %3177 = vmatprep.mubr.f32.mxu0 0.0
    %3178 = vmatmul.mubr.f32.gmra.mrb[0].mxu0 %v1911
    %v3179 = vpop.f32.mrb[0].mxu0
    %v3180 = vadd.f32 0.0, %v3179
    %v3181 = vpop.f32.mrb[0].mxu0
    %3182 = vmatprep.mubr.f32.mxu0 0.0
    %3183 = vmatmul.mubr.f32.gmra.mrb[0].mxu0 %v1914
    %v3184 = vpop.f32.mrb[0].mxu0
    %v3185 = vadd.f32 0.0, %v3184
    %v3186 = vpop.f32.mrb[0].mxu0
    %3187 = vmatprep.mubr.f32.mxu0 0.0
    %3188 = vmatmul.mubr.f32.gmra.mrb[0].mxu0 %v1917
    %v3189 = vpop.f32.mrb[0].mxu0
    %v3190 = vadd.f32 0.0, %v3189
    %v3191 = vpop.f32.mrb[0].mxu0
    %3192 = vmatprep.mubr.f32.mxu0 0.0
    %3193 = vmatmul.mubr.f32.gmra.mrb[0].mxu0 %v1920
    %v3194 = vpop.f32.mrb[0].mxu0
    %v3195 = vadd.f32 0.0, %v3194
    %v3196 = vpop.f32.mrb[0].mxu0
    %3197 = vdwg.mxu0
    %3198 = vmatprep.subr.mxu0 0.0
    %3199 = vmatpush1.msra.mxu0 %v2555
    %3200 = vmatprep.subr.mxu0 0.0
    %3201 = vmatpush1.msra.mxu0 %v2556
    %3202 = vmatprep.subr.mxu0 0.0
    %3203 = vmatpush1.msra.mxu0 %v2557
    %3204 = vmatprep.subr.mxu0 0.0
    %3205 = vmatpush1.msra.mxu0 %v2558
    %3206 = vmatprep.subr.mxu0 0.0
    %3207 = vmatpush1.msra.mxu0 %v2559
    %3208 = vmatprep.subr.mxu0 0.0
    %3209 = vmatpush1.msra.mxu0 %v2560
    %3210 = vmatprep.subr.mxu0 0.0
    %3211 = vmatpush1.msra.mxu0 %v2561
    %3212 = vmatprep.subr.mxu0 0.0
    %3213 = vmatpush1.msra.mxu0 %v2562
    %3214 = vmatprep.subr.mxu0 0.0
    %3215 = vmatpush1.msra.mxu0 0.0
    %3216 = vmatprep.subr.mxu0 0.0
    %3217 = vmatpush1.msra.mxu0 0.0
    %3218 = vmatprep.subr.mxu0 0.0
    %3219 = vmatpush1.msra.mxu0 0.0
    %3220 = vmatprep.subr.mxu0 0.0
    %3221 = vmatpush1.msra.mxu0 0.0
    %3222 = vmatprep.subr.mxu0 0.0
    %3223 = vmatpush1.msra.mxu0 0.0
    %3224 = vmatprep.subr.mxu0 0.0
    %3225 = vmatpush1.msra.mxu0 0.0
    %3226 = vmatprep.subr.mxu0 0.0
    %3227 = vmatpush1.msra.mxu0 0.0
    %3228 = vmatprep.subr.mxu0 0.0
    %3229 = vmatpush1.msra.mxu0 0.0
    %3230 = vmatprep.subr.mxu0 0.0
    %3231 = vmatpush1.msra.mxu0 0.0
    %3232 = vmatprep.subr.mxu0 0.0
    %3233 = vmatpush1.msra.mxu0 0.0
    %3234 = vmatprep.subr.mxu0 0.0
    %3235 = vmatpush1.msra.mxu0 0.0
    %3236 = vmatprep.subr.mxu0 0.0
    %3237 = vmatpush1.msra.mxu0 0.0
    %3238 = vmatprep.subr.mxu0 0.0
    %3239 = vmatpush1.msra.mxu0 0.0
    %3240 = vmatprep.subr.mxu0 0.0
    %3241 = vmatpush1.msra.mxu0 0.0
    %3242 = vmatprep.subr.mxu0 0.0
    %3243 = vmatpush1.msra.mxu0 0.0
    %3244 = vmatprep.subr.mxu0 0.0
    %3245 = vmatpush1.msra.mxu0 0.0
    %3246 = vmatprep.subr.mxu0 0.0
    %3247 = vmatpush1.msra.mxu0 0.0
    %3248 = vmatprep.subr.mxu0 0.0
    %3249 = vmatpush1.msra.mxu0 0.0
    %3250 = vmatprep.subr.mxu0 0.0
    %3251 = vmatpush1.msra.mxu0 0.0
    %3252 = vmatprep.subr.mxu0 0.0
    %3253 = vmatpush1.msra.mxu0 0.0
    %3254 = vmatprep.subr.mxu0 0.0
    %3255 = vmatpush1.msra.mxu0 0.0
    %3256 = vmatprep.subr.mxu0 0.0
    %3257 = vmatpush1.msra.mxu0 0.0
    %3258 = vmatprep.subr.mxu0 0.0
    %3259 = vmatpush1.msra.mxu0 0.0
    %3260 = vmatprep.subr.mxu0 0.0
    %3261 = vmatpush1.msra.mxu0 0.0
    %3262 = vmatprep.mubr.f32.mxu0 0.0
    %3263 = vmatmul.mubr.f32.gmra.mrb[0].mxu0 %v2028
    %v3264 = vpop.f32.mrb[0].mxu0
    %v3265 = vadd.f32 %v3160, %v3264
    %v3266 = vpop.f32.mrb[0].mxu0
    %3267 = vmatprep.mubr.f32.mxu0 0.0
    %3268 = vmatmul.mubr.f32.gmra.mrb[0].mxu0 %v2031
    %v3269 = vpop.f32.mrb[0].mxu0
    %v3270 = vadd.f32 %v3165, %v3269
    %v3271 = vpop.f32.mrb[0].mxu0
    %3272 = vmatprep.mubr.f32.mxu0 0.0
    %3273 = vmatmul.mubr.f32.gmra.mrb[0].mxu0 %v2034
    %v3274 = vpop.f32.mrb[0].mxu0
    %v3275 = vadd.f32 %v3170, %v3274
    %v3276 = vpop.f32.mrb[0].mxu0
    %3277 = vmatprep.mubr.f32.mxu0 0.0
    %3278 = vmatmul.mubr.f32.gmra.mrb[0].mxu0 %v2037
    %v3279 = vpop.f32.mrb[0].mxu0
    %v3280 = vadd.f32 %v3175, %v3279
    %v3281 = vpop.f32.mrb[0].mxu0
    %3282 = vmatprep.mubr.f32.mxu0 0.0
    %3283 = vmatmul.mubr.f32.gmra.mrb[0].mxu0 %v2040
    %v3284 = vpop.f32.mrb[0].mxu0
    %v3285 = vadd.f32 %v3180, %v3284
    %v3286 = vpop.f32.mrb[0].mxu0
    %3287 = vmatprep.mubr.f32.mxu0 0.0
    %3288 = vmatmul.mubr.f32.gmra.mrb[0].mxu0 %v2043
    %v3289 = vpop.f32.mrb[0].mxu0
    %v3290 = vadd.f32 %v3185, %v3289
    %v3291 = vpop.f32.mrb[0].mxu0
    %3292 = vmatprep.mubr.f32.mxu0 0.0
    %3293 = vmatmul.mubr.f32.gmra.mrb[0].mxu0 %v2046
    %v3294 = vpop.f32.mrb[0].mxu0
    %v3295 = vadd.f32 %v3190, %v3294
    %v3296 = vpop.f32.mrb[0].mxu0
    %3297 = vmatprep.mubr.f32.mxu0 0.0
    %3298 = vmatmul.mubr.f32.gmra.mrb[0].mxu0 %v2049
    %v3299 = vpop.f32.mrb[0].mxu0
    %v3300 = vadd.f32 %v3195, %v3299
    %v3301 = vpop.f32.mrb[0].mxu0
    %3302 = vdwg.mxu0
    %v3303 = vld [vmem:[%s882] sm:$0xff]
    %v3304 = vld [vmem:[%s882 + $0x8] sm:$0xff]
    %v3305 = vld [vmem:[%s882 + $0x10] sm:$0xff]
    %v3306 = vld [vmem:[%s882 + $0x18] sm:$0xff]
    %v3307 = vld [vmem:[%s882 + $0x20] sm:$0xff]
    %v3308 = vld [vmem:[%s882 + $0x28] sm:$0xff]
    %v3309 = vld [vmem:[%s882 + $0x30] sm:$0xff]
    %v3310 = vld [vmem:[%s882 + $0x38] sm:$0xff]
    %3311 = vmatprep.subr.mxu0 0.0
    %3312 = vmatpush1.msra.mxu0 %v3303
    %3313 = vmatprep.subr.mxu0 0.0
    %3314 = vmatpush1.msra.mxu0 %v3304
    %3315 = vmatprep.subr.mxu0 0.0
    %3316 = vmatpush1.msra.mxu0 %v3305
    %3317 = vmatprep.subr.mxu0 0.0
    %3318 = vmatpush1.msra.mxu0 %v3306
    %3319 = vmatprep.subr.mxu0 0.0
    %3320 = vmatpush1.msra.mxu0 %v3307
    %3321 = vmatprep.subr.mxu0 0.0
    %3322 = vmatpush1.msra.mxu0 %v3308
    %3323 = vmatprep.subr.mxu0 0.0
    %3324 = vmatpush1.msra.mxu0 %v3309
    %3325 = vmatprep.subr.mxu0 0.0
    %3326 = vmatpush1.msra.mxu0 %v3310
    %3327 = vmatprep.subr.mxu0 0.0
    %3328 = vmatpush1.msra.mxu0 0.0
    %3329 = vmatprep.subr.mxu0 0.0
    %3330 = vmatpush1.msra.mxu0 0.0
    %3331 = vmatprep.subr.mxu0 0.0
    %3332 = vmatpush1.msra.mxu0 0.0
    %3333 = vmatprep.subr.mxu0 0.0
    %3334 = vmatpush1.msra.mxu0 0.0
    %3335 = vmatprep.subr.mxu0 0.0
    %3336 = vmatpush1.msra.mxu0 0.0
    %3337 = vmatprep.subr.mxu0 0.0
    %3338 = vmatpush1.msra.mxu0 0.0
    %3339 = vmatprep.subr.mxu0 0.0
    %3340 = vmatpush1.msra.mxu0 0.0
    %3341 = vmatprep.subr.mxu0 0.0
    %3342 = vmatpush1.msra.mxu0 0.0
    %3343 = vmatprep.subr.mxu0 0.0
    %3344 = vmatpush1.msra.mxu0 0.0
    %3345 = vmatprep.subr.mxu0 0.0
    %3346 = vmatpush1.msra.mxu0 0.0
    %3347 = vmatprep.subr.mxu0 0.0
    %3348 = vmatpush1.msra.mxu0 0.0
    %3349 = vmatprep.subr.mxu0 0.0
    %3350 = vmatpush1.msra.mxu0 0.0
    %3351 = vmatprep.subr.mxu0 0.0
    %3352 = vmatpush1.msra.mxu0 0.0
    %3353 = vmatprep.subr.mxu0 0.0
    %3354 = vmatpush1.msra.mxu0 0.0
    %3355 = vmatprep.subr.mxu0 0.0
    %3356 = vmatpush1.msra.mxu0 0.0
    %3357 = vmatprep.subr.mxu0 0.0
    %3358 = vmatpush1.msra.mxu0 0.0
    %3359 = vmatprep.subr.mxu0 0.0
    %3360 = vmatpush1.msra.mxu0 0.0
    %3361 = vmatprep.subr.mxu0 0.0
    %3362 = vmatpush1.msra.mxu0 0.0
    %3363 = vmatprep.subr.mxu0 0.0
    %3364 = vmatpush1.msra.mxu0 0.0
    %3365 = vmatprep.subr.mxu0 0.0
    %3366 = vmatpush1.msra.mxu0 0.0
    %3367 = vmatprep.subr.mxu0 0.0
    %3368 = vmatpush1.msra.mxu0 0.0
    %3369 = vmatprep.subr.mxu0 0.0
    %3370 = vmatpush1.msra.mxu0 0.0
    %3371 = vmatprep.subr.mxu0 0.0
    %3372 = vmatpush1.msra.mxu0 0.0
    %3373 = vmatprep.subr.mxu0 0.0
    %3374 = vmatpush1.msra.mxu0 0.0
    %3375 = vmatprep.mubr.f32.mxu0 0.0
    %3376 = vmatmul.mubr.f32.gmra.mrb[0].mxu0 %v2165
    %v3377 = vpop.f32.mrb[0].mxu0
    %v3378 = vadd.f32 0.0, %v3377
    %v3379 = vpop.f32.mrb[0].mxu0
    %3380 = vmatprep.mubr.f32.mxu0 0.0
    %3381 = vmatmul.mubr.f32.gmra.mrb[0].mxu0 %v2168
    %v3382 = vpop.f32.mrb[0].mxu0
    %v3383 = vadd.f32 0.0, %v3382
    %v3384 = vpop.f32.mrb[0].mxu0
    %3385 = vmatprep.mubr.f32.mxu0 0.0
    %3386 = vmatmul.mubr.f32.gmra.mrb[0].mxu0 %v2171
    %v3387 = vpop.f32.mrb[0].mxu0
    %v3388 = vadd.f32 0.0, %v3387
    %v3389 = vpop.f32.mrb[0].mxu0
    %3390 = vmatprep.mubr.f32.mxu0 0.0
    %3391 = vmatmul.mubr.f32.gmra.mrb[0].mxu0 %v2174
    %v3392 = vpop.f32.mrb[0].mxu0
    %v3393 = vadd.f32 0.0, %v3392
    %v3394 = vpop.f32.mrb[0].mxu0
    %3395 = vmatprep.mubr.f32.mxu0 0.0
    %3396 = vmatmul.mubr.f32.gmra.mrb[0].mxu0 %v2177
    %v3397 = vpop.f32.mrb[0].mxu0
    %v3398 = vadd.f32 0.0, %v3397
    %v3399 = vpop.f32.mrb[0].mxu0
    %3400 = vmatprep.mubr.f32.mxu0 0.0
    %3401 = vmatmul.mubr.f32.gmra.mrb[0].mxu0 %v2180
    %v3402 = vpop.f32.mrb[0].mxu0
    %v3403 = vadd.f32 0.0, %v3402
    %v3404 = vpop.f32.mrb[0].mxu0
    %3405 = vmatprep.mubr.f32.mxu0 0.0
    %3406 = vmatmul.mubr.f32.gmra.mrb[0].mxu0 %v2183
    %v3407 = vpop.f32.mrb[0].mxu0
    %v3408 = vadd.f32 0.0, %v3407
    %v3409 = vpop.f32.mrb[0].mxu0
    %3410 = vmatprep.mubr.f32.mxu0 0.0
    %3411 = vmatmul.mubr.f32.gmra.mrb[0].mxu0 %v2186
    %v3412 = vpop.f32.mrb[0].mxu0
    %v3413 = vadd.f32 0.0, %v3412
    %v3414 = vpop.f32.mrb[0].mxu0
    %3415 = vdwg.mxu0
    %v3416 = vadd.f32 %v3265, %v3378
    %v3417 = vadd.f32 %v3270, %v3383
    %v3418 = vadd.f32 %v3275, %v3388
    %v3419 = vadd.f32 %v3280, %v3393
    %v3420 = vadd.f32 %v3285, %v3398
    %v3421 = vadd.f32 %v3290, %v3403
    %v3422 = vadd.f32 %v3295, %v3408
    %v3423 = vadd.f32 %v3300, %v3413
    %v3424 = vadd.f32 %v3416, %v126
    %v3425 = vadd.f32 %v3417, %v131
    %v3426 = vadd.f32 %v3418, %v136
    %v3427 = vadd.f32 %v3419, %v141
    %v3428 = vadd.f32 %v3420, %v146
    %v3429 = vadd.f32 %v3421, %v151
    %v3430 = vadd.f32 %v3422, %v156
    %v3431 = vadd.f32 %v3423, %v161
    %v3432 = vmax.f32 %v3424, 0.0
    %v3433 = vmax.f32 %v3425, 0.0
    %v3434 = vmax.f32 %v3426, 0.0
    %v3435 = vmax.f32 %v3427, 0.0
    %v3436 = vmax.f32 %v3428, 0.0
    %v3437 = vmax.f32 %v3429, 0.0
    %v3438 = vmax.f32 %v3430, 0.0
    %v3439 = vmax.f32 %v3431, 0.0
    %v3440 = vadd.f32 %v3432, %v3433
    %v3441 = vadd.f32 %v3440, %v3434
    %v3442 = vadd.f32 %v3441, %v3435
    %v3443 = vadd.f32 %v3442, %v3436
    %v3444 = vadd.f32 %v3443, %v3437
    %v3445 = vadd.f32 %v3444, %v3438
    %v3446 = vadd.f32 %v3445, %v3439
    %v3447 = vrot.slane %v3446, 4
    %v3448 = vadd.f32 %v3446, %v3447
    %v3449 = vrot.slane %v3448, 2
    %v3450 = vadd.f32 %v3448, %v3449
    %v3451 = vrot.slane %v3450, 1
    %v3452 = vadd.f32 %v3450, %v3451
    %v3453 = vmul.f32 %v3452, %v2330
    %v3454 = vmax.f32 %v3432, %v3436
    %v3455 = vmax.f32 %v3433, %v3437
    %v3456 = vmax.f32 %v3434, %v3438
    %v3457 = vmax.f32 %v3435, %v3439
    %v3458 = vmax.f32 %v3454, %v3455
    %v3459 = vmax.f32 %v3456, %v3457
    %v3460 = vmax.f32 %v3458, %v3459
    %v3461 = vrot.slane %v3460, 4
    %v3462 = vmax.f32 %v3460, %v3461
    %v3463 = vrot.slane %v3462, 2
    %v3464 = vmax.f32 %v3462, %v3463
    %v3465 = vrot.slane %v3464, 1
    %v3466 = vmax.f32 %v3464, %v3465
    %3467 = vmatprep.subr.mxu0 0.0
    %3468 = vmatpush1.msra.mxu0 %v3303
    %3469 = vmatprep.subr.mxu0 0.0
    %3470 = vmatpush1.msra.mxu0 %v3304
    %3471 = vmatprep.subr.mxu0 0.0
    %3472 = vmatpush1.msra.mxu0 %v3305
    %3473 = vmatprep.subr.mxu0 0.0
    %3474 = vmatpush1.msra.mxu0 %v3306
    %3475 = vmatprep.subr.mxu0 0.0
    %3476 = vmatpush1.msra.mxu0 %v3307
    %3477 = vmatprep.subr.mxu0 0.0
    %3478 = vmatpush1.msra.mxu0 %v3308
    %3479 = vmatprep.subr.mxu0 0.0
    %3480 = vmatpush1.msra.mxu0 %v3309
    %3481 = vmatprep.subr.mxu0 0.0
    %3482 = vmatpush1.msra.mxu0 %v3310
    %3483 = vmatprep.subr.mxu0 0.0
    %3484 = vmatpush1.msra.mxu0 0.0
    %3485 = vmatprep.subr.mxu0 0.0
    %3486 = vmatpush1.msra.mxu0 0.0
    %3487 = vmatprep.subr.mxu0 0.0
    %3488 = vmatpush1.msra.mxu0 0.0
    %3489 = vmatprep.subr.mxu0 0.0
    %3490 = vmatpush1.msra.mxu0 0.0
    %3491 = vmatprep.subr.mxu0 0.0
    %3492 = vmatpush1.msra.mxu0 0.0
    %3493 = vmatprep.subr.mxu0 0.0
    %3494 = vmatpush1.msra.mxu0 0.0
    %3495 = vmatprep.subr.mxu0 0.0
    %3496 = vmatpush1.msra.mxu0 0.0
    %3497 = vmatprep.subr.mxu0 0.0
    %3498 = vmatpush1.msra.mxu0 0.0
    %3499 = vmatprep.subr.mxu0 0.0
    %3500 = vmatpush1.msra.mxu0 0.0
    %3501 = vmatprep.subr.mxu0 0.0
    %3502 = vmatpush1.msra.mxu0 0.0
    %3503 = vmatprep.subr.mxu0 0.0
    %3504 = vmatpush1.msra.mxu0 0.0
    %3505 = vmatprep.subr.mxu0 0.0
    %3506 = vmatpush1.msra.mxu0 0.0
    %3507 = vmatprep.subr.mxu0 0.0
    %3508 = vmatpush1.msra.mxu0 0.0
    %3509 = vmatprep.subr.mxu0 0.0
    %3510 = vmatpush1.msra.mxu0 0.0
    %3511 = vmatprep.subr.mxu0 0.0
    %3512 = vmatpush1.msra.mxu0 0.0
    %3513 = vmatprep.subr.mxu0 0.0
    %3514 = vmatpush1.msra.mxu0 0.0
    %3515 = vmatprep.subr.mxu0 0.0
    %3516 = vmatpush1.msra.mxu0 0.0
    %3517 = vmatprep.subr.mxu0 0.0
    %3518 = vmatpush1.msra.mxu0 0.0
    %3519 = vmatprep.subr.mxu0 0.0
    %3520 = vmatpush1.msra.mxu0 0.0
    %3521 = vmatprep.subr.mxu0 0.0
    %3522 = vmatpush1.msra.mxu0 0.0
    %3523 = vmatprep.subr.mxu0 0.0
    %3524 = vmatpush1.msra.mxu0 0.0
    %3525 = vmatprep.subr.mxu0 0.0
    %3526 = vmatpush1.msra.mxu0 0.0
    %3527 = vmatprep.subr.mxu0 0.0
    %3528 = vmatpush1.msra.mxu0 0.0
    %3529 = vmatprep.subr.mxu0 0.0
    %3530 = vmatpush1.msra.mxu0 0.0
    %3531 = vmatprep.mubr.f32.mxu0 0.0
    %3532 = vmatmul.mubr.f32.gmra.mrb[0].mxu0 %v1899
    %v3533 = vpop.f32.mrb[0].mxu0
    %v3534 = vadd.f32 0.0, %v3533
    %v3535 = vpop.f32.mrb[0].mxu0
    %3536 = vmatprep.mubr.f32.mxu0 0.0
    %3537 = vmatmul.mubr.f32.gmra.mrb[0].mxu0 %v1902
    %v3538 = vpop.f32.mrb[0].mxu0
    %v3539 = vadd.f32 0.0, %v3538
    %v3540 = vpop.f32.mrb[0].mxu0
    %3541 = vmatprep.mubr.f32.mxu0 0.0
    %3542 = vmatmul.mubr.f32.gmra.mrb[0].mxu0 %v1905
    %v3543 = vpop.f32.mrb[0].mxu0
    %v3544 = vadd.f32 0.0, %v3543
    %v3545 = vpop.f32.mrb[0].mxu0
    %3546 = vmatprep.mubr.f32.mxu0 0.0
    %3547 = vmatmul.mubr.f32.gmra.mrb[0].mxu0 %v1908
    %v3548 = vpop.f32.mrb[0].mxu0
    %v3549 = vadd.f32 0.0, %v3548
    %v3550 = vpop.f32.mrb[0].mxu0
    %3551 = vmatprep.mubr.f32.mxu0 0.0
    %3552 = vmatmul.mubr.f32.gmra.mrb[0].mxu0 %v1911
    %v3553 = vpop.f32.mrb[0].mxu0
    %v3554 = vadd.f32 0.0, %v3553
    %v3555 = vpop.f32.mrb[0].mxu0
    %3556 = vmatprep.mubr.f32.mxu0 0.0
    %3557 = vmatmul.mubr.f32.gmra.mrb[0].mxu0 %v1914
    %v3558 = vpop.f32.mrb[0].mxu0
    %v3559 = vadd.f32 0.0, %v3558
    %v3560 = vpop.f32.mrb[0].mxu0
    %3561 = vmatprep.mubr.f32.mxu0 0.0
    %3562 = vmatmul.mubr.f32.gmra.mrb[0].mxu0 %v1917
    %v3563 = vpop.f32.mrb[0].mxu0
    %v3564 = vadd.f32 0.0, %v3563
    %v3565 = vpop.f32.mrb[0].mxu0
    %3566 = vmatprep.mubr.f32.mxu0 0.0
    %3567 = vmatmul.mubr.f32.gmra.mrb[0].mxu0 %v1920
    %v3568 = vpop.f32.mrb[0].mxu0
    %v3569 = vadd.f32 0.0, %v3568
    %v3570 = vpop.f32.mrb[0].mxu0
    %3571 = vdwg.mxu0
    %3572 = vmatprep.subr.mxu0 0.0
    %3573 = vmatpush1.msra.mxu0 %v2929
    %3574 = vmatprep.subr.mxu0 0.0
    %3575 = vmatpush1.msra.mxu0 %v2930
    %3576 = vmatprep.subr.mxu0 0.0
    %3577 = vmatpush1.msra.mxu0 %v2931
    %3578 = vmatprep.subr.mxu0 0.0
    %3579 = vmatpush1.msra.mxu0 %v2932
    %3580 = vmatprep.subr.mxu0 0.0
    %3581 = vmatpush1.msra.mxu0 %v2933
    %3582 = vmatprep.subr.mxu0 0.0
    %3583 = vmatpush1.msra.mxu0 %v2934
    %3584 = vmatprep.subr.mxu0 0.0
    %3585 = vmatpush1.msra.mxu0 %v2935
    %3586 = vmatprep.subr.mxu0 0.0
    %3587 = vmatpush1.msra.mxu0 %v2936
    %3588 = vmatprep.subr.mxu0 0.0
    %3589 = vmatpush1.msra.mxu0 0.0
    %3590 = vmatprep.subr.mxu0 0.0
    %3591 = vmatpush1.msra.mxu0 0.0
    %3592 = vmatprep.subr.mxu0 0.0
    %3593 = vmatpush1.msra.mxu0 0.0
    %3594 = vmatprep.subr.mxu0 0.0
    %3595 = vmatpush1.msra.mxu0 0.0
    %3596 = vmatprep.subr.mxu0 0.0
    %3597 = vmatpush1.msra.mxu0 0.0
    %3598 = vmatprep.subr.mxu0 0.0
    %3599 = vmatpush1.msra.mxu0 0.0
    %3600 = vmatprep.subr.mxu0 0.0
    %3601 = vmatpush1.msra.mxu0 0.0
    %3602 = vmatprep.subr.mxu0 0.0
    %3603 = vmatpush1.msra.mxu0 0.0
    %3604 = vmatprep.subr.mxu0 0.0
    %3605 = vmatpush1.msra.mxu0 0.0
    %3606 = vmatprep.subr.mxu0 0.0
    %3607 = vmatpush1.msra.mxu0 0.0
    %3608 = vmatprep.subr.mxu0 0.0
    %3609 = vmatpush1.msra.mxu0 0.0
    %3610 = vmatprep.subr.mxu0 0.0
    %3611 = vmatpush1.msra.mxu0 0.0
    %3612 = vmatprep.subr.mxu0 0.0
    %3613 = vmatpush1.msra.mxu0 0.0
    %3614 = vmatprep.subr.mxu0 0.0
    %3615 = vmatpush1.msra.mxu0 0.0
    %3616 = vmatprep.subr.mxu0 0.0
    %3617 = vmatpush1.msra.mxu0 0.0
    %3618 = vmatprep.subr.mxu0 0.0
    %3619 = vmatpush1.msra.mxu0 0.0
    %3620 = vmatprep.subr.mxu0 0.0
    %3621 = vmatpush1.msra.mxu0 0.0
    %3622 = vmatprep.subr.mxu0 0.0
    %3623 = vmatpush1.msra.mxu0 0.0
    %3624 = vmatprep.subr.mxu0 0.0
    %3625 = vmatpush1.msra.mxu0 0.0
    %3626 = vmatprep.subr.mxu0 0.0
    %3627 = vmatpush1.msra.mxu0 0.0
    %3628 = vmatprep.subr.mxu0 0.0
    %3629 = vmatpush1.msra.mxu0 0.0
    %3630 = vmatprep.subr.mxu0 0.0
    %3631 = vmatpush1.msra.mxu0 0.0
    %3632 = vmatprep.subr.mxu0 0.0
    %3633 = vmatpush1.msra.mxu0 0.0
    %3634 = vmatprep.subr.mxu0 0.0
    %3635 = vmatpush1.msra.mxu0 0.0
    %3636 = vmatprep.mubr.f32.mxu0 0.0
    %3637 = vmatmul.mubr.f32.gmra.mrb[0].mxu0 %v2028
    %v3638 = vpop.f32.mrb[0].mxu0
    %v3639 = vadd.f32 %v3534, %v3638
    %v3640 = vpop.f32.mrb[0].mxu0
    %3641 = vmatprep.mubr.f32.mxu0 0.0
    %3642 = vmatmul.mubr.f32.gmra.mrb[0].mxu0 %v2031
    %v3643 = vpop.f32.mrb[0].mxu0
    %v3644 = vadd.f32 %v3539, %v3643
    %v3645 = vpop.f32.mrb[0].mxu0
    %3646 = vmatprep.mubr.f32.mxu0 0.0
    %3647 = vmatmul.mubr.f32.gmra.mrb[0].mxu0 %v2034
    %v3648 = vpop.f32.mrb[0].mxu0
    %v3649 = vadd.f32 %v3544, %v3648
    %v3650 = vpop.f32.mrb[0].mxu0
    %3651 = vmatprep.mubr.f32.mxu0 0.0
    %3652 = vmatmul.mubr.f32.gmra.mrb[0].mxu0 %v2037
    %v3653 = vpop.f32.mrb[0].mxu0
    %v3654 = vadd.f32 %v3549, %v3653
    %v3655 = vpop.f32.mrb[0].mxu0
    %3656 = vmatprep.mubr.f32.mxu0 0.0
    %3657 = vmatmul.mubr.f32.gmra.mrb[0].mxu0 %v2040
    %v3658 = vpop.f32.mrb[0].mxu0
    %v3659 = vadd.f32 %v3554, %v3658
    %v3660 = vpop.f32.mrb[0].mxu0
    %3661 = vmatprep.mubr.f32.mxu0 0.0
    %3662 = vmatmul.mubr.f32.gmra.mrb[0].mxu0 %v2043
    %v3663 = vpop.f32.mrb[0].mxu0
    %v3664 = vadd.f32 %v3559, %v3663
    %v3665 = vpop.f32.mrb[0].mxu0
    %3666 = vmatprep.mubr.f32.mxu0 0.0
    %3667 = vmatmul.mubr.f32.gmra.mrb[0].mxu0 %v2046
    %v3668 = vpop.f32.mrb[0].mxu0
    %v3669 = vadd.f32 %v3564, %v3668
    %v3670 = vpop.f32.mrb[0].mxu0
    %3671 = vmatprep.mubr.f32.mxu0 0.0
    %3672 = vmatmul.mubr.f32.gmra.mrb[0].mxu0 %v2049
    %v3673 = vpop.f32.mrb[0].mxu0
    %v3674 = vadd.f32 %v3569, %v3673
    %v3675 = vpop.f32.mrb[0].mxu0
    %3676 = vdwg.mxu0
    %v3677 = vld [vmem:[%s981] sm:$0xff]
    %v3678 = vld [vmem:[%s981 + $0x8] sm:$0xff]
    %v3679 = vld [vmem:[%s981 + $0x10] sm:$0xff]
    %v3680 = vld [vmem:[%s981 + $0x18] sm:$0xff]
    %v3681 = vld [vmem:[%s981 + $0x20] sm:$0xff]
    %v3682 = vld [vmem:[%s981 + $0x28] sm:$0xff]
    %v3683 = vld [vmem:[%s981 + $0x30] sm:$0xff]
    %v3684 = vld [vmem:[%s981 + $0x38] sm:$0xff]
    %3685 = vmatprep.subr.mxu0 0.0
    %3686 = vmatpush1.msra.mxu0 %v3677
    %3687 = vmatprep.subr.mxu0 0.0
    %3688 = vmatpush1.msra.mxu0 %v3678
    %3689 = vmatprep.subr.mxu0 0.0
    %3690 = vmatpush1.msra.mxu0 %v3679
    %3691 = vmatprep.subr.mxu0 0.0
    %3692 = vmatpush1.msra.mxu0 %v3680
    %3693 = vmatprep.subr.mxu0 0.0
    %3694 = vmatpush1.msra.mxu0 %v3681
    %3695 = vmatprep.subr.mxu0 0.0
    %3696 = vmatpush1.msra.mxu0 %v3682
    %3697 = vmatprep.subr.mxu0 0.0
    %3698 = vmatpush1.msra.mxu0 %v3683
    %3699 = vmatprep.subr.mxu0 0.0
    %3700 = vmatpush1.msra.mxu0 %v3684
    %3701 = vmatprep.subr.mxu0 0.0
    %3702 = vmatpush1.msra.mxu0 0.0
    %3703 = vmatprep.subr.mxu0 0.0
    %3704 = vmatpush1.msra.mxu0 0.0
    %3705 = vmatprep.subr.mxu0 0.0
    %3706 = vmatpush1.msra.mxu0 0.0
    %3707 = vmatprep.subr.mxu0 0.0
    %3708 = vmatpush1.msra.mxu0 0.0
    %3709 = vmatprep.subr.mxu0 0.0
    %3710 = vmatpush1.msra.mxu0 0.0
    %3711 = vmatprep.subr.mxu0 0.0
    %3712 = vmatpush1.msra.mxu0 0.0
    %3713 = vmatprep.subr.mxu0 0.0
    %3714 = vmatpush1.msra.mxu0 0.0
    %3715 = vmatprep.subr.mxu0 0.0
    %3716 = vmatpush1.msra.mxu0 0.0
    %3717 = vmatprep.subr.mxu0 0.0
    %3718 = vmatpush1.msra.mxu0 0.0
    %3719 = vmatprep.subr.mxu0 0.0
    %3720 = vmatpush1.msra.mxu0 0.0
    %3721 = vmatprep.subr.mxu0 0.0
    %3722 = vmatpush1.msra.mxu0 0.0
    %3723 = vmatprep.subr.mxu0 0.0
    %3724 = vmatpush1.msra.mxu0 0.0
    %3725 = vmatprep.subr.mxu0 0.0
    %3726 = vmatpush1.msra.mxu0 0.0
    %3727 = vmatprep.subr.mxu0 0.0
    %3728 = vmatpush1.msra.mxu0 0.0
    %3729 = vmatprep.subr.mxu0 0.0
    %3730 = vmatpush1.msra.mxu0 0.0
    %3731 = vmatprep.subr.mxu0 0.0
    %3732 = vmatpush1.msra.mxu0 0.0
    %3733 = vmatprep.subr.mxu0 0.0
    %3734 = vmatpush1.msra.mxu0 0.0
    %3735 = vmatprep.subr.mxu0 0.0
    %3736 = vmatpush1.msra.mxu0 0.0
    %3737 = vmatprep.subr.mxu0 0.0
    %3738 = vmatpush1.msra.mxu0 0.0
    %3739 = vmatprep.subr.mxu0 0.0
    %3740 = vmatpush1.msra.mxu0 0.0
    %3741 = vmatprep.subr.mxu0 0.0
    %3742 = vmatpush1.msra.mxu0 0.0
    %3743 = vmatprep.subr.mxu0 0.0
    %3744 = vmatpush1.msra.mxu0 0.0
    %3745 = vmatprep.subr.mxu0 0.0
    %3746 = vmatpush1.msra.mxu0 0.0
    %3747 = vmatprep.subr.mxu0 0.0
    %3748 = vmatpush1.msra.mxu0 0.0
    %3749 = vmatprep.mubr.f32.mxu0 0.0
    %3750 = vmatmul.mubr.f32.gmra.mrb[0].mxu0 %v2165
    %v3751 = vpop.f32.mrb[0].mxu0
    %v3752 = vadd.f32 0.0, %v3751
    %v3753 = vpop.f32.mrb[0].mxu0
    %3754 = vmatprep.mubr.f32.mxu0 0.0
    %3755 = vmatmul.mubr.f32.gmra.mrb[0].mxu0 %v2168
    %v3756 = vpop.f32.mrb[0].mxu0
    %v3757 = vadd.f32 0.0, %v3756
    %v3758 = vpop.f32.mrb[0].mxu0
    %3759 = vmatprep.mubr.f32.mxu0 0.0
    %3760 = vmatmul.mubr.f32.gmra.mrb[0].mxu0 %v2171
    %v3761 = vpop.f32.mrb[0].mxu0
    %v3762 = vadd.f32 0.0, %v3761
    %v3763 = vpop.f32.mrb[0].mxu0
    %3764 = vmatprep.mubr.f32.mxu0 0.0
    %3765 = vmatmul.mubr.f32.gmra.mrb[0].mxu0 %v2174
    %v3766 = vpop.f32.mrb[0].mxu0
    %v3767 = vadd.f32 0.0, %v3766
    %v3768 = vpop.f32.mrb[0].mxu0
    %3769 = vmatprep.mubr.f32.mxu0 0.0
    %3770 = vmatmul.mubr.f32.gmra.mrb[0].mxu0 %v2177
    %v3771 = vpop.f32.mrb[0].mxu0
    %v3772 = vadd.f32 0.0, %v3771
    %v3773 = vpop.f32.mrb[0].mxu0
    %3774 = vmatprep.mubr.f32.mxu0 0.0
    %3775 = vmatmul.mubr.f32.gmra.mrb[0].mxu0 %v2180
    %v3776 = vpop.f32.mrb[0].mxu0
    %v3777 = vadd.f32 0.0, %v3776
    %v3778 = vpop.f32.mrb[0].mxu0
    %3779 = vmatprep.mubr.f32.mxu0 0.0
    %3780 = vmatmul.mubr.f32.gmra.mrb[0].mxu0 %v2183
    %v3781 = vpop.f32.mrb[0].mxu0
    %v3782 = vadd.f32 0.0, %v3781
    %v3783 = vpop.f32.mrb[0].mxu0
    %3784 = vmatprep.mubr.f32.mxu0 0.0
    %3785 = vmatmul.mubr.f32.gmra.mrb[0].mxu0 %v2186
    %v3786 = vpop.f32.mrb[0].mxu0
    %v3787 = vadd.f32 0.0, %v3786
    %v3788 = vpop.f32.mrb[0].mxu0
    %3789 = vdwg.mxu0
    %v3790 = vadd.f32 %v3639, %v3752
    %v3791 = vadd.f32 %v3644, %v3757
    %v3792 = vadd.f32 %v3649, %v3762
    %v3793 = vadd.f32 %v3654, %v3767
    %v3794 = vadd.f32 %v3659, %v3772
    %v3795 = vadd.f32 %v3664, %v3777
    %v3796 = vadd.f32 %v3669, %v3782
    %v3797 = vadd.f32 %v3674, %v3787
    %v3798 = vadd.f32 %v3790, %v126
    %v3799 = vadd.f32 %v3791, %v131
    %v3800 = vadd.f32 %v3792, %v136
    %v3801 = vadd.f32 %v3793, %v141
    %v3802 = vadd.f32 %v3794, %v146
    %v3803 = vadd.f32 %v3795, %v151
    %v3804 = vadd.f32 %v3796, %v156
    %v3805 = vadd.f32 %v3797, %v161
    %v3806 = vmax.f32 %v3798, 0.0
    %v3807 = vmax.f32 %v3799, 0.0
    %v3808 = vmax.f32 %v3800, 0.0
    %v3809 = vmax.f32 %v3801, 0.0
    %v3810 = vmax.f32 %v3802, 0.0
    %v3811 = vmax.f32 %v3803, 0.0
    %v3812 = vmax.f32 %v3804, 0.0
    %v3813 = vmax.f32 %v3805, 0.0
    %v3814 = vadd.f32 %v3806, %v3807
    %v3815 = vadd.f32 %v3814, %v3808
    %v3816 = vadd.f32 %v3815, %v3809
    %v3817 = vadd.f32 %v3816, %v3810
    %v3818 = vadd.f32 %v3817, %v3811
    %v3819 = vadd.f32 %v3818, %v3812
    %v3820 = vadd.f32 %v3819, %v3813
    %v3821 = vrot.slane %v3820, 4
    %v3822 = vadd.f32 %v3820, %v3821
    %v3823 = vrot.slane %v3822, 2
    %v3824 = vadd.f32 %v3822, %v3823
    %v3825 = vrot.slane %v3824, 1
    %v3826 = vadd.f32 %v3824, %v3825
    %v3827 = vmul.f32 %v3826, %v2330
    %v3828 = vmax.f32 %v3806, %v3810
    %v3829 = vmax.f32 %v3807, %v3811
    %v3830 = vmax.f32 %v3808, %v3812
    %v3831 = vmax.f32 %v3809, %v3813
    %v3832 = vmax.f32 %v3828, %v3829
    %v3833 = vmax.f32 %v3830, %v3831
    %v3834 = vmax.f32 %v3832, %v3833
    %v3835 = vrot.slane %v3834, 4
    %v3836 = vmax.f32 %v3834, %v3835
    %v3837 = vrot.slane %v3836, 2
    %v3838 = vmax.f32 %v3836, %v3837
    %v3839 = vrot.slane %v3838, 1
    %v3840 = vmax.f32 %v3838, %v3839
    %3841 = vmatprep.subr.mxu0 0.0
    %3842 = vmatpush1.msra.mxu0 %v3677
    %3843 = vmatprep.subr.mxu0 0.0
    %3844 = vmatpush1.msra.mxu0 %v3678
    %3845 = vmatprep.subr.mxu0 0.0
    %3846 = vmatpush1.msra.mxu0 %v3679
    %3847 = vmatprep.subr.mxu0 0.0
    %3848 = vmatpush1.msra.mxu0 %v3680
    %3849 = vmatprep.subr.mxu0 0.0
    %3850 = vmatpush1.msra.mxu0 %v3681
    %3851 = vmatprep.subr.mxu0 0.0
    %3852 = vmatpush1.msra.mxu0 %v3682
    %3853 = vmatprep.subr.mxu0 0.0
    %3854 = vmatpush1.msra.mxu0 %v3683
    %3855 = vmatprep.subr.mxu0 0.0
    %3856 = vmatpush1.msra.mxu0 %v3684
    %3857 = vmatprep.subr.mxu0 0.0
    %3858 = vmatpush1.msra.mxu0 0.0
    %3859 = vmatprep.subr.mxu0 0.0
    %3860 = vmatpush1.msra.mxu0 0.0
    %3861 = vmatprep.subr.mxu0 0.0
    %3862 = vmatpush1.msra.mxu0 0.0
    %3863 = vmatprep.subr.mxu0 0.0
    %3864 = vmatpush1.msra.mxu0 0.0
    %3865 = vmatprep.subr.mxu0 0.0
    %3866 = vmatpush1.msra.mxu0 0.0
    %3867 = vmatprep.subr.mxu0 0.0
    %3868 = vmatpush1.msra.mxu0 0.0
    %3869 = vmatprep.subr.mxu0 0.0
    %3870 = vmatpush1.msra.mxu0 0.0
    %3871 = vmatprep.subr.mxu0 0.0
    %3872 = vmatpush1.msra.mxu0 0.0
    %3873 = vmatprep.subr.mxu0 0.0
    %3874 = vmatpush1.msra.mxu0 0.0
    %3875 = vmatprep.subr.mxu0 0.0
    %3876 = vmatpush1.msra.mxu0 0.0
    %3877 = vmatprep.subr.mxu0 0.0
    %3878 = vmatpush1.msra.mxu0 0.0
    %3879 = vmatprep.subr.mxu0 0.0
    %3880 = vmatpush1.msra.mxu0 0.0
    %3881 = vmatprep.subr.mxu0 0.0
    %3882 = vmatpush1.msra.mxu0 0.0
    %3883 = vmatprep.subr.mxu0 0.0
    %3884 = vmatpush1.msra.mxu0 0.0
    %3885 = vmatprep.subr.mxu0 0.0
    %3886 = vmatpush1.msra.mxu0 0.0
    %3887 = vmatprep.subr.mxu0 0.0
    %3888 = vmatpush1.msra.mxu0 0.0
    %3889 = vmatprep.subr.mxu0 0.0
    %3890 = vmatpush1.msra.mxu0 0.0
    %3891 = vmatprep.subr.mxu0 0.0
    %3892 = vmatpush1.msra.mxu0 0.0
    %3893 = vmatprep.subr.mxu0 0.0
    %3894 = vmatpush1.msra.mxu0 0.0
    %3895 = vmatprep.subr.mxu0 0.0
    %3896 = vmatpush1.msra.mxu0 0.0
    %3897 = vmatprep.subr.mxu0 0.0
    %3898 = vmatpush1.msra.mxu0 0.0
    %3899 = vmatprep.subr.mxu0 0.0
    %3900 = vmatpush1.msra.mxu0 0.0
    %3901 = vmatprep.subr.mxu0 0.0
    %3902 = vmatpush1.msra.mxu0 0.0
    %3903 = vmatprep.subr.mxu0 0.0
    %3904 = vmatpush1.msra.mxu0 0.0
    %3905 = vmatprep.mubr.f32.mxu0 0.0
    %3906 = vmatmul.mubr.f32.gmra.mrb[0].mxu0 %v1899
    %v3907 = vpop.f32.mrb[0].mxu0
    %v3908 = vadd.f32 0.0, %v3907
    %v3909 = vpop.f32.mrb[0].mxu0
    %3910 = vmatprep.mubr.f32.mxu0 0.0
    %3911 = vmatmul.mubr.f32.gmra.mrb[0].mxu0 %v1902
    %v3912 = vpop.f32.mrb[0].mxu0
    %v3913 = vadd.f32 0.0, %v3912
    %v3914 = vpop.f32.mrb[0].mxu0
    %3915 = vmatprep.mubr.f32.mxu0 0.0
    %3916 = vmatmul.mubr.f32.gmra.mrb[0].mxu0 %v1905
    %v3917 = vpop.f32.mrb[0].mxu0
    %v3918 = vadd.f32 0.0, %v3917
    %v3919 = vpop.f32.mrb[0].mxu0
    %3920 = vmatprep.mubr.f32.mxu0 0.0
    %3921 = vmatmul.mubr.f32.gmra.mrb[0].mxu0 %v1908
    %v3922 = vpop.f32.mrb[0].mxu0
    %v3923 = vadd.f32 0.0, %v3922
    %v3924 = vpop.f32.mrb[0].mxu0
    %3925 = vmatprep.mubr.f32.mxu0 0.0
    %3926 = vmatmul.mubr.f32.gmra.mrb[0].mxu0 %v1911
    %v3927 = vpop.f32.mrb[0].mxu0
    %v3928 = vadd.f32 0.0, %v3927
    %v3929 = vpop.f32.mrb[0].mxu0
    %3930 = vmatprep.mubr.f32.mxu0 0.0
    %3931 = vmatmul.mubr.f32.gmra.mrb[0].mxu0 %v1914
    %v3932 = vpop.f32.mrb[0].mxu0
    %v3933 = vadd.f32 0.0, %v3932
    %v3934 = vpop.f32.mrb[0].mxu0
    %3935 = vmatprep.mubr.f32.mxu0 0.0
    %3936 = vmatmul.mubr.f32.gmra.mrb[0].mxu0 %v1917
    %v3937 = vpop.f32.mrb[0].mxu0
    %v3938 = vadd.f32 0.0, %v3937
    %v3939 = vpop.f32.mrb[0].mxu0
    %3940 = vmatprep.mubr.f32.mxu0 0.0
    %3941 = vmatmul.mubr.f32.gmra.mrb[0].mxu0 %v1920
    %v3942 = vpop.f32.mrb[0].mxu0
    %v3943 = vadd.f32 0.0, %v3942
    %v3944 = vpop.f32.mrb[0].mxu0
    %3945 = vdwg.mxu0
    %3946 = vmatprep.subr.mxu0 0.0
    %3947 = vmatpush1.msra.mxu0 %v3303
    %3948 = vmatprep.subr.mxu0 0.0
    %3949 = vmatpush1.msra.mxu0 %v3304
    %3950 = vmatprep.subr.mxu0 0.0
    %3951 = vmatpush1.msra.mxu0 %v3305
    %3952 = vmatprep.subr.mxu0 0.0
    %3953 = vmatpush1.msra.mxu0 %v3306
    %3954 = vmatprep.subr.mxu0 0.0
    %3955 = vmatpush1.msra.mxu0 %v3307
    %3956 = vmatprep.subr.mxu0 0.0
    %3957 = vmatpush1.msra.mxu0 %v3308
    %3958 = vmatprep.subr.mxu0 0.0
    %3959 = vmatpush1.msra.mxu0 %v3309
    %3960 = vmatprep.subr.mxu0 0.0
    %3961 = vmatpush1.msra.mxu0 %v3310
    %3962 = vmatprep.subr.mxu0 0.0
    %3963 = vmatpush1.msra.mxu0 0.0
    %3964 = vmatprep.subr.mxu0 0.0
    %3965 = vmatpush1.msra.mxu0 0.0
    %3966 = vmatprep.subr.mxu0 0.0
    %3967 = vmatpush1.msra.mxu0 0.0
    %3968 = vmatprep.subr.mxu0 0.0
    %3969 = vmatpush1.msra.mxu0 0.0
    %3970 = vmatprep.subr.mxu0 0.0
    %3971 = vmatpush1.msra.mxu0 0.0
    %3972 = vmatprep.subr.mxu0 0.0
    %3973 = vmatpush1.msra.mxu0 0.0
    %3974 = vmatprep.subr.mxu0 0.0
    %3975 = vmatpush1.msra.mxu0 0.0
    %3976 = vmatprep.subr.mxu0 0.0
    %3977 = vmatpush1.msra.mxu0 0.0
    %3978 = vmatprep.subr.mxu0 0.0
    %3979 = vmatpush1.msra.mxu0 0.0
    %3980 = vmatprep.subr.mxu0 0.0
    %3981 = vmatpush1.msra.mxu0 0.0
    %3982 = vmatprep.subr.mxu0 0.0
    %3983 = vmatpush1.msra.mxu0 0.0
    %3984 = vmatprep.subr.mxu0 0.0
    %3985 = vmatpush1.msra.mxu0 0.0
    %3986 = vmatprep.subr.mxu0 0.0
    %3987 = vmatpush1.msra.mxu0 0.0
    %3988 = vmatprep.subr.mxu0 0.0
    %3989 = vmatpush1.msra.mxu0 0.0
    %3990 = vmatprep.subr.mxu0 0.0
    %3991 = vmatpush1.msra.mxu0 0.0
    %3992 = vmatprep.subr.mxu0 0.0
    %3993 = vmatpush1.msra.mxu0 0.0
    %3994 = vmatprep.subr.mxu0 0.0
    %3995 = vmatpush1.msra.mxu0 0.0
    %3996 = vmatprep.subr.mxu0 0.0
    %3997 = vmatpush1.msra.mxu0 0.0
    %3998 = vmatprep.subr.mxu0 0.0
    %3999 = vmatpush1.msra.mxu0 0.0
    %4000 = vmatprep.subr.mxu0 0.0
    %4001 = vmatpush1.msra.mxu0 0.0
    %4002 = vmatprep.subr.mxu0 0.0
    %4003 = vmatpush1.msra.mxu0 0.0
    %4004 = vmatprep.subr.mxu0 0.0
    %4005 = vmatpush1.msra.mxu0 0.0
    %4006 = vmatprep.subr.mxu0 0.0
    %4007 = vmatpush1.msra.mxu0 0.0
    %4008 = vmatprep.subr.mxu0 0.0
    %4009 = vmatpush1.msra.mxu0 0.0
    %4010 = vmatprep.mubr.f32.mxu0 0.0
    %4011 = vmatmul.mubr.f32.gmra.mrb[0].mxu0 %v2028
    %v4012 = vpop.f32.mrb[0].mxu0
    %v4013 = vadd.f32 %v3908, %v4012
    %v4014 = vpop.f32.mrb[0].mxu0
    %4015 = vmatprep.mubr.f32.mxu0 0.0
    %4016 = vmatmul.mubr.f32.gmra.mrb[0].mxu0 %v2031
    %v4017 = vpop.f32.mrb[0].mxu0
    %v4018 = vadd.f32 %v3913, %v4017
    %v4019 = vpop.f32.mrb[0].mxu0
    %4020 = vmatprep.mubr.f32.mxu0 0.0
    %4021 = vmatmul.mubr.f32.gmra.mrb[0].mxu0 %v2034
    %v4022 = vpop.f32.mrb[0].mxu0
    %v4023 = vadd.f32 %v3918, %v4022
    %v4024 = vpop.f32.mrb[0].mxu0
    %4025 = vmatprep.mubr.f32.mxu0 0.0
    %4026 = vmatmul.mubr.f32.gmra.mrb[0].mxu0 %v2037
    %v4027 = vpop.f32.mrb[0].mxu0
    %v4028 = vadd.f32 %v3923, %v4027
    %v4029 = vpop.f32.mrb[0].mxu0
    %4030 = vmatprep.mubr.f32.mxu0 0.0
    %4031 = vmatmul.mubr.f32.gmra.mrb[0].mxu0 %v2040
    %v4032 = vpop.f32.mrb[0].mxu0
    %v4033 = vadd.f32 %v3928, %v4032
    %v4034 = vpop.f32.mrb[0].mxu0
    %4035 = vmatprep.mubr.f32.mxu0 0.0
    %4036 = vmatmul.mubr.f32.gmra.mrb[0].mxu0 %v2043
    %v4037 = vpop.f32.mrb[0].mxu0
    %v4038 = vadd.f32 %v3933, %v4037
    %v4039 = vpop.f32.mrb[0].mxu0
    %4040 = vmatprep.mubr.f32.mxu0 0.0
    %4041 = vmatmul.mubr.f32.gmra.mrb[0].mxu0 %v2046
    %v4042 = vpop.f32.mrb[0].mxu0
    %v4043 = vadd.f32 %v3938, %v4042
    %v4044 = vpop.f32.mrb[0].mxu0
    %4045 = vmatprep.mubr.f32.mxu0 0.0
    %4046 = vmatmul.mubr.f32.gmra.mrb[0].mxu0 %v2049
    %v4047 = vpop.f32.mrb[0].mxu0
    %v4048 = vadd.f32 %v3943, %v4047
    %v4049 = vpop.f32.mrb[0].mxu0
    %4050 = vdwg.mxu0
    %v4051 = vld [vmem:[%s1080] sm:$0xff]
    %v4052 = vld [vmem:[%s1080 + $0x8] sm:$0xff]
    %v4053 = vld [vmem:[%s1080 + $0x10] sm:$0xff]
    %v4054 = vld [vmem:[%s1080 + $0x18] sm:$0xff]
    %v4055 = vld [vmem:[%s1080 + $0x20] sm:$0xff]
    %v4056 = vld [vmem:[%s1080 + $0x28] sm:$0xff]
    %v4057 = vld [vmem:[%s1080 + $0x30] sm:$0xff]
    %v4058 = vld [vmem:[%s1080 + $0x38] sm:$0xff]
    %4059 = vmatprep.subr.mxu0 0.0
    %4060 = vmatpush1.msra.mxu0 %v4051
    %4061 = vmatprep.subr.mxu0 0.0
    %4062 = vmatpush1.msra.mxu0 %v4052
    %4063 = vmatprep.subr.mxu0 0.0
    %4064 = vmatpush1.msra.mxu0 %v4053
    %4065 = vmatprep.subr.mxu0 0.0
    %4066 = vmatpush1.msra.mxu0 %v4054
    %4067 = vmatprep.subr.mxu0 0.0
    %4068 = vmatpush1.msra.mxu0 %v4055
    %4069 = vmatprep.subr.mxu0 0.0
    %4070 = vmatpush1.msra.mxu0 %v4056
    %4071 = vmatprep.subr.mxu0 0.0
    %4072 = vmatpush1.msra.mxu0 %v4057
    %4073 = vmatprep.subr.mxu0 0.0
    %4074 = vmatpush1.msra.mxu0 %v4058
    %4075 = vmatprep.subr.mxu0 0.0
    %4076 = vmatpush1.msra.mxu0 0.0
    %4077 = vmatprep.subr.mxu0 0.0
    %4078 = vmatpush1.msra.mxu0 0.0
    %4079 = vmatprep.subr.mxu0 0.0
    %4080 = vmatpush1.msra.mxu0 0.0
    %4081 = vmatprep.subr.mxu0 0.0
    %4082 = vmatpush1.msra.mxu0 0.0
    %4083 = vmatprep.subr.mxu0 0.0
    %4084 = vmatpush1.msra.mxu0 0.0
    %4085 = vmatprep.subr.mxu0 0.0
    %4086 = vmatpush1.msra.mxu0 0.0
    %4087 = vmatprep.subr.mxu0 0.0
    %4088 = vmatpush1.msra.mxu0 0.0
    %4089 = vmatprep.subr.mxu0 0.0
    %4090 = vmatpush1.msra.mxu0 0.0
    %4091 = vmatprep.subr.mxu0 0.0
    %4092 = vmatpush1.msra.mxu0 0.0
    %4093 = vmatprep.subr.mxu0 0.0
    %4094 = vmatpush1.msra.mxu0 0.0
    %4095 = vmatprep.subr.mxu0 0.0
    %4096 = vmatpush1.msra.mxu0 0.0
    %4097 = vmatprep.subr.mxu0 0.0
    %4098 = vmatpush1.msra.mxu0 0.0
    %4099 = vmatprep.subr.mxu0 0.0
    %4100 = vmatpush1.msra.mxu0 0.0
    %4101 = vmatprep.subr.mxu0 0.0
    %4102 = vmatpush1.msra.mxu0 0.0
    %4103 = vmatprep.subr.mxu0 0.0
    %4104 = vmatpush1.msra.mxu0 0.0
    %4105 = vmatprep.subr.mxu0 0.0
    %4106 = vmatpush1.msra.mxu0 0.0
    %4107 = vmatprep.subr.mxu0 0.0
    %4108 = vmatpush1.msra.mxu0 0.0
    %4109 = vmatprep.subr.mxu0 0.0
    %4110 = vmatpush1.msra.mxu0 0.0
    %4111 = vmatprep.subr.mxu0 0.0
    %4112 = vmatpush1.msra.mxu0 0.0
    %4113 = vmatprep.subr.mxu0 0.0
    %4114 = vmatpush1.msra.mxu0 0.0
    %4115 = vmatprep.subr.mxu0 0.0
    %4116 = vmatpush1.msra.mxu0 0.0
    %4117 = vmatprep.subr.mxu0 0.0
    %4118 = vmatpush1.msra.mxu0 0.0
    %4119 = vmatprep.subr.mxu0 0.0
    %4120 = vmatpush1.msra.mxu0 0.0
    %4121 = vmatprep.subr.mxu0 0.0
    %4122 = vmatpush1.msra.mxu0 0.0
    %4123 = vmatprep.mubr.f32.mxu0 0.0
    %4124 = vmatmul.mubr.f32.gmra.mrb[0].mxu0 %v2165
    %v4125 = vpop.f32.mrb[0].mxu0
    %v4126 = vadd.f32 0.0, %v4125
    %v4127 = vpop.f32.mrb[0].mxu0
    %4128 = vmatprep.mubr.f32.mxu0 0.0
    %4129 = vmatmul.mubr.f32.gmra.mrb[0].mxu0 %v2168
    %v4130 = vpop.f32.mrb[0].mxu0
    %v4131 = vadd.f32 0.0, %v4130
    %v4132 = vpop.f32.mrb[0].mxu0
    %4133 = vmatprep.mubr.f32.mxu0 0.0
    %4134 = vmatmul.mubr.f32.gmra.mrb[0].mxu0 %v2171
    %v4135 = vpop.f32.mrb[0].mxu0
    %v4136 = vadd.f32 0.0, %v4135
    %v4137 = vpop.f32.mrb[0].mxu0
    %4138 = vmatprep.mubr.f32.mxu0 0.0
    %4139 = vmatmul.mubr.f32.gmra.mrb[0].mxu0 %v2174
    %v4140 = vpop.f32.mrb[0].mxu0
    %v4141 = vadd.f32 0.0, %v4140
    %v4142 = vpop.f32.mrb[0].mxu0
    %4143 = vmatprep.mubr.f32.mxu0 0.0
    %4144 = vmatmul.mubr.f32.gmra.mrb[0].mxu0 %v2177
    %v4145 = vpop.f32.mrb[0].mxu0
    %v4146 = vadd.f32 0.0, %v4145
    %v4147 = vpop.f32.mrb[0].mxu0
    %4148 = vmatprep.mubr.f32.mxu0 0.0
    %4149 = vmatmul.mubr.f32.gmra.mrb[0].mxu0 %v2180
    %v4150 = vpop.f32.mrb[0].mxu0
    %v4151 = vadd.f32 0.0, %v4150
    %v4152 = vpop.f32.mrb[0].mxu0
    %4153 = vmatprep.mubr.f32.mxu0 0.0
    %4154 = vmatmul.mubr.f32.gmra.mrb[0].mxu0 %v2183
    %v4155 = vpop.f32.mrb[0].mxu0
    %v4156 = vadd.f32 0.0, %v4155
    %v4157 = vpop.f32.mrb[0].mxu0
    %4158 = vmatprep.mubr.f32.mxu0 0.0
    %4159 = vmatmul.mubr.f32.gmra.mrb[0].mxu0 %v2186
    %v4160 = vpop.f32.mrb[0].mxu0
    %v4161 = vadd.f32 0.0, %v4160
    %v4162 = vpop.f32.mrb[0].mxu0
    %4163 = vdwg.mxu0
    %v4164 = vadd.f32 %v4013, %v4126
    %v4165 = vadd.f32 %v4018, %v4131
    %v4166 = vadd.f32 %v4023, %v4136
    %v4167 = vadd.f32 %v4028, %v4141
    %v4168 = vadd.f32 %v4033, %v4146
    %v4169 = vadd.f32 %v4038, %v4151
    %v4170 = vadd.f32 %v4043, %v4156
    %v4171 = vadd.f32 %v4048, %v4161
    %v4172 = vadd.f32 %v4164, %v126
    %v4173 = vadd.f32 %v4165, %v131
    %v4174 = vadd.f32 %v4166, %v136
    %v4175 = vadd.f32 %v4167, %v141
    %v4176 = vadd.f32 %v4168, %v146
    %v4177 = vadd.f32 %v4169, %v151
    %v4178 = vadd.f32 %v4170, %v156
    %v4179 = vadd.f32 %v4171, %v161
    %v4180 = vmax.f32 %v4172, 0.0
    %v4181 = vmax.f32 %v4173, 0.0
    %v4182 = vmax.f32 %v4174, 0.0
    %v4183 = vmax.f32 %v4175, 0.0
    %v4184 = vmax.f32 %v4176, 0.0
    %v4185 = vmax.f32 %v4177, 0.0
    %v4186 = vmax.f32 %v4178, 0.0
    %v4187 = vmax.f32 %v4179, 0.0
    %v4188 = vadd.f32 %v4180, %v4181
    %v4189 = vadd.f32 %v4188, %v4182
    %v4190 = vadd.f32 %v4189, %v4183
    %v4191 = vadd.f32 %v4190, %v4184
    %v4192 = vadd.f32 %v4191, %v4185
    %v4193 = vadd.f32 %v4192, %v4186
    %v4194 = vadd.f32 %v4193, %v4187
    %v4195 = vrot.slane %v4194, 4
    %v4196 = vadd.f32 %v4194, %v4195
    %v4197 = vrot.slane %v4196, 2
    %v4198 = vadd.f32 %v4196, %v4197
    %v4199 = vrot.slane %v4198, 1
    %v4200 = vadd.f32 %v4198, %v4199
    %v4201 = vmul.f32 %v4200, %v2330
    %v4202 = vmax.f32 %v4180, %v4184
    %v4203 = vmax.f32 %v4181, %v4185
    %v4204 = vmax.f32 %v4182, %v4186
    %v4205 = vmax.f32 %v4183, %v4187
    %v4206 = vmax.f32 %v4202, %v4203
    %v4207 = vmax.f32 %v4204, %v4205
    %v4208 = vmax.f32 %v4206, %v4207
    %v4209 = vrot.slane %v4208, 4
    %v4210 = vmax.f32 %v4208, %v4209
    %v4211 = vrot.slane %v4210, 2
    %v4212 = vmax.f32 %v4210, %v4211
    %v4213 = vrot.slane %v4212, 1
    %v4214 = vmax.f32 %v4212, %v4213
    %4215 = vmatprep.subr.mxu0 0.0
    %4216 = vmatpush1.msra.mxu0 %v4051
    %4217 = vmatprep.subr.mxu0 0.0
    %4218 = vmatpush1.msra.mxu0 %v4052
    %4219 = vmatprep.subr.mxu0 0.0
    %4220 = vmatpush1.msra.mxu0 %v4053
    %4221 = vmatprep.subr.mxu0 0.0
    %4222 = vmatpush1.msra.mxu0 %v4054
    %4223 = vmatprep.subr.mxu0 0.0
    %4224 = vmatpush1.msra.mxu0 %v4055
    %4225 = vmatprep.subr.mxu0 0.0
    %4226 = vmatpush1.msra.mxu0 %v4056
    %4227 = vmatprep.subr.mxu0 0.0
    %4228 = vmatpush1.msra.mxu0 %v4057
    %4229 = vmatprep.subr.mxu0 0.0
    %4230 = vmatpush1.msra.mxu0 %v4058
    %4231 = vmatprep.subr.mxu0 0.0
    %4232 = vmatpush1.msra.mxu0 0.0
    %4233 = vmatprep.subr.mxu0 0.0
    %4234 = vmatpush1.msra.mxu0 0.0
    %4235 = vmatprep.subr.mxu0 0.0
    %4236 = vmatpush1.msra.mxu0 0.0
    %4237 = vmatprep.subr.mxu0 0.0
    %4238 = vmatpush1.msra.mxu0 0.0
    %4239 = vmatprep.subr.mxu0 0.0
    %4240 = vmatpush1.msra.mxu0 0.0
    %4241 = vmatprep.subr.mxu0 0.0
    %4242 = vmatpush1.msra.mxu0 0.0
    %4243 = vmatprep.subr.mxu0 0.0
    %4244 = vmatpush1.msra.mxu0 0.0
    %4245 = vmatprep.subr.mxu0 0.0
    %4246 = vmatpush1.msra.mxu0 0.0
    %4247 = vmatprep.subr.mxu0 0.0
    %4248 = vmatpush1.msra.mxu0 0.0
    %4249 = vmatprep.subr.mxu0 0.0
    %4250 = vmatpush1.msra.mxu0 0.0
    %4251 = vmatprep.subr.mxu0 0.0
    %4252 = vmatpush1.msra.mxu0 0.0
    %4253 = vmatprep.subr.mxu0 0.0
    %4254 = vmatpush1.msra.mxu0 0.0
    %4255 = vmatprep.subr.mxu0 0.0
    %4256 = vmatpush1.msra.mxu0 0.0
    %4257 = vmatprep.subr.mxu0 0.0
    %4258 = vmatpush1.msra.mxu0 0.0
    %4259 = vmatprep.subr.mxu0 0.0
    %4260 = vmatpush1.msra.mxu0 0.0
    %4261 = vmatprep.subr.mxu0 0.0
    %4262 = vmatpush1.msra.mxu0 0.0
    %4263 = vmatprep.subr.mxu0 0.0
    %4264 = vmatpush1.msra.mxu0 0.0
    %4265 = vmatprep.subr.mxu0 0.0
    %4266 = vmatpush1.msra.mxu0 0.0
    %4267 = vmatprep.subr.mxu0 0.0
    %4268 = vmatpush1.msra.mxu0 0.0
    %4269 = vmatprep.subr.mxu0 0.0
    %4270 = vmatpush1.msra.mxu0 0.0
    %4271 = vmatprep.subr.mxu0 0.0
    %4272 = vmatpush1.msra.mxu0 0.0
    %4273 = vmatprep.subr.mxu0 0.0
    %4274 = vmatpush1.msra.mxu0 0.0
    %4275 = vmatprep.subr.mxu0 0.0
    %4276 = vmatpush1.msra.mxu0 0.0
    %4277 = vmatprep.subr.mxu0 0.0
    %4278 = vmatpush1.msra.mxu0 0.0
    %4279 = vmatprep.mubr.f32.mxu0 0.0
    %4280 = vmatmul.mubr.f32.gmra.mrb[0].mxu0 %v1899
    %v4281 = vpop.f32.mrb[0].mxu0
    %v4282 = vadd.f32 0.0, %v4281
    %v4283 = vpop.f32.mrb[0].mxu0
    %4284 = vmatprep.mubr.f32.mxu0 0.0
    %4285 = vmatmul.mubr.f32.gmra.mrb[0].mxu0 %v1902
    %v4286 = vpop.f32.mrb[0].mxu0
    %v4287 = vadd.f32 0.0, %v4286
    %v4288 = vpop.f32.mrb[0].mxu0
    %4289 = vmatprep.mubr.f32.mxu0 0.0
    %4290 = vmatmul.mubr.f32.gmra.mrb[0].mxu0 %v1905
    %v4291 = vpop.f32.mrb[0].mxu0
    %v4292 = vadd.f32 0.0, %v4291
    %v4293 = vpop.f32.mrb[0].mxu0
    %4294 = vmatprep.mubr.f32.mxu0 0.0
    %4295 = vmatmul.mubr.f32.gmra.mrb[0].mxu0 %v1908
    %v4296 = vpop.f32.mrb[0].mxu0
    %v4297 = vadd.f32 0.0, %v4296
    %v4298 = vpop.f32.mrb[0].mxu0
    %4299 = vmatprep.mubr.f32.mxu0 0.0
    %4300 = vmatmul.mubr.f32.gmra.mrb[0].mxu0 %v1911
    %v4301 = vpop.f32.mrb[0].mxu0
    %v4302 = vadd.f32 0.0, %v4301
    %v4303 = vpop.f32.mrb[0].mxu0
    %4304 = vmatprep.mubr.f32.mxu0 0.0
    %4305 = vmatmul.mubr.f32.gmra.mrb[0].mxu0 %v1914
    %v4306 = vpop.f32.mrb[0].mxu0
    %v4307 = vadd.f32 0.0, %v4306
    %v4308 = vpop.f32.mrb[0].mxu0
    %4309 = vmatprep.mubr.f32.mxu0 0.0
    %4310 = vmatmul.mubr.f32.gmra.mrb[0].mxu0 %v1917
    %v4311 = vpop.f32.mrb[0].mxu0
    %v4312 = vadd.f32 0.0, %v4311
    %v4313 = vpop.f32.mrb[0].mxu0
    %4314 = vmatprep.mubr.f32.mxu0 0.0
    %4315 = vmatmul.mubr.f32.gmra.mrb[0].mxu0 %v1920
    %v4316 = vpop.f32.mrb[0].mxu0
    %v4317 = vadd.f32 0.0, %v4316
    %v4318 = vpop.f32.mrb[0].mxu0
    %4319 = vdwg.mxu0
    %4320 = vmatprep.subr.mxu0 0.0
    %4321 = vmatpush1.msra.mxu0 %v3677
    %4322 = vmatprep.subr.mxu0 0.0
    %4323 = vmatpush1.msra.mxu0 %v3678
    %4324 = vmatprep.subr.mxu0 0.0
    %4325 = vmatpush1.msra.mxu0 %v3679
    %4326 = vmatprep.subr.mxu0 0.0
    %4327 = vmatpush1.msra.mxu0 %v3680
    %4328 = vmatprep.subr.mxu0 0.0
    %4329 = vmatpush1.msra.mxu0 %v3681
    %4330 = vmatprep.subr.mxu0 0.0
    %4331 = vmatpush1.msra.mxu0 %v3682
    %4332 = vmatprep.subr.mxu0 0.0
    %4333 = vmatpush1.msra.mxu0 %v3683
    %4334 = vmatprep.subr.mxu0 0.0
    %4335 = vmatpush1.msra.mxu0 %v3684
    %4336 = vmatprep.subr.mxu0 0.0
    %4337 = vmatpush1.msra.mxu0 0.0
    %4338 = vmatprep.subr.mxu0 0.0
    %4339 = vmatpush1.msra.mxu0 0.0
    %4340 = vmatprep.subr.mxu0 0.0
    %4341 = vmatpush1.msra.mxu0 0.0
    %4342 = vmatprep.subr.mxu0 0.0
    %4343 = vmatpush1.msra.mxu0 0.0
    %4344 = vmatprep.subr.mxu0 0.0
    %4345 = vmatpush1.msra.mxu0 0.0
    %4346 = vmatprep.subr.mxu0 0.0
    %4347 = vmatpush1.msra.mxu0 0.0
    %4348 = vmatprep.subr.mxu0 0.0
    %4349 = vmatpush1.msra.mxu0 0.0
    %4350 = vmatprep.subr.mxu0 0.0
    %4351 = vmatpush1.msra.mxu0 0.0
    %4352 = vmatprep.subr.mxu0 0.0
    %4353 = vmatpush1.msra.mxu0 0.0
    %4354 = vmatprep.subr.mxu0 0.0
    %4355 = vmatpush1.msra.mxu0 0.0
    %4356 = vmatprep.subr.mxu0 0.0
    %4357 = vmatpush1.msra.mxu0 0.0
    %4358 = vmatprep.subr.mxu0 0.0
    %4359 = vmatpush1.msra.mxu0 0.0
    %4360 = vmatprep.subr.mxu0 0.0
    %4361 = vmatpush1.msra.mxu0 0.0
    %4362 = vmatprep.subr.mxu0 0.0
    %4363 = vmatpush1.msra.mxu0 0.0
    %4364 = vmatprep.subr.mxu0 0.0
    %4365 = vmatpush1.msra.mxu0 0.0
    %4366 = vmatprep.subr.mxu0 0.0
    %4367 = vmatpush1.msra.mxu0 0.0
    %4368 = vmatprep.subr.mxu0 0.0
    %4369 = vmatpush1.msra.mxu0 0.0
    %4370 = vmatprep.subr.mxu0 0.0
    %4371 = vmatpush1.msra.mxu0 0.0
    %4372 = vmatprep.subr.mxu0 0.0
    %4373 = vmatpush1.msra.mxu0 0.0
    %4374 = vmatprep.subr.mxu0 0.0
    %4375 = vmatpush1.msra.mxu0 0.0
    %4376 = vmatprep.subr.mxu0 0.0
    %4377 = vmatpush1.msra.mxu0 0.0
    %4378 = vmatprep.subr.mxu0 0.0
    %4379 = vmatpush1.msra.mxu0 0.0
    %4380 = vmatprep.subr.mxu0 0.0
    %4381 = vmatpush1.msra.mxu0 0.0
    %4382 = vmatprep.subr.mxu0 0.0
    %4383 = vmatpush1.msra.mxu0 0.0
    %4384 = vmatprep.mubr.f32.mxu0 0.0
    %4385 = vmatmul.mubr.f32.gmra.mrb[0].mxu0 %v2028
    %v4386 = vpop.f32.mrb[0].mxu0
    %v4387 = vadd.f32 %v4282, %v4386
    %v4388 = vpop.f32.mrb[0].mxu0
    %4389 = vmatprep.mubr.f32.mxu0 0.0
    %4390 = vmatmul.mubr.f32.gmra.mrb[0].mxu0 %v2031
    %v4391 = vpop.f32.mrb[0].mxu0
    %v4392 = vadd.f32 %v4287, %v4391
    %v4393 = vpop.f32.mrb[0].mxu0
    %4394 = vmatprep.mubr.f32.mxu0 0.0
    %4395 = vmatmul.mubr.f32.gmra.mrb[0].mxu0 %v2034
    %v4396 = vpop.f32.mrb[0].mxu0
    %v4397 = vadd.f32 %v4292, %v4396
    %v4398 = vpop.f32.mrb[0].mxu0
    %4399 = vmatprep.mubr.f32.mxu0 0.0
    %4400 = vmatmul.mubr.f32.gmra.mrb[0].mxu0 %v2037
    %v4401 = vpop.f32.mrb[0].mxu0
    %v4402 = vadd.f32 %v4297, %v4401
    %v4403 = vpop.f32.mrb[0].mxu0
    %4404 = vmatprep.mubr.f32.mxu0 0.0
    %4405 = vmatmul.mubr.f32.gmra.mrb[0].mxu0 %v2040
    %v4406 = vpop.f32.mrb[0].mxu0
    %v4407 = vadd.f32 %v4302, %v4406
    %v4408 = vpop.f32.mrb[0].mxu0
    %4409 = vmatprep.mubr.f32.mxu0 0.0
    %4410 = vmatmul.mubr.f32.gmra.mrb[0].mxu0 %v2043
    %v4411 = vpop.f32.mrb[0].mxu0
    %v4412 = vadd.f32 %v4307, %v4411
    %v4413 = vpop.f32.mrb[0].mxu0
    %4414 = vmatprep.mubr.f32.mxu0 0.0
    %4415 = vmatmul.mubr.f32.gmra.mrb[0].mxu0 %v2046
    %v4416 = vpop.f32.mrb[0].mxu0
    %v4417 = vadd.f32 %v4312, %v4416
    %v4418 = vpop.f32.mrb[0].mxu0
    %4419 = vmatprep.mubr.f32.mxu0 0.0
    %4420 = vmatmul.mubr.f32.gmra.mrb[0].mxu0 %v2049
    %v4421 = vpop.f32.mrb[0].mxu0
    %v4422 = vadd.f32 %v4317, %v4421
    %v4423 = vpop.f32.mrb[0].mxu0
    %4424 = vdwg.mxu0
    %v4425 = vld [vmem:[%s1179] sm:$0xff]
    %v4426 = vld [vmem:[%s1179 + $0x8] sm:$0xff]
    %v4427 = vld [vmem:[%s1179 + $0x10] sm:$0xff]
    %v4428 = vld [vmem:[%s1179 + $0x18] sm:$0xff]
    %v4429 = vld [vmem:[%s1179 + $0x20] sm:$0xff]
    %v4430 = vld [vmem:[%s1179 + $0x28] sm:$0xff]
    %v4431 = vld [vmem:[%s1179 + $0x30] sm:$0xff]
    %v4432 = vld [vmem:[%s1179 + $0x38] sm:$0xff]
    %4433 = vmatprep.subr.mxu0 0.0
    %4434 = vmatpush1.msra.mxu0 %v4425
    %4435 = vmatprep.subr.mxu0 0.0
    %4436 = vmatpush1.msra.mxu0 %v4426
    %4437 = vmatprep.subr.mxu0 0.0
    %4438 = vmatpush1.msra.mxu0 %v4427
    %4439 = vmatprep.subr.mxu0 0.0
    %4440 = vmatpush1.msra.mxu0 %v4428
    %4441 = vmatprep.subr.mxu0 0.0
    %4442 = vmatpush1.msra.mxu0 %v4429
    %4443 = vmatprep.subr.mxu0 0.0
    %4444 = vmatpush1.msra.mxu0 %v4430
    %4445 = vmatprep.subr.mxu0 0.0
    %4446 = vmatpush1.msra.mxu0 %v4431
    %4447 = vmatprep.subr.mxu0 0.0
    %4448 = vmatpush1.msra.mxu0 %v4432
    %4449 = vmatprep.subr.mxu0 0.0
    %4450 = vmatpush1.msra.mxu0 0.0
    %4451 = vmatprep.subr.mxu0 0.0
    %4452 = vmatpush1.msra.mxu0 0.0
    %4453 = vmatprep.subr.mxu0 0.0
    %4454 = vmatpush1.msra.mxu0 0.0
    %4455 = vmatprep.subr.mxu0 0.0
    %4456 = vmatpush1.msra.mxu0 0.0
    %4457 = vmatprep.subr.mxu0 0.0
    %4458 = vmatpush1.msra.mxu0 0.0
    %4459 = vmatprep.subr.mxu0 0.0
    %4460 = vmatpush1.msra.mxu0 0.0
    %4461 = vmatprep.subr.mxu0 0.0
    %4462 = vmatpush1.msra.mxu0 0.0
    %4463 = vmatprep.subr.mxu0 0.0
    %4464 = vmatpush1.msra.mxu0 0.0
    %4465 = vmatprep.subr.mxu0 0.0
    %4466 = vmatpush1.msra.mxu0 0.0
    %4467 = vmatprep.subr.mxu0 0.0
    %4468 = vmatpush1.msra.mxu0 0.0
    %4469 = vmatprep.subr.mxu0 0.0
    %4470 = vmatpush1.msra.mxu0 0.0
    %4471 = vmatprep.subr.mxu0 0.0
    %4472 = vmatpush1.msra.mxu0 0.0
    %4473 = vmatprep.subr.mxu0 0.0
    %4474 = vmatpush1.msra.mxu0 0.0
    %4475 = vmatprep.subr.mxu0 0.0
    %4476 = vmatpush1.msra.mxu0 0.0
    %4477 = vmatprep.subr.mxu0 0.0
    %4478 = vmatpush1.msra.mxu0 0.0
    %4479 = vmatprep.subr.mxu0 0.0
    %4480 = vmatpush1.msra.mxu0 0.0
    %4481 = vmatprep.subr.mxu0 0.0
    %4482 = vmatpush1.msra.mxu0 0.0
    %4483 = vmatprep.subr.mxu0 0.0
    %4484 = vmatpush1.msra.mxu0 0.0
    %4485 = vmatprep.subr.mxu0 0.0
    %4486 = vmatpush1.msra.mxu0 0.0
    %4487 = vmatprep.subr.mxu0 0.0
    %4488 = vmatpush1.msra.mxu0 0.0
    %4489 = vmatprep.subr.mxu0 0.0
    %4490 = vmatpush1.msra.mxu0 0.0
    %4491 = vmatprep.subr.mxu0 0.0
    %4492 = vmatpush1.msra.mxu0 0.0
    %4493 = vmatprep.subr.mxu0 0.0
    %4494 = vmatpush1.msra.mxu0 0.0
    %4495 = vmatprep.subr.mxu0 0.0
    %4496 = vmatpush1.msra.mxu0 0.0
    %4497 = vmatprep.mubr.f32.mxu0 0.0
    %4498 = vmatmul.mubr.f32.gmra.mrb[0].mxu0 %v2165
    %v4499 = vpop.f32.mrb[0].mxu0
    %v4500 = vadd.f32 0.0, %v4499
    %v4501 = vpop.f32.mrb[0].mxu0
    %4502 = vmatprep.mubr.f32.mxu0 0.0
    %4503 = vmatmul.mubr.f32.gmra.mrb[0].mxu0 %v2168
    %v4504 = vpop.f32.mrb[0].mxu0
    %v4505 = vadd.f32 0.0, %v4504
    %v4506 = vpop.f32.mrb[0].mxu0
    %4507 = vmatprep.mubr.f32.mxu0 0.0
    %4508 = vmatmul.mubr.f32.gmra.mrb[0].mxu0 %v2171
    %v4509 = vpop.f32.mrb[0].mxu0
    %v4510 = vadd.f32 0.0, %v4509
    %v4511 = vpop.f32.mrb[0].mxu0
    %4512 = vmatprep.mubr.f32.mxu0 0.0
    %4513 = vmatmul.mubr.f32.gmra.mrb[0].mxu0 %v2174
    %v4514 = vpop.f32.mrb[0].mxu0
    %v4515 = vadd.f32 0.0, %v4514
    %v4516 = vpop.f32.mrb[0].mxu0
    %4517 = vmatprep.mubr.f32.mxu0 0.0
    %4518 = vmatmul.mubr.f32.gmra.mrb[0].mxu0 %v2177
    %v4519 = vpop.f32.mrb[0].mxu0
    %v4520 = vadd.f32 0.0, %v4519
    %v4521 = vpop.f32.mrb[0].mxu0
    %4522 = vmatprep.mubr.f32.mxu0 0.0
    %4523 = vmatmul.mubr.f32.gmra.mrb[0].mxu0 %v2180
    %v4524 = vpop.f32.mrb[0].mxu0
    %v4525 = vadd.f32 0.0, %v4524
    %v4526 = vpop.f32.mrb[0].mxu0
    %4527 = vmatprep.mubr.f32.mxu0 0.0
    %4528 = vmatmul.mubr.f32.gmra.mrb[0].mxu0 %v2183
    %v4529 = vpop.f32.mrb[0].mxu0
    %v4530 = vadd.f32 0.0, %v4529
    %v4531 = vpop.f32.mrb[0].mxu0
    %4532 = vmatprep.mubr.f32.mxu0 0.0
    %4533 = vmatmul.mubr.f32.gmra.mrb[0].mxu0 %v2186
    %v4534 = vpop.f32.mrb[0].mxu0
    %v4535 = vadd.f32 0.0, %v4534
    %v4536 = vpop.f32.mrb[0].mxu0
    %4537 = vdwg.mxu0
    %v4538 = vadd.f32 %v4387, %v4500
    %v4539 = vadd.f32 %v4392, %v4505
    %v4540 = vadd.f32 %v4397, %v4510
    %v4541 = vadd.f32 %v4402, %v4515
    %v4542 = vadd.f32 %v4407, %v4520
    %v4543 = vadd.f32 %v4412, %v4525
    %v4544 = vadd.f32 %v4417, %v4530
    %v4545 = vadd.f32 %v4422, %v4535
    %v4546 = vadd.f32 %v4538, %v126
    %v4547 = vadd.f32 %v4539, %v131
    %v4548 = vadd.f32 %v4540, %v136
    %v4549 = vadd.f32 %v4541, %v141
    %v4550 = vadd.f32 %v4542, %v146
    %v4551 = vadd.f32 %v4543, %v151
    %v4552 = vadd.f32 %v4544, %v156
    %v4553 = vadd.f32 %v4545, %v161
    %v4554 = vmax.f32 %v4546, 0.0
    %v4555 = vmax.f32 %v4547, 0.0
    %v4556 = vmax.f32 %v4548, 0.0
    %v4557 = vmax.f32 %v4549, 0.0
    %v4558 = vmax.f32 %v4550, 0.0
    %v4559 = vmax.f32 %v4551, 0.0
    %v4560 = vmax.f32 %v4552, 0.0
    %v4561 = vmax.f32 %v4553, 0.0
    %v4562 = vadd.f32 %v4554, %v4555
    %v4563 = vadd.f32 %v4562, %v4556
    %v4564 = vadd.f32 %v4563, %v4557
    %v4565 = vadd.f32 %v4564, %v4558
    %v4566 = vadd.f32 %v4565, %v4559
    %v4567 = vadd.f32 %v4566, %v4560
    %v4568 = vadd.f32 %v4567, %v4561
    %v4569 = vrot.slane %v4568, 4
    %v4570 = vadd.f32 %v4568, %v4569
    %v4571 = vrot.slane %v4570, 2
    %v4572 = vadd.f32 %v4570, %v4571
    %v4573 = vrot.slane %v4572, 1
    %v4574 = vadd.f32 %v4572, %v4573
    %v4575 = vmul.f32 %v4574, %v2330
    %v4576 = vmax.f32 %v4554, %v4558
    %v4577 = vmax.f32 %v4555, %v4559
    %v4578 = vmax.f32 %v4556, %v4560
    %v4579 = vmax.f32 %v4557, %v4561
    %v4580 = vmax.f32 %v4576, %v4577
    %v4581 = vmax.f32 %v4578, %v4579
    %v4582 = vmax.f32 %v4580, %v4581
    %v4583 = vrot.slane %v4582, 4
    %v4584 = vmax.f32 %v4582, %v4583
    %v4585 = vrot.slane %v4584, 2
    %v4586 = vmax.f32 %v4584, %v4585
    %v4587 = vrot.slane %v4586, 1
    %v4588 = vmax.f32 %v4586, %v4587
    %4589 = vmatprep.subr.mxu0 0.0
    %4590 = vmatpush1.msra.mxu0 %v4425
    %4591 = vmatprep.subr.mxu0 0.0
    %4592 = vmatpush1.msra.mxu0 %v4426
    %4593 = vmatprep.subr.mxu0 0.0
    %4594 = vmatpush1.msra.mxu0 %v4427
    %4595 = vmatprep.subr.mxu0 0.0
    %4596 = vmatpush1.msra.mxu0 %v4428
    %4597 = vmatprep.subr.mxu0 0.0
    %4598 = vmatpush1.msra.mxu0 %v4429
    %4599 = vmatprep.subr.mxu0 0.0
    %4600 = vmatpush1.msra.mxu0 %v4430
    %4601 = vmatprep.subr.mxu0 0.0
    %4602 = vmatpush1.msra.mxu0 %v4431
    %4603 = vmatprep.subr.mxu0 0.0
    %4604 = vmatpush1.msra.mxu0 %v4432
    %4605 = vmatprep.subr.mxu0 0.0
    %4606 = vmatpush1.msra.mxu0 0.0
    %4607 = vmatprep.subr.mxu0 0.0
    %4608 = vmatpush1.msra.mxu0 0.0
    %4609 = vmatprep.subr.mxu0 0.0
    %4610 = vmatpush1.msra.mxu0 0.0
    %4611 = vmatprep.subr.mxu0 0.0
    %4612 = vmatpush1.msra.mxu0 0.0
    %4613 = vmatprep.subr.mxu0 0.0
    %4614 = vmatpush1.msra.mxu0 0.0
    %4615 = vmatprep.subr.mxu0 0.0
    %4616 = vmatpush1.msra.mxu0 0.0
    %4617 = vmatprep.subr.mxu0 0.0
    %4618 = vmatpush1.msra.mxu0 0.0
    %4619 = vmatprep.subr.mxu0 0.0
    %4620 = vmatpush1.msra.mxu0 0.0
    %4621 = vmatprep.subr.mxu0 0.0
    %4622 = vmatpush1.msra.mxu0 0.0
    %4623 = vmatprep.subr.mxu0 0.0
    %4624 = vmatpush1.msra.mxu0 0.0
    %4625 = vmatprep.subr.mxu0 0.0
    %4626 = vmatpush1.msra.mxu0 0.0
    %4627 = vmatprep.subr.mxu0 0.0
    %4628 = vmatpush1.msra.mxu0 0.0
    %4629 = vmatprep.subr.mxu0 0.0
    %4630 = vmatpush1.msra.mxu0 0.0
    %4631 = vmatprep.subr.mxu0 0.0
    %4632 = vmatpush1.msra.mxu0 0.0
    %4633 = vmatprep.subr.mxu0 0.0
    %4634 = vmatpush1.msra.mxu0 0.0
    %4635 = vmatprep.subr.mxu0 0.0
    %4636 = vmatpush1.msra.mxu0 0.0
    %4637 = vmatprep.subr.mxu0 0.0
    %4638 = vmatpush1.msra.mxu0 0.0
    %4639 = vmatprep.subr.mxu0 0.0
    %4640 = vmatpush1.msra.mxu0 0.0
    %4641 = vmatprep.subr.mxu0 0.0
    %4642 = vmatpush1.msra.mxu0 0.0
    %4643 = vmatprep.subr.mxu0 0.0
    %4644 = vmatpush1.msra.mxu0 0.0
    %4645 = vmatprep.subr.mxu0 0.0
    %4646 = vmatpush1.msra.mxu0 0.0
    %4647 = vmatprep.subr.mxu0 0.0
    %4648 = vmatpush1.msra.mxu0 0.0
    %4649 = vmatprep.subr.mxu0 0.0
    %4650 = vmatpush1.msra.mxu0 0.0
    %4651 = vmatprep.subr.mxu0 0.0
    %4652 = vmatpush1.msra.mxu0 0.0
    %4653 = vmatprep.mubr.f32.mxu0 0.0
    %4654 = vmatmul.mubr.f32.gmra.mrb[0].mxu0 %v1899
    %v4655 = vpop.f32.mrb[0].mxu0
    %v4656 = vadd.f32 0.0, %v4655
    %v4657 = vpop.f32.mrb[0].mxu0
    %4658 = vmatprep.mubr.f32.mxu0 0.0
    %4659 = vmatmul.mubr.f32.gmra.mrb[0].mxu0 %v1902
    %v4660 = vpop.f32.mrb[0].mxu0
    %v4661 = vadd.f32 0.0, %v4660
    %v4662 = vpop.f32.mrb[0].mxu0
    %4663 = vmatprep.mubr.f32.mxu0 0.0
    %4664 = vmatmul.mubr.f32.gmra.mrb[0].mxu0 %v1905
    %v4665 = vpop.f32.mrb[0].mxu0
    %v4666 = vadd.f32 0.0, %v4665
    %v4667 = vpop.f32.mrb[0].mxu0
    %4668 = vmatprep.mubr.f32.mxu0 0.0
    %4669 = vmatmul.mubr.f32.gmra.mrb[0].mxu0 %v1908
    %v4670 = vpop.f32.mrb[0].mxu0
    %v4671 = vadd.f32 0.0, %v4670
    %v4672 = vpop.f32.mrb[0].mxu0
    %4673 = vmatprep.mubr.f32.mxu0 0.0
    %4674 = vmatmul.mubr.f32.gmra.mrb[0].mxu0 %v1911
    %v4675 = vpop.f32.mrb[0].mxu0
    %v4676 = vadd.f32 0.0, %v4675
    %v4677 = vpop.f32.mrb[0].mxu0
    %4678 = vmatprep.mubr.f32.mxu0 0.0
    %4679 = vmatmul.mubr.f32.gmra.mrb[0].mxu0 %v1914
    %v4680 = vpop.f32.mrb[0].mxu0
    %v4681 = vadd.f32 0.0, %v4680
    %v4682 = vpop.f32.mrb[0].mxu0
    %4683 = vmatprep.mubr.f32.mxu0 0.0
    %4684 = vmatmul.mubr.f32.gmra.mrb[0].mxu0 %v1917
    %v4685 = vpop.f32.mrb[0].mxu0
    %v4686 = vadd.f32 0.0, %v4685
    %v4687 = vpop.f32.mrb[0].mxu0
    %4688 = vmatprep.mubr.f32.mxu0 0.0
    %4689 = vmatmul.mubr.f32.gmra.mrb[0].mxu0 %v1920
    %v4690 = vpop.f32.mrb[0].mxu0
    %v4691 = vadd.f32 0.0, %v4690
    %v4692 = vpop.f32.mrb[0].mxu0
    %4693 = vdwg.mxu0
    %4694 = vmatprep.subr.mxu0 0.0
    %4695 = vmatpush1.msra.mxu0 %v4051
    %4696 = vmatprep.subr.mxu0 0.0
    %4697 = vmatpush1.msra.mxu0 %v4052
    %4698 = vmatprep.subr.mxu0 0.0
    %4699 = vmatpush1.msra.mxu0 %v4053
    %4700 = vmatprep.subr.mxu0 0.0
    %4701 = vmatpush1.msra.mxu0 %v4054
    %4702 = vmatprep.subr.mxu0 0.0
    %4703 = vmatpush1.msra.mxu0 %v4055
    %4704 = vmatprep.subr.mxu0 0.0
    %4705 = vmatpush1.msra.mxu0 %v4056
    %4706 = vmatprep.subr.mxu0 0.0
    %4707 = vmatpush1.msra.mxu0 %v4057
    %4708 = vmatprep.subr.mxu0 0.0
    %4709 = vmatpush1.msra.mxu0 %v4058
    %4710 = vmatprep.subr.mxu0 0.0
    %4711 = vmatpush1.msra.mxu0 0.0
    %4712 = vmatprep.subr.mxu0 0.0
    %4713 = vmatpush1.msra.mxu0 0.0
    %4714 = vmatprep.subr.mxu0 0.0
    %4715 = vmatpush1.msra.mxu0 0.0
    %4716 = vmatprep.subr.mxu0 0.0
    %4717 = vmatpush1.msra.mxu0 0.0
    %4718 = vmatprep.subr.mxu0 0.0
    %4719 = vmatpush1.msra.mxu0 0.0
    %4720 = vmatprep.subr.mxu0 0.0
    %4721 = vmatpush1.msra.mxu0 0.0
    %4722 = vmatprep.subr.mxu0 0.0
    %4723 = vmatpush1.msra.mxu0 0.0
    %4724 = vmatprep.subr.mxu0 0.0
    %4725 = vmatpush1.msra.mxu0 0.0
    %4726 = vmatprep.subr.mxu0 0.0
    %4727 = vmatpush1.msra.mxu0 0.0
    %4728 = vmatprep.subr.mxu0 0.0
    %4729 = vmatpush1.msra.mxu0 0.0
    %4730 = vmatprep.subr.mxu0 0.0
    %4731 = vmatpush1.msra.mxu0 0.0
    %4732 = vmatprep.subr.mxu0 0.0
    %4733 = vmatpush1.msra.mxu0 0.0
    %4734 = vmatprep.subr.mxu0 0.0
    %4735 = vmatpush1.msra.mxu0 0.0
    %4736 = vmatprep.subr.mxu0 0.0
    %4737 = vmatpush1.msra.mxu0 0.0
    %4738 = vmatprep.subr.mxu0 0.0
    %4739 = vmatpush1.msra.mxu0 0.0
    %4740 = vmatprep.subr.mxu0 0.0
    %4741 = vmatpush1.msra.mxu0 0.0
    %4742 = vmatprep.subr.mxu0 0.0
    %4743 = vmatpush1.msra.mxu0 0.0
    %4744 = vmatprep.subr.mxu0 0.0
    %4745 = vmatpush1.msra.mxu0 0.0
    %4746 = vmatprep.subr.mxu0 0.0
    %4747 = vmatpush1.msra.mxu0 0.0
    %4748 = vmatprep.subr.mxu0 0.0
    %4749 = vmatpush1.msra.mxu0 0.0
    %4750 = vmatprep.subr.mxu0 0.0
    %4751 = vmatpush1.msra.mxu0 0.0
    %4752 = vmatprep.subr.mxu0 0.0
    %4753 = vmatpush1.msra.mxu0 0.0
    %4754 = vmatprep.subr.mxu0 0.0
    %4755 = vmatpush1.msra.mxu0 0.0
    %4756 = vmatprep.subr.mxu0 0.0
    %4757 = vmatpush1.msra.mxu0 0.0
    %4758 = vmatprep.mubr.f32.mxu0 0.0
    %4759 = vmatmul.mubr.f32.gmra.mrb[0].mxu0 %v2028
    %v4760 = vpop.f32.mrb[0].mxu0
    %v4761 = vadd.f32 %v4656, %v4760
    %v4762 = vpop.f32.mrb[0].mxu0
    %4763 = vmatprep.mubr.f32.mxu0 0.0
    %4764 = vmatmul.mubr.f32.gmra.mrb[0].mxu0 %v2031
    %v4765 = vpop.f32.mrb[0].mxu0
    %v4766 = vadd.f32 %v4661, %v4765
    %v4767 = vpop.f32.mrb[0].mxu0
    %4768 = vmatprep.mubr.f32.mxu0 0.0
    %4769 = vmatmul.mubr.f32.gmra.mrb[0].mxu0 %v2034
    %v4770 = vpop.f32.mrb[0].mxu0
    %v4771 = vadd.f32 %v4666, %v4770
    %v4772 = vpop.f32.mrb[0].mxu0
    %4773 = vmatprep.mubr.f32.mxu0 0.0
    %4774 = vmatmul.mubr.f32.gmra.mrb[0].mxu0 %v2037
    %v4775 = vpop.f32.mrb[0].mxu0
    %v4776 = vadd.f32 %v4671, %v4775
    %v4777 = vpop.f32.mrb[0].mxu0
    %4778 = vmatprep.mubr.f32.mxu0 0.0
    %4779 = vmatmul.mubr.f32.gmra.mrb[0].mxu0 %v2040
    %v4780 = vpop.f32.mrb[0].mxu0
    %v4781 = vadd.f32 %v4676, %v4780
    %v4782 = vpop.f32.mrb[0].mxu0
    %4783 = vmatprep.mubr.f32.mxu0 0.0
    %4784 = vmatmul.mubr.f32.gmra.mrb[0].mxu0 %v2043
    %v4785 = vpop.f32.mrb[0].mxu0
    %v4786 = vadd.f32 %v4681, %v4785
    %v4787 = vpop.f32.mrb[0].mxu0
    %4788 = vmatprep.mubr.f32.mxu0 0.0
    %4789 = vmatmul.mubr.f32.gmra.mrb[0].mxu0 %v2046
    %v4790 = vpop.f32.mrb[0].mxu0
    %v4791 = vadd.f32 %v4686, %v4790
    %v4792 = vpop.f32.mrb[0].mxu0
    %4793 = vmatprep.mubr.f32.mxu0 0.0
    %4794 = vmatmul.mubr.f32.gmra.mrb[0].mxu0 %v2049
    %v4795 = vpop.f32.mrb[0].mxu0
    %v4796 = vadd.f32 %v4691, %v4795
    %v4797 = vpop.f32.mrb[0].mxu0
    %4798 = vdwg.mxu0
    %v4799 = vld [vmem:[%s1278] sm:$0xff]
    %v4800 = vld [vmem:[%s1278 + $0x8] sm:$0xff]
    %v4801 = vld [vmem:[%s1278 + $0x10] sm:$0xff]
    %v4802 = vld [vmem:[%s1278 + $0x18] sm:$0xff]
    %v4803 = vld [vmem:[%s1278 + $0x20] sm:$0xff]
    %v4804 = vld [vmem:[%s1278 + $0x28] sm:$0xff]
    %v4805 = vld [vmem:[%s1278 + $0x30] sm:$0xff]
    %v4806 = vld [vmem:[%s1278 + $0x38] sm:$0xff]
    %4807 = vmatprep.subr.mxu0 0.0
    %4808 = vmatpush1.msra.mxu0 %v4799
    %4809 = vmatprep.subr.mxu0 0.0
    %4810 = vmatpush1.msra.mxu0 %v4800
    %4811 = vmatprep.subr.mxu0 0.0
    %4812 = vmatpush1.msra.mxu0 %v4801
    %4813 = vmatprep.subr.mxu0 0.0
    %4814 = vmatpush1.msra.mxu0 %v4802
    %4815 = vmatprep.subr.mxu0 0.0
    %4816 = vmatpush1.msra.mxu0 %v4803
    %4817 = vmatprep.subr.mxu0 0.0
    %4818 = vmatpush1.msra.mxu0 %v4804
    %4819 = vmatprep.subr.mxu0 0.0
    %4820 = vmatpush1.msra.mxu0 %v4805
    %4821 = vmatprep.subr.mxu0 0.0
    %4822 = vmatpush1.msra.mxu0 %v4806
    %4823 = vmatprep.subr.mxu0 0.0
    %4824 = vmatpush1.msra.mxu0 0.0
    %4825 = vmatprep.subr.mxu0 0.0
    %4826 = vmatpush1.msra.mxu0 0.0
    %4827 = vmatprep.subr.mxu0 0.0
    %4828 = vmatpush1.msra.mxu0 0.0
    %4829 = vmatprep.subr.mxu0 0.0
    %4830 = vmatpush1.msra.mxu0 0.0
    %4831 = vmatprep.subr.mxu0 0.0
    %4832 = vmatpush1.msra.mxu0 0.0
    %4833 = vmatprep.subr.mxu0 0.0
    %4834 = vmatpush1.msra.mxu0 0.0
    %4835 = vmatprep.subr.mxu0 0.0
    %4836 = vmatpush1.msra.mxu0 0.0
    %4837 = vmatprep.subr.mxu0 0.0
    %4838 = vmatpush1.msra.mxu0 0.0
    %4839 = vmatprep.subr.mxu0 0.0
    %4840 = vmatpush1.msra.mxu0 0.0
    %4841 = vmatprep.subr.mxu0 0.0
    %4842 = vmatpush1.msra.mxu0 0.0
    %4843 = vmatprep.subr.mxu0 0.0
    %4844 = vmatpush1.msra.mxu0 0.0
    %4845 = vmatprep.subr.mxu0 0.0
    %4846 = vmatpush1.msra.mxu0 0.0
    %4847 = vmatprep.subr.mxu0 0.0
    %4848 = vmatpush1.msra.mxu0 0.0
    %4849 = vmatprep.subr.mxu0 0.0
    %4850 = vmatpush1.msra.mxu0 0.0
    %4851 = vmatprep.subr.mxu0 0.0
    %4852 = vmatpush1.msra.mxu0 0.0
    %4853 = vmatprep.subr.mxu0 0.0
    %4854 = vmatpush1.msra.mxu0 0.0
    %4855 = vmatprep.subr.mxu0 0.0
    %4856 = vmatpush1.msra.mxu0 0.0
    %4857 = vmatprep.subr.mxu0 0.0
    %4858 = vmatpush1.msra.mxu0 0.0
    %4859 = vmatprep.subr.mxu0 0.0
    %4860 = vmatpush1.msra.mxu0 0.0
    %4861 = vmatprep.subr.mxu0 0.0
    %4862 = vmatpush1.msra.mxu0 0.0
    %4863 = vmatprep.subr.mxu0 0.0
    %4864 = vmatpush1.msra.mxu0 0.0
    %4865 = vmatprep.subr.mxu0 0.0
    %4866 = vmatpush1.msra.mxu0 0.0
    %4867 = vmatprep.subr.mxu0 0.0
    %4868 = vmatpush1.msra.mxu0 0.0
    %4869 = vmatprep.subr.mxu0 0.0
    %4870 = vmatpush1.msra.mxu0 0.0
    %4871 = vmatprep.mubr.f32.mxu0 0.0
    %4872 = vmatmul.mubr.f32.gmra.mrb[0].mxu0 %v2165
    %v4873 = vpop.f32.mrb[0].mxu0
    %v4874 = vadd.f32 0.0, %v4873
    %v4875 = vpop.f32.mrb[0].mxu0
    %4876 = vmatprep.mubr.f32.mxu0 0.0
    %4877 = vmatmul.mubr.f32.gmra.mrb[0].mxu0 %v2168
    %v4878 = vpop.f32.mrb[0].mxu0
    %v4879 = vadd.f32 0.0, %v4878
    %v4880 = vpop.f32.mrb[0].mxu0
    %4881 = vmatprep.mubr.f32.mxu0 0.0
    %4882 = vmatmul.mubr.f32.gmra.mrb[0].mxu0 %v2171
    %v4883 = vpop.f32.mrb[0].mxu0
    %v4884 = vadd.f32 0.0, %v4883
    %v4885 = vpop.f32.mrb[0].mxu0
    %4886 = vmatprep.mubr.f32.mxu0 0.0
    %4887 = vmatmul.mubr.f32.gmra.mrb[0].mxu0 %v2174
    %v4888 = vpop.f32.mrb[0].mxu0
    %v4889 = vadd.f32 0.0, %v4888
    %v4890 = vpop.f32.mrb[0].mxu0
    %4891 = vmatprep.mubr.f32.mxu0 0.0
    %4892 = vmatmul.mubr.f32.gmra.mrb[0].mxu0 %v2177
    %v4893 = vpop.f32.mrb[0].mxu0
    %v4894 = vadd.f32 0.0, %v4893
    %v4895 = vpop.f32.mrb[0].mxu0
    %4896 = vmatprep.mubr.f32.mxu0 0.0
    %4897 = vmatmul.mubr.f32.gmra.mrb[0].mxu0 %v2180
    %v4898 = vpop.f32.mrb[0].mxu0
    %v4899 = vadd.f32 0.0, %v4898
    %v4900 = vpop.f32.mrb[0].mxu0
    %4901 = vmatprep.mubr.f32.mxu0 0.0
    %4902 = vmatmul.mubr.f32.gmra.mrb[0].mxu0 %v2183
    %v4903 = vpop.f32.mrb[0].mxu0
    %v4904 = vadd.f32 0.0, %v4903
    %v4905 = vpop.f32.mrb[0].mxu0
    %4906 = vmatprep.mubr.f32.mxu0 0.0
    %4907 = vmatmul.mubr.f32.gmra.mrb[0].mxu0 %v2186
    %v4908 = vpop.f32.mrb[0].mxu0
    %v4909 = vadd.f32 0.0, %v4908
    %v4910 = vpop.f32.mrb[0].mxu0
    %4911 = vdwg.mxu0
    %v4912 = vadd.f32 %v4761, %v4874
    %v4913 = vadd.f32 %v4766, %v4879
    %v4914 = vadd.f32 %v4771, %v4884
    %v4915 = vadd.f32 %v4776, %v4889
    %v4916 = vadd.f32 %v4781, %v4894
    %v4917 = vadd.f32 %v4786, %v4899
    %v4918 = vadd.f32 %v4791, %v4904
    %v4919 = vadd.f32 %v4796, %v4909
    %v4920 = vadd.f32 %v4912, %v126
    %v4921 = vadd.f32 %v4913, %v131
    %v4922 = vadd.f32 %v4914, %v136
    %v4923 = vadd.f32 %v4915, %v141
    %v4924 = vadd.f32 %v4916, %v146
    %v4925 = vadd.f32 %v4917, %v151
    %v4926 = vadd.f32 %v4918, %v156
    %v4927 = vadd.f32 %v4919, %v161
    %v4928 = vmax.f32 %v4920, 0.0
    %v4929 = vmax.f32 %v4921, 0.0
    %v4930 = vmax.f32 %v4922, 0.0
    %v4931 = vmax.f32 %v4923, 0.0
    %v4932 = vmax.f32 %v4924, 0.0
    %v4933 = vmax.f32 %v4925, 0.0
    %v4934 = vmax.f32 %v4926, 0.0
    %v4935 = vmax.f32 %v4927, 0.0
    %v4936 = vadd.f32 %v4928, %v4929
    %v4937 = vadd.f32 %v4936, %v4930
    %v4938 = vadd.f32 %v4937, %v4931
    %v4939 = vadd.f32 %v4938, %v4932
    %v4940 = vadd.f32 %v4939, %v4933
    %v4941 = vadd.f32 %v4940, %v4934
    %v4942 = vadd.f32 %v4941, %v4935
    %v4943 = vrot.slane %v4942, 4
    %v4944 = vadd.f32 %v4942, %v4943
    %v4945 = vrot.slane %v4944, 2
    %v4946 = vadd.f32 %v4944, %v4945
    %v4947 = vrot.slane %v4946, 1
    %v4948 = vadd.f32 %v4946, %v4947
    %v4949 = vmul.f32 %v4948, %v2330
    %v4950 = vmax.f32 %v4928, %v4932
    %v4951 = vmax.f32 %v4929, %v4933
    %v4952 = vmax.f32 %v4930, %v4934
    %v4953 = vmax.f32 %v4931, %v4935
    %v4954 = vmax.f32 %v4950, %v4951
    %v4955 = vmax.f32 %v4952, %v4953
    %v4956 = vmax.f32 %v4954, %v4955
    %v4957 = vrot.slane %v4956, 4
    %v4958 = vmax.f32 %v4956, %v4957
    %v4959 = vrot.slane %v4958, 2
    %v4960 = vmax.f32 %v4958, %v4959
    %v4961 = vrot.slane %v4960, 1
    %v4962 = vmax.f32 %v4960, %v4961
    %4963 = vmatprep.subr.mxu0 0.0
    %4964 = vmatpush1.msra.mxu0 %v4799
    %4965 = vmatprep.subr.mxu0 0.0
    %4966 = vmatpush1.msra.mxu0 %v4800
    %4967 = vmatprep.subr.mxu0 0.0
    %4968 = vmatpush1.msra.mxu0 %v4801
    %4969 = vmatprep.subr.mxu0 0.0
    %4970 = vmatpush1.msra.mxu0 %v4802
    %4971 = vmatprep.subr.mxu0 0.0
    %4972 = vmatpush1.msra.mxu0 %v4803
    %4973 = vmatprep.subr.mxu0 0.0
    %4974 = vmatpush1.msra.mxu0 %v4804
    %4975 = vmatprep.subr.mxu0 0.0
    %4976 = vmatpush1.msra.mxu0 %v4805
    %4977 = vmatprep.subr.mxu0 0.0
    %4978 = vmatpush1.msra.mxu0 %v4806
    %4979 = vmatprep.subr.mxu0 0.0
    %4980 = vmatpush1.msra.mxu0 0.0
    %4981 = vmatprep.subr.mxu0 0.0
    %4982 = vmatpush1.msra.mxu0 0.0
    %4983 = vmatprep.subr.mxu0 0.0
    %4984 = vmatpush1.msra.mxu0 0.0
    %4985 = vmatprep.subr.mxu0 0.0
    %4986 = vmatpush1.msra.mxu0 0.0
    %4987 = vmatprep.subr.mxu0 0.0
    %4988 = vmatpush1.msra.mxu0 0.0
    %4989 = vmatprep.subr.mxu0 0.0
    %4990 = vmatpush1.msra.mxu0 0.0
    %4991 = vmatprep.subr.mxu0 0.0
    %4992 = vmatpush1.msra.mxu0 0.0
    %4993 = vmatprep.subr.mxu0 0.0
    %4994 = vmatpush1.msra.mxu0 0.0
    %4995 = vmatprep.subr.mxu0 0.0
    %4996 = vmatpush1.msra.mxu0 0.0
    %4997 = vmatprep.subr.mxu0 0.0
    %4998 = vmatpush1.msra.mxu0 0.0
    %4999 = vmatprep.subr.mxu0 0.0
    %5000 = vmatpush1.msra.mxu0 0.0
    %5001 = vmatprep.subr.mxu0 0.0
    %5002 = vmatpush1.msra.mxu0 0.0
    %5003 = vmatprep.subr.mxu0 0.0
    %5004 = vmatpush1.msra.mxu0 0.0
    %5005 = vmatprep.subr.mxu0 0.0
    %5006 = vmatpush1.msra.mxu0 0.0
    %5007 = vmatprep.subr.mxu0 0.0
    %5008 = vmatpush1.msra.mxu0 0.0
    %5009 = vmatprep.subr.mxu0 0.0
    %5010 = vmatpush1.msra.mxu0 0.0
    %5011 = vmatprep.subr.mxu0 0.0
    %5012 = vmatpush1.msra.mxu0 0.0
    %5013 = vmatprep.subr.mxu0 0.0
    %5014 = vmatpush1.msra.mxu0 0.0
    %5015 = vmatprep.subr.mxu0 0.0
    %5016 = vmatpush1.msra.mxu0 0.0
    %5017 = vmatprep.subr.mxu0 0.0
    %5018 = vmatpush1.msra.mxu0 0.0
    %5019 = vmatprep.subr.mxu0 0.0
    %5020 = vmatpush1.msra.mxu0 0.0
    %5021 = vmatprep.subr.mxu0 0.0
    %5022 = vmatpush1.msra.mxu0 0.0
    %5023 = vmatprep.subr.mxu0 0.0
    %5024 = vmatpush1.msra.mxu0 0.0
    %5025 = vmatprep.subr.mxu0 0.0
    %5026 = vmatpush1.msra.mxu0 0.0
    %5027 = vmatprep.mubr.f32.mxu0 0.0
    %5028 = vmatmul.mubr.f32.gmra.mrb[0].mxu0 %v1899
    %v5029 = vpop.f32.mrb[0].mxu0
    %v5030 = vadd.f32 0.0, %v5029
    %v5031 = vpop.f32.mrb[0].mxu0
    %5032 = vmatprep.mubr.f32.mxu0 0.0
    %5033 = vmatmul.mubr.f32.gmra.mrb[0].mxu0 %v1902
    %v5034 = vpop.f32.mrb[0].mxu0
    %v5035 = vadd.f32 0.0, %v5034
    %v5036 = vpop.f32.mrb[0].mxu0
    %5037 = vmatprep.mubr.f32.mxu0 0.0
    %5038 = vmatmul.mubr.f32.gmra.mrb[0].mxu0 %v1905
    %v5039 = vpop.f32.mrb[0].mxu0
    %v5040 = vadd.f32 0.0, %v5039
    %v5041 = vpop.f32.mrb[0].mxu0
    %5042 = vmatprep.mubr.f32.mxu0 0.0
    %5043 = vmatmul.mubr.f32.gmra.mrb[0].mxu0 %v1908
    %v5044 = vpop.f32.mrb[0].mxu0
    %v5045 = vadd.f32 0.0, %v5044
    %v5046 = vpop.f32.mrb[0].mxu0
    %5047 = vmatprep.mubr.f32.mxu0 0.0
    %5048 = vmatmul.mubr.f32.gmra.mrb[0].mxu0 %v1911
    %v5049 = vpop.f32.mrb[0].mxu0
    %v5050 = vadd.f32 0.0, %v5049
    %v5051 = vpop.f32.mrb[0].mxu0
    %5052 = vmatprep.mubr.f32.mxu0 0.0
    %5053 = vmatmul.mubr.f32.gmra.mrb[0].mxu0 %v1914
    %v5054 = vpop.f32.mrb[0].mxu0
    %v5055 = vadd.f32 0.0, %v5054
    %v5056 = vpop.f32.mrb[0].mxu0
    %5057 = vmatprep.mubr.f32.mxu0 0.0
    %5058 = vmatmul.mubr.f32.gmra.mrb[0].mxu0 %v1917
    %v5059 = vpop.f32.mrb[0].mxu0
    %v5060 = vadd.f32 0.0, %v5059
    %v5061 = vpop.f32.mrb[0].mxu0
    %5062 = vmatprep.mubr.f32.mxu0 0.0
    %5063 = vmatmul.mubr.f32.gmra.mrb[0].mxu0 %v1920
    %v5064 = vpop.f32.mrb[0].mxu0
    %v5065 = vadd.f32 0.0, %v5064
    %v5066 = vpop.f32.mrb[0].mxu0
    %5067 = vdwg.mxu0
    %5068 = vmatprep.subr.mxu0 0.0
    %5069 = vmatpush1.msra.mxu0 %v4425
    %5070 = vmatprep.subr.mxu0 0.0
    %5071 = vmatpush1.msra.mxu0 %v4426
    %5072 = vmatprep.subr.mxu0 0.0
    %5073 = vmatpush1.msra.mxu0 %v4427
    %5074 = vmatprep.subr.mxu0 0.0
    %5075 = vmatpush1.msra.mxu0 %v4428
    %5076 = vmatprep.subr.mxu0 0.0
    %5077 = vmatpush1.msra.mxu0 %v4429
    %5078 = vmatprep.subr.mxu0 0.0
    %5079 = vmatpush1.msra.mxu0 %v4430
    %5080 = vmatprep.subr.mxu0 0.0
    %5081 = vmatpush1.msra.mxu0 %v4431
    %5082 = vmatprep.subr.mxu0 0.0
    %5083 = vmatpush1.msra.mxu0 %v4432
    %5084 = vmatprep.subr.mxu0 0.0
    %5085 = vmatpush1.msra.mxu0 0.0
    %5086 = vmatprep.subr.mxu0 0.0
    %5087 = vmatpush1.msra.mxu0 0.0
    %5088 = vmatprep.subr.mxu0 0.0
    %5089 = vmatpush1.msra.mxu0 0.0
    %5090 = vmatprep.subr.mxu0 0.0
    %5091 = vmatpush1.msra.mxu0 0.0
    %5092 = vmatprep.subr.mxu0 0.0
    %5093 = vmatpush1.msra.mxu0 0.0
    %5094 = vmatprep.subr.mxu0 0.0
    %5095 = vmatpush1.msra.mxu0 0.0
    %5096 = vmatprep.subr.mxu0 0.0
    %5097 = vmatpush1.msra.mxu0 0.0
    %5098 = vmatprep.subr.mxu0 0.0
    %5099 = vmatpush1.msra.mxu0 0.0
    %5100 = vmatprep.subr.mxu0 0.0
    %5101 = vmatpush1.msra.mxu0 0.0
    %5102 = vmatprep.subr.mxu0 0.0
    %5103 = vmatpush1.msra.mxu0 0.0
    %5104 = vmatprep.subr.mxu0 0.0
    %5105 = vmatpush1.msra.mxu0 0.0
    %5106 = vmatprep.subr.mxu0 0.0
    %5107 = vmatpush1.msra.mxu0 0.0
    %5108 = vmatprep.subr.mxu0 0.0
    %5109 = vmatpush1.msra.mxu0 0.0
    %5110 = vmatprep.subr.mxu0 0.0
    %5111 = vmatpush1.msra.mxu0 0.0
    %5112 = vmatprep.subr.mxu0 0.0
    %5113 = vmatpush1.msra.mxu0 0.0
    %5114 = vmatprep.subr.mxu0 0.0
    %5115 = vmatpush1.msra.mxu0 0.0
    %5116 = vmatprep.subr.mxu0 0.0
    %5117 = vmatpush1.msra.mxu0 0.0
    %5118 = vmatprep.subr.mxu0 0.0
    %5119 = vmatpush1.msra.mxu0 0.0
    %5120 = vmatprep.subr.mxu0 0.0
    %5121 = vmatpush1.msra.mxu0 0.0
    %5122 = vmatprep.subr.mxu0 0.0
    %5123 = vmatpush1.msra.mxu0 0.0
    %5124 = vmatprep.subr.mxu0 0.0
    %5125 = vmatpush1.msra.mxu0 0.0
    %5126 = vmatprep.subr.mxu0 0.0
    %5127 = vmatpush1.msra.mxu0 0.0
    %5128 = vmatprep.subr.mxu0 0.0
    %5129 = vmatpush1.msra.mxu0 0.0
    %5130 = vmatprep.subr.mxu0 0.0
    %5131 = vmatpush1.msra.mxu0 0.0
    %5132 = vmatprep.mubr.f32.mxu0 0.0
    %5133 = vmatmul.mubr.f32.gmra.mrb[0].mxu0 %v2028
    %v5134 = vpop.f32.mrb[0].mxu0
    %v5135 = vadd.f32 %v5030, %v5134
    %v5136 = vpop.f32.mrb[0].mxu0
    %5137 = vmatprep.mubr.f32.mxu0 0.0
    %5138 = vmatmul.mubr.f32.gmra.mrb[0].mxu0 %v2031
    %v5139 = vpop.f32.mrb[0].mxu0
    %v5140 = vadd.f32 %v5035, %v5139
    %v5141 = vpop.f32.mrb[0].mxu0
    %5142 = vmatprep.mubr.f32.mxu0 0.0
    %5143 = vmatmul.mubr.f32.gmra.mrb[0].mxu0 %v2034
    %v5144 = vpop.f32.mrb[0].mxu0
    %v5145 = vadd.f32 %v5040, %v5144
    %v5146 = vpop.f32.mrb[0].mxu0
    %5147 = vmatprep.mubr.f32.mxu0 0.0
    %5148 = vmatmul.mubr.f32.gmra.mrb[0].mxu0 %v2037
    %v5149 = vpop.f32.mrb[0].mxu0
    %v5150 = vadd.f32 %v5045, %v5149
    %v5151 = vpop.f32.mrb[0].mxu0
    %5152 = vmatprep.mubr.f32.mxu0 0.0
    %5153 = vmatmul.mubr.f32.gmra.mrb[0].mxu0 %v2040
    %v5154 = vpop.f32.mrb[0].mxu0
    %v5155 = vadd.f32 %v5050, %v5154
    %v5156 = vpop.f32.mrb[0].mxu0
    %5157 = vmatprep.mubr.f32.mxu0 0.0
    %5158 = vmatmul.mubr.f32.gmra.mrb[0].mxu0 %v2043
    %v5159 = vpop.f32.mrb[0].mxu0
    %v5160 = vadd.f32 %v5055, %v5159
    %v5161 = vpop.f32.mrb[0].mxu0
    %5162 = vmatprep.mubr.f32.mxu0 0.0
    %5163 = vmatmul.mubr.f32.gmra.mrb[0].mxu0 %v2046
    %v5164 = vpop.f32.mrb[0].mxu0
    %v5165 = vadd.f32 %v5060, %v5164
    %v5166 = vpop.f32.mrb[0].mxu0
    %5167 = vmatprep.mubr.f32.mxu0 0.0
    %5168 = vmatmul.mubr.f32.gmra.mrb[0].mxu0 %v2049
    %v5169 = vpop.f32.mrb[0].mxu0
    %v5170 = vadd.f32 %v5065, %v5169
    %v5171 = vpop.f32.mrb[0].mxu0
    %5172 = vdwg.mxu0
    %v5173 = vld [vmem:[%s1377] sm:$0xff]
    %v5174 = vld [vmem:[%s1377 + $0x8] sm:$0xff]
    %v5175 = vld [vmem:[%s1377 + $0x10] sm:$0xff]
    %v5176 = vld [vmem:[%s1377 + $0x18] sm:$0xff]
    %v5177 = vld [vmem:[%s1377 + $0x20] sm:$0xff]
    %v5178 = vld [vmem:[%s1377 + $0x28] sm:$0xff]
    %v5179 = vld [vmem:[%s1377 + $0x30] sm:$0xff]
    %v5180 = vld [vmem:[%s1377 + $0x38] sm:$0xff]
    %5181 = vmatprep.subr.mxu0 0.0
    %5182 = vmatpush1.msra.mxu0 %v5173
    %5183 = vmatprep.subr.mxu0 0.0
    %5184 = vmatpush1.msra.mxu0 %v5174
    %5185 = vmatprep.subr.mxu0 0.0
    %5186 = vmatpush1.msra.mxu0 %v5175
    %5187 = vmatprep.subr.mxu0 0.0
    %5188 = vmatpush1.msra.mxu0 %v5176
    %5189 = vmatprep.subr.mxu0 0.0
    %5190 = vmatpush1.msra.mxu0 %v5177
    %5191 = vmatprep.subr.mxu0 0.0
    %5192 = vmatpush1.msra.mxu0 %v5178
    %5193 = vmatprep.subr.mxu0 0.0
    %5194 = vmatpush1.msra.mxu0 %v5179
    %5195 = vmatprep.subr.mxu0 0.0
    %5196 = vmatpush1.msra.mxu0 %v5180
    %5197 = vmatprep.subr.mxu0 0.0
    %5198 = vmatpush1.msra.mxu0 0.0
    %5199 = vmatprep.subr.mxu0 0.0
    %5200 = vmatpush1.msra.mxu0 0.0
    %5201 = vmatprep.subr.mxu0 0.0
    %5202 = vmatpush1.msra.mxu0 0.0
    %5203 = vmatprep.subr.mxu0 0.0
    %5204 = vmatpush1.msra.mxu0 0.0
    %5205 = vmatprep.subr.mxu0 0.0
    %5206 = vmatpush1.msra.mxu0 0.0
    %5207 = vmatprep.subr.mxu0 0.0
    %5208 = vmatpush1.msra.mxu0 0.0
    %5209 = vmatprep.subr.mxu0 0.0
    %5210 = vmatpush1.msra.mxu0 0.0
    %5211 = vmatprep.subr.mxu0 0.0
    %5212 = vmatpush1.msra.mxu0 0.0
    %5213 = vmatprep.subr.mxu0 0.0
    %5214 = vmatpush1.msra.mxu0 0.0
    %5215 = vmatprep.subr.mxu0 0.0
    %5216 = vmatpush1.msra.mxu0 0.0
    %5217 = vmatprep.subr.mxu0 0.0
    %5218 = vmatpush1.msra.mxu0 0.0
    %5219 = vmatprep.subr.mxu0 0.0
    %5220 = vmatpush1.msra.mxu0 0.0
    %5221 = vmatprep.subr.mxu0 0.0
    %5222 = vmatpush1.msra.mxu0 0.0
    %5223 = vmatprep.subr.mxu0 0.0
    %5224 = vmatpush1.msra.mxu0 0.0
    %5225 = vmatprep.subr.mxu0 0.0
    %5226 = vmatpush1.msra.mxu0 0.0
    %5227 = vmatprep.subr.mxu0 0.0
    %5228 = vmatpush1.msra.mxu0 0.0
    %5229 = vmatprep.subr.mxu0 0.0
    %5230 = vmatpush1.msra.mxu0 0.0
    %5231 = vmatprep.subr.mxu0 0.0
    %5232 = vmatpush1.msra.mxu0 0.0
    %5233 = vmatprep.subr.mxu0 0.0
    %5234 = vmatpush1.msra.mxu0 0.0
    %5235 = vmatprep.subr.mxu0 0.0
    %5236 = vmatpush1.msra.mxu0 0.0
    %5237 = vmatprep.subr.mxu0 0.0
    %5238 = vmatpush1.msra.mxu0 0.0
    %5239 = vmatprep.subr.mxu0 0.0
    %5240 = vmatpush1.msra.mxu0 0.0
    %5241 = vmatprep.subr.mxu0 0.0
    %5242 = vmatpush1.msra.mxu0 0.0
    %5243 = vmatprep.subr.mxu0 0.0
    %5244 = vmatpush1.msra.mxu0 0.0
    %5245 = vmatprep.mubr.f32.mxu0 0.0
    %5246 = vmatmul.mubr.f32.gmra.mrb[0].mxu0 %v2165
    %v5247 = vpop.f32.mrb[0].mxu0
    %v5248 = vadd.f32 0.0, %v5247
    %v5249 = vpop.f32.mrb[0].mxu0
    %5250 = vmatprep.mubr.f32.mxu0 0.0
    %5251 = vmatmul.mubr.f32.gmra.mrb[0].mxu0 %v2168
    %v5252 = vpop.f32.mrb[0].mxu0
    %v5253 = vadd.f32 0.0, %v5252
    %v5254 = vpop.f32.mrb[0].mxu0
    %5255 = vmatprep.mubr.f32.mxu0 0.0
    %5256 = vmatmul.mubr.f32.gmra.mrb[0].mxu0 %v2171
    %v5257 = vpop.f32.mrb[0].mxu0
    %v5258 = vadd.f32 0.0, %v5257
    %v5259 = vpop.f32.mrb[0].mxu0
    %5260 = vmatprep.mubr.f32.mxu0 0.0
    %5261 = vmatmul.mubr.f32.gmra.mrb[0].mxu0 %v2174
    %v5262 = vpop.f32.mrb[0].mxu0
    %v5263 = vadd.f32 0.0, %v5262
    %v5264 = vpop.f32.mrb[0].mxu0
    %5265 = vmatprep.mubr.f32.mxu0 0.0
    %5266 = vmatmul.mubr.f32.gmra.mrb[0].mxu0 %v2177
    %v5267 = vpop.f32.mrb[0].mxu0
    %v5268 = vadd.f32 0.0, %v5267
    %v5269 = vpop.f32.mrb[0].mxu0
    %5270 = vmatprep.mubr.f32.mxu0 0.0
    %5271 = vmatmul.mubr.f32.gmra.mrb[0].mxu0 %v2180
    %v5272 = vpop.f32.mrb[0].mxu0
    %v5273 = vadd.f32 0.0, %v5272
    %v5274 = vpop.f32.mrb[0].mxu0
    %5275 = vmatprep.mubr.f32.mxu0 0.0
    %5276 = vmatmul.mubr.f32.gmra.mrb[0].mxu0 %v2183
    %v5277 = vpop.f32.mrb[0].mxu0
    %v5278 = vadd.f32 0.0, %v5277
    %v5279 = vpop.f32.mrb[0].mxu0
    %5280 = vmatprep.mubr.f32.mxu0 0.0
    %5281 = vmatmul.mubr.f32.gmra.mrb[0].mxu0 %v2186
    %v5282 = vpop.f32.mrb[0].mxu0
    %v5283 = vadd.f32 0.0, %v5282
    %v5284 = vpop.f32.mrb[0].mxu0
    %5285 = vdwg.mxu0
    %v5286 = vadd.f32 %v5135, %v5248
    %v5287 = vadd.f32 %v5140, %v5253
    %v5288 = vadd.f32 %v5145, %v5258
    %v5289 = vadd.f32 %v5150, %v5263
    %v5290 = vadd.f32 %v5155, %v5268
    %v5291 = vadd.f32 %v5160, %v5273
    %v5292 = vadd.f32 %v5165, %v5278
    %v5293 = vadd.f32 %v5170, %v5283
    %v5294 = vadd.f32 %v5286, %v126
    %v5295 = vadd.f32 %v5287, %v131
    %v5296 = vadd.f32 %v5288, %v136
    %v5297 = vadd.f32 %v5289, %v141
    %v5298 = vadd.f32 %v5290, %v146
    %v5299 = vadd.f32 %v5291, %v151
    %v5300 = vadd.f32 %v5292, %v156
    %v5301 = vadd.f32 %v5293, %v161
    %v5302 = vmax.f32 %v5294, 0.0
    %v5303 = vmax.f32 %v5295, 0.0
    %v5304 = vmax.f32 %v5296, 0.0
    %v5305 = vmax.f32 %v5297, 0.0
    %v5306 = vmax.f32 %v5298, 0.0
    %v5307 = vmax.f32 %v5299, 0.0
    %v5308 = vmax.f32 %v5300, 0.0
    %v5309 = vmax.f32 %v5301, 0.0
    %v5310 = vadd.f32 %v5302, %v5303
    %v5311 = vadd.f32 %v5310, %v5304
    %v5312 = vadd.f32 %v5311, %v5305
    %v5313 = vadd.f32 %v5312, %v5306
    %v5314 = vadd.f32 %v5313, %v5307
    %v5315 = vadd.f32 %v5314, %v5308
    %v5316 = vadd.f32 %v5315, %v5309
    %v5317 = vrot.slane %v5316, 4
    %v5318 = vadd.f32 %v5316, %v5317
    %v5319 = vrot.slane %v5318, 2
    %v5320 = vadd.f32 %v5318, %v5319
    %v5321 = vrot.slane %v5320, 1
    %v5322 = vadd.f32 %v5320, %v5321
    %v5323 = vmul.f32 %v5322, %v2330
    %v5324 = vmax.f32 %v5302, %v5306
    %v5325 = vmax.f32 %v5303, %v5307
    %v5326 = vmax.f32 %v5304, %v5308
    %v5327 = vmax.f32 %v5305, %v5309
    %v5328 = vmax.f32 %v5324, %v5325
    %v5329 = vmax.f32 %v5326, %v5327
    %v5330 = vmax.f32 %v5328, %v5329
    %v5331 = vrot.slane %v5330, 4
    %v5332 = vmax.f32 %v5330, %v5331
    %v5333 = vrot.slane %v5332, 2
    %v5334 = vmax.f32 %v5332, %v5333
    %v5335 = vrot.slane %v5334, 1
    %v5336 = vmax.f32 %v5334, %v5335
    %5337 = vmatprep.subr.mxu0 0.0
    %5338 = vmatpush1.msra.mxu0 %v5173
    %5339 = vmatprep.subr.mxu0 0.0
    %5340 = vmatpush1.msra.mxu0 %v5174
    %5341 = vmatprep.subr.mxu0 0.0
    %5342 = vmatpush1.msra.mxu0 %v5175
    %5343 = vmatprep.subr.mxu0 0.0
    %5344 = vmatpush1.msra.mxu0 %v5176
    %5345 = vmatprep.subr.mxu0 0.0
    %5346 = vmatpush1.msra.mxu0 %v5177
    %5347 = vmatprep.subr.mxu0 0.0
    %5348 = vmatpush1.msra.mxu0 %v5178
    %5349 = vmatprep.subr.mxu0 0.0
    %5350 = vmatpush1.msra.mxu0 %v5179
    %5351 = vmatprep.subr.mxu0 0.0
    %5352 = vmatpush1.msra.mxu0 %v5180
    %5353 = vmatprep.subr.mxu0 0.0
    %5354 = vmatpush1.msra.mxu0 0.0
    %5355 = vmatprep.subr.mxu0 0.0
    %5356 = vmatpush1.msra.mxu0 0.0
    %5357 = vmatprep.subr.mxu0 0.0
    %5358 = vmatpush1.msra.mxu0 0.0
    %5359 = vmatprep.subr.mxu0 0.0
    %5360 = vmatpush1.msra.mxu0 0.0
    %5361 = vmatprep.subr.mxu0 0.0
    %5362 = vmatpush1.msra.mxu0 0.0
    %5363 = vmatprep.subr.mxu0 0.0
    %5364 = vmatpush1.msra.mxu0 0.0
    %5365 = vmatprep.subr.mxu0 0.0
    %5366 = vmatpush1.msra.mxu0 0.0
    %5367 = vmatprep.subr.mxu0 0.0
    %5368 = vmatpush1.msra.mxu0 0.0
    %5369 = vmatprep.subr.mxu0 0.0
    %5370 = vmatpush1.msra.mxu0 0.0
    %5371 = vmatprep.subr.mxu0 0.0
    %5372 = vmatpush1.msra.mxu0 0.0
    %5373 = vmatprep.subr.mxu0 0.0
    %5374 = vmatpush1.msra.mxu0 0.0
    %5375 = vmatprep.subr.mxu0 0.0
    %5376 = vmatpush1.msra.mxu0 0.0
    %5377 = vmatprep.subr.mxu0 0.0
    %5378 = vmatpush1.msra.mxu0 0.0
    %5379 = vmatprep.subr.mxu0 0.0
    %5380 = vmatpush1.msra.mxu0 0.0
    %5381 = vmatprep.subr.mxu0 0.0
    %5382 = vmatpush1.msra.mxu0 0.0
    %5383 = vmatprep.subr.mxu0 0.0
    %5384 = vmatpush1.msra.mxu0 0.0
    %5385 = vmatprep.subr.mxu0 0.0
    %5386 = vmatpush1.msra.mxu0 0.0
    %5387 = vmatprep.subr.mxu0 0.0
    %5388 = vmatpush1.msra.mxu0 0.0
    %5389 = vmatprep.subr.mxu0 0.0
    %5390 = vmatpush1.msra.mxu0 0.0
    %5391 = vmatprep.subr.mxu0 0.0
    %5392 = vmatpush1.msra.mxu0 0.0
    %5393 = vmatprep.subr.mxu0 0.0
    %5394 = vmatpush1.msra.mxu0 0.0
    %5395 = vmatprep.subr.mxu0 0.0
    %5396 = vmatpush1.msra.mxu0 0.0
    %5397 = vmatprep.subr.mxu0 0.0
    %5398 = vmatpush1.msra.mxu0 0.0
    %5399 = vmatprep.subr.mxu0 0.0
    %5400 = vmatpush1.msra.mxu0 0.0
    %5401 = vmatprep.mubr.f32.mxu0 0.0
    %5402 = vmatmul.mubr.f32.gmra.mrb[0].mxu0 %v1899
    %v5403 = vpop.f32.mrb[0].mxu0
    %v5404 = vadd.f32 0.0, %v5403
    %v5405 = vpop.f32.mrb[0].mxu0
    %5406 = vmatprep.mubr.f32.mxu0 0.0
    %5407 = vmatmul.mubr.f32.gmra.mrb[0].mxu0 %v1902
    %v5408 = vpop.f32.mrb[0].mxu0
    %v5409 = vadd.f32 0.0, %v5408
    %v5410 = vpop.f32.mrb[0].mxu0
    %5411 = vmatprep.mubr.f32.mxu0 0.0
    %5412 = vmatmul.mubr.f32.gmra.mrb[0].mxu0 %v1905
    %v5413 = vpop.f32.mrb[0].mxu0
    %v5414 = vadd.f32 0.0, %v5413
    %v5415 = vpop.f32.mrb[0].mxu0
    %5416 = vmatprep.mubr.f32.mxu0 0.0
    %5417 = vmatmul.mubr.f32.gmra.mrb[0].mxu0 %v1908
    %v5418 = vpop.f32.mrb[0].mxu0
    %v5419 = vadd.f32 0.0, %v5418
    %v5420 = vpop.f32.mrb[0].mxu0
    %5421 = vmatprep.mubr.f32.mxu0 0.0
    %5422 = vmatmul.mubr.f32.gmra.mrb[0].mxu0 %v1911
    %v5423 = vpop.f32.mrb[0].mxu0
    %v5424 = vadd.f32 0.0, %v5423
    %v5425 = vpop.f32.mrb[0].mxu0
    %5426 = vmatprep.mubr.f32.mxu0 0.0
    %5427 = vmatmul.mubr.f32.gmra.mrb[0].mxu0 %v1914
    %v5428 = vpop.f32.mrb[0].mxu0
    %v5429 = vadd.f32 0.0, %v5428
    %v5430 = vpop.f32.mrb[0].mxu0
    %5431 = vmatprep.mubr.f32.mxu0 0.0
    %5432 = vmatmul.mubr.f32.gmra.mrb[0].mxu0 %v1917
    %v5433 = vpop.f32.mrb[0].mxu0
    %v5434 = vadd.f32 0.0, %v5433
    %v5435 = vpop.f32.mrb[0].mxu0
    %5436 = vmatprep.mubr.f32.mxu0 0.0
    %5437 = vmatmul.mubr.f32.gmra.mrb[0].mxu0 %v1920
    %v5438 = vpop.f32.mrb[0].mxu0
    %v5439 = vadd.f32 0.0, %v5438
    %v5440 = vpop.f32.mrb[0].mxu0
    %5441 = vdwg.mxu0
    %5442 = vmatprep.subr.mxu0 0.0
    %5443 = vmatpush1.msra.mxu0 %v4799
    %5444 = vmatprep.subr.mxu0 0.0
    %5445 = vmatpush1.msra.mxu0 %v4800
    %5446 = vmatprep.subr.mxu0 0.0
    %5447 = vmatpush1.msra.mxu0 %v4801
    %5448 = vmatprep.subr.mxu0 0.0
    %5449 = vmatpush1.msra.mxu0 %v4802
    %5450 = vmatprep.subr.mxu0 0.0
    %5451 = vmatpush1.msra.mxu0 %v4803
    %5452 = vmatprep.subr.mxu0 0.0
    %5453 = vmatpush1.msra.mxu0 %v4804
    %5454 = vmatprep.subr.mxu0 0.0
    %5455 = vmatpush1.msra.mxu0 %v4805
    %5456 = vmatprep.subr.mxu0 0.0
    %5457 = vmatpush1.msra.mxu0 %v4806
    %5458 = vmatprep.subr.mxu0 0.0
    %5459 = vmatpush1.msra.mxu0 0.0
    %5460 = vmatprep.subr.mxu0 0.0
    %5461 = vmatpush1.msra.mxu0 0.0
    %5462 = vmatprep.subr.mxu0 0.0
    %5463 = vmatpush1.msra.mxu0 0.0
    %5464 = vmatprep.subr.mxu0 0.0
    %5465 = vmatpush1.msra.mxu0 0.0
    %5466 = vmatprep.subr.mxu0 0.0
    %5467 = vmatpush1.msra.mxu0 0.0
    %5468 = vmatprep.subr.mxu0 0.0
    %5469 = vmatpush1.msra.mxu0 0.0
    %5470 = vmatprep.subr.mxu0 0.0
    %5471 = vmatpush1.msra.mxu0 0.0
    %5472 = vmatprep.subr.mxu0 0.0
    %5473 = vmatpush1.msra.mxu0 0.0
    %5474 = vmatprep.subr.mxu0 0.0
    %5475 = vmatpush1.msra.mxu0 0.0
    %5476 = vmatprep.subr.mxu0 0.0
    %5477 = vmatpush1.msra.mxu0 0.0
    %5478 = vmatprep.subr.mxu0 0.0
    %5479 = vmatpush1.msra.mxu0 0.0
    %5480 = vmatprep.subr.mxu0 0.0
    %5481 = vmatpush1.msra.mxu0 0.0
    %5482 = vmatprep.subr.mxu0 0.0
    %5483 = vmatpush1.msra.mxu0 0.0
    %5484 = vmatprep.subr.mxu0 0.0
    %5485 = vmatpush1.msra.mxu0 0.0
    %5486 = vmatprep.subr.mxu0 0.0
    %5487 = vmatpush1.msra.mxu0 0.0
    %5488 = vmatprep.subr.mxu0 0.0
    %5489 = vmatpush1.msra.mxu0 0.0
    %5490 = vmatprep.subr.mxu0 0.0
    %5491 = vmatpush1.msra.mxu0 0.0
    %5492 = vmatprep.subr.mxu0 0.0
    %5493 = vmatpush1.msra.mxu0 0.0
    %5494 = vmatprep.subr.mxu0 0.0
    %5495 = vmatpush1.msra.mxu0 0.0
    %5496 = vmatprep.subr.mxu0 0.0
    %5497 = vmatpush1.msra.mxu0 0.0
    %5498 = vmatprep.subr.mxu0 0.0
    %5499 = vmatpush1.msra.mxu0 0.0
    %5500 = vmatprep.subr.mxu0 0.0
    %5501 = vmatpush1.msra.mxu0 0.0
    %5502 = vmatprep.subr.mxu0 0.0
    %5503 = vmatpush1.msra.mxu0 0.0
    %5504 = vmatprep.subr.mxu0 0.0
    %5505 = vmatpush1.msra.mxu0 0.0
    %5506 = vmatprep.mubr.f32.mxu0 0.0
    %5507 = vmatmul.mubr.f32.gmra.mrb[0].mxu0 %v2028
    %v5508 = vpop.f32.mrb[0].mxu0
    %v5509 = vadd.f32 %v5404, %v5508
    %v5510 = vpop.f32.mrb[0].mxu0
    %5511 = vmatprep.mubr.f32.mxu0 0.0
    %5512 = vmatmul.mubr.f32.gmra.mrb[0].mxu0 %v2031
    %v5513 = vpop.f32.mrb[0].mxu0
    %v5514 = vadd.f32 %v5409, %v5513
    %v5515 = vpop.f32.mrb[0].mxu0
    %5516 = vmatprep.mubr.f32.mxu0 0.0
    %5517 = vmatmul.mubr.f32.gmra.mrb[0].mxu0 %v2034
    %v5518 = vpop.f32.mrb[0].mxu0
    %v5519 = vadd.f32 %v5414, %v5518
    %v5520 = vpop.f32.mrb[0].mxu0
    %5521 = vmatprep.mubr.f32.mxu0 0.0
    %5522 = vmatmul.mubr.f32.gmra.mrb[0].mxu0 %v2037
    %v5523 = vpop.f32.mrb[0].mxu0
    %v5524 = vadd.f32 %v5419, %v5523
    %v5525 = vpop.f32.mrb[0].mxu0
    %5526 = vmatprep.mubr.f32.mxu0 0.0
    %5527 = vmatmul.mubr.f32.gmra.mrb[0].mxu0 %v2040
    %v5528 = vpop.f32.mrb[0].mxu0
    %v5529 = vadd.f32 %v5424, %v5528
    %v5530 = vpop.f32.mrb[0].mxu0
    %5531 = vmatprep.mubr.f32.mxu0 0.0
    %5532 = vmatmul.mubr.f32.gmra.mrb[0].mxu0 %v2043
    %v5533 = vpop.f32.mrb[0].mxu0
    %v5534 = vadd.f32 %v5429, %v5533
    %v5535 = vpop.f32.mrb[0].mxu0
    %5536 = vmatprep.mubr.f32.mxu0 0.0
    %5537 = vmatmul.mubr.f32.gmra.mrb[0].mxu0 %v2046
    %v5538 = vpop.f32.mrb[0].mxu0
    %v5539 = vadd.f32 %v5434, %v5538
    %v5540 = vpop.f32.mrb[0].mxu0
    %5541 = vmatprep.mubr.f32.mxu0 0.0
    %5542 = vmatmul.mubr.f32.gmra.mrb[0].mxu0 %v2049
    %v5543 = vpop.f32.mrb[0].mxu0
    %v5544 = vadd.f32 %v5439, %v5543
    %v5545 = vpop.f32.mrb[0].mxu0
    %5546 = vdwg.mxu0
    %v5547 = vld [vmem:[%s1476] sm:$0xff]
    %v5548 = vld [vmem:[%s1476 + $0x8] sm:$0xff]
    %v5549 = vld [vmem:[%s1476 + $0x10] sm:$0xff]
    %v5550 = vld [vmem:[%s1476 + $0x18] sm:$0xff]
    %v5551 = vld [vmem:[%s1476 + $0x20] sm:$0xff]
    %v5552 = vld [vmem:[%s1476 + $0x28] sm:$0xff]
    %v5553 = vld [vmem:[%s1476 + $0x30] sm:$0xff]
    %v5554 = vld [vmem:[%s1476 + $0x38] sm:$0xff]
    %5555 = vmatprep.subr.mxu0 0.0
    %5556 = vmatpush1.msra.mxu0 %v5547
    %5557 = vmatprep.subr.mxu0 0.0
    %5558 = vmatpush1.msra.mxu0 %v5548
    %5559 = vmatprep.subr.mxu0 0.0
    %5560 = vmatpush1.msra.mxu0 %v5549
    %5561 = vmatprep.subr.mxu0 0.0
    %5562 = vmatpush1.msra.mxu0 %v5550
    %5563 = vmatprep.subr.mxu0 0.0
    %5564 = vmatpush1.msra.mxu0 %v5551
    %5565 = vmatprep.subr.mxu0 0.0
    %5566 = vmatpush1.msra.mxu0 %v5552
    %5567 = vmatprep.subr.mxu0 0.0
    %5568 = vmatpush1.msra.mxu0 %v5553
    %5569 = vmatprep.subr.mxu0 0.0
    %5570 = vmatpush1.msra.mxu0 %v5554
    %5571 = vmatprep.subr.mxu0 0.0
    %5572 = vmatpush1.msra.mxu0 0.0
    %5573 = vmatprep.subr.mxu0 0.0
    %5574 = vmatpush1.msra.mxu0 0.0
    %5575 = vmatprep.subr.mxu0 0.0
    %5576 = vmatpush1.msra.mxu0 0.0
    %5577 = vmatprep.subr.mxu0 0.0
    %5578 = vmatpush1.msra.mxu0 0.0
    %5579 = vmatprep.subr.mxu0 0.0
    %5580 = vmatpush1.msra.mxu0 0.0
    %5581 = vmatprep.subr.mxu0 0.0
    %5582 = vmatpush1.msra.mxu0 0.0
    %5583 = vmatprep.subr.mxu0 0.0
    %5584 = vmatpush1.msra.mxu0 0.0
    %5585 = vmatprep.subr.mxu0 0.0
    %5586 = vmatpush1.msra.mxu0 0.0
    %5587 = vmatprep.subr.mxu0 0.0
    %5588 = vmatpush1.msra.mxu0 0.0
    %5589 = vmatprep.subr.mxu0 0.0
    %5590 = vmatpush1.msra.mxu0 0.0
    %5591 = vmatprep.subr.mxu0 0.0
    %5592 = vmatpush1.msra.mxu0 0.0
    %5593 = vmatprep.subr.mxu0 0.0
    %5594 = vmatpush1.msra.mxu0 0.0
    %5595 = vmatprep.subr.mxu0 0.0
    %5596 = vmatpush1.msra.mxu0 0.0
    %5597 = vmatprep.subr.mxu0 0.0
    %5598 = vmatpush1.msra.mxu0 0.0
    %5599 = vmatprep.subr.mxu0 0.0
    %5600 = vmatpush1.msra.mxu0 0.0
    %5601 = vmatprep.subr.mxu0 0.0
    %5602 = vmatpush1.msra.mxu0 0.0
    %5603 = vmatprep.subr.mxu0 0.0
    %5604 = vmatpush1.msra.mxu0 0.0
    %5605 = vmatprep.subr.mxu0 0.0
    %5606 = vmatpush1.msra.mxu0 0.0
    %5607 = vmatprep.subr.mxu0 0.0
    %5608 = vmatpush1.msra.mxu0 0.0
    %5609 = vmatprep.subr.mxu0 0.0
    %5610 = vmatpush1.msra.mxu0 0.0
    %5611 = vmatprep.subr.mxu0 0.0
    %5612 = vmatpush1.msra.mxu0 0.0
    %5613 = vmatprep.subr.mxu0 0.0
    %5614 = vmatpush1.msra.mxu0 0.0
    %5615 = vmatprep.subr.mxu0 0.0
    %5616 = vmatpush1.msra.mxu0 0.0
    %5617 = vmatprep.subr.mxu0 0.0
    %5618 = vmatpush1.msra.mxu0 0.0
    %5619 = vmatprep.mubr.f32.mxu0 0.0
    %5620 = vmatmul.mubr.f32.gmra.mrb[0].mxu0 %v2165
    %v5621 = vpop.f32.mrb[0].mxu0
    %v5622 = vadd.f32 0.0, %v5621
    %v5623 = vpop.f32.mrb[0].mxu0
    %5624 = vmatprep.mubr.f32.mxu0 0.0
    %5625 = vmatmul.mubr.f32.gmra.mrb[0].mxu0 %v2168
    %v5626 = vpop.f32.mrb[0].mxu0
    %v5627 = vadd.f32 0.0, %v5626
    %v5628 = vpop.f32.mrb[0].mxu0
    %5629 = vmatprep.mubr.f32.mxu0 0.0
    %5630 = vmatmul.mubr.f32.gmra.mrb[0].mxu0 %v2171
    %v5631 = vpop.f32.mrb[0].mxu0
    %v5632 = vadd.f32 0.0, %v5631
    %v5633 = vpop.f32.mrb[0].mxu0
    %5634 = vmatprep.mubr.f32.mxu0 0.0
    %5635 = vmatmul.mubr.f32.gmra.mrb[0].mxu0 %v2174
    %v5636 = vpop.f32.mrb[0].mxu0
    %v5637 = vadd.f32 0.0, %v5636
    %v5638 = vpop.f32.mrb[0].mxu0
    %5639 = vmatprep.mubr.f32.mxu0 0.0
    %5640 = vmatmul.mubr.f32.gmra.mrb[0].mxu0 %v2177
    %v5641 = vpop.f32.mrb[0].mxu0
    %v5642 = vadd.f32 0.0, %v5641
    %v5643 = vpop.f32.mrb[0].mxu0
    %5644 = vmatprep.mubr.f32.mxu0 0.0
    %5645 = vmatmul.mubr.f32.gmra.mrb[0].mxu0 %v2180
    %v5646 = vpop.f32.mrb[0].mxu0
    %v5647 = vadd.f32 0.0, %v5646
    %v5648 = vpop.f32.mrb[0].mxu0
    %5649 = vmatprep.mubr.f32.mxu0 0.0
    %5650 = vmatmul.mubr.f32.gmra.mrb[0].mxu0 %v2183
    %v5651 = vpop.f32.mrb[0].mxu0
    %v5652 = vadd.f32 0.0, %v5651
    %v5653 = vpop.f32.mrb[0].mxu0
    %5654 = vmatprep.mubr.f32.mxu0 0.0
    %5655 = vmatmul.mubr.f32.gmra.mrb[0].mxu0 %v2186
    %v5656 = vpop.f32.mrb[0].mxu0
    %v5657 = vadd.f32 0.0, %v5656
    %v5658 = vpop.f32.mrb[0].mxu0
    %5659 = vdwg.mxu0
    %v5660 = vadd.f32 %v5509, %v5622
    %v5661 = vadd.f32 %v5514, %v5627
    %v5662 = vadd.f32 %v5519, %v5632
    %v5663 = vadd.f32 %v5524, %v5637
    %v5664 = vadd.f32 %v5529, %v5642
    %v5665 = vadd.f32 %v5534, %v5647
    %v5666 = vadd.f32 %v5539, %v5652
    %v5667 = vadd.f32 %v5544, %v5657
    %v5668 = vadd.f32 %v5660, %v126
    %v5669 = vadd.f32 %v5661, %v131
    %v5670 = vadd.f32 %v5662, %v136
    %v5671 = vadd.f32 %v5663, %v141
    %v5672 = vadd.f32 %v5664, %v146
    %v5673 = vadd.f32 %v5665, %v151
    %v5674 = vadd.f32 %v5666, %v156
    %v5675 = vadd.f32 %v5667, %v161
    %v5676 = vmax.f32 %v5668, 0.0
    %v5677 = vmax.f32 %v5669, 0.0
    %v5678 = vmax.f32 %v5670, 0.0
    %v5679 = vmax.f32 %v5671, 0.0
    %v5680 = vmax.f32 %v5672, 0.0
    %v5681 = vmax.f32 %v5673, 0.0
    %v5682 = vmax.f32 %v5674, 0.0
    %v5683 = vmax.f32 %v5675, 0.0
    %v5684 = vadd.f32 %v5676, %v5677
    %v5685 = vadd.f32 %v5684, %v5678
    %v5686 = vadd.f32 %v5685, %v5679
    %v5687 = vadd.f32 %v5686, %v5680
    %v5688 = vadd.f32 %v5687, %v5681
    %v5689 = vadd.f32 %v5688, %v5682
    %v5690 = vadd.f32 %v5689, %v5683
    %v5691 = vrot.slane %v5690, 4
    %v5692 = vadd.f32 %v5690, %v5691
    %v5693 = vrot.slane %v5692, 2
    %v5694 = vadd.f32 %v5692, %v5693
    %v5695 = vrot.slane %v5694, 1
    %v5696 = vadd.f32 %v5694, %v5695
    %v5697 = vmul.f32 %v5696, %v2330
    %v5698 = vmax.f32 %v5676, %v5680
    %v5699 = vmax.f32 %v5677, %v5681
    %v5700 = vmax.f32 %v5678, %v5682
    %v5701 = vmax.f32 %v5679, %v5683
    %v5702 = vmax.f32 %v5698, %v5699
    %v5703 = vmax.f32 %v5700, %v5701
    %v5704 = vmax.f32 %v5702, %v5703
    %v5705 = vrot.slane %v5704, 4
    %v5706 = vmax.f32 %v5704, %v5705
    %v5707 = vrot.slane %v5706, 2
    %v5708 = vmax.f32 %v5706, %v5707
    %v5709 = vrot.slane %v5708, 1
    %v5710 = vmax.f32 %v5708, %v5709
    %5711 = vmatprep.subr.mxu0 0.0
    %5712 = vmatpush1.msra.mxu0 %v5547
    %5713 = vmatprep.subr.mxu0 0.0
    %5714 = vmatpush1.msra.mxu0 %v5548
    %5715 = vmatprep.subr.mxu0 0.0
    %5716 = vmatpush1.msra.mxu0 %v5549
    %5717 = vmatprep.subr.mxu0 0.0
    %5718 = vmatpush1.msra.mxu0 %v5550
    %5719 = vmatprep.subr.mxu0 0.0
    %5720 = vmatpush1.msra.mxu0 %v5551
    %5721 = vmatprep.subr.mxu0 0.0
    %5722 = vmatpush1.msra.mxu0 %v5552
    %5723 = vmatprep.subr.mxu0 0.0
    %5724 = vmatpush1.msra.mxu0 %v5553
    %5725 = vmatprep.subr.mxu0 0.0
    %5726 = vmatpush1.msra.mxu0 %v5554
    %5727 = vmatprep.subr.mxu0 0.0
    %5728 = vmatpush1.msra.mxu0 0.0
    %5729 = vmatprep.subr.mxu0 0.0
    %5730 = vmatpush1.msra.mxu0 0.0
    %5731 = vmatprep.subr.mxu0 0.0
    %5732 = vmatpush1.msra.mxu0 0.0
    %5733 = vmatprep.subr.mxu0 0.0
    %5734 = vmatpush1.msra.mxu0 0.0
    %5735 = vmatprep.subr.mxu0 0.0
    %5736 = vmatpush1.msra.mxu0 0.0
    %5737 = vmatprep.subr.mxu0 0.0
    %5738 = vmatpush1.msra.mxu0 0.0
    %5739 = vmatprep.subr.mxu0 0.0
    %5740 = vmatpush1.msra.mxu0 0.0
    %5741 = vmatprep.subr.mxu0 0.0
    %5742 = vmatpush1.msra.mxu0 0.0
    %5743 = vmatprep.subr.mxu0 0.0
    %5744 = vmatpush1.msra.mxu0 0.0
    %5745 = vmatprep.subr.mxu0 0.0
    %5746 = vmatpush1.msra.mxu0 0.0
    %5747 = vmatprep.subr.mxu0 0.0
    %5748 = vmatpush1.msra.mxu0 0.0
    %5749 = vmatprep.subr.mxu0 0.0
    %5750 = vmatpush1.msra.mxu0 0.0
    %5751 = vmatprep.subr.mxu0 0.0
    %5752 = vmatpush1.msra.mxu0 0.0
    %5753 = vmatprep.subr.mxu0 0.0
    %5754 = vmatpush1.msra.mxu0 0.0
    %5755 = vmatprep.subr.mxu0 0.0
    %5756 = vmatpush1.msra.mxu0 0.0
    %5757 = vmatprep.subr.mxu0 0.0
    %5758 = vmatpush1.msra.mxu0 0.0
    %5759 = vmatprep.subr.mxu0 0.0
    %5760 = vmatpush1.msra.mxu0 0.0
    %5761 = vmatprep.subr.mxu0 0.0
    %5762 = vmatpush1.msra.mxu0 0.0
    %5763 = vmatprep.subr.mxu0 0.0
    %5764 = vmatpush1.msra.mxu0 0.0
    %5765 = vmatprep.subr.mxu0 0.0
    %5766 = vmatpush1.msra.mxu0 0.0
    %5767 = vmatprep.subr.mxu0 0.0
    %5768 = vmatpush1.msra.mxu0 0.0
    %5769 = vmatprep.subr.mxu0 0.0
    %5770 = vmatpush1.msra.mxu0 0.0
    %5771 = vmatprep.subr.mxu0 0.0
    %5772 = vmatpush1.msra.mxu0 0.0
    %5773 = vmatprep.subr.mxu0 0.0
    %5774 = vmatpush1.msra.mxu0 0.0
    %5775 = vmatprep.mubr.f32.mxu0 0.0
    %5776 = vmatmul.mubr.f32.gmra.mrb[0].mxu0 %v1899
    %v5777 = vpop.f32.mrb[0].mxu0
    %v5778 = vadd.f32 0.0, %v5777
    %v5779 = vpop.f32.mrb[0].mxu0
    %5780 = vmatprep.mubr.f32.mxu0 0.0
    %5781 = vmatmul.mubr.f32.gmra.mrb[0].mxu0 %v1902
    %v5782 = vpop.f32.mrb[0].mxu0
    %v5783 = vadd.f32 0.0, %v5782
    %v5784 = vpop.f32.mrb[0].mxu0
    %5785 = vmatprep.mubr.f32.mxu0 0.0
    %5786 = vmatmul.mubr.f32.gmra.mrb[0].mxu0 %v1905
    %v5787 = vpop.f32.mrb[0].mxu0
    %v5788 = vadd.f32 0.0, %v5787
    %v5789 = vpop.f32.mrb[0].mxu0
    %5790 = vmatprep.mubr.f32.mxu0 0.0
    %5791 = vmatmul.mubr.f32.gmra.mrb[0].mxu0 %v1908
    %v5792 = vpop.f32.mrb[0].mxu0
    %v5793 = vadd.f32 0.0, %v5792
    %v5794 = vpop.f32.mrb[0].mxu0
    %5795 = vmatprep.mubr.f32.mxu0 0.0
    %5796 = vmatmul.mubr.f32.gmra.mrb[0].mxu0 %v1911
    %v5797 = vpop.f32.mrb[0].mxu0
    %v5798 = vadd.f32 0.0, %v5797
    %v5799 = vpop.f32.mrb[0].mxu0
    %5800 = vmatprep.mubr.f32.mxu0 0.0
    %5801 = vmatmul.mubr.f32.gmra.mrb[0].mxu0 %v1914
    %v5802 = vpop.f32.mrb[0].mxu0
    %v5803 = vadd.f32 0.0, %v5802
    %v5804 = vpop.f32.mrb[0].mxu0
    %5805 = vmatprep.mubr.f32.mxu0 0.0
    %5806 = vmatmul.mubr.f32.gmra.mrb[0].mxu0 %v1917
    %v5807 = vpop.f32.mrb[0].mxu0
    %v5808 = vadd.f32 0.0, %v5807
    %v5809 = vpop.f32.mrb[0].mxu0
    %5810 = vmatprep.mubr.f32.mxu0 0.0
    %5811 = vmatmul.mubr.f32.gmra.mrb[0].mxu0 %v1920
    %v5812 = vpop.f32.mrb[0].mxu0
    %v5813 = vadd.f32 0.0, %v5812
    %v5814 = vpop.f32.mrb[0].mxu0
    %5815 = vdwg.mxu0
    %5816 = vmatprep.subr.mxu0 0.0
    %5817 = vmatpush1.msra.mxu0 %v5173
    %5818 = vmatprep.subr.mxu0 0.0
    %5819 = vmatpush1.msra.mxu0 %v5174
    %5820 = vmatprep.subr.mxu0 0.0
    %5821 = vmatpush1.msra.mxu0 %v5175
    %5822 = vmatprep.subr.mxu0 0.0
    %5823 = vmatpush1.msra.mxu0 %v5176
    %5824 = vmatprep.subr.mxu0 0.0
    %5825 = vmatpush1.msra.mxu0 %v5177
    %5826 = vmatprep.subr.mxu0 0.0
    %5827 = vmatpush1.msra.mxu0 %v5178
    %5828 = vmatprep.subr.mxu0 0.0
    %5829 = vmatpush1.msra.mxu0 %v5179
    %5830 = vmatprep.subr.mxu0 0.0
    %5831 = vmatpush1.msra.mxu0 %v5180
    %5832 = vmatprep.subr.mxu0 0.0
    %5833 = vmatpush1.msra.mxu0 0.0
    %5834 = vmatprep.subr.mxu0 0.0
    %5835 = vmatpush1.msra.mxu0 0.0
    %5836 = vmatprep.subr.mxu0 0.0
    %5837 = vmatpush1.msra.mxu0 0.0
    %5838 = vmatprep.subr.mxu0 0.0
    %5839 = vmatpush1.msra.mxu0 0.0
    %5840 = vmatprep.subr.mxu0 0.0
    %5841 = vmatpush1.msra.mxu0 0.0
    %5842 = vmatprep.subr.mxu0 0.0
    %5843 = vmatpush1.msra.mxu0 0.0
    %5844 = vmatprep.subr.mxu0 0.0
    %5845 = vmatpush1.msra.mxu0 0.0
    %5846 = vmatprep.subr.mxu0 0.0
    %5847 = vmatpush1.msra.mxu0 0.0
    %5848 = vmatprep.subr.mxu0 0.0
    %5849 = vmatpush1.msra.mxu0 0.0
    %5850 = vmatprep.subr.mxu0 0.0
    %5851 = vmatpush1.msra.mxu0 0.0
    %5852 = vmatprep.subr.mxu0 0.0
    %5853 = vmatpush1.msra.mxu0 0.0
    %5854 = vmatprep.subr.mxu0 0.0
    %5855 = vmatpush1.msra.mxu0 0.0
    %5856 = vmatprep.subr.mxu0 0.0
    %5857 = vmatpush1.msra.mxu0 0.0
    %5858 = vmatprep.subr.mxu0 0.0
    %5859 = vmatpush1.msra.mxu0 0.0
    %5860 = vmatprep.subr.mxu0 0.0
    %5861 = vmatpush1.msra.mxu0 0.0
    %5862 = vmatprep.subr.mxu0 0.0
    %5863 = vmatpush1.msra.mxu0 0.0
    %5864 = vmatprep.subr.mxu0 0.0
    %5865 = vmatpush1.msra.mxu0 0.0
    %5866 = vmatprep.subr.mxu0 0.0
    %5867 = vmatpush1.msra.mxu0 0.0
    %5868 = vmatprep.subr.mxu0 0.0
    %5869 = vmatpush1.msra.mxu0 0.0
    %5870 = vmatprep.subr.mxu0 0.0
    %5871 = vmatpush1.msra.mxu0 0.0
    %5872 = vmatprep.subr.mxu0 0.0
    %5873 = vmatpush1.msra.mxu0 0.0
    %5874 = vmatprep.subr.mxu0 0.0
    %5875 = vmatpush1.msra.mxu0 0.0
    %5876 = vmatprep.subr.mxu0 0.0
    %5877 = vmatpush1.msra.mxu0 0.0
    %5878 = vmatprep.subr.mxu0 0.0
    %5879 = vmatpush1.msra.mxu0 0.0
    %5880 = vmatprep.mubr.f32.mxu0 0.0
    %5881 = vmatmul.mubr.f32.gmra.mrb[0].mxu0 %v2028
    %v5882 = vpop.f32.mrb[0].mxu0
    %v5883 = vadd.f32 %v5778, %v5882
    %v5884 = vpop.f32.mrb[0].mxu0
    %5885 = vmatprep.mubr.f32.mxu0 0.0
    %5886 = vmatmul.mubr.f32.gmra.mrb[0].mxu0 %v2031
    %v5887 = vpop.f32.mrb[0].mxu0
    %v5888 = vadd.f32 %v5783, %v5887
    %v5889 = vpop.f32.mrb[0].mxu0
    %5890 = vmatprep.mubr.f32.mxu0 0.0
    %5891 = vmatmul.mubr.f32.gmra.mrb[0].mxu0 %v2034
    %v5892 = vpop.f32.mrb[0].mxu0
    %v5893 = vadd.f32 %v5788, %v5892
    %v5894 = vpop.f32.mrb[0].mxu0
    %5895 = vmatprep.mubr.f32.mxu0 0.0
    %5896 = vmatmul.mubr.f32.gmra.mrb[0].mxu0 %v2037
    %v5897 = vpop.f32.mrb[0].mxu0
    %v5898 = vadd.f32 %v5793, %v5897
    %v5899 = vpop.f32.mrb[0].mxu0
    %5900 = vmatprep.mubr.f32.mxu0 0.0
    %5901 = vmatmul.mubr.f32.gmra.mrb[0].mxu0 %v2040
    %v5902 = vpop.f32.mrb[0].mxu0
    %v5903 = vadd.f32 %v5798, %v5902
    %v5904 = vpop.f32.mrb[0].mxu0
    %5905 = vmatprep.mubr.f32.mxu0 0.0
    %5906 = vmatmul.mubr.f32.gmra.mrb[0].mxu0 %v2043
    %v5907 = vpop.f32.mrb[0].mxu0
    %v5908 = vadd.f32 %v5803, %v5907
    %v5909 = vpop.f32.mrb[0].mxu0
    %5910 = vmatprep.mubr.f32.mxu0 0.0
    %5911 = vmatmul.mubr.f32.gmra.mrb[0].mxu0 %v2046
    %v5912 = vpop.f32.mrb[0].mxu0
    %v5913 = vadd.f32 %v5808, %v5912
    %v5914 = vpop.f32.mrb[0].mxu0
    %5915 = vmatprep.mubr.f32.mxu0 0.0
    %5916 = vmatmul.mubr.f32.gmra.mrb[0].mxu0 %v2049
    %v5917 = vpop.f32.mrb[0].mxu0
    %v5918 = vadd.f32 %v5813, %v5917
    %v5919 = vpop.f32.mrb[0].mxu0
    %5920 = vdwg.mxu0
    %v5921 = vld [vmem:[%s1575] sm:$0xff]
    %v5922 = vld [vmem:[%s1575 + $0x8] sm:$0xff]
    %v5923 = vld [vmem:[%s1575 + $0x10] sm:$0xff]
    %v5924 = vld [vmem:[%s1575 + $0x18] sm:$0xff]
    %v5925 = vld [vmem:[%s1575 + $0x20] sm:$0xff]
    %v5926 = vld [vmem:[%s1575 + $0x28] sm:$0xff]
    %v5927 = vld [vmem:[%s1575 + $0x30] sm:$0xff]
    %v5928 = vld [vmem:[%s1575 + $0x38] sm:$0xff]
    %5929 = vmatprep.subr.mxu0 0.0
    %5930 = vmatpush1.msra.mxu0 %v5921
    %5931 = vmatprep.subr.mxu0 0.0
    %5932 = vmatpush1.msra.mxu0 %v5922
    %5933 = vmatprep.subr.mxu0 0.0
    %5934 = vmatpush1.msra.mxu0 %v5923
    %5935 = vmatprep.subr.mxu0 0.0
    %5936 = vmatpush1.msra.mxu0 %v5924
    %5937 = vmatprep.subr.mxu0 0.0
    %5938 = vmatpush1.msra.mxu0 %v5925
    %5939 = vmatprep.subr.mxu0 0.0
    %5940 = vmatpush1.msra.mxu0 %v5926
    %5941 = vmatprep.subr.mxu0 0.0
    %5942 = vmatpush1.msra.mxu0 %v5927
    %5943 = vmatprep.subr.mxu0 0.0
    %5944 = vmatpush1.msra.mxu0 %v5928
    %5945 = vmatprep.subr.mxu0 0.0
    %5946 = vmatpush1.msra.mxu0 0.0
    %5947 = vmatprep.subr.mxu0 0.0
    %5948 = vmatpush1.msra.mxu0 0.0
    %5949 = vmatprep.subr.mxu0 0.0
    %5950 = vmatpush1.msra.mxu0 0.0
    %5951 = vmatprep.subr.mxu0 0.0
    %5952 = vmatpush1.msra.mxu0 0.0
    %5953 = vmatprep.subr.mxu0 0.0
    %5954 = vmatpush1.msra.mxu0 0.0
    %5955 = vmatprep.subr.mxu0 0.0
    %5956 = vmatpush1.msra.mxu0 0.0
    %5957 = vmatprep.subr.mxu0 0.0
    %5958 = vmatpush1.msra.mxu0 0.0
    %5959 = vmatprep.subr.mxu0 0.0
    %5960 = vmatpush1.msra.mxu0 0.0
    %5961 = vmatprep.subr.mxu0 0.0
    %5962 = vmatpush1.msra.mxu0 0.0
    %5963 = vmatprep.subr.mxu0 0.0
    %5964 = vmatpush1.msra.mxu0 0.0
    %5965 = vmatprep.subr.mxu0 0.0
    %5966 = vmatpush1.msra.mxu0 0.0
    %5967 = vmatprep.subr.mxu0 0.0
    %5968 = vmatpush1.msra.mxu0 0.0
    %5969 = vmatprep.subr.mxu0 0.0
    %5970 = vmatpush1.msra.mxu0 0.0
    %5971 = vmatprep.subr.mxu0 0.0
    %5972 = vmatpush1.msra.mxu0 0.0
    %5973 = vmatprep.subr.mxu0 0.0
    %5974 = vmatpush1.msra.mxu0 0.0
    %5975 = vmatprep.subr.mxu0 0.0
    %5976 = vmatpush1.msra.mxu0 0.0
    %5977 = vmatprep.subr.mxu0 0.0
    %5978 = vmatpush1.msra.mxu0 0.0
    %5979 = vmatprep.subr.mxu0 0.0
    %5980 = vmatpush1.msra.mxu0 0.0
    %5981 = vmatprep.subr.mxu0 0.0
    %5982 = vmatpush1.msra.mxu0 0.0
    %5983 = vmatprep.subr.mxu0 0.0
    %5984 = vmatpush1.msra.mxu0 0.0
    %5985 = vmatprep.subr.mxu0 0.0
    %5986 = vmatpush1.msra.mxu0 0.0
    %5987 = vmatprep.subr.mxu0 0.0
    %5988 = vmatpush1.msra.mxu0 0.0
    %5989 = vmatprep.subr.mxu0 0.0
    %5990 = vmatpush1.msra.mxu0 0.0
    %5991 = vmatprep.subr.mxu0 0.0
    %5992 = vmatpush1.msra.mxu0 0.0
    %5993 = vmatprep.mubr.f32.mxu0 0.0
    %5994 = vmatmul.mubr.f32.gmra.mrb[0].mxu0 %v2165
    %v5995 = vpop.f32.mrb[0].mxu0
    %v5996 = vadd.f32 0.0, %v5995
    %v5997 = vpop.f32.mrb[0].mxu0
    %5998 = vmatprep.mubr.f32.mxu0 0.0
    %5999 = vmatmul.mubr.f32.gmra.mrb[0].mxu0 %v2168
    %v6000 = vpop.f32.mrb[0].mxu0
    %v6001 = vadd.f32 0.0, %v6000
    %v6002 = vpop.f32.mrb[0].mxu0
    %6003 = vmatprep.mubr.f32.mxu0 0.0
    %6004 = vmatmul.mubr.f32.gmra.mrb[0].mxu0 %v2171
    %v6005 = vpop.f32.mrb[0].mxu0
    %v6006 = vadd.f32 0.0, %v6005
    %v6007 = vpop.f32.mrb[0].mxu0
    %6008 = vmatprep.mubr.f32.mxu0 0.0
    %6009 = vmatmul.mubr.f32.gmra.mrb[0].mxu0 %v2174
    %v6010 = vpop.f32.mrb[0].mxu0
    %v6011 = vadd.f32 0.0, %v6010
    %v6012 = vpop.f32.mrb[0].mxu0
    %6013 = vmatprep.mubr.f32.mxu0 0.0
    %6014 = vmatmul.mubr.f32.gmra.mrb[0].mxu0 %v2177
    %v6015 = vpop.f32.mrb[0].mxu0
    %v6016 = vadd.f32 0.0, %v6015
    %v6017 = vpop.f32.mrb[0].mxu0
    %6018 = vmatprep.mubr.f32.mxu0 0.0
    %6019 = vmatmul.mubr.f32.gmra.mrb[0].mxu0 %v2180
    %v6020 = vpop.f32.mrb[0].mxu0
    %v6021 = vadd.f32 0.0, %v6020
    %v6022 = vpop.f32.mrb[0].mxu0
    %6023 = vmatprep.mubr.f32.mxu0 0.0
    %6024 = vmatmul.mubr.f32.gmra.mrb[0].mxu0 %v2183
    %v6025 = vpop.f32.mrb[0].mxu0
    %v6026 = vadd.f32 0.0, %v6025
    %v6027 = vpop.f32.mrb[0].mxu0
    %6028 = vmatprep.mubr.f32.mxu0 0.0
    %6029 = vmatmul.mubr.f32.gmra.mrb[0].mxu0 %v2186
    %v6030 = vpop.f32.mrb[0].mxu0
    %v6031 = vadd.f32 0.0, %v6030
    %v6032 = vpop.f32.mrb[0].mxu0
    %6033 = vdwg.mxu0
    %v6034 = vadd.f32 %v5883, %v5996
    %v6035 = vadd.f32 %v5888, %v6001
    %v6036 = vadd.f32 %v5893, %v6006
    %v6037 = vadd.f32 %v5898, %v6011
    %v6038 = vadd.f32 %v5903, %v6016
    %v6039 = vadd.f32 %v5908, %v6021
    %v6040 = vadd.f32 %v5913, %v6026
    %v6041 = vadd.f32 %v5918, %v6031
    %v6042 = vadd.f32 %v6034, %v126
    %v6043 = vadd.f32 %v6035, %v131
    %v6044 = vadd.f32 %v6036, %v136
    %v6045 = vadd.f32 %v6037, %v141
    %v6046 = vadd.f32 %v6038, %v146
    %v6047 = vadd.f32 %v6039, %v151
    %v6048 = vadd.f32 %v6040, %v156
    %v6049 = vadd.f32 %v6041, %v161
    %v6050 = vmax.f32 %v6042, 0.0
    %v6051 = vmax.f32 %v6043, 0.0
    %v6052 = vmax.f32 %v6044, 0.0
    %v6053 = vmax.f32 %v6045, 0.0
    %v6054 = vmax.f32 %v6046, 0.0
    %v6055 = vmax.f32 %v6047, 0.0
    %v6056 = vmax.f32 %v6048, 0.0
    %v6057 = vmax.f32 %v6049, 0.0
    %v6058 = vadd.f32 %v6050, %v6051
    %v6059 = vadd.f32 %v6058, %v6052
    %v6060 = vadd.f32 %v6059, %v6053
    %v6061 = vadd.f32 %v6060, %v6054
    %v6062 = vadd.f32 %v6061, %v6055
    %v6063 = vadd.f32 %v6062, %v6056
    %v6064 = vadd.f32 %v6063, %v6057
    %v6065 = vrot.slane %v6064, 4
    %v6066 = vadd.f32 %v6064, %v6065
    %v6067 = vrot.slane %v6066, 2
    %v6068 = vadd.f32 %v6066, %v6067
    %v6069 = vrot.slane %v6068, 1
    %v6070 = vadd.f32 %v6068, %v6069
    %v6071 = vmul.f32 %v6070, %v2330
    %v6072 = vmax.f32 %v6050, %v6054
    %v6073 = vmax.f32 %v6051, %v6055
    %v6074 = vmax.f32 %v6052, %v6056
    %v6075 = vmax.f32 %v6053, %v6057
    %v6076 = vmax.f32 %v6072, %v6073
    %v6077 = vmax.f32 %v6074, %v6075
    %v6078 = vmax.f32 %v6076, %v6077
    %v6079 = vrot.slane %v6078, 4
    %v6080 = vmax.f32 %v6078, %v6079
    %v6081 = vrot.slane %v6080, 2
    %v6082 = vmax.f32 %v6080, %v6081
    %v6083 = vrot.slane %v6082, 1
    %v6084 = vmax.f32 %v6082, %v6083
    %6085 = vmatprep.subr.mxu0 0.0
    %6086 = vmatpush1.msra.mxu0 %v5921
    %6087 = vmatprep.subr.mxu0 0.0
    %6088 = vmatpush1.msra.mxu0 %v5922
    %6089 = vmatprep.subr.mxu0 0.0
    %6090 = vmatpush1.msra.mxu0 %v5923
    %6091 = vmatprep.subr.mxu0 0.0
    %6092 = vmatpush1.msra.mxu0 %v5924
    %6093 = vmatprep.subr.mxu0 0.0
    %6094 = vmatpush1.msra.mxu0 %v5925
    %6095 = vmatprep.subr.mxu0 0.0
    %6096 = vmatpush1.msra.mxu0 %v5926
    %6097 = vmatprep.subr.mxu0 0.0
    %6098 = vmatpush1.msra.mxu0 %v5927
    %6099 = vmatprep.subr.mxu0 0.0
    %6100 = vmatpush1.msra.mxu0 %v5928
    %6101 = vmatprep.subr.mxu0 0.0
    %6102 = vmatpush1.msra.mxu0 0.0
    %6103 = vmatprep.subr.mxu0 0.0
    %6104 = vmatpush1.msra.mxu0 0.0
    %6105 = vmatprep.subr.mxu0 0.0
    %6106 = vmatpush1.msra.mxu0 0.0
    %6107 = vmatprep.subr.mxu0 0.0
    %6108 = vmatpush1.msra.mxu0 0.0
    %6109 = vmatprep.subr.mxu0 0.0
    %6110 = vmatpush1.msra.mxu0 0.0
    %6111 = vmatprep.subr.mxu0 0.0
    %6112 = vmatpush1.msra.mxu0 0.0
    %6113 = vmatprep.subr.mxu0 0.0
    %6114 = vmatpush1.msra.mxu0 0.0
    %6115 = vmatprep.subr.mxu0 0.0
    %6116 = vmatpush1.msra.mxu0 0.0
    %6117 = vmatprep.subr.mxu0 0.0
    %6118 = vmatpush1.msra.mxu0 0.0
    %6119 = vmatprep.subr.mxu0 0.0
    %6120 = vmatpush1.msra.mxu0 0.0
    %6121 = vmatprep.subr.mxu0 0.0
    %6122 = vmatpush1.msra.mxu0 0.0
    %6123 = vmatprep.subr.mxu0 0.0
    %6124 = vmatpush1.msra.mxu0 0.0
    %6125 = vmatprep.subr.mxu0 0.0
    %6126 = vmatpush1.msra.mxu0 0.0
    %6127 = vmatprep.subr.mxu0 0.0
    %6128 = vmatpush1.msra.mxu0 0.0
    %6129 = vmatprep.subr.mxu0 0.0
    %6130 = vmatpush1.msra.mxu0 0.0
    %6131 = vmatprep.subr.mxu0 0.0
    %6132 = vmatpush1.msra.mxu0 0.0
    %6133 = vmatprep.subr.mxu0 0.0
    %6134 = vmatpush1.msra.mxu0 0.0
    %6135 = vmatprep.subr.mxu0 0.0
    %6136 = vmatpush1.msra.mxu0 0.0
    %6137 = vmatprep.subr.mxu0 0.0
    %6138 = vmatpush1.msra.mxu0 0.0
    %6139 = vmatprep.subr.mxu0 0.0
    %6140 = vmatpush1.msra.mxu0 0.0
    %6141 = vmatprep.subr.mxu0 0.0
    %6142 = vmatpush1.msra.mxu0 0.0
    %6143 = vmatprep.subr.mxu0 0.0
    %6144 = vmatpush1.msra.mxu0 0.0
    %6145 = vmatprep.subr.mxu0 0.0
    %6146 = vmatpush1.msra.mxu0 0.0
    %6147 = vmatprep.subr.mxu0 0.0
    %6148 = vmatpush1.msra.mxu0 0.0
    %6149 = vmatprep.mubr.f32.mxu0 0.0
    %6150 = vmatmul.mubr.f32.gmra.mrb[0].mxu0 %v1899
    %v6151 = vpop.f32.mrb[0].mxu0
    %v6152 = vadd.f32 0.0, %v6151
    %v6153 = vpop.f32.mrb[0].mxu0
    %6154 = vmatprep.mubr.f32.mxu0 0.0
    %6155 = vmatmul.mubr.f32.gmra.mrb[0].mxu0 %v1902
    %v6156 = vpop.f32.mrb[0].mxu0
    %v6157 = vadd.f32 0.0, %v6156
    %v6158 = vpop.f32.mrb[0].mxu0
    %6159 = vmatprep.mubr.f32.mxu0 0.0
    %6160 = vmatmul.mubr.f32.gmra.mrb[0].mxu0 %v1905
    %v6161 = vpop.f32.mrb[0].mxu0
    %v6162 = vadd.f32 0.0, %v6161
    %v6163 = vpop.f32.mrb[0].mxu0
    %6164 = vmatprep.mubr.f32.mxu0 0.0
    %6165 = vmatmul.mubr.f32.gmra.mrb[0].mxu0 %v1908
    %v6166 = vpop.f32.mrb[0].mxu0
    %v6167 = vadd.f32 0.0, %v6166
    %v6168 = vpop.f32.mrb[0].mxu0
    %6169 = vmatprep.mubr.f32.mxu0 0.0
    %6170 = vmatmul.mubr.f32.gmra.mrb[0].mxu0 %v1911
    %v6171 = vpop.f32.mrb[0].mxu0
    %v6172 = vadd.f32 0.0, %v6171
    %v6173 = vpop.f32.mrb[0].mxu0
    %6174 = vmatprep.mubr.f32.mxu0 0.0
    %6175 = vmatmul.mubr.f32.gmra.mrb[0].mxu0 %v1914
    %v6176 = vpop.f32.mrb[0].mxu0
    %v6177 = vadd.f32 0.0, %v6176
    %v6178 = vpop.f32.mrb[0].mxu0
    %6179 = vmatprep.mubr.f32.mxu0 0.0
    %6180 = vmatmul.mubr.f32.gmra.mrb[0].mxu0 %v1917
    %v6181 = vpop.f32.mrb[0].mxu0
    %v6182 = vadd.f32 0.0, %v6181
    %v6183 = vpop.f32.mrb[0].mxu0
    %6184 = vmatprep.mubr.f32.mxu0 0.0
    %6185 = vmatmul.mubr.f32.gmra.mrb[0].mxu0 %v1920
    %v6186 = vpop.f32.mrb[0].mxu0
    %v6187 = vadd.f32 0.0, %v6186
    %v6188 = vpop.f32.mrb[0].mxu0
    %6189 = vdwg.mxu0
    %6190 = vmatprep.subr.mxu0 0.0
    %6191 = vmatpush1.msra.mxu0 %v5547
    %6192 = vmatprep.subr.mxu0 0.0
    %6193 = vmatpush1.msra.mxu0 %v5548
    %6194 = vmatprep.subr.mxu0 0.0
    %6195 = vmatpush1.msra.mxu0 %v5549
    %6196 = vmatprep.subr.mxu0 0.0
    %6197 = vmatpush1.msra.mxu0 %v5550
    %6198 = vmatprep.subr.mxu0 0.0
    %6199 = vmatpush1.msra.mxu0 %v5551
    %6200 = vmatprep.subr.mxu0 0.0
    %6201 = vmatpush1.msra.mxu0 %v5552
    %6202 = vmatprep.subr.mxu0 0.0
    %6203 = vmatpush1.msra.mxu0 %v5553
    %6204 = vmatprep.subr.mxu0 0.0
    %6205 = vmatpush1.msra.mxu0 %v5554
    %6206 = vmatprep.subr.mxu0 0.0
    %6207 = vmatpush1.msra.mxu0 0.0
    %6208 = vmatprep.subr.mxu0 0.0
    %6209 = vmatpush1.msra.mxu0 0.0
    %6210 = vmatprep.subr.mxu0 0.0
    %6211 = vmatpush1.msra.mxu0 0.0
    %6212 = vmatprep.subr.mxu0 0.0
    %6213 = vmatpush1.msra.mxu0 0.0
    %6214 = vmatprep.subr.mxu0 0.0
    %6215 = vmatpush1.msra.mxu0 0.0
    %6216 = vmatprep.subr.mxu0 0.0
    %6217 = vmatpush1.msra.mxu0 0.0
    %6218 = vmatprep.subr.mxu0 0.0
    %6219 = vmatpush1.msra.mxu0 0.0
    %6220 = vmatprep.subr.mxu0 0.0
    %6221 = vmatpush1.msra.mxu0 0.0
    %6222 = vmatprep.subr.mxu0 0.0
    %6223 = vmatpush1.msra.mxu0 0.0
    %6224 = vmatprep.subr.mxu0 0.0
    %6225 = vmatpush1.msra.mxu0 0.0
    %6226 = vmatprep.subr.mxu0 0.0
    %6227 = vmatpush1.msra.mxu0 0.0
    %6228 = vmatprep.subr.mxu0 0.0
    %6229 = vmatpush1.msra.mxu0 0.0
    %6230 = vmatprep.subr.mxu0 0.0
    %6231 = vmatpush1.msra.mxu0 0.0
    %6232 = vmatprep.subr.mxu0 0.0
    %6233 = vmatpush1.msra.mxu0 0.0
    %6234 = vmatprep.subr.mxu0 0.0
    %6235 = vmatpush1.msra.mxu0 0.0
    %6236 = vmatprep.subr.mxu0 0.0
    %6237 = vmatpush1.msra.mxu0 0.0
    %6238 = vmatprep.subr.mxu0 0.0
    %6239 = vmatpush1.msra.mxu0 0.0
    %6240 = vmatprep.subr.mxu0 0.0
    %6241 = vmatpush1.msra.mxu0 0.0
    %6242 = vmatprep.subr.mxu0 0.0
    %6243 = vmatpush1.msra.mxu0 0.0
    %6244 = vmatprep.subr.mxu0 0.0
    %6245 = vmatpush1.msra.mxu0 0.0
    %6246 = vmatprep.subr.mxu0 0.0
    %6247 = vmatpush1.msra.mxu0 0.0
    %6248 = vmatprep.subr.mxu0 0.0
    %6249 = vmatpush1.msra.mxu0 0.0
    %6250 = vmatprep.subr.mxu0 0.0
    %6251 = vmatpush1.msra.mxu0 0.0
    %6252 = vmatprep.subr.mxu0 0.0
    %6253 = vmatpush1.msra.mxu0 0.0
    %6254 = vmatprep.mubr.f32.mxu0 0.0
    %6255 = vmatmul.mubr.f32.gmra.mrb[0].mxu0 %v2028
    %v6256 = vpop.f32.mrb[0].mxu0
    %v6257 = vadd.f32 %v6152, %v6256
    %v6258 = vpop.f32.mrb[0].mxu0
    %6259 = vmatprep.mubr.f32.mxu0 0.0
    %6260 = vmatmul.mubr.f32.gmra.mrb[0].mxu0 %v2031
    %v6261 = vpop.f32.mrb[0].mxu0
    %v6262 = vadd.f32 %v6157, %v6261
    %v6263 = vpop.f32.mrb[0].mxu0
    %6264 = vmatprep.mubr.f32.mxu0 0.0
    %6265 = vmatmul.mubr.f32.gmra.mrb[0].mxu0 %v2034
    %v6266 = vpop.f32.mrb[0].mxu0
    %v6267 = vadd.f32 %v6162, %v6266
    %v6268 = vpop.f32.mrb[0].mxu0
    %6269 = vmatprep.mubr.f32.mxu0 0.0
    %6270 = vmatmul.mubr.f32.gmra.mrb[0].mxu0 %v2037
    %v6271 = vpop.f32.mrb[0].mxu0
    %v6272 = vadd.f32 %v6167, %v6271
    %v6273 = vpop.f32.mrb[0].mxu0
    %6274 = vmatprep.mubr.f32.mxu0 0.0
    %6275 = vmatmul.mubr.f32.gmra.mrb[0].mxu0 %v2040
    %v6276 = vpop.f32.mrb[0].mxu0
    %v6277 = vadd.f32 %v6172, %v6276
    %v6278 = vpop.f32.mrb[0].mxu0
    %6279 = vmatprep.mubr.f32.mxu0 0.0
    %6280 = vmatmul.mubr.f32.gmra.mrb[0].mxu0 %v2043
    %v6281 = vpop.f32.mrb[0].mxu0
    %v6282 = vadd.f32 %v6177, %v6281
    %v6283 = vpop.f32.mrb[0].mxu0
    %6284 = vmatprep.mubr.f32.mxu0 0.0
    %6285 = vmatmul.mubr.f32.gmra.mrb[0].mxu0 %v2046
    %v6286 = vpop.f32.mrb[0].mxu0
    %v6287 = vadd.f32 %v6182, %v6286
    %v6288 = vpop.f32.mrb[0].mxu0
    %6289 = vmatprep.mubr.f32.mxu0 0.0
    %6290 = vmatmul.mubr.f32.gmra.mrb[0].mxu0 %v2049
    %v6291 = vpop.f32.mrb[0].mxu0
    %v6292 = vadd.f32 %v6187, %v6291
    %v6293 = vpop.f32.mrb[0].mxu0
    %6294 = vdwg.mxu0
    %v6295 = vld [vmem:[%s1674] sm:$0xff]
    %v6296 = vld [vmem:[%s1674 + $0x8] sm:$0xff]
    %v6297 = vld [vmem:[%s1674 + $0x10] sm:$0xff]
    %v6298 = vld [vmem:[%s1674 + $0x18] sm:$0xff]
    %v6299 = vld [vmem:[%s1674 + $0x20] sm:$0xff]
    %v6300 = vld [vmem:[%s1674 + $0x28] sm:$0xff]
    %v6301 = vld [vmem:[%s1674 + $0x30] sm:$0xff]
    %v6302 = vld [vmem:[%s1674 + $0x38] sm:$0xff]
    %6303 = vmatprep.subr.mxu0 0.0
    %6304 = vmatpush1.msra.mxu0 %v6295
    %6305 = vmatprep.subr.mxu0 0.0
    %6306 = vmatpush1.msra.mxu0 %v6296
    %6307 = vmatprep.subr.mxu0 0.0
    %6308 = vmatpush1.msra.mxu0 %v6297
    %6309 = vmatprep.subr.mxu0 0.0
    %6310 = vmatpush1.msra.mxu0 %v6298
    %6311 = vmatprep.subr.mxu0 0.0
    %6312 = vmatpush1.msra.mxu0 %v6299
    %6313 = vmatprep.subr.mxu0 0.0
    %6314 = vmatpush1.msra.mxu0 %v6300
    %6315 = vmatprep.subr.mxu0 0.0
    %6316 = vmatpush1.msra.mxu0 %v6301
    %6317 = vmatprep.subr.mxu0 0.0
    %6318 = vmatpush1.msra.mxu0 %v6302
    %6319 = vmatprep.subr.mxu0 0.0
    %6320 = vmatpush1.msra.mxu0 0.0
    %6321 = vmatprep.subr.mxu0 0.0
    %6322 = vmatpush1.msra.mxu0 0.0
    %6323 = vmatprep.subr.mxu0 0.0
    %6324 = vmatpush1.msra.mxu0 0.0
    %6325 = vmatprep.subr.mxu0 0.0
    %6326 = vmatpush1.msra.mxu0 0.0
    %6327 = vmatprep.subr.mxu0 0.0
    %6328 = vmatpush1.msra.mxu0 0.0
    %6329 = vmatprep.subr.mxu0 0.0
    %6330 = vmatpush1.msra.mxu0 0.0
    %6331 = vmatprep.subr.mxu0 0.0
    %6332 = vmatpush1.msra.mxu0 0.0
    %6333 = vmatprep.subr.mxu0 0.0
    %6334 = vmatpush1.msra.mxu0 0.0
    %6335 = vmatprep.subr.mxu0 0.0
    %6336 = vmatpush1.msra.mxu0 0.0
    %6337 = vmatprep.subr.mxu0 0.0
    %6338 = vmatpush1.msra.mxu0 0.0
    %6339 = vmatprep.subr.mxu0 0.0
    %6340 = vmatpush1.msra.mxu0 0.0
    %6341 = vmatprep.subr.mxu0 0.0
    %6342 = vmatpush1.msra.mxu0 0.0
    %6343 = vmatprep.subr.mxu0 0.0
    %6344 = vmatpush1.msra.mxu0 0.0
    %6345 = vmatprep.subr.mxu0 0.0
    %6346 = vmatpush1.msra.mxu0 0.0
    %6347 = vmatprep.subr.mxu0 0.0
    %6348 = vmatpush1.msra.mxu0 0.0
    %6349 = vmatprep.subr.mxu0 0.0
    %6350 = vmatpush1.msra.mxu0 0.0
    %6351 = vmatprep.subr.mxu0 0.0
    %6352 = vmatpush1.msra.mxu0 0.0
    %6353 = vmatprep.subr.mxu0 0.0
    %6354 = vmatpush1.msra.mxu0 0.0
    %6355 = vmatprep.subr.mxu0 0.0
    %6356 = vmatpush1.msra.mxu0 0.0
    %6357 = vmatprep.subr.mxu0 0.0
    %6358 = vmatpush1.msra.mxu0 0.0
    %6359 = vmatprep.subr.mxu0 0.0
    %6360 = vmatpush1.msra.mxu0 0.0
    %6361 = vmatprep.subr.mxu0 0.0
    %6362 = vmatpush1.msra.mxu0 0.0
    %6363 = vmatprep.subr.mxu0 0.0
    %6364 = vmatpush1.msra.mxu0 0.0
    %6365 = vmatprep.subr.mxu0 0.0
    %6366 = vmatpush1.msra.mxu0 0.0
    %6367 = vmatprep.mubr.f32.mxu0 0.0
    %6368 = vmatmul.mubr.f32.gmra.mrb[0].mxu0 %v2165
    %v6369 = vpop.f32.mrb[0].mxu0
    %v6370 = vadd.f32 0.0, %v6369
    %v6371 = vpop.f32.mrb[0].mxu0
    %6372 = vmatprep.mubr.f32.mxu0 0.0
    %6373 = vmatmul.mubr.f32.gmra.mrb[0].mxu0 %v2168
    %v6374 = vpop.f32.mrb[0].mxu0
    %v6375 = vadd.f32 0.0, %v6374
    %v6376 = vpop.f32.mrb[0].mxu0
    %6377 = vmatprep.mubr.f32.mxu0 0.0
    %6378 = vmatmul.mubr.f32.gmra.mrb[0].mxu0 %v2171
    %v6379 = vpop.f32.mrb[0].mxu0
    %v6380 = vadd.f32 0.0, %v6379
    %v6381 = vpop.f32.mrb[0].mxu0
    %6382 = vmatprep.mubr.f32.mxu0 0.0
    %6383 = vmatmul.mubr.f32.gmra.mrb[0].mxu0 %v2174
    %v6384 = vpop.f32.mrb[0].mxu0
    %v6385 = vadd.f32 0.0, %v6384
    %v6386 = vpop.f32.mrb[0].mxu0
    %6387 = vmatprep.mubr.f32.mxu0 0.0
    %6388 = vmatmul.mubr.f32.gmra.mrb[0].mxu0 %v2177
    %v6389 = vpop.f32.mrb[0].mxu0
    %v6390 = vadd.f32 0.0, %v6389
    %v6391 = vpop.f32.mrb[0].mxu0
    %6392 = vmatprep.mubr.f32.mxu0 0.0
    %6393 = vmatmul.mubr.f32.gmra.mrb[0].mxu0 %v2180
    %v6394 = vpop.f32.mrb[0].mxu0
    %v6395 = vadd.f32 0.0, %v6394
    %v6396 = vpop.f32.mrb[0].mxu0
    %6397 = vmatprep.mubr.f32.mxu0 0.0
    %6398 = vmatmul.mubr.f32.gmra.mrb[0].mxu0 %v2183
    %v6399 = vpop.f32.mrb[0].mxu0
    %v6400 = vadd.f32 0.0, %v6399
    %v6401 = vpop.f32.mrb[0].mxu0
    %6402 = vmatprep.mubr.f32.mxu0 0.0
    %6403 = vmatmul.mubr.f32.gmra.mrb[0].mxu0 %v2186
    %v6404 = vpop.f32.mrb[0].mxu0
    %v6405 = vadd.f32 0.0, %v6404
    %v6406 = vpop.f32.mrb[0].mxu0
    %6407 = vdwg.mxu0
    %v6408 = vadd.f32 %v6257, %v6370
    %v6409 = vadd.f32 %v6262, %v6375
    %v6410 = vadd.f32 %v6267, %v6380
    %v6411 = vadd.f32 %v6272, %v6385
    %v6412 = vadd.f32 %v6277, %v6390
    %v6413 = vadd.f32 %v6282, %v6395
    %v6414 = vadd.f32 %v6287, %v6400
    %v6415 = vadd.f32 %v6292, %v6405
    %v6416 = vadd.f32 %v6408, %v126
    %v6417 = vadd.f32 %v6409, %v131
    %v6418 = vadd.f32 %v6410, %v136
    %v6419 = vadd.f32 %v6411, %v141
    %v6420 = vadd.f32 %v6412, %v146
    %v6421 = vadd.f32 %v6413, %v151
    %v6422 = vadd.f32 %v6414, %v156
    %v6423 = vadd.f32 %v6415, %v161
    %v6424 = vmax.f32 %v6416, 0.0
    %v6425 = vmax.f32 %v6417, 0.0
    %v6426 = vmax.f32 %v6418, 0.0
    %v6427 = vmax.f32 %v6419, 0.0
    %v6428 = vmax.f32 %v6420, 0.0
    %v6429 = vmax.f32 %v6421, 0.0
    %v6430 = vmax.f32 %v6422, 0.0
    %v6431 = vmax.f32 %v6423, 0.0
    %v6432 = vadd.f32 %v6424, %v6425
    %v6433 = vadd.f32 %v6432, %v6426
    %v6434 = vadd.f32 %v6433, %v6427
    %v6435 = vadd.f32 %v6434, %v6428
    %v6436 = vadd.f32 %v6435, %v6429
    %v6437 = vadd.f32 %v6436, %v6430
    %v6438 = vadd.f32 %v6437, %v6431
    %v6439 = vrot.slane %v6438, 4
    %v6440 = vadd.f32 %v6438, %v6439
    %v6441 = vrot.slane %v6440, 2
    %v6442 = vadd.f32 %v6440, %v6441
    %v6443 = vrot.slane %v6442, 1
    %v6444 = vadd.f32 %v6442, %v6443
    %v6445 = vmul.f32 %v6444, %v2330
    %v6446 = vmax.f32 %v6424, %v6428
    %v6447 = vmax.f32 %v6425, %v6429
    %v6448 = vmax.f32 %v6426, %v6430
    %v6449 = vmax.f32 %v6427, %v6431
    %v6450 = vmax.f32 %v6446, %v6447
    %v6451 = vmax.f32 %v6448, %v6449
    %v6452 = vmax.f32 %v6450, %v6451
    %v6453 = vrot.slane %v6452, 4
    %v6454 = vmax.f32 %v6452, %v6453
    %v6455 = vrot.slane %v6454, 2
    %v6456 = vmax.f32 %v6454, %v6455
    %v6457 = vrot.slane %v6456, 1
    %v6458 = vmax.f32 %v6456, %v6457
    %6459 = vmatprep.subr.mxu0 0.0
    %6460 = vmatpush1.msra.mxu0 %v6295
    %6461 = vmatprep.subr.mxu0 0.0
    %6462 = vmatpush1.msra.mxu0 %v6296
    %6463 = vmatprep.subr.mxu0 0.0
    %6464 = vmatpush1.msra.mxu0 %v6297
    %6465 = vmatprep.subr.mxu0 0.0
    %6466 = vmatpush1.msra.mxu0 %v6298
    %6467 = vmatprep.subr.mxu0 0.0
    %6468 = vmatpush1.msra.mxu0 %v6299
    %6469 = vmatprep.subr.mxu0 0.0
    %6470 = vmatpush1.msra.mxu0 %v6300
    %6471 = vmatprep.subr.mxu0 0.0
    %6472 = vmatpush1.msra.mxu0 %v6301
    %6473 = vmatprep.subr.mxu0 0.0
    %6474 = vmatpush1.msra.mxu0 %v6302
    %6475 = vmatprep.subr.mxu0 0.0
    %6476 = vmatpush1.msra.mxu0 0.0
    %6477 = vmatprep.subr.mxu0 0.0
    %6478 = vmatpush1.msra.mxu0 0.0
    %6479 = vmatprep.subr.mxu0 0.0
    %6480 = vmatpush1.msra.mxu0 0.0
    %6481 = vmatprep.subr.mxu0 0.0
    %6482 = vmatpush1.msra.mxu0 0.0
    %6483 = vmatprep.subr.mxu0 0.0
    %6484 = vmatpush1.msra.mxu0 0.0
    %6485 = vmatprep.subr.mxu0 0.0
    %6486 = vmatpush1.msra.mxu0 0.0
    %6487 = vmatprep.subr.mxu0 0.0
    %6488 = vmatpush1.msra.mxu0 0.0
    %6489 = vmatprep.subr.mxu0 0.0
    %6490 = vmatpush1.msra.mxu0 0.0
    %6491 = vmatprep.subr.mxu0 0.0
    %6492 = vmatpush1.msra.mxu0 0.0
    %6493 = vmatprep.subr.mxu0 0.0
    %6494 = vmatpush1.msra.mxu0 0.0
    %6495 = vmatprep.subr.mxu0 0.0
    %6496 = vmatpush1.msra.mxu0 0.0
    %6497 = vmatprep.subr.mxu0 0.0
    %6498 = vmatpush1.msra.mxu0 0.0
    %6499 = vmatprep.subr.mxu0 0.0
    %6500 = vmatpush1.msra.mxu0 0.0
    %6501 = vmatprep.subr.mxu0 0.0
    %6502 = vmatpush1.msra.mxu0 0.0
    %6503 = vmatprep.subr.mxu0 0.0
    %6504 = vmatpush1.msra.mxu0 0.0
    %6505 = vmatprep.subr.mxu0 0.0
    %6506 = vmatpush1.msra.mxu0 0.0
    %6507 = vmatprep.subr.mxu0 0.0
    %6508 = vmatpush1.msra.mxu0 0.0
    %6509 = vmatprep.subr.mxu0 0.0
    %6510 = vmatpush1.msra.mxu0 0.0
    %6511 = vmatprep.subr.mxu0 0.0
    %6512 = vmatpush1.msra.mxu0 0.0
    %6513 = vmatprep.subr.mxu0 0.0
    %6514 = vmatpush1.msra.mxu0 0.0
    %6515 = vmatprep.subr.mxu0 0.0
    %6516 = vmatpush1.msra.mxu0 0.0
    %6517 = vmatprep.subr.mxu0 0.0
    %6518 = vmatpush1.msra.mxu0 0.0
    %6519 = vmatprep.subr.mxu0 0.0
    %6520 = vmatpush1.msra.mxu0 0.0
    %6521 = vmatprep.subr.mxu0 0.0
    %6522 = vmatpush1.msra.mxu0 0.0
    %6523 = vmatprep.mubr.f32.mxu0 0.0
    %6524 = vmatmul.mubr.f32.gmra.mrb[0].mxu0 %v1899
    %v6525 = vpop.f32.mrb[0].mxu0
    %v6526 = vadd.f32 0.0, %v6525
    %v6527 = vpop.f32.mrb[0].mxu0
    %6528 = vmatprep.mubr.f32.mxu0 0.0
    %6529 = vmatmul.mubr.f32.gmra.mrb[0].mxu0 %v1902
    %v6530 = vpop.f32.mrb[0].mxu0
    %v6531 = vadd.f32 0.0, %v6530
    %v6532 = vpop.f32.mrb[0].mxu0
    %6533 = vmatprep.mubr.f32.mxu0 0.0
    %6534 = vmatmul.mubr.f32.gmra.mrb[0].mxu0 %v1905
    %v6535 = vpop.f32.mrb[0].mxu0
    %v6536 = vadd.f32 0.0, %v6535
    %v6537 = vpop.f32.mrb[0].mxu0
    %6538 = vmatprep.mubr.f32.mxu0 0.0
    %6539 = vmatmul.mubr.f32.gmra.mrb[0].mxu0 %v1908
    %v6540 = vpop.f32.mrb[0].mxu0
    %v6541 = vadd.f32 0.0, %v6540
    %v6542 = vpop.f32.mrb[0].mxu0
    %6543 = vmatprep.mubr.f32.mxu0 0.0
    %6544 = vmatmul.mubr.f32.gmra.mrb[0].mxu0 %v1911
    %v6545 = vpop.f32.mrb[0].mxu0
    %v6546 = vadd.f32 0.0, %v6545
    %v6547 = vpop.f32.mrb[0].mxu0
    %6548 = vmatprep.mubr.f32.mxu0 0.0
    %6549 = vmatmul.mubr.f32.gmra.mrb[0].mxu0 %v1914
    %v6550 = vpop.f32.mrb[0].mxu0
    %v6551 = vadd.f32 0.0, %v6550
    %v6552 = vpop.f32.mrb[0].mxu0
    %6553 = vmatprep.mubr.f32.mxu0 0.0
    %6554 = vmatmul.mubr.f32.gmra.mrb[0].mxu0 %v1917
    %v6555 = vpop.f32.mrb[0].mxu0
    %v6556 = vadd.f32 0.0, %v6555
    %v6557 = vpop.f32.mrb[0].mxu0
    %6558 = vmatprep.mubr.f32.mxu0 0.0
    %6559 = vmatmul.mubr.f32.gmra.mrb[0].mxu0 %v1920
    %v6560 = vpop.f32.mrb[0].mxu0
    %v6561 = vadd.f32 0.0, %v6560
    %v6562 = vpop.f32.mrb[0].mxu0
    %6563 = vdwg.mxu0
    %6564 = vmatprep.subr.mxu0 0.0
    %6565 = vmatpush1.msra.mxu0 %v5921
    %6566 = vmatprep.subr.mxu0 0.0
    %6567 = vmatpush1.msra.mxu0 %v5922
    %6568 = vmatprep.subr.mxu0 0.0
    %6569 = vmatpush1.msra.mxu0 %v5923
    %6570 = vmatprep.subr.mxu0 0.0
    %6571 = vmatpush1.msra.mxu0 %v5924
    %6572 = vmatprep.subr.mxu0 0.0
    %6573 = vmatpush1.msra.mxu0 %v5925
    %6574 = vmatprep.subr.mxu0 0.0
    %6575 = vmatpush1.msra.mxu0 %v5926
    %6576 = vmatprep.subr.mxu0 0.0
    %6577 = vmatpush1.msra.mxu0 %v5927
    %6578 = vmatprep.subr.mxu0 0.0
    %6579 = vmatpush1.msra.mxu0 %v5928
    %6580 = vmatprep.subr.mxu0 0.0
    %6581 = vmatpush1.msra.mxu0 0.0
    %6582 = vmatprep.subr.mxu0 0.0
    %6583 = vmatpush1.msra.mxu0 0.0
    %6584 = vmatprep.subr.mxu0 0.0
    %6585 = vmatpush1.msra.mxu0 0.0
    %6586 = vmatprep.subr.mxu0 0.0
    %6587 = vmatpush1.msra.mxu0 0.0
    %6588 = vmatprep.subr.mxu0 0.0
    %6589 = vmatpush1.msra.mxu0 0.0
    %6590 = vmatprep.subr.mxu0 0.0
    %6591 = vmatpush1.msra.mxu0 0.0
    %6592 = vmatprep.subr.mxu0 0.0
    %6593 = vmatpush1.msra.mxu0 0.0
    %6594 = vmatprep.subr.mxu0 0.0
    %6595 = vmatpush1.msra.mxu0 0.0
    %6596 = vmatprep.subr.mxu0 0.0
    %6597 = vmatpush1.msra.mxu0 0.0
    %6598 = vmatprep.subr.mxu0 0.0
    %6599 = vmatpush1.msra.mxu0 0.0
    %6600 = vmatprep.subr.mxu0 0.0
    %6601 = vmatpush1.msra.mxu0 0.0
    %6602 = vmatprep.subr.mxu0 0.0
    %6603 = vmatpush1.msra.mxu0 0.0
    %6604 = vmatprep.subr.mxu0 0.0
    %6605 = vmatpush1.msra.mxu0 0.0
    %6606 = vmatprep.subr.mxu0 0.0
    %6607 = vmatpush1.msra.mxu0 0.0
    %6608 = vmatprep.subr.mxu0 0.0
    %6609 = vmatpush1.msra.mxu0 0.0
    %6610 = vmatprep.subr.mxu0 0.0
    %6611 = vmatpush1.msra.mxu0 0.0
    %6612 = vmatprep.subr.mxu0 0.0
    %6613 = vmatpush1.msra.mxu0 0.0
    %6614 = vmatprep.subr.mxu0 0.0
    %6615 = vmatpush1.msra.mxu0 0.0
    %6616 = vmatprep.subr.mxu0 0.0
    %6617 = vmatpush1.msra.mxu0 0.0
    %6618 = vmatprep.subr.mxu0 0.0
    %6619 = vmatpush1.msra.mxu0 0.0
    %6620 = vmatprep.subr.mxu0 0.0
    %6621 = vmatpush1.msra.mxu0 0.0
    %6622 = vmatprep.subr.mxu0 0.0
    %6623 = vmatpush1.msra.mxu0 0.0
    %6624 = vmatprep.subr.mxu0 0.0
    %6625 = vmatpush1.msra.mxu0 0.0
    %6626 = vmatprep.subr.mxu0 0.0
    %6627 = vmatpush1.msra.mxu0 0.0
    %6628 = vmatprep.mubr.f32.mxu0 0.0
    %6629 = vmatmul.mubr.f32.gmra.mrb[0].mxu0 %v2028
    %v6630 = vpop.f32.mrb[0].mxu0
    %v6631 = vadd.f32 %v6526, %v6630
    %v6632 = vpop.f32.mrb[0].mxu0
    %6633 = vmatprep.mubr.f32.mxu0 0.0
    %6634 = vmatmul.mubr.f32.gmra.mrb[0].mxu0 %v2031
    %v6635 = vpop.f32.mrb[0].mxu0
    %v6636 = vadd.f32 %v6531, %v6635
    %v6637 = vpop.f32.mrb[0].mxu0
    %6638 = vmatprep.mubr.f32.mxu0 0.0
    %6639 = vmatmul.mubr.f32.gmra.mrb[0].mxu0 %v2034
    %v6640 = vpop.f32.mrb[0].mxu0
    %v6641 = vadd.f32 %v6536, %v6640
    %v6642 = vpop.f32.mrb[0].mxu0
    %6643 = vmatprep.mubr.f32.mxu0 0.0
    %6644 = vmatmul.mubr.f32.gmra.mrb[0].mxu0 %v2037
    %v6645 = vpop.f32.mrb[0].mxu0
    %v6646 = vadd.f32 %v6541, %v6645
    %v6647 = vpop.f32.mrb[0].mxu0
    %6648 = vmatprep.mubr.f32.mxu0 0.0
    %6649 = vmatmul.mubr.f32.gmra.mrb[0].mxu0 %v2040
    %v6650 = vpop.f32.mrb[0].mxu0
    %v6651 = vadd.f32 %v6546, %v6650
    %v6652 = vpop.f32.mrb[0].mxu0
    %6653 = vmatprep.mubr.f32.mxu0 0.0
    %6654 = vmatmul.mubr.f32.gmra.mrb[0].mxu0 %v2043
    %v6655 = vpop.f32.mrb[0].mxu0
    %v6656 = vadd.f32 %v6551, %v6655
    %v6657 = vpop.f32.mrb[0].mxu0
    %6658 = vmatprep.mubr.f32.mxu0 0.0
    %6659 = vmatmul.mubr.f32.gmra.mrb[0].mxu0 %v2046
    %v6660 = vpop.f32.mrb[0].mxu0
    %v6661 = vadd.f32 %v6556, %v6660
    %v6662 = vpop.f32.mrb[0].mxu0
    %6663 = vmatprep.mubr.f32.mxu0 0.0
    %6664 = vmatmul.mubr.f32.gmra.mrb[0].mxu0 %v2049
    %v6665 = vpop.f32.mrb[0].mxu0
    %v6666 = vadd.f32 %v6561, %v6665
    %v6667 = vpop.f32.mrb[0].mxu0
    %6668 = vdwg.mxu0
    %v6669 = vld [vmem:[%s1773] sm:$0xff]
    %v6670 = vld [vmem:[%s1773 + $0x8] sm:$0xff]
    %v6671 = vld [vmem:[%s1773 + $0x10] sm:$0xff]
    %v6672 = vld [vmem:[%s1773 + $0x18] sm:$0xff]
    %v6673 = vld [vmem:[%s1773 + $0x20] sm:$0xff]
    %v6674 = vld [vmem:[%s1773 + $0x28] sm:$0xff]
    %v6675 = vld [vmem:[%s1773 + $0x30] sm:$0xff]
    %v6676 = vld [vmem:[%s1773 + $0x38] sm:$0xff]
    %6677 = vmatprep.subr.mxu0 0.0
    %6678 = vmatpush1.msra.mxu0 %v6669
    %6679 = vmatprep.subr.mxu0 0.0
    %6680 = vmatpush1.msra.mxu0 %v6670
    %6681 = vmatprep.subr.mxu0 0.0
    %6682 = vmatpush1.msra.mxu0 %v6671
    %6683 = vmatprep.subr.mxu0 0.0
    %6684 = vmatpush1.msra.mxu0 %v6672
    %6685 = vmatprep.subr.mxu0 0.0
    %6686 = vmatpush1.msra.mxu0 %v6673
    %6687 = vmatprep.subr.mxu0 0.0
    %6688 = vmatpush1.msra.mxu0 %v6674
    %6689 = vmatprep.subr.mxu0 0.0
    %6690 = vmatpush1.msra.mxu0 %v6675
    %6691 = vmatprep.subr.mxu0 0.0
    %6692 = vmatpush1.msra.mxu0 %v6676
    %6693 = vmatprep.subr.mxu0 0.0
    %6694 = vmatpush1.msra.mxu0 0.0
    %6695 = vmatprep.subr.mxu0 0.0
    %6696 = vmatpush1.msra.mxu0 0.0
    %6697 = vmatprep.subr.mxu0 0.0
    %6698 = vmatpush1.msra.mxu0 0.0
    %6699 = vmatprep.subr.mxu0 0.0
    %6700 = vmatpush1.msra.mxu0 0.0
    %6701 = vmatprep.subr.mxu0 0.0
    %6702 = vmatpush1.msra.mxu0 0.0
    %6703 = vmatprep.subr.mxu0 0.0
    %6704 = vmatpush1.msra.mxu0 0.0
    %6705 = vmatprep.subr.mxu0 0.0
    %6706 = vmatpush1.msra.mxu0 0.0
    %6707 = vmatprep.subr.mxu0 0.0
    %6708 = vmatpush1.msra.mxu0 0.0
    %6709 = vmatprep.subr.mxu0 0.0
    %6710 = vmatpush1.msra.mxu0 0.0
    %6711 = vmatprep.subr.mxu0 0.0
    %6712 = vmatpush1.msra.mxu0 0.0
    %6713 = vmatprep.subr.mxu0 0.0
    %6714 = vmatpush1.msra.mxu0 0.0
    %6715 = vmatprep.subr.mxu0 0.0
    %6716 = vmatpush1.msra.mxu0 0.0
    %6717 = vmatprep.subr.mxu0 0.0
    %6718 = vmatpush1.msra.mxu0 0.0
    %6719 = vmatprep.subr.mxu0 0.0
    %6720 = vmatpush1.msra.mxu0 0.0
    %6721 = vmatprep.subr.mxu0 0.0
    %6722 = vmatpush1.msra.mxu0 0.0
    %6723 = vmatprep.subr.mxu0 0.0
    %6724 = vmatpush1.msra.mxu0 0.0
    %6725 = vmatprep.subr.mxu0 0.0
    %6726 = vmatpush1.msra.mxu0 0.0
    %6727 = vmatprep.subr.mxu0 0.0
    %6728 = vmatpush1.msra.mxu0 0.0
    %6729 = vmatprep.subr.mxu0 0.0
    %6730 = vmatpush1.msra.mxu0 0.0
    %6731 = vmatprep.subr.mxu0 0.0
    %6732 = vmatpush1.msra.mxu0 0.0
    %6733 = vmatprep.subr.mxu0 0.0
    %6734 = vmatpush1.msra.mxu0 0.0
    %6735 = vmatprep.subr.mxu0 0.0
    %6736 = vmatpush1.msra.mxu0 0.0
    %6737 = vmatprep.subr.mxu0 0.0
    %6738 = vmatpush1.msra.mxu0 0.0
    %6739 = vmatprep.subr.mxu0 0.0
    %6740 = vmatpush1.msra.mxu0 0.0
    %6741 = vmatprep.mubr.f32.mxu0 0.0
    %6742 = vmatmul.mubr.f32.gmra.mrb[0].mxu0 %v2165
    %v6743 = vpop.f32.mrb[0].mxu0
    %v6744 = vadd.f32 0.0, %v6743
    %v6745 = vpop.f32.mrb[0].mxu0
    %6746 = vmatprep.mubr.f32.mxu0 0.0
    %6747 = vmatmul.mubr.f32.gmra.mrb[0].mxu0 %v2168
    %v6748 = vpop.f32.mrb[0].mxu0
    %v6749 = vadd.f32 0.0, %v6748
    %v6750 = vpop.f32.mrb[0].mxu0
    %6751 = vmatprep.mubr.f32.mxu0 0.0
    %6752 = vmatmul.mubr.f32.gmra.mrb[0].mxu0 %v2171
    %v6753 = vpop.f32.mrb[0].mxu0
    %v6754 = vadd.f32 0.0, %v6753
    %v6755 = vpop.f32.mrb[0].mxu0
    %6756 = vmatprep.mubr.f32.mxu0 0.0
    %6757 = vmatmul.mubr.f32.gmra.mrb[0].mxu0 %v2174
    %v6758 = vpop.f32.mrb[0].mxu0
    %v6759 = vadd.f32 0.0, %v6758
    %v6760 = vpop.f32.mrb[0].mxu0
    %6761 = vmatprep.mubr.f32.mxu0 0.0
    %6762 = vmatmul.mubr.f32.gmra.mrb[0].mxu0 %v2177
    %v6763 = vpop.f32.mrb[0].mxu0
    %v6764 = vadd.f32 0.0, %v6763
    %v6765 = vpop.f32.mrb[0].mxu0
    %6766 = vmatprep.mubr.f32.mxu0 0.0
    %6767 = vmatmul.mubr.f32.gmra.mrb[0].mxu0 %v2180
    %v6768 = vpop.f32.mrb[0].mxu0
    %v6769 = vadd.f32 0.0, %v6768
    %v6770 = vpop.f32.mrb[0].mxu0
    %6771 = vmatprep.mubr.f32.mxu0 0.0
    %6772 = vmatmul.mubr.f32.gmra.mrb[0].mxu0 %v2183
    %v6773 = vpop.f32.mrb[0].mxu0
    %v6774 = vadd.f32 0.0, %v6773
    %v6775 = vpop.f32.mrb[0].mxu0
    %6776 = vmatprep.mubr.f32.mxu0 0.0
    %6777 = vmatmul.mubr.f32.gmra.mrb[0].mxu0 %v2186
    %v6778 = vpop.f32.mrb[0].mxu0
    %v6779 = vadd.f32 0.0, %v6778
    %v6780 = vpop.f32.mrb[0].mxu0
    %6781 = vdwg.mxu0
    %v6782 = vadd.f32 %v6631, %v6744
    %v6783 = vadd.f32 %v6636, %v6749
    %v6784 = vadd.f32 %v6641, %v6754
    %v6785 = vadd.f32 %v6646, %v6759
    %v6786 = vadd.f32 %v6651, %v6764
    %v6787 = vadd.f32 %v6656, %v6769
    %v6788 = vadd.f32 %v6661, %v6774
    %v6789 = vadd.f32 %v6666, %v6779
    %v6790 = vadd.f32 %v6782, %v126
    %v6791 = vadd.f32 %v6783, %v131
    %v6792 = vadd.f32 %v6784, %v136
    %v6793 = vadd.f32 %v6785, %v141
    %v6794 = vadd.f32 %v6786, %v146
    %v6795 = vadd.f32 %v6787, %v151
    %v6796 = vadd.f32 %v6788, %v156
    %v6797 = vadd.f32 %v6789, %v161
    %v6798 = vmax.f32 %v6790, 0.0
    %v6799 = vmax.f32 %v6791, 0.0
    %v6800 = vmax.f32 %v6792, 0.0
    %v6801 = vmax.f32 %v6793, 0.0
    %v6802 = vmax.f32 %v6794, 0.0
    %v6803 = vmax.f32 %v6795, 0.0
    %v6804 = vmax.f32 %v6796, 0.0
    %v6805 = vmax.f32 %v6797, 0.0
    %v6806 = vadd.f32 %v6798, %v6799
    %v6807 = vadd.f32 %v6806, %v6800
    %v6808 = vadd.f32 %v6807, %v6801
    %v6809 = vadd.f32 %v6808, %v6802
    %v6810 = vadd.f32 %v6809, %v6803
    %v6811 = vadd.f32 %v6810, %v6804
    %v6812 = vadd.f32 %v6811, %v6805
    %v6813 = vrot.slane %v6812, 4
    %v6814 = vadd.f32 %v6812, %v6813
    %v6815 = vrot.slane %v6814, 2
    %v6816 = vadd.f32 %v6814, %v6815
    %v6817 = vrot.slane %v6816, 1
    %v6818 = vadd.f32 %v6816, %v6817
    %v6819 = vmul.f32 %v6818, %v2330
    %v6820 = vmax.f32 %v6798, %v6802
    %v6821 = vmax.f32 %v6799, %v6803
    %v6822 = vmax.f32 %v6800, %v6804
    %v6823 = vmax.f32 %v6801, %v6805
    %v6824 = vmax.f32 %v6820, %v6821
    %v6825 = vmax.f32 %v6822, %v6823
    %v6826 = vmax.f32 %v6824, %v6825
    %v6827 = vrot.slane %v6826, 4
    %v6828 = vmax.f32 %v6826, %v6827
    %v6829 = vrot.slane %v6828, 2
    %v6830 = vmax.f32 %v6828, %v6829
    %v6831 = vrot.slane %v6830, 1
    %v6832 = vmax.f32 %v6830, %v6831
    %6833 = vmatprep.subr.mxu0 0.0
    %6834 = vmatpush1.msra.mxu0 %v6669
    %6835 = vmatprep.subr.mxu0 0.0
    %6836 = vmatpush1.msra.mxu0 %v6670
    %6837 = vmatprep.subr.mxu0 0.0
    %6838 = vmatpush1.msra.mxu0 %v6671
    %6839 = vmatprep.subr.mxu0 0.0
    %6840 = vmatpush1.msra.mxu0 %v6672
    %6841 = vmatprep.subr.mxu0 0.0
    %6842 = vmatpush1.msra.mxu0 %v6673
    %6843 = vmatprep.subr.mxu0 0.0
    %6844 = vmatpush1.msra.mxu0 %v6674
    %6845 = vmatprep.subr.mxu0 0.0
    %6846 = vmatpush1.msra.mxu0 %v6675
    %6847 = vmatprep.subr.mxu0 0.0
    %6848 = vmatpush1.msra.mxu0 %v6676
    %6849 = vmatprep.subr.mxu0 0.0
    %6850 = vmatpush1.msra.mxu0 0.0
    %6851 = vmatprep.subr.mxu0 0.0
    %6852 = vmatpush1.msra.mxu0 0.0
    %6853 = vmatprep.subr.mxu0 0.0
    %6854 = vmatpush1.msra.mxu0 0.0
    %6855 = vmatprep.subr.mxu0 0.0
    %6856 = vmatpush1.msra.mxu0 0.0
    %6857 = vmatprep.subr.mxu0 0.0
    %6858 = vmatpush1.msra.mxu0 0.0
    %6859 = vmatprep.subr.mxu0 0.0
    %6860 = vmatpush1.msra.mxu0 0.0
    %6861 = vmatprep.subr.mxu0 0.0
    %6862 = vmatpush1.msra.mxu0 0.0
    %6863 = vmatprep.subr.mxu0 0.0
    %6864 = vmatpush1.msra.mxu0 0.0
    %6865 = vmatprep.subr.mxu0 0.0
    %6866 = vmatpush1.msra.mxu0 0.0
    %6867 = vmatprep.subr.mxu0 0.0
    %6868 = vmatpush1.msra.mxu0 0.0
    %6869 = vmatprep.subr.mxu0 0.0
    %6870 = vmatpush1.msra.mxu0 0.0
    %6871 = vmatprep.subr.mxu0 0.0
    %6872 = vmatpush1.msra.mxu0 0.0
    %6873 = vmatprep.subr.mxu0 0.0
    %6874 = vmatpush1.msra.mxu0 0.0
    %6875 = vmatprep.subr.mxu0 0.0
    %6876 = vmatpush1.msra.mxu0 0.0
    %6877 = vmatprep.subr.mxu0 0.0
    %6878 = vmatpush1.msra.mxu0 0.0
    %6879 = vmatprep.subr.mxu0 0.0
    %6880 = vmatpush1.msra.mxu0 0.0
    %6881 = vmatprep.subr.mxu0 0.0
    %6882 = vmatpush1.msra.mxu0 0.0
    %6883 = vmatprep.subr.mxu0 0.0
    %6884 = vmatpush1.msra.mxu0 0.0
    %6885 = vmatprep.subr.mxu0 0.0
    %6886 = vmatpush1.msra.mxu0 0.0
    %6887 = vmatprep.subr.mxu0 0.0
    %6888 = vmatpush1.msra.mxu0 0.0
    %6889 = vmatprep.subr.mxu0 0.0
    %6890 = vmatpush1.msra.mxu0 0.0
    %6891 = vmatprep.subr.mxu0 0.0
    %6892 = vmatpush1.msra.mxu0 0.0
    %6893 = vmatprep.subr.mxu0 0.0
    %6894 = vmatpush1.msra.mxu0 0.0
    %6895 = vmatprep.subr.mxu0 0.0
    %6896 = vmatpush1.msra.mxu0 0.0
    %6897 = vmatprep.mubr.f32.mxu0 0.0
    %6898 = vmatmul.mubr.f32.gmra.mrb[0].mxu0 %v1899
    %v6899 = vpop.f32.mrb[0].mxu0
    %v6900 = vadd.f32 0.0, %v6899
    %v6901 = vpop.f32.mrb[0].mxu0
    %6902 = vmatprep.mubr.f32.mxu0 0.0
    %6903 = vmatmul.mubr.f32.gmra.mrb[0].mxu0 %v1902
    %v6904 = vpop.f32.mrb[0].mxu0
    %v6905 = vadd.f32 0.0, %v6904
    %v6906 = vpop.f32.mrb[0].mxu0
    %6907 = vmatprep.mubr.f32.mxu0 0.0
    %6908 = vmatmul.mubr.f32.gmra.mrb[0].mxu0 %v1905
    %v6909 = vpop.f32.mrb[0].mxu0
    %v6910 = vadd.f32 0.0, %v6909
    %v6911 = vpop.f32.mrb[0].mxu0
    %6912 = vmatprep.mubr.f32.mxu0 0.0
    %6913 = vmatmul.mubr.f32.gmra.mrb[0].mxu0 %v1908
    %v6914 = vpop.f32.mrb[0].mxu0
    %v6915 = vadd.f32 0.0, %v6914
    %v6916 = vpop.f32.mrb[0].mxu0
    %6917 = vmatprep.mubr.f32.mxu0 0.0
    %6918 = vmatmul.mubr.f32.gmra.mrb[0].mxu0 %v1911
    %v6919 = vpop.f32.mrb[0].mxu0
    %v6920 = vadd.f32 0.0, %v6919
    %v6921 = vpop.f32.mrb[0].mxu0
    %6922 = vmatprep.mubr.f32.mxu0 0.0
    %6923 = vmatmul.mubr.f32.gmra.mrb[0].mxu0 %v1914
    %v6924 = vpop.f32.mrb[0].mxu0
    %v6925 = vadd.f32 0.0, %v6924
    %v6926 = vpop.f32.mrb[0].mxu0
    %6927 = vmatprep.mubr.f32.mxu0 0.0
    %6928 = vmatmul.mubr.f32.gmra.mrb[0].mxu0 %v1917
    %v6929 = vpop.f32.mrb[0].mxu0
    %v6930 = vadd.f32 0.0, %v6929
    %v6931 = vpop.f32.mrb[0].mxu0
    %6932 = vmatprep.mubr.f32.mxu0 0.0
    %6933 = vmatmul.mubr.f32.gmra.mrb[0].mxu0 %v1920
    %v6934 = vpop.f32.mrb[0].mxu0
    %v6935 = vadd.f32 0.0, %v6934
    %v6936 = vpop.f32.mrb[0].mxu0
    %6937 = vdwg.mxu0
    %6938 = vmatprep.subr.mxu0 0.0
    %6939 = vmatpush1.msra.mxu0 %v6295
    %6940 = vmatprep.subr.mxu0 0.0
    %6941 = vmatpush1.msra.mxu0 %v6296
    %6942 = vmatprep.subr.mxu0 0.0
    %6943 = vmatpush1.msra.mxu0 %v6297
    %6944 = vmatprep.subr.mxu0 0.0
    %6945 = vmatpush1.msra.mxu0 %v6298
    %6946 = vmatprep.subr.mxu0 0.0
    %6947 = vmatpush1.msra.mxu0 %v6299
    %6948 = vmatprep.subr.mxu0 0.0
    %6949 = vmatpush1.msra.mxu0 %v6300
    %6950 = vmatprep.subr.mxu0 0.0
    %6951 = vmatpush1.msra.mxu0 %v6301
    %6952 = vmatprep.subr.mxu0 0.0
    %6953 = vmatpush1.msra.mxu0 %v6302
    %6954 = vmatprep.subr.mxu0 0.0
    %6955 = vmatpush1.msra.mxu0 0.0
    %6956 = vmatprep.subr.mxu0 0.0
    %6957 = vmatpush1.msra.mxu0 0.0
    %6958 = vmatprep.subr.mxu0 0.0
    %6959 = vmatpush1.msra.mxu0 0.0
    %6960 = vmatprep.subr.mxu0 0.0
    %6961 = vmatpush1.msra.mxu0 0.0
    %6962 = vmatprep.subr.mxu0 0.0
    %6963 = vmatpush1.msra.mxu0 0.0
    %6964 = vmatprep.subr.mxu0 0.0
    %6965 = vmatpush1.msra.mxu0 0.0
    %6966 = vmatprep.subr.mxu0 0.0
    %6967 = vmatpush1.msra.mxu0 0.0
    %6968 = vmatprep.subr.mxu0 0.0
    %6969 = vmatpush1.msra.mxu0 0.0
    %6970 = vmatprep.subr.mxu0 0.0
    %6971 = vmatpush1.msra.mxu0 0.0
    %6972 = vmatprep.subr.mxu0 0.0
    %6973 = vmatpush1.msra.mxu0 0.0
    %6974 = vmatprep.subr.mxu0 0.0
    %6975 = vmatpush1.msra.mxu0 0.0
    %6976 = vmatprep.subr.mxu0 0.0
    %6977 = vmatpush1.msra.mxu0 0.0
    %6978 = vmatprep.subr.mxu0 0.0
    %6979 = vmatpush1.msra.mxu0 0.0
    %6980 = vmatprep.subr.mxu0 0.0
    %6981 = vmatpush1.msra.mxu0 0.0
    %6982 = vmatprep.subr.mxu0 0.0
    %6983 = vmatpush1.msra.mxu0 0.0
    %6984 = vmatprep.subr.mxu0 0.0
    %6985 = vmatpush1.msra.mxu0 0.0
    %6986 = vmatprep.subr.mxu0 0.0
    %6987 = vmatpush1.msra.mxu0 0.0
    %6988 = vmatprep.subr.mxu0 0.0
    %6989 = vmatpush1.msra.mxu0 0.0
    %6990 = vmatprep.subr.mxu0 0.0
    %6991 = vmatpush1.msra.mxu0 0.0
    %6992 = vmatprep.subr.mxu0 0.0
    %6993 = vmatpush1.msra.mxu0 0.0
    %6994 = vmatprep.subr.mxu0 0.0
    %6995 = vmatpush1.msra.mxu0 0.0
    %6996 = vmatprep.subr.mxu0 0.0
    %6997 = vmatpush1.msra.mxu0 0.0
    %6998 = vmatprep.subr.mxu0 0.0
    %6999 = vmatpush1.msra.mxu0 0.0
    %7000 = vmatprep.subr.mxu0 0.0
    %7001 = vmatpush1.msra.mxu0 0.0
    %7002 = vmatprep.mubr.f32.mxu0 0.0
    %7003 = vmatmul.mubr.f32.gmra.mrb[0].mxu0 %v2028
    %v7004 = vpop.f32.mrb[0].mxu0
    %v7005 = vadd.f32 %v6900, %v7004
    %v7006 = vpop.f32.mrb[0].mxu0
    %7007 = vmatprep.mubr.f32.mxu0 0.0
    %7008 = vmatmul.mubr.f32.gmra.mrb[0].mxu0 %v2031
    %v7009 = vpop.f32.mrb[0].mxu0
    %v7010 = vadd.f32 %v6905, %v7009
    %v7011 = vpop.f32.mrb[0].mxu0
    %7012 = vmatprep.mubr.f32.mxu0 0.0
    %7013 = vmatmul.mubr.f32.gmra.mrb[0].mxu0 %v2034
    %v7014 = vpop.f32.mrb[0].mxu0
    %v7015 = vadd.f32 %v6910, %v7014
    %v7016 = vpop.f32.mrb[0].mxu0
    %7017 = vmatprep.mubr.f32.mxu0 0.0
    %7018 = vmatmul.mubr.f32.gmra.mrb[0].mxu0 %v2037
    %v7019 = vpop.f32.mrb[0].mxu0
    %v7020 = vadd.f32 %v6915, %v7019
    %v7021 = vpop.f32.mrb[0].mxu0
    %7022 = vmatprep.mubr.f32.mxu0 0.0
    %7023 = vmatmul.mubr.f32.gmra.mrb[0].mxu0 %v2040
    %v7024 = vpop.f32.mrb[0].mxu0
    %v7025 = vadd.f32 %v6920, %v7024
    %v7026 = vpop.f32.mrb[0].mxu0
    %7027 = vmatprep.mubr.f32.mxu0 0.0
    %7028 = vmatmul.mubr.f32.gmra.mrb[0].mxu0 %v2043
    %v7029 = vpop.f32.mrb[0].mxu0
    %v7030 = vadd.f32 %v6925, %v7029
    %v7031 = vpop.f32.mrb[0].mxu0
    %7032 = vmatprep.mubr.f32.mxu0 0.0
    %7033 = vmatmul.mubr.f32.gmra.mrb[0].mxu0 %v2046
    %v7034 = vpop.f32.mrb[0].mxu0
    %v7035 = vadd.f32 %v6930, %v7034
    %v7036 = vpop.f32.mrb[0].mxu0
    %7037 = vmatprep.mubr.f32.mxu0 0.0
    %7038 = vmatmul.mubr.f32.gmra.mrb[0].mxu0 %v2049
    %v7039 = vpop.f32.mrb[0].mxu0
    %v7040 = vadd.f32 %v6935, %v7039
    %v7041 = vpop.f32.mrb[0].mxu0
    %7042 = vdwg.mxu0
    %v7043 = vld [vmem:[%s1872] sm:$0xff]
    %v7044 = vld [vmem:[%s1872 + $0x8] sm:$0xff]
    %v7045 = vld [vmem:[%s1872 + $0x10] sm:$0xff]
    %v7046 = vld [vmem:[%s1872 + $0x18] sm:$0xff]
    %v7047 = vld [vmem:[%s1872 + $0x20] sm:$0xff]
    %v7048 = vld [vmem:[%s1872 + $0x28] sm:$0xff]
    %v7049 = vld [vmem:[%s1872 + $0x30] sm:$0xff]
    %v7050 = vld [vmem:[%s1872 + $0x38] sm:$0xff]
    %7051 = vmatprep.subr.mxu0 0.0
    %7052 = vmatpush1.msra.mxu0 %v7043
    %7053 = vmatprep.subr.mxu0 0.0
    %7054 = vmatpush1.msra.mxu0 %v7044
    %7055 = vmatprep.subr.mxu0 0.0
    %7056 = vmatpush1.msra.mxu0 %v7045
    %7057 = vmatprep.subr.mxu0 0.0
    %7058 = vmatpush1.msra.mxu0 %v7046
    %7059 = vmatprep.subr.mxu0 0.0
    %7060 = vmatpush1.msra.mxu0 %v7047
    %7061 = vmatprep.subr.mxu0 0.0
    %7062 = vmatpush1.msra.mxu0 %v7048
    %7063 = vmatprep.subr.mxu0 0.0
    %7064 = vmatpush1.msra.mxu0 %v7049
    %7065 = vmatprep.subr.mxu0 0.0
    %7066 = vmatpush1.msra.mxu0 %v7050
    %7067 = vmatprep.subr.mxu0 0.0
    %7068 = vmatpush1.msra.mxu0 0.0
    %7069 = vmatprep.subr.mxu0 0.0
    %7070 = vmatpush1.msra.mxu0 0.0
    %7071 = vmatprep.subr.mxu0 0.0
    %7072 = vmatpush1.msra.mxu0 0.0
    %7073 = vmatprep.subr.mxu0 0.0
    %7074 = vmatpush1.msra.mxu0 0.0
    %7075 = vmatprep.subr.mxu0 0.0
    %7076 = vmatpush1.msra.mxu0 0.0
    %7077 = vmatprep.subr.mxu0 0.0
    %7078 = vmatpush1.msra.mxu0 0.0
    %7079 = vmatprep.subr.mxu0 0.0
    %7080 = vmatpush1.msra.mxu0 0.0
    %7081 = vmatprep.subr.mxu0 0.0
    %7082 = vmatpush1.msra.mxu0 0.0
    %7083 = vmatprep.subr.mxu0 0.0
    %7084 = vmatpush1.msra.mxu0 0.0
    %7085 = vmatprep.subr.mxu0 0.0
    %7086 = vmatpush1.msra.mxu0 0.0
    %7087 = vmatprep.subr.mxu0 0.0
    %7088 = vmatpush1.msra.mxu0 0.0
    %7089 = vmatprep.subr.mxu0 0.0
    %7090 = vmatpush1.msra.mxu0 0.0
    %7091 = vmatprep.subr.mxu0 0.0
    %7092 = vmatpush1.msra.mxu0 0.0
    %7093 = vmatprep.subr.mxu0 0.0
    %7094 = vmatpush1.msra.mxu0 0.0
    %7095 = vmatprep.subr.mxu0 0.0
    %7096 = vmatpush1.msra.mxu0 0.0
    %7097 = vmatprep.subr.mxu0 0.0
    %7098 = vmatpush1.msra.mxu0 0.0
    %7099 = vmatprep.subr.mxu0 0.0
    %7100 = vmatpush1.msra.mxu0 0.0
    %7101 = vmatprep.subr.mxu0 0.0
    %7102 = vmatpush1.msra.mxu0 0.0
    %7103 = vmatprep.subr.mxu0 0.0
    %7104 = vmatpush1.msra.mxu0 0.0
    %7105 = vmatprep.subr.mxu0 0.0
    %7106 = vmatpush1.msra.mxu0 0.0
    %7107 = vmatprep.subr.mxu0 0.0
    %7108 = vmatpush1.msra.mxu0 0.0
    %7109 = vmatprep.subr.mxu0 0.0
    %7110 = vmatpush1.msra.mxu0 0.0
    %7111 = vmatprep.subr.mxu0 0.0
    %7112 = vmatpush1.msra.mxu0 0.0
    %7113 = vmatprep.subr.mxu0 0.0
    %7114 = vmatpush1.msra.mxu0 0.0
    %7115 = vmatprep.mubr.f32.mxu0 0.0
    %7116 = vmatmul.mubr.f32.gmra.mrb[0].mxu0 %v2165
    %v7117 = vpop.f32.mrb[0].mxu0
    %v7118 = vadd.f32 0.0, %v7117
    %v7119 = vpop.f32.mrb[0].mxu0
    %7120 = vmatprep.mubr.f32.mxu0 0.0
    %7121 = vmatmul.mubr.f32.gmra.mrb[0].mxu0 %v2168
    %v7122 = vpop.f32.mrb[0].mxu0
    %v7123 = vadd.f32 0.0, %v7122
    %v7124 = vpop.f32.mrb[0].mxu0
    %7125 = vmatprep.mubr.f32.mxu0 0.0
    %7126 = vmatmul.mubr.f32.gmra.mrb[0].mxu0 %v2171
    %v7127 = vpop.f32.mrb[0].mxu0
    %v7128 = vadd.f32 0.0, %v7127
    %v7129 = vpop.f32.mrb[0].mxu0
    %7130 = vmatprep.mubr.f32.mxu0 0.0
    %7131 = vmatmul.mubr.f32.gmra.mrb[0].mxu0 %v2174
    %v7132 = vpop.f32.mrb[0].mxu0
    %v7133 = vadd.f32 0.0, %v7132
    %v7134 = vpop.f32.mrb[0].mxu0
    %7135 = vmatprep.mubr.f32.mxu0 0.0
    %7136 = vmatmul.mubr.f32.gmra.mrb[0].mxu0 %v2177
    %v7137 = vpop.f32.mrb[0].mxu0
    %v7138 = vadd.f32 0.0, %v7137
    %v7139 = vpop.f32.mrb[0].mxu0
    %7140 = vmatprep.mubr.f32.mxu0 0.0
    %7141 = vmatmul.mubr.f32.gmra.mrb[0].mxu0 %v2180
    %v7142 = vpop.f32.mrb[0].mxu0
    %v7143 = vadd.f32 0.0, %v7142
    %v7144 = vpop.f32.mrb[0].mxu0
    %7145 = vmatprep.mubr.f32.mxu0 0.0
    %7146 = vmatmul.mubr.f32.gmra.mrb[0].mxu0 %v2183
    %v7147 = vpop.f32.mrb[0].mxu0
    %v7148 = vadd.f32 0.0, %v7147
    %v7149 = vpop.f32.mrb[0].mxu0
    %7150 = vmatprep.mubr.f32.mxu0 0.0
    %7151 = vmatmul.mubr.f32.gmra.mrb[0].mxu0 %v2186
    %v7152 = vpop.f32.mrb[0].mxu0
    %v7153 = vadd.f32 0.0, %v7152
    %v7154 = vpop.f32.mrb[0].mxu0
    %7155 = vdwg.mxu0
    %v7156 = vadd.f32 %v7005, %v7118
    %v7157 = vadd.f32 %v7010, %v7123
    %v7158 = vadd.f32 %v7015, %v7128
    %v7159 = vadd.f32 %v7020, %v7133
    %v7160 = vadd.f32 %v7025, %v7138
    %v7161 = vadd.f32 %v7030, %v7143
    %v7162 = vadd.f32 %v7035, %v7148
    %v7163 = vadd.f32 %v7040, %v7153
    %v7164 = vadd.f32 %v7156, %v126
    %v7165 = vadd.f32 %v7157, %v131
    %v7166 = vadd.f32 %v7158, %v136
    %v7167 = vadd.f32 %v7159, %v141
    %v7168 = vadd.f32 %v7160, %v146
    %v7169 = vadd.f32 %v7161, %v151
    %v7170 = vadd.f32 %v7162, %v156
    %v7171 = vadd.f32 %v7163, %v161
    %v7172 = vmax.f32 %v7164, 0.0
    %v7173 = vmax.f32 %v7165, 0.0
    %v7174 = vmax.f32 %v7166, 0.0
    %v7175 = vmax.f32 %v7167, 0.0
    %v7176 = vmax.f32 %v7168, 0.0
    %v7177 = vmax.f32 %v7169, 0.0
    %v7178 = vmax.f32 %v7170, 0.0
    %v7179 = vmax.f32 %v7171, 0.0
    %v7180 = vadd.f32 %v7172, %v7173
    %v7181 = vadd.f32 %v7180, %v7174
    %v7182 = vadd.f32 %v7181, %v7175
    %v7183 = vadd.f32 %v7182, %v7176
    %v7184 = vadd.f32 %v7183, %v7177
    %v7185 = vadd.f32 %v7184, %v7178
    %v7186 = vadd.f32 %v7185, %v7179
    %v7187 = vrot.slane %v7186, 4
    %v7188 = vadd.f32 %v7186, %v7187
    %v7189 = vrot.slane %v7188, 2
    %v7190 = vadd.f32 %v7188, %v7189
    %v7191 = vrot.slane %v7190, 1
    %v7192 = vadd.f32 %v7190, %v7191
    %v7193 = vmul.f32 %v7192, %v2330
    %v7194 = vmax.f32 %v7172, %v7176
    %v7195 = vmax.f32 %v7173, %v7177
    %v7196 = vmax.f32 %v7174, %v7178
    %v7197 = vmax.f32 %v7175, %v7179
    %v7198 = vmax.f32 %v7194, %v7195
    %v7199 = vmax.f32 %v7196, %v7197
    %v7200 = vmax.f32 %v7198, %v7199
    %v7201 = vrot.slane %v7200, 4
    %v7202 = vmax.f32 %v7200, %v7201
    %v7203 = vrot.slane %v7202, 2
    %v7204 = vmax.f32 %v7202, %v7203
    %v7205 = vrot.slane %v7204, 1
    %v7206 = vmax.f32 %v7204, %v7205
    %vm7207 = vcmask 1040384
    %v7208 = vsel %vm7207, %v2331, %v2705
    %vm7209 = vcmask 1041408
    %v7210 = vsel %vm7209, %v7208, %v3079
    %vm7211 = vcmask 1042432
    %v7212 = vsel %vm7211, %v7210, %v3453
    %vm7213 = vcmask 1043456
    %v7214 = vsel %vm7213, %v7212, %v3827
    %vm7215 = vcmask 1044480
    %v7216 = vsel %vm7215, %v7214, %v4201
    %vm7217 = vcmask 1045504
    %v7218 = vsel %vm7217, %v7216, %v4575
    %vm7219 = vcmask 1046528
    %v7220 = vsel %vm7219, %v7218, %v4949
    %v7221 = vsel %vm7207, %v5323, %v5697
    %v7222 = vsel %vm7209, %v7221, %v6071
    %v7223 = vsel %vm7211, %v7222, %v6445
    %v7224 = vsel %vm7213, %v7223, %v6819
    %v7225 = vsel %vm7215, %v7224, %v7193
    %v7226 = vsel %vm7217, %v7225, %v2344
    %v7227 = vsel %vm7219, %v7226, %v2718
    %v7228 = vsel %vm7207, %v3092, %v3466
    %v7229 = vsel %vm7209, %v7228, %v3840
    %v7230 = vsel %vm7211, %v7229, %v4214
    %v7231 = vsel %vm7213, %v7230, %v4588
    %v7232 = vsel %vm7215, %v7231, %v4962
    %v7233 = vsel %vm7217, %v7232, %v5336
    %v7234 = vsel %vm7219, %v7233, %v5710
    %v7235 = vsel %vm7207, %v6084, %v6458
    %v7236 = vsel %vm7209, %v7235, %v6832
    %v7237 = vsel %vm7211, %v7236, %v7206
    %7238 = vst [vmem:[#allocation6] sm:$0xff] %v7220
    %7239 = vst [vmem:[#allocation6 + $0x8] sm:$0xff] %v7227
    %7240 = vst [vmem:[#allocation6 + $0x10] sm:$0xff] %v7234
    %7241 = vst [vmem:[#allocation6 + $0x18] sm:$0xf] %v7237
    // Predicated region
    $region26: #{tpu_custom_call.1} parent=1 // pred_check
      _
    $region27: #{tpu_custom_call.1} parent=1 // pred_check_branch
      %7243 = sbr.rel (0) target = $region29
    $region28: #{tpu_custom_call.1} parent=1 // pred_region
      %s7245 = ssub.s32 512, 512
      %7246 = vsyncadd [#allocation5], %s7245
      %s7247 = sshll.u32 [#allocation6], 4
      %s7248 = int_to_ptr.vmem [resolvable:$true] %s7247
      %7253 = dma.vmem_to_hbm [thread:$0]  %s7248, 512, %s5, [#allocation5], 128, 128, 8
    $region29: #{tpu_custom_call.1} parent=1 // pred_fallthru
      _
    // Predicated region
    $region30: #{tpu_custom_call.1} parent=1 // pred_check
      _
    $region31: #{tpu_custom_call.1} parent=1 // pred_check_branch
      %7255 = sbr.rel (0) target = $region33
    $region32: #{tpu_custom_call.1} parent=1 // pred_region
      %7256 = dma.done [#allocation5], 512
    $region33: #{tpu_custom_call.1} parent=1 // pred_fallthru
      _
    %7257 = vsyncpa [#allocation4], 1
    %7258 = vsyncpa [#allocation5], 1

</llo_original>
